<compile_context>
chip_gen: v6e
topology: v6e:2x2x1
jax: 0.10.0
libtpu: 0.0.40
codegen_flags: <defaults>
</compile_context>

<pallas_src>
import jax
import jax.numpy as jnp
from jax.experimental import pallas as pl
from jax.experimental.pallas import tpu as pltpu

N_WORD = 16
N_H = 32
N_DEPTH = 2
NOUT_MAX = 8   # per-head score width (max 6), padded to 8 lanes


# ----------------------------------------------------------------------------
# Head table (one entry per attention head of the module).
#   src     : columns source (0 = e_col, 1 = col_emb [4 chosen cols])
#   raw     : weighted sum uses the raw (-100 filled) attention (the reference
#             really does this for the *_num / *_par heads)
#   cmask   : also mask attention rows with column index >= col_len
#   summed  : sum the weighted vectors over the real e_col columns (1 row out)
#   condcol : add cond_col_out_sel(K_sel_agg) (hoisted, computed once)
#   relu    : ReLU instead of Tanh before the final projection
# ----------------------------------------------------------------------------
def _head(name, att, src, wk, wout, nout, wcol=None, wmid=None,
          raw=0, cmask=0, summed=0, relu=0, condcol=0):
    return dict(name=name, att=att, src=src, wk=wk, wcol=wcol, wmid=wmid,
                wout=wout, nout=nout, raw=raw, cmask=cmask, summed=summed,
                relu=relu, condcol=condcol)


HEADS = (
    _head("sel_num",  "sel_num_h",    0, "sel_num_l",      "sel_num_out_1", 4, raw=1, cmask=1, summed=1),
    _head("gby_num",  "gby_num_h",    0, "gby_num_l",      "gby_num_out_1", 3, raw=1, cmask=1, summed=1),
    _head("ody_num",  "ody_num_h",    0, "ody_num_l",      "ody_num_out_1", 2, raw=1, cmask=1, summed=1),
    _head("ody_par",  "ody_par_h",    0, "ody_par_l",      "ody_par_out_1", 3, raw=1, cmask=1, summed=1),
    _head("cond_num", "num_type_att", 0, "ty_num_out",     "cond_num_out_1", 5, cmask=1, summed=1),
    _head("sel",      "sel_att",      0, "sel_out_K",      "sel_out_1", 1, wcol="sel_out_col"),
    _head("gby",      "gby_att",      0, "gby_out_K",      "gby_out_1", 1, wcol="gby_out_col"),
    _head("ody",      "ody_att",      0, "ody_out_K",      "ody_out_1", 1, wcol="ody_out_col"),
    _head("agg_num",  "agg_num_att",  1, "agg_num_out_K",  "agg_num_out_2", 4, wcol="agg_num_out_col", wmid="agg_num_out_0"),
    _head("agg_op",   "agg_op_att",   1, "agg_op_out_K",   "agg_op_out_2", 6, wcol="agg_op_out_col",  wmid="agg_op_out_0"),
    _head("ody_agg",  "ody_agg_att",  1, "ody_agg_out_K",  "ody_agg_out_2", 6, wcol="ody_agg_out_col", wmid="ody_agg_out_0"),
    _head("cond_col", "cond_col_att", 0, "cond_col_out_K", "cond_col_out_1", 1, wcol="cond_col_out_col", relu=1, condcol=1),
)
NHEADS = len(HEADS)
HEAD_IDX = {cfg["name"]: i for i, cfg in enumerate(HEADS)}
OUT_W = ((NHEADS * NOUT_MAX + 127) // 128) * 128    # 128 — lane-dense slab


def _sigmoid(x):
    return 1.0 / (1.0 + jnp.exp(-x))


# ----------------------------------------------------------------------------
# Fused per-batch kernel: ALL 12 heads (attention, masking, raw/softmax
# weighting, weighted sum, full post-attention linear chain) in one grid step.
# ----------------------------------------------------------------------------
def _fused_heads_kernel(xlen_ref, clen_ref, necol_ref,
                        henc_ref, ecol_ref, cemb_ref, chosen_ref,
                        watt_ref, batt_ref, wcolpk_ref,
                        wk_ref, binner_ref, wmid_ref, bmid_ref,
                        wout_ref, bout_ref,
                        wca_ref, bca_ref, wcs_ref,
                        out_ref):
    b = pl.program_id(0)
    xl = xlen_ref[b]
    cl = clen_ref[b]
    ne = necol_ref[0]

    f32 = jnp.float32
    henc = henc_ref[0]                 # (X, H)   question encoding
    ecol = ecol_ref[0]                 # (CR, H)  column encodings (padded)
    cemb = cemb_ref[0]                 # (CR, H)  4 chosen cols (padded)
    chosen = chosen_ref[0]             # (1, H)
    X = henc.shape[0]
    CR, H = ecol.shape

    # ---- shared lane-packed precompute (once per batch element) -----------
    # cw[:, h*H:(h+1)*H]   = cols @ W_att_h        (attention projection)
    # ccon[:, h*H:(h+1)*H] = cols @ Wcol_h^T       (per-column linear term)
    cw_e = jnp.dot(ecol, watt_ref[...], preferred_element_type=f32)    # (CR, 12H)
    cw_c = jnp.dot(cemb, watt_ref[...], preferred_element_type=f32)
    cb_e = jnp.dot(ecol, batt_ref[...], preferred_element_type=f32)    # (CR, 12)
    cb_c = jnp.dot(cemb, batt_ref[...], preferred_element_type=f32)
    cc_e = jnp.dot(ecol, wcolpk_ref[...], preferred_element_type=f32)  # (CR, 12H)
    cc_c = jnp.dot(cemb, wcolpk_ref[...], preferred_element_type=f32)

    xmask = jax.lax.broadcasted_iota(jnp.int32, (1, X), 1) >= xl        # (1, X)
    col_ids = jax.lax.broadcasted_iota(jnp.int32, (CR, 1), 0)           # (CR, 1)
    colmask = col_ids >= cl
    ecol_valid = (col_ids < ne).astype(f32)                             # real e_col rows

    # ---- cond_col "extra" path, hoisted (computed once, used by one head) -
    wh_sel = jnp.dot(henc, wca_ref[...], preferred_element_type=f32) + bca_ref[...]
    att_sel = jax.lax.dot_general(chosen, wh_sel, (((1,), (1,)), ((), ())),
                                  preferred_element_type=f32)           # (1, X)
    att_sel = jnp.where(xmask, -100.0, att_sel)
    es = jnp.exp(att_sel - jnp.max(att_sel, axis=-1, keepdims=True))
    p_sel = es / jnp.sum(es, axis=-1, keepdims=True)
    k_sel = jnp.dot(p_sel, henc, preferred_element_type=f32)            # (1, H)
    extra_condcol = jnp.dot(k_sel, wcs_ref[...], preferred_element_type=f32)

    # ---- per-head chain (statically specialized, unrolled) ----------------
    blocks = []
    for h, cfg in enumerate(HEADS):
        from_cemb = cfg["src"] == 1
        cw = (cw_c if from_cemb else cw_e)[:, h * H:(h + 1) * H]        # (CR, H)
        cb = (cb_c if from_cemb else cb_e)[:, h:h + 1]                  # (CR, 1)
        ccon = (cc_c if from_cemb else cc_e)[:, h * H:(h + 1) * H]

        att = jax.lax.dot_general(cw, henc, (((1,), (1,)), ((), ())),
                                  preferred_element_type=f32) + cb      # (CR, X)
        mask = (xmask | colmask) if cfg["cmask"] else xmask
        att = jnp.where(mask, -100.0, att)

        if cfg["raw"]:
            att_use = att
        else:
            ea = jnp.exp(att - jnp.max(att, axis=-1, keepdims=True))
            att_use = ea / jnp.sum(ea, axis=-1, keepdims=True)

        K = jnp.dot(att_use, henc, preferred_element_type=f32)          # (CR, H)

        if cfg["summed"]:
            K = jnp.sum(K * ecol_valid, axis=0, keepdims=True)          # (1, H)
            z = jnp.dot(K, wk_ref[h], preferred_element_type=f32) + binner_ref[h]
        else:
            z = (jnp.dot(K, wk_ref[h], preferred_element_type=f32)
                 + ccon + binner_ref[h])
            if cfg["condcol"]:
                z = z + extra_condcol
        if cfg["wmid"] is not None:
            z = jnp.dot(z, wmid_ref[h], preferred_element_type=f32) + bmid_ref[h]
        z = jnp.maximum(z, 0.0) if cfg["relu"] else jnp.tanh(z)
        sc = jnp.dot(z, wout_ref[h], preferred_element_type=f32) + bout_ref[h]
        if cfg["summed"]:
            sc = jnp.concatenate([sc, jnp.zeros((CR - 1, NOUT_MAX), f32)], axis=0)
        blocks.append(sc)                                                # (CR, 8)

    if OUT_W > NHEADS * NOUT_MAX:
        blocks.append(jnp.zeros((CR, OUT_W - NHEADS * NOUT_MAX), f32))
    out_ref[0] = jnp.concatenate(blocks, axis=-1)                        # (CR, OUT_W)


def fused_heads(fp, h_enc, e_col_pad, col_emb_pad, chosen_cols,
                x_len, col_len, n_ecol):
    B, X, H = h_enc.shape
    CR = e_col_pad.shape[1]
    n_ecol_arr = jnp.full((1,), n_ecol, jnp.int32)

    grid_spec = pltpu.PrefetchScalarGridSpec(
        num_scalar_prefetch=3,
        grid=(B,),
        in_specs=[
            pl.BlockSpec((1, X, H),  lambda b, xl, cl, ne: (b, 0, 0)),   # h_enc
            pl.BlockSpec((1, CR, H), lambda b, xl, cl, ne: (b, 0, 0)),   # e_col (pad)
            pl.BlockSpec((1, CR, H), lambda b, xl, cl, ne: (b, 0, 0)),   # col_emb (pad)
            pl.BlockSpec((1, 1, H),  lambda b, xl, cl, ne: (b, 0, 0)),   # chosen col
            pl.BlockSpec((H, NHEADS * H), lambda b, xl, cl, ne: (0, 0)),  # watt (packed)
            pl.BlockSpec((H, NHEADS),     lambda b, xl, cl, ne: (0, 0)),  # batt (packed)
            pl.BlockSpec((H, NHEADS * H), lambda b, xl, cl, ne: (0, 0)),  # wcol (packed)
            pl.BlockSpec((NHEADS, H, H), lambda b, xl, cl, ne: (0, 0, 0)),        # wk
            pl.BlockSpec((NHEADS, 1, H), lambda b, xl, cl, ne: (0, 0, 0)),        # binner
            pl.BlockSpec((NHEADS, H, H), lambda b, xl, cl, ne: (0, 0, 0)),        # wmid
            pl.BlockSpec((NHEADS, 1, H), lambda b, xl, cl, ne: (0, 0, 0)),        # bmid
            pl.BlockSpec((NHEADS, H, NOUT_MAX), lambda b, xl, cl, ne: (0, 0, 0)),  # wout
            pl.BlockSpec((NHEADS, 1, NOUT_MAX), lambda b, xl, cl, ne: (0, 0, 0)),  # bout
            pl.BlockSpec((H, H), lambda b, xl, cl, ne: (0, 0)),          # col_att W^T
            pl.BlockSpec((1, H), lambda b, xl, cl, ne: (0, 0)),          # col_att b
            pl.BlockSpec((H, H), lambda b, xl, cl, ne: (0, 0)),          # cond_col_out_sel W^T
        ],
        out_specs=pl.BlockSpec((1, CR, OUT_W), lambda b, xl, cl, ne: (b, 0, 0)),
    )
    return pl.pallas_call(
        _fused_heads_kernel,
        grid_spec=grid_spec,
        out_shape=jax.ShapeDtypeStruct((B, CR, OUT_W), jnp.float32),
        compiler_params=pltpu.CompilerParams(dimension_semantics=("parallel",)),
    )(x_len, col_len, n_ecol_arr,
      h_enc, e_col_pad, col_emb_pad, chosen_cols,
      fp["watt_pk"], fp["batt_pk"], fp["wcol_pk"],
      fp["wk_t"], fp["binner"], fp["wmid_t"], fp["bmid"],
      fp["wout_t"], fp["bout"],
      fp["w_colatt_t"], fp["b_colatt"], fp["w_sel_t"])


# ----------------------------------------------------------------------------
# Bidirectional LSTM with packed-sequence semantics.  The sequential
# recurrence runs in a Pallas kernel (grid over time, "arbitrary"); the
# input-to-hidden projection is hoisted into one big matmul outside.
# ----------------------------------------------------------------------------
def _lstm_step_kernel(xp_ref, m_ref, whh_ref, y_ref, h_ref, c_ref):
    t = pl.program_id(0)

    @pl.when(t == 0)
    def _():
        h_ref[...] = jnp.zeros_like(h_ref)
        c_ref[...] = jnp.zeros_like(c_ref)

    xp = xp_ref[0]                       # (B, 8*Hd)  pre-projected inputs (both dirs)
    m = m_ref[0]                         # (B, 1)     1.0 where t < length
    h = h_ref[...]                       # (B, 2*Hd)  [fwd | bwd]
    c = c_ref[...]
    Hd = h.shape[1] // 2

    gates = xp + jnp.dot(h, whh_ref[...], preferred_element_type=jnp.float32)

    def cell(g, cc):
        i = _sigmoid(g[:, :Hd])
        f = _sigmoid(g[:, Hd:2 * Hd])
        gg = jnp.tanh(g[:, 2 * Hd:3 * Hd])
        o = _sigmoid(g[:, 3 * Hd:])
        cn = f * cc + i * gg
        return o * jnp.tanh(cn), cn

    hf, cf = cell(gates[:, :4 * Hd], c[:, :Hd])
    hb, cb = cell(gates[:, 4 * Hd:], c[:, Hd:])
    h_new = jnp.concatenate([hf, hb], axis=-1)
    c_new = jnp.concatenate([cf, cb], axis=-1)

    h_out = m * h_new                    # padded steps emit zeros (packed semantics)
    h_ref[...] = h_out + (1.0 - m) * h
    c_ref[...] = m * c_new + (1.0 - m) * c
    y_ref[0] = h_out


def _lstm_recurrence(x_proj_t, mask_t, whh_blk):
    T, B, G = x_proj_t.shape
    Hd2 = whh_blk.shape[0]
    return pl.pallas_call(
        _lstm_step_kernel,
        grid_spec=pltpu.PrefetchScalarGridSpec(
            num_scalar_prefetch=0,
            grid=(T,),
            in_specs=[pl.BlockSpec((1, B, G), lambda t: (t, 0, 0)),
                      pl.BlockSpec((1, B, 1), lambda t: (t, 0, 0)),
                      pl.BlockSpec((Hd2, G), lambda t: (0, 0))],
            out_specs=pl.BlockSpec((1, B, Hd2), lambda t: (t, 0, 0)),
            scratch_shapes=[pltpu.VMEM((B, Hd2), jnp.float32),
                            pltpu.VMEM((B, Hd2), jnp.float32)]),
        out_shape=jax.ShapeDtypeStruct((T, B, Hd2), jnp.float32),
        compiler_params=pltpu.CompilerParams(dimension_semantics=("arbitrary",)),
    )(x_proj_t, mask_t, whh_blk)


def _bilstm_layer(x, lens, layer):
    B, T, _ = x.shape
    Hd = N_H // 2
    t_idx = jnp.arange(T)
    valid = t_idx[None, :] < lens[:, None]                    # (B, T)
    mask = valid.astype(jnp.float32)
    rev_idx = jnp.where(valid, lens[:, None] - 1 - t_idx[None, :], t_idx[None, :])
    bar = jnp.arange(B)[:, None]
    x_rev = x[bar, rev_idx]

    # input-to-hidden projection for all timesteps & both directions at once
    x_cat = jnp.concatenate([x, x_rev], axis=-1)              # (B, T, 2*in)
    x_proj = x_cat @ layer["wih_blk"] + layer["b_all"]        # (B, T, 8*Hd)

    x_proj_t = jnp.swapaxes(x_proj, 0, 1)                     # (T, B, 8*Hd)
    mask_t = jnp.swapaxes(mask, 0, 1)[:, :, None]             # (T, B, 1)
    ys = _lstm_recurrence(x_proj_t, mask_t, layer["whh_blk"])  # (T, B, 2*Hd)

    out = jnp.swapaxes(ys, 0, 1)                              # (B, T, 2*Hd)
    out_f = out[..., :Hd]
    out_b = out[..., Hd:][bar, rev_idx]                       # un-reverse (involution)
    return jnp.concatenate([out_f, out_b], axis=-1)


def bilstm(layers_prep, x, lens):
    h = x
    for layer in layers_prep:   # dropout between layers is a no-op in eval mode
        h = _bilstm_layer(h, lens, layer)
    return h


# ----------------------------------------------------------------------------
# One-time parameter preparation (all transposes / concats / packing happen
# here, OUTSIDE the jitted forward).
# ----------------------------------------------------------------------------
def _prep_lstm(layers):
    Hd = N_H // 2
    prepped = []
    for layer in layers:
        Wih_f, Whh_f, bih_f, bhh_f = layer["fwd"]
        Wih_b, Whh_b, bih_b, bhh_b = layer["bwd"]
        Din = Wih_f.shape[1]
        wih_blk = jnp.zeros((2 * Din, 8 * Hd), jnp.float32)
        wih_blk = wih_blk.at[:Din, :4 * Hd].set(Wih_f.T)
        wih_blk = wih_blk.at[Din:, 4 * Hd:].set(Wih_b.T)
        whh_blk = jnp.zeros((2 * Hd, 8 * Hd), jnp.float32)
        whh_blk = whh_blk.at[:Hd, :4 * Hd].set(Whh_f.T)
        whh_blk = whh_blk.at[Hd:, 4 * Hd:].set(Whh_b.T)
        b_all = jnp.concatenate([bih_f + bhh_f, bih_b + bhh_b])
        prepped.append({"wih_blk": wih_blk, "whh_blk": whh_blk, "b_all": b_all})
    return prepped


def _prep_fused(params):
    H = N_H
    zHH = jnp.zeros((H, H), jnp.float32)
    z1H = jnp.zeros((1, H), jnp.float32)

    watt_c, batt_c, wcol_c = [], [], []
    wk, binner, wmid, bmid, wout, bout = [], [], [], [], [], []

    for cfg in HEADS:
        Wa, ba = params[cfg["att"]]
        watt_c.append(Wa)                          # cols @ W_a  (no transpose)
        batt_c.append(ba.reshape(H, 1))

        Wk, bk = params[cfg["wk"]]
        wk.append(Wk.T)
        wcol_c.append(params[cfg["wcol"]][0].T if cfg["wcol"] is not None else zHH)

        if cfg["name"] == "cond_col":
            b_in = (params["cond_col_out_K"][1] + params["cond_col_out_col"][1]
                    + params["cond_col_out_sel"][1]).reshape(1, H)
        elif cfg["wcol"] is not None:
            b_in = (bk + params[cfg["wcol"]][1]).reshape(1, H)
        else:
            b_in = bk.reshape(1, H)
        binner.append(b_in)

        if cfg["wmid"] is not None:
            Wm, bm = params[cfg["wmid"]]
            wmid.append(Wm.T)
            bmid.append(bm.reshape(1, H))
        else:                                       # never read (statically skipped)
            wmid.append(jnp.eye(H, dtype=jnp.float32))
            bmid.append(z1H)

        Wo, bo = params[cfg["wout"]]
        n = Wo.shape[0]
        wout.append(jnp.zeros((H, NOUT_MAX), jnp.float32).at[:, :n].set(Wo.T))
        bout.append(jnp.zeros((1, NOUT_MAX), jnp.float32).at[0, :n].set(bo))

    Wca, bca = params["col_att"]
    Wcs, _ = params["cond_col_out_sel"]
    return {
        "watt_pk": jnp.concatenate(watt_c, axis=1),     # (H, 12H)
        "batt_pk": jnp.concatenate(batt_c, axis=1),     # (H, 12)
        "wcol_pk": jnp.concatenate(wcol_c, axis=1),     # (H, 12H)
        "wk_t": jnp.stack(wk), "binner": jnp.stack(binner),
        "wmid_t": jnp.stack(wmid), "bmid": jnp.stack(bmid),
        "wout_t": jnp.stack(wout), "bout": jnp.stack(bout),
        "w_colatt_t": Wca.T, "b_colatt": bca.reshape(1, H), "w_sel_t": Wcs.T,
    }


def prepare_params(params):
    return {
        "lstm_q": _prep_lstm(params["selcond_lstm"]),
        "lstm_col": _prep_lstm(params["selcond_name_enc"]),
        "fused": _prep_fused(params),
    }


# ----------------------------------------------------------------------------
# Deterministic parameter initialization (shapes from the module's __init__)
# ----------------------------------------------------------------------------
def init_params(key):
    H, Hd = N_H, N_H // 2
    keys = iter(jax.random.split(key, 256))

    def u(shape, bound):
        return jax.random.uniform(next(keys), shape, jnp.float32, -bound, bound)

    def linear_p(out_dim, in_dim):
        bound = 1.0 / (in_dim ** 0.5)
        return (u((out_dim, in_dim), bound), u((out_dim,), bound))

    def lstm_p():
        bound = 1.0 / (Hd ** 0.5)
        layers = []
        for layer in range(N_DEPTH):
            in_dim = N_WORD if layer == 0 else H
            layers.append({
                d: (u((4 * Hd, in_dim), bound), u((4 * Hd, Hd), bound),
                    u((4 * Hd,), bound), u((4 * Hd,), bound))
                for d in ("fwd", "bwd")
            })
        return layers

    params = {"selcond_lstm": lstm_p(), "selcond_name_enc": lstm_p()}

    specs = {
        "sel_num_h": (H, H), "sel_num_l": (H, H), "sel_num_out_1": (4, H),
        "sel_att": (H, H), "sel_out_K": (H, H), "sel_out_col": (H, H), "sel_out_1": (1, H),
        "num_type_att": (H, H), "ty_num_out": (H, H), "cond_num_out_1": (5, H),
        "agg_num_att": (H, H), "agg_num_out_K": (H, H), "agg_num_out_col": (H, H),
        "agg_num_out_0": (H, H), "agg_num_out_2": (4, H),
        "agg_op_att": (H, H), "agg_op_out_K": (H, H), "agg_op_out_col": (H, H),
        "agg_op_out_0": (H, H), "agg_op_out_2": (6, H),
        "gby_num_h": (H, H), "gby_num_l": (H, H), "gby_num_out_1": (3, H),
        "gby_att": (H, H), "gby_out_K": (H, H), "gby_out_col": (H, H), "gby_out_1": (1, H),
        "ody_num_h": (H, H), "ody_num_l": (H, H), "ody_num_out_1": (2, H),
        "ody_att": (H, H), "ody_out_K": (H, H), "ody_out_col": (H, H), "ody_out_1": (1, H),
        "ody_agg_att": (H, H), "ody_agg_out_K": (H, H), "ody_agg_out_col": (H, H),
        "ody_agg_out_0": (H, H), "ody_agg_out_2": (6, H),
        "ody_par_h": (H, H), "ody_par_l": (H, H), "ody_par_out_1": (3, H),
        "cond_col_att": (H, H), "cond_col_out_K": (H, H), "cond_col_out_col": (H, H),
        "cond_col_out_sel": (H, H), "col_att": (H, H), "cond_col_out_1": (1, H),
    }
    for name, (o, i) in specs.items():
        params[name] = linear_p(o, i)
    return params


# ----------------------------------------------------------------------------
# Forward pass (12 score outputs, same semantics/shapes as the PyTorch module)
# ----------------------------------------------------------------------------
def forward(prep, x_emb, x_len, col_inp, col_len, col_idx, chosen_idx):
    B, X, _ = x_emb.shape
    C = col_inp.shape[1]                       # == max_col_len of the reference
    CR = ((max(C, 4) + 7) // 8) * 8            # padded column rows (sublane mult)

    e_col = bilstm(prep["lstm_col"], col_inp, col_len)     # (B, C, N_h)
    h_enc = bilstm(prep["lstm_q"], x_emb, x_len)           # (B, X, N_h)

    bar = jnp.arange(B)
    col_emb = e_col[bar[:, None], col_idx]                 # (B, 4, N_h)
    chosen_cols = e_col[bar, chosen_idx][:, None, :]       # (B, 1, N_h)

    def pad_rows(t, rows):
        n = t.shape[1]
        if n < rows:
            t = jnp.concatenate(
                [t, jnp.zeros((B, rows - n, N_H), t.dtype)], axis=1)
        return t

    e_col_pad = pad_rows(e_col, CR)
    col_emb_pad = pad_rows(col_emb, CR)

    scores = fused_heads(prep["fused"], h_enc, e_col_pad, col_emb_pad,
                         chosen_cols, x_len, col_len, C)   # (B, CR, OUT_W)

    def head_slice(name, rows, nout):
        base = HEAD_IDX[name] * NOUT_MAX
        return scores[:, :rows, base:base + nout]

    cmask = jnp.arange(C)[None, :] >= col_len[:, None]

    sel_num_score  = head_slice("sel_num", 1, 4)[:, 0]
    gby_num_score  = head_slice("gby_num", 1, 3)[:, 0]
    ody_num_score  = head_slice("ody_num", 1, 2)[:, 0]
    ody_par_score  = head_slice("ody_par", 1, 3)[:, 0]
    cond_num_score = head_slice("cond_num", 1, 5)[:, 0]

    sel_score      = jnp.where(cmask, -100.0, head_slice("sel", C, 1)[:, :, 0])
    gby_score      = head_slice("gby", C, 1)[:, :, 0]
    ody_score      = head_slice("ody", C, 1)[:, :, 0]
    cond_col_score = jnp.where(cmask, -100.0, head_slice("cond_col", C, 1)[:, :, 0])

    agg_num_score  = head_slice("agg_num", 4, 4)
    agg_op_score   = head_slice("agg_op", 4, 6)
    ody_agg_score  = head_slice("ody_agg", 4, 6)

    return (sel_num_score, cond_num_score, sel_score, cond_col_score,
            agg_num_score, agg_op_score, gby_num_score, gby_score,
            ody_num_score, ody_score, ody_agg_score, ody_par_score)


if __name__ == "__main__":
    key = jax.random.PRNGKey(0)
    k_p, k_x, k_c = jax.random.split(key, 3)
    params = init_params(k_p)
    prep = prepare_params(params)   # one-time weight packing (outside jit)

    B, X, C = 2, 8, 5
    x_len = [8, 5]
    col_len = [5, 3]
    gt_sel = [[1, 2], [0, 0, 2]]

    x_emb = jax.random.normal(k_x, (B, X, N_WORD), jnp.float32)
    col_inp = jax.random.normal(k_c, (B, C, N_WORD), jnp.float32)

    # host-side gt_sel handling (identical to the PyTorch python loops)
    chosen_sel_gt = []
    for x in gt_sel:
        curr = x[0]
        curr_sel = [curr]
        for col in x:
            if col != curr:
                curr_sel.append(col)
        chosen_sel_gt.append(curr_sel)
    col_idx = jnp.asarray([cs + [0] * (4 - len(cs)) for cs in chosen_sel_gt], jnp.int32)
    chosen_idx = jnp.asarray([x[0] for x in gt_sel], jnp.int32)

    fwd = jax.jit(forward)
    scores = fwd(prep, x_emb, jnp.asarray(x_len, jnp.int32),
                 col_inp, jnp.asarray(col_len, jnp.int32), col_idx, chosen_idx)
    jax.block_until_ready(scores)
    assert scores[0].shape == (B, 4) and scores[4].shape == (B, 4, 4)
    print("KERNEL_OK")
</pallas_src>

<mosaic_0001>
module attributes {stable_mosaic.version = 11 : i64} {
  func.func @_lstm_step_kernel(%arg0: i32, %arg1: memref<1x2x128xf32, #tpu.memory_space<vmem>>, %arg2: memref<1x2x1xf32, #tpu.memory_space<vmem>>, %arg3: memref<32x128xf32, #tpu.memory_space<vmem>>, %arg4: memref<1x2x32xf32, #tpu.memory_space<vmem>>, %arg5: memref<2x32xf32, #tpu.memory_space<vmem>>, %arg6: memref<2x32xf32, #tpu.memory_space<vmem>>) attributes {dimension_semantics = [#tpu.dimension_semantics<arbitrary>], iteration_bounds = array<i64: 5>, scalar_prefetch = 0 : i64, scratch_operands = 2 : i64, tpu.core_type = #tpu.core_type<tc>, window_params = [{transform_indices = @transform_0, window_bounds = array<i64: 1, 2, 128>}, {transform_indices = @transform_1, window_bounds = array<i64: 1, 2, 1>}, {pipeline_mode = #tpu.pipeline_mode<synchronous>, transform_indices = @transform_2, window_bounds = array<i64: 32, 128>}, {transform_indices = @transform_3, window_bounds = array<i64: 1, 2, 32>}]} {
    %c0_i32 = arith.constant 0 : i32
    %0 = arith.cmpi eq, %arg0, %c0_i32 : i32
    %1 = arith.extui %0 : i1 to i32
    %c0_i32_0 = arith.constant 0 : i32
    %2 = arith.cmpi ne, %1, %c0_i32_0 : i32
    scf.if %2 {
      %cst_39 = arith.constant 0.000000e+00 : f32
      %99 = vector.broadcast %cst_39 : f32 to vector<2x32xf32>
      %c0_40 = arith.constant 0 : index
      %c0_41 = arith.constant 0 : index
      %100 = vector.load %arg5[%c0_40, %c0_41] : memref<2x32xf32, #tpu.memory_space<vmem>>, vector<2x32xf32>
      tpu.vector_store %arg5[%c0_40, %c0_41], %99 {strides = array<i32>} : memref<2x32xf32, #tpu.memory_space<vmem>>, vector<2x32xf32>,
      %cst_42 = arith.constant 0.000000e+00 : f32
      %101 = vector.broadcast %cst_42 : f32 to vector<2x32xf32>
      %c0_43 = arith.constant 0 : index
      %c0_44 = arith.constant 0 : index
      %102 = vector.load %arg6[%c0_43, %c0_44] : memref<2x32xf32, #tpu.memory_space<vmem>>, vector<2x32xf32>
      tpu.vector_store %arg6[%c0_43, %c0_44], %101 {strides = array<i32>} : memref<2x32xf32, #tpu.memory_space<vmem>>, vector<2x32xf32>,
    } else {
    }
    %c0 = arith.constant 0 : index
    %c0_1 = arith.constant 0 : index
    %c0_2 = arith.constant 0 : index
    %3 = vector.load %arg1[%c0, %c0_1, %c0_2] : memref<1x2x128xf32, #tpu.memory_space<vmem>>, vector<1x2x128xf32>
    %4 = vector.shape_cast %3 : vector<1x2x128xf32> to vector<2x128xf32>
    %c0_3 = arith.constant 0 : index
    %c0_4 = arith.constant 0 : index
    %c0_5 = arith.constant 0 : index
    %5 = vector.load %arg2[%c0_3, %c0_4, %c0_5] : memref<1x2x1xf32, #tpu.memory_space<vmem>>, vector<1x2x1xf32>
    %6 = vector.shape_cast %5 : vector<1x2x1xf32> to vector<2x1xf32>
    %c0_6 = arith.constant 0 : index
    %c0_7 = arith.constant 0 : index
    %7 = vector.load %arg5[%c0_6, %c0_7] : memref<2x32xf32, #tpu.memory_space<vmem>>, vector<2x32xf32>
    %c0_8 = arith.constant 0 : index
    %c0_9 = arith.constant 0 : index
    %8 = vector.load %arg6[%c0_8, %c0_9] : memref<2x32xf32, #tpu.memory_space<vmem>>, vector<2x32xf32>
    %c0_10 = arith.constant 0 : index
    %c0_11 = arith.constant 0 : index
    %9 = vector.load %arg3[%c0_10, %c0_11] : memref<32x128xf32, #tpu.memory_space<vmem>>, vector<32x128xf32>
    %cst = arith.constant dense<0.000000e+00> : vector<2x128xf32>
    %10 = tpu.matmul %7, %9, %cst {dimension_numbers = #tpu.dot_dimension_numbers<[1], [0], [0], [1], [0, 0, 1, 1], [], []>} : vector<2x32xf32>, vector<32x128xf32>, vector<2x128xf32> -> vector<2x128xf32>
    %11 = arith.addf %4, %10 : vector<2x128xf32>
    %12 = vector.extract_strided_slice %11 {offsets = [0, 0], sizes = [2, 64], strides = [1, 1]} : vector<2x128xf32> to vector<2x64xf32>
    %13 = vector.extract_strided_slice %8 {offsets = [0, 0], sizes = [2, 16], strides = [1, 1]} : vector<2x32xf32> to vector<2x16xf32>
    %14 = vector.extract_strided_slice %12 {offsets = [0, 0], sizes = [2, 16], strides = [1, 1]} : vector<2x64xf32> to vector<2x16xf32>
    %cst_12 = arith.constant 0.000000e+00 : f32
    %15 = vector.broadcast %cst_12 : f32 to vector<2x16xf32>
    %16 = arith.subf %15, %14 : vector<2x16xf32>
    %17 = math.exp %16 : vector<2x16xf32>
    %cst_13 = arith.constant 1.000000e+00 : f32
    %18 = vector.broadcast %cst_13 : f32 to vector<2x16xf32>
    %19 = arith.addf %18, %17 : vector<2x16xf32>
    %cst_14 = arith.constant 1.000000e+00 : f32
    %20 = vector.broadcast %cst_14 : f32 to vector<2x16xf32>
    %21 = arith.divf %20, %19 : vector<2x16xf32>
    %22 = vector.extract_strided_slice %12 {offsets = [0, 16], sizes = [2, 16], strides = [1, 1]} : vector<2x64xf32> to vector<2x16xf32>
    %cst_15 = arith.constant 0.000000e+00 : f32
    %23 = vector.broadcast %cst_15 : f32 to vector<2x16xf32>
    %24 = arith.subf %23, %22 : vector<2x16xf32>
    %25 = math.exp %24 : vector<2x16xf32>
    %cst_16 = arith.constant 1.000000e+00 : f32
    %26 = vector.broadcast %cst_16 : f32 to vector<2x16xf32>
    %27 = arith.addf %26, %25 : vector<2x16xf32>
    %cst_17 = arith.constant 1.000000e+00 : f32
    %28 = vector.broadcast %cst_17 : f32 to vector<2x16xf32>
    %29 = arith.divf %28, %27 : vector<2x16xf32>
    %30 = vector.extract_strided_slice %12 {offsets = [0, 32], sizes = [2, 16], strides = [1, 1]} : vector<2x64xf32> to vector<2x16xf32>
    %31 = math.tanh %30 : vector<2x16xf32>
    %32 = vector.extract_strided_slice %12 {offsets = [0, 48], sizes = [2, 16], strides = [1, 1]} : vector<2x64xf32> to vector<2x16xf32>
    %cst_18 = arith.constant 0.000000e+00 : f32
    %33 = vector.broadcast %cst_18 : f32 to vector<2x16xf32>
    %34 = arith.subf %33, %32 : vector<2x16xf32>
    %35 = math.exp %34 : vector<2x16xf32>
    %cst_19 = arith.constant 1.000000e+00 : f32
    %36 = vector.broadcast %cst_19 : f32 to vector<2x16xf32>
    %37 = arith.addf %36, %35 : vector<2x16xf32>
    %cst_20 = arith.constant 1.000000e+00 : f32
    %38 = vector.broadcast %cst_20 : f32 to vector<2x16xf32>
    %39 = arith.divf %38, %37 : vector<2x16xf32>
    %40 = arith.mulf %29, %13 : vector<2x16xf32>
    %41 = arith.mulf %21, %31 : vector<2x16xf32>
    %42 = arith.addf %40, %41 : vector<2x16xf32>
    %43 = math.tanh %42 : vector<2x16xf32>
    %44 = arith.mulf %39, %43 : vector<2x16xf32>
    %45 = vector.extract_strided_slice %11 {offsets = [0, 64], sizes = [2, 64], strides = [1, 1]} : vector<2x128xf32> to vector<2x64xf32>
    %46 = vector.extract_strided_slice %8 {offsets = [0, 16], sizes = [2, 16], strides = [1, 1]} : vector<2x32xf32> to vector<2x16xf32>
    %47 = vector.extract_strided_slice %45 {offsets = [0, 0], sizes = [2, 16], strides = [1, 1]} : vector<2x64xf32> to vector<2x16xf32>
    %cst_21 = arith.constant 0.000000e+00 : f32
    %48 = vector.broadcast %cst_21 : f32 to vector<2x16xf32>
    %49 = arith.subf %48, %47 : vector<2x16xf32>
    %50 = math.exp %49 : vector<2x16xf32>
    %cst_22 = arith.constant 1.000000e+00 : f32
    %51 = vector.broadcast %cst_22 : f32 to vector<2x16xf32>
    %52 = arith.addf %51, %50 : vector<2x16xf32>
    %cst_23 = arith.constant 1.000000e+00 : f32
    %53 = vector.broadcast %cst_23 : f32 to vector<2x16xf32>
    %54 = arith.divf %53, %52 : vector<2x16xf32>
    %55 = vector.extract_strided_slice %45 {offsets = [0, 16], sizes = [2, 16], strides = [1, 1]} : vector<2x64xf32> to vector<2x16xf32>
    %cst_24 = arith.constant 0.000000e+00 : f32
    %56 = vector.broadcast %cst_24 : f32 to vector<2x16xf32>
    %57 = arith.subf %56, %55 : vector<2x16xf32>
    %58 = math.exp %57 : vector<2x16xf32>
    %cst_25 = arith.constant 1.000000e+00 : f32
    %59 = vector.broadcast %cst_25 : f32 to vector<2x16xf32>
    %60 = arith.addf %59, %58 : vector<2x16xf32>
    %cst_26 = arith.constant 1.000000e+00 : f32
    %61 = vector.broadcast %cst_26 : f32 to vector<2x16xf32>
    %62 = arith.divf %61, %60 : vector<2x16xf32>
    %63 = vector.extract_strided_slice %45 {offsets = [0, 32], sizes = [2, 16], strides = [1, 1]} : vector<2x64xf32> to vector<2x16xf32>
    %64 = math.tanh %63 : vector<2x16xf32>
    %65 = vector.extract_strided_slice %45 {offsets = [0, 48], sizes = [2, 16], strides = [1, 1]} : vector<2x64xf32> to vector<2x16xf32>
    %cst_27 = arith.constant 0.000000e+00 : f32
    %66 = vector.broadcast %cst_27 : f32 to vector<2x16xf32>
    %67 = arith.subf %66, %65 : vector<2x16xf32>
    %68 = math.exp %67 : vector<2x16xf32>
    %cst_28 = arith.constant 1.000000e+00 : f32
    %69 = vector.broadcast %cst_28 : f32 to vector<2x16xf32>
    %70 = arith.addf %69, %68 : vector<2x16xf32>
    %cst_29 = arith.constant 1.000000e+00 : f32
    %71 = vector.broadcast %cst_29 : f32 to vector<2x16xf32>
    %72 = arith.divf %71, %70 : vector<2x16xf32>
    %73 = arith.mulf %62, %46 : vector<2x16xf32>
    %74 = arith.mulf %54, %64 : vector<2x16xf32>
    %75 = arith.addf %73, %74 : vector<2x16xf32>
    %76 = math.tanh %75 : vector<2x16xf32>
    %77 = arith.mulf %72, %76 : vector<2x16xf32>
    %78 = tpu.concatenate %44, %77 in 1 : vector<2x16xf32>, vector<2x16xf32> -> vector<2x32xf32>
    %79 = tpu.concatenate %42, %75 in 1 : vector<2x16xf32>, vector<2x16xf32> -> vector<2x32xf32>
    %80 = vector.broadcast %6 : vector<2x1xf32> to vector<2x32xf32>
    %81 = arith.mulf %80, %78 : vector<2x32xf32>
    %cst_30 = arith.constant 1.000000e+00 : f32
    %82 = vector.broadcast %cst_30 : f32 to vector<2x1xf32>
    %83 = arith.subf %82, %6 : vector<2x1xf32>
    %84 = vector.broadcast %83 : vector<2x1xf32> to vector<2x32xf32>
    %85 = arith.mulf %84, %7 : vector<2x32xf32>
    %86 = arith.addf %81, %85 : vector<2x32xf32>
    %c0_31 = arith.constant 0 : index
    %c0_32 = arith.constant 0 : index
    %87 = vector.load %arg5[%c0_31, %c0_32] : memref<2x32xf32, #tpu.memory_space<vmem>>, vector<2x32xf32>
    tpu.vector_store %arg5[%c0_31, %c0_32], %86 {strides = array<i32>} : memref<2x32xf32, #tpu.memory_space<vmem>>, vector<2x32xf32>,
    %88 = vector.broadcast %6 : vector<2x1xf32> to vector<2x32xf32>
    %89 = arith.mulf %88, %79 : vector<2x32xf32>
    %cst_33 = arith.constant 1.000000e+00 : f32
    %90 = vector.broadcast %cst_33 : f32 to vector<2x1xf32>
    %91 = arith.subf %90, %6 : vector<2x1xf32>
    %92 = vector.broadcast %91 : vector<2x1xf32> to vector<2x32xf32>
    %93 = arith.mulf %92, %8 : vector<2x32xf32>
    %94 = arith.addf %89, %93 : vector<2x32xf32>
    %c0_34 = arith.constant 0 : index
    %c0_35 = arith.constant 0 : index
    %95 = vector.load %arg6[%c0_34, %c0_35] : memref<2x32xf32, #tpu.memory_space<vmem>>, vector<2x32xf32>
    tpu.vector_store %arg6[%c0_34, %c0_35], %94 {strides = array<i32>} : memref<2x32xf32, #tpu.memory_space<vmem>>, vector<2x32xf32>,
    %c0_36 = arith.constant 0 : index
    %c0_37 = arith.constant 0 : index
    %c0_38 = arith.constant 0 : index
    %96 = vector.load %arg4[%c0_36, %c0_37, %c0_38] : memref<1x2x32xf32, #tpu.memory_space<vmem>>, vector<1x2x32xf32>
    %97 = vector.shape_cast %96 : vector<1x2x32xf32> to vector<2x32xf32>
    %98 = vector.shape_cast %81 : vector<2x32xf32> to vector<1x2x32xf32>
    tpu.vector_store %arg4[%c0_36, %c0_37, %c0_38], %98 {strides = array<i32>} : memref<1x2x32xf32, #tpu.memory_space<vmem>>, vector<1x2x32xf32>,
    return
  }
  func.func @transform_0(%arg0: i32) -> (i32, i32, i32) {
    %c0_i32 = arith.constant 0 : i32
    %c0_i32_0 = arith.constant 0 : i32
    %c0_i32_1 = arith.constant 0 : i32
    return %arg0, %c0_i32, %c0_i32_0 : i32, i32, i32
  }
  func.func @transform_1(%arg0: i32) -> (i32, i32, i32) {
    %c0_i32 = arith.constant 0 : i32
    %c0_i32_0 = arith.constant 0 : i32
    %c0_i32_1 = arith.constant 0 : i32
    return %arg0, %c0_i32, %c0_i32_0 : i32, i32, i32
  }
  func.func @transform_2(%arg0: i32) -> (i32, i32) {
    %c0_i32 = arith.constant 0 : i32
    %c0_i32_0 = arith.constant 0 : i32
    %c0_i32_1 = arith.constant 0 : i32
    return %c0_i32, %c0_i32_0 : i32, i32
  }
  func.func @transform_3(%arg0: i32) -> (i32, i32, i32) {
    %c0_i32 = arith.constant 0 : i32
    %c0_i32_0 = arith.constant 0 : i32
    %c0_i32_1 = arith.constant 0 : i32
    return %arg0, %c0_i32, %c0_i32_0 : i32, i32, i32
  }
}

module attributes {stable_mosaic.version = 11 : i64} {
  func.func @_lstm_step_kernel(%arg0: i32, %arg1: memref<1x2x128xf32, #tpu.memory_space<vmem>>, %arg2: memref<1x2x1xf32, #tpu.memory_space<vmem>>, %arg3: memref<32x128xf32, #tpu.memory_space<vmem>>, %arg4: memref<1x2x32xf32, #tpu.memory_space<vmem>>, %arg5: memref<2x32xf32, #tpu.memory_space<vmem>>, %arg6: memref<2x32xf32, #tpu.memory_space<vmem>>) attributes {dimension_semantics = [#tpu.dimension_semantics<arbitrary>], iteration_bounds = array<i64: 8>, scalar_prefetch = 0 : i64, scratch_operands = 2 : i64, tpu.core_type = #tpu.core_type<tc>, window_params = [{transform_indices = @transform_0, window_bounds = array<i64: 1, 2, 128>}, {transform_indices = @transform_1, window_bounds = array<i64: 1, 2, 1>}, {pipeline_mode = #tpu.pipeline_mode<synchronous>, transform_indices = @transform_2, window_bounds = array<i64: 32, 128>}, {transform_indices = @transform_3, window_bounds = array<i64: 1, 2, 32>}]} {
    %c0_i32 = arith.constant 0 : i32
    %0 = arith.cmpi eq, %arg0, %c0_i32 : i32
    %1 = arith.extui %0 : i1 to i32
    %c0_i32_0 = arith.constant 0 : i32
    %2 = arith.cmpi ne, %1, %c0_i32_0 : i32
    scf.if %2 {
      %cst_39 = arith.constant 0.000000e+00 : f32
      %99 = vector.broadcast %cst_39 : f32 to vector<2x32xf32>
      %c0_40 = arith.constant 0 : index
      %c0_41 = arith.constant 0 : index
      %100 = vector.load %arg5[%c0_40, %c0_41] : memref<2x32xf32, #tpu.memory_space<vmem>>, vector<2x32xf32>
      tpu.vector_store %arg5[%c0_40, %c0_41], %99 {strides = array<i32>} : memref<2x32xf32, #tpu.memory_space<vmem>>, vector<2x32xf32>,
      %cst_42 = arith.constant 0.000000e+00 : f32
      %101 = vector.broadcast %cst_42 : f32 to vector<2x32xf32>
      %c0_43 = arith.constant 0 : index
      %c0_44 = arith.constant 0 : index
      %102 = vector.load %arg6[%c0_43, %c0_44] : memref<2x32xf32, #tpu.memory_space<vmem>>, vector<2x32xf32>
      tpu.vector_store %arg6[%c0_43, %c0_44], %101 {strides = array<i32>} : memref<2x32xf32, #tpu.memory_space<vmem>>, vector<2x32xf32>,
    } else {
    }
    %c0 = arith.constant 0 : index
    %c0_1 = arith.constant 0 : index
    %c0_2 = arith.constant 0 : index
    %3 = vector.load %arg1[%c0, %c0_1, %c0_2] : memref<1x2x128xf32, #tpu.memory_space<vmem>>, vector<1x2x128xf32>
    %4 = vector.shape_cast %3 : vector<1x2x128xf32> to vector<2x128xf32>
    %c0_3 = arith.constant 0 : index
    %c0_4 = arith.constant 0 : index
    %c0_5 = arith.constant 0 : index
    %5 = vector.load %arg2[%c0_3, %c0_4, %c0_5] : memref<1x2x1xf32, #tpu.memory_space<vmem>>, vector<1x2x1xf32>
    %6 = vector.shape_cast %5 : vector<1x2x1xf32> to vector<2x1xf32>
    %c0_6 = arith.constant 0 : index
    %c0_7 = arith.constant 0 : index
    %7 = vector.load %arg5[%c0_6, %c0_7] : memref<2x32xf32, #tpu.memory_space<vmem>>, vector<2x32xf32>
    %c0_8 = arith.constant 0 : index
    %c0_9 = arith.constant 0 : index
    %8 = vector.load %arg6[%c0_8, %c0_9] : memref<2x32xf32, #tpu.memory_space<vmem>>, vector<2x32xf32>
    %c0_10 = arith.constant 0 : index
    %c0_11 = arith.constant 0 : index
    %9 = vector.load %arg3[%c0_10, %c0_11] : memref<32x128xf32, #tpu.memory_space<vmem>>, vector<32x128xf32>
    %cst = arith.constant dense<0.000000e+00> : vector<2x128xf32>
    %10 = tpu.matmul %7, %9, %cst {dimension_numbers = #tpu.dot_dimension_numbers<[1], [0], [0], [1], [0, 0, 1, 1], [], []>} : vector<2x32xf32>, vector<32x128xf32>, vector<2x128xf32> -> vector<2x128xf32>
    %11 = arith.addf %4, %10 : vector<2x128xf32>
    %12 = vector.extract_strided_slice %11 {offsets = [0, 0], sizes = [2, 64], strides = [1, 1]} : vector<2x128xf32> to vector<2x64xf32>
    %13 = vector.extract_strided_slice %8 {offsets = [0, 0], sizes = [2, 16], strides = [1, 1]} : vector<2x32xf32> to vector<2x16xf32>
    %14 = vector.extract_strided_slice %12 {offsets = [0, 0], sizes = [2, 16], strides = [1, 1]} : vector<2x64xf32> to vector<2x16xf32>
    %cst_12 = arith.constant 0.000000e+00 : f32
    %15 = vector.broadcast %cst_12 : f32 to vector<2x16xf32>
    %16 = arith.subf %15, %14 : vector<2x16xf32>
    %17 = math.exp %16 : vector<2x16xf32>
    %cst_13 = arith.constant 1.000000e+00 : f32
    %18 = vector.broadcast %cst_13 : f32 to vector<2x16xf32>
    %19 = arith.addf %18, %17 : vector<2x16xf32>
    %cst_14 = arith.constant 1.000000e+00 : f32
    %20 = vector.broadcast %cst_14 : f32 to vector<2x16xf32>
    %21 = arith.divf %20, %19 : vector<2x16xf32>
    %22 = vector.extract_strided_slice %12 {offsets = [0, 16], sizes = [2, 16], strides = [1, 1]} : vector<2x64xf32> to vector<2x16xf32>
    %cst_15 = arith.constant 0.000000e+00 : f32
    %23 = vector.broadcast %cst_15 : f32 to vector<2x16xf32>
    %24 = arith.subf %23, %22 : vector<2x16xf32>
    %25 = math.exp %24 : vector<2x16xf32>
    %cst_16 = arith.constant 1.000000e+00 : f32
    %26 = vector.broadcast %cst_16 : f32 to vector<2x16xf32>
    %27 = arith.addf %26, %25 : vector<2x16xf32>
    %cst_17 = arith.constant 1.000000e+00 : f32
    %28 = vector.broadcast %cst_17 : f32 to vector<2x16xf32>
    %29 = arith.divf %28, %27 : vector<2x16xf32>
    %30 = vector.extract_strided_slice %12 {offsets = [0, 32], sizes = [2, 16], strides = [1, 1]} : vector<2x64xf32> to vector<2x16xf32>
    %31 = math.tanh %30 : vector<2x16xf32>
    %32 = vector.extract_strided_slice %12 {offsets = [0, 48], sizes = [2, 16], strides = [1, 1]} : vector<2x64xf32> to vector<2x16xf32>
    %cst_18 = arith.constant 0.000000e+00 : f32
    %33 = vector.broadcast %cst_18 : f32 to vector<2x16xf32>
    %34 = arith.subf %33, %32 : vector<2x16xf32>
    %35 = math.exp %34 : vector<2x16xf32>
    %cst_19 = arith.constant 1.000000e+00 : f32
    %36 = vector.broadcast %cst_19 : f32 to vector<2x16xf32>
    %37 = arith.addf %36, %35 : vector<2x16xf32>
    %cst_20 = arith.constant 1.000000e+00 : f32
    %38 = vector.broadcast %cst_20 : f32 to vector<2x16xf32>
    %39 = arith.divf %38, %37 : vector<2x16xf32>
    %40 = arith.mulf %29, %13 : vector<2x16xf32>
    %41 = arith.mulf %21, %31 : vector<2x16xf32>
    %42 = arith.addf %40, %41 : vector<2x16xf32>
    %43 = math.tanh %42 : vector<2x16xf32>
    %44 = arith.mulf %39, %43 : vector<2x16xf32>
    %45 = vector.extract_strided_slice %11 {offsets = [0, 64], sizes = [2, 64], strides = [1, 1]} : vector<2x128xf32> to vector<2x64xf32>
    %46 = vector.extract_strided_slice %8 {offsets = [0, 16], sizes = [2, 16], strides = [1, 1]} : vector<2x32xf32> to vector<2x16xf32>
    %47 = vector.extract_strided_slice %45 {offsets = [0, 0], sizes = [2, 16], strides = [1, 1]} : vector<2x64xf32> to vector<2x16xf32>
    %cst_21 = arith.constant 0.000000e+00 : f32
    %48 = vector.broadcast %cst_21 : f32 to vector<2x16xf32>
    %49 = arith.subf %48, %47 : vector<2x16xf32>
    %50 = math.exp %49 : vector<2x16xf32>
    %cst_22 = arith.constant 1.000000e+00 : f32
    %51 = vector.broadcast %cst_22 : f32 to vector<2x16xf32>
    %52 = arith.addf %51, %50 : vector<2x16xf32>
    %cst_23 = arith.constant 1.000000e+00 : f32
    %53 = vector.broadcast %cst_23 : f32 to vector<2x16xf32>
    %54 = arith.divf %53, %52 : vector<2x16xf32>
    %55 = vector.extract_strided_slice %45 {offsets = [0, 16], sizes = [2, 16], strides = [1, 1]} : vector<2x64xf32> to vector<2x16xf32>
    %cst_24 = arith.constant 0.000000e+00 : f32
    %56 = vector.broadcast %cst_24 : f32 to vector<2x16xf32>
    %57 = arith.subf %56, %55 : vector<2x16xf32>
    %58 = math.exp %57 : vector<2x16xf32>
    %cst_25 = arith.constant 1.000000e+00 : f32
    %59 = vector.broadcast %cst_25 : f32 to vector<2x16xf32>
    %60 = arith.addf %59, %58 : vector<2x16xf32>
    %cst_26 = arith.constant 1.000000e+00 : f32
    %61 = vector.broadcast %cst_26 : f32 to vector<2x16xf32>
    %62 = arith.divf %61, %60 : vector<2x16xf32>
    %63 = vector.extract_strided_slice %45 {offsets = [0, 32], sizes = [2, 16], strides = [1, 1]} : vector<2x64xf32> to vector<2x16xf32>
    %64 = math.tanh %63 : vector<2x16xf32>
    %65 = vector.extract_strided_slice %45 {offsets = [0, 48], sizes = [2, 16], strides = [1, 1]} : vector<2x64xf32> to vector<2x16xf32>
    %cst_27 = arith.constant 0.000000e+00 : f32
    %66 = vector.broadcast %cst_27 : f32 to vector<2x16xf32>
    %67 = arith.subf %66, %65 : vector<2x16xf32>
    %68 = math.exp %67 : vector<2x16xf32>
    %cst_28 = arith.constant 1.000000e+00 : f32
    %69 = vector.broadcast %cst_28 : f32 to vector<2x16xf32>
    %70 = arith.addf %69, %68 : vector<2x16xf32>
    %cst_29 = arith.constant 1.000000e+00 : f32
    %71 = vector.broadcast %cst_29 : f32 to vector<2x16xf32>
    %72 = arith.divf %71, %70 : vector<2x16xf32>
    %73 = arith.mulf %62, %46 : vector<2x16xf32>
    %74 = arith.mulf %54, %64 : vector<2x16xf32>
    %75 = arith.addf %73, %74 : vector<2x16xf32>
    %76 = math.tanh %75 : vector<2x16xf32>
    %77 = arith.mulf %72, %76 : vector<2x16xf32>
    %78 = tpu.concatenate %44, %77 in 1 : vector<2x16xf32>, vector<2x16xf32> -> vector<2x32xf32>
    %79 = tpu.concatenate %42, %75 in 1 : vector<2x16xf32>, vector<2x16xf32> -> vector<2x32xf32>
    %80 = vector.broadcast %6 : vector<2x1xf32> to vector<2x32xf32>
    %81 = arith.mulf %80, %78 : vector<2x32xf32>
    %cst_30 = arith.constant 1.000000e+00 : f32
    %82 = vector.broadcast %cst_30 : f32 to vector<2x1xf32>
    %83 = arith.subf %82, %6 : vector<2x1xf32>
    %84 = vector.broadcast %83 : vector<2x1xf32> to vector<2x32xf32>
    %85 = arith.mulf %84, %7 : vector<2x32xf32>
    %86 = arith.addf %81, %85 : vector<2x32xf32>
    %c0_31 = arith.constant 0 : index
    %c0_32 = arith.constant 0 : index
    %87 = vector.load %arg5[%c0_31, %c0_32] : memref<2x32xf32, #tpu.memory_space<vmem>>, vector<2x32xf32>
    tpu.vector_store %arg5[%c0_31, %c0_32], %86 {strides = array<i32>} : memref<2x32xf32, #tpu.memory_space<vmem>>, vector<2x32xf32>,
    %88 = vector.broadcast %6 : vector<2x1xf32> to vector<2x32xf32>
    %89 = arith.mulf %88, %79 : vector<2x32xf32>
    %cst_33 = arith.constant 1.000000e+00 : f32
    %90 = vector.broadcast %cst_33 : f32 to vector<2x1xf32>
    %91 = arith.subf %90, %6 : vector<2x1xf32>
    %92 = vector.broadcast %91 : vector<2x1xf32> to vector<2x32xf32>
    %93 = arith.mulf %92, %8 : vector<2x32xf32>
    %94 = arith.addf %89, %93 : vector<2x32xf32>
    %c0_34 = arith.constant 0 : index
    %c0_35 = arith.constant 0 : index
    %95 = vector.load %arg6[%c0_34, %c0_35] : memref<2x32xf32, #tpu.memory_space<vmem>>, vector<2x32xf32>
    tpu.vector_store %arg6[%c0_34, %c0_35], %94 {strides = array<i32>} : memref<2x32xf32, #tpu.memory_space<vmem>>, vector<2x32xf32>,
    %c0_36 = arith.constant 0 : index
    %c0_37 = arith.constant 0 : index
    %c0_38 = arith.constant 0 : index
    %96 = vector.load %arg4[%c0_36, %c0_37, %c0_38] : memref<1x2x32xf32, #tpu.memory_space<vmem>>, vector<1x2x32xf32>
    %97 = vector.shape_cast %96 : vector<1x2x32xf32> to vector<2x32xf32>
    %98 = vector.shape_cast %81 : vector<2x32xf32> to vector<1x2x32xf32>
    tpu.vector_store %arg4[%c0_36, %c0_37, %c0_38], %98 {strides = array<i32>} : memref<1x2x32xf32, #tpu.memory_space<vmem>>, vector<1x2x32xf32>,
    return
  }
  func.func @transform_0(%arg0: i32) -> (i32, i32, i32) {
    %c0_i32 = arith.constant 0 : i32
    %c0_i32_0 = arith.constant 0 : i32
    %c0_i32_1 = arith.constant 0 : i32
    return %arg0, %c0_i32, %c0_i32_0 : i32, i32, i32
  }
  func.func @transform_1(%arg0: i32) -> (i32, i32, i32) {
    %c0_i32 = arith.constant 0 : i32
    %c0_i32_0 = arith.constant 0 : i32
    %c0_i32_1 = arith.constant 0 : i32
    return %arg0, %c0_i32, %c0_i32_0 : i32, i32, i32
  }
  func.func @transform_2(%arg0: i32) -> (i32, i32) {
    %c0_i32 = arith.constant 0 : i32
    %c0_i32_0 = arith.constant 0 : i32
    %c0_i32_1 = arith.constant 0 : i32
    return %c0_i32, %c0_i32_0 : i32, i32
  }
  func.func @transform_3(%arg0: i32) -> (i32, i32, i32) {
    %c0_i32 = arith.constant 0 : i32
    %c0_i32_0 = arith.constant 0 : i32
    %c0_i32_1 = arith.constant 0 : i32
    return %arg0, %c0_i32, %c0_i32_0 : i32, i32, i32
  }
}

module attributes {stable_mosaic.version = 11 : i64} {
  func.func @_fused_heads_kernel(%arg0: i32, %arg1: memref<2xi32, #tpu.memory_space<smem>>, %arg2: memref<2xi32, #tpu.memory_space<smem>>, %arg3: memref<1xi32, #tpu.memory_space<smem>>, %arg4: memref<1x8x32xf32, #tpu.memory_space<vmem>>, %arg5: memref<1x8x32xf32, #tpu.memory_space<vmem>>, %arg6: memref<1x8x32xf32, #tpu.memory_space<vmem>>, %arg7: memref<1x1x32xf32, #tpu.memory_space<vmem>>, %arg8: memref<32x384xf32, #tpu.memory_space<vmem>>, %arg9: memref<32x12xf32, #tpu.memory_space<vmem>>, %arg10: memref<32x384xf32, #tpu.memory_space<vmem>>, %arg11: memref<12x32x32xf32, #tpu.memory_space<vmem>>, %arg12: memref<12x1x32xf32, #tpu.memory_space<vmem>>, %arg13: memref<12x32x32xf32, #tpu.memory_space<vmem>>, %arg14: memref<12x1x32xf32, #tpu.memory_space<vmem>>, %arg15: memref<12x32x8xf32, #tpu.memory_space<vmem>>, %arg16: memref<12x1x8xf32, #tpu.memory_space<vmem>>, %arg17: memref<32x32xf32, #tpu.memory_space<vmem>>, %arg18: memref<1x32xf32, #tpu.memory_space<vmem>>, %arg19: memref<32x32xf32, #tpu.memory_space<vmem>>, %arg20: memref<1x8x128xf32, #tpu.memory_space<vmem>>) attributes {dimension_semantics = [#tpu.dimension_semantics<parallel>], iteration_bounds = array<i64: 2>, scalar_prefetch = 3 : i64, scratch_operands = 0 : i64, tpu.core_type = #tpu.core_type<tc>, window_params = [{transform_indices = @transform_0, window_bounds = array<i64: 1, 8, 32>}, {transform_indices = @transform_1, window_bounds = array<i64: 1, 8, 32>}, {transform_indices = @transform_2, window_bounds = array<i64: 1, 8, 32>}, {transform_indices = @transform_3, window_bounds = array<i64: 1, 1, 32>}, {pipeline_mode = #tpu.pipeline_mode<synchronous>, transform_indices = @transform_4, window_bounds = array<i64: 32, 384>}, {pipeline_mode = #tpu.pipeline_mode<synchronous>, transform_indices = @transform_5, window_bounds = array<i64: 32, 12>}, {pipeline_mode = #tpu.pipeline_mode<synchronous>, transform_indices = @transform_6, window_bounds = array<i64: 32, 384>}, {pipeline_mode = #tpu.pipeline_mode<synchronous>, transform_indices = @transform_7, window_bounds = array<i64: 12, 32, 32>}, {pipeline_mode = #tpu.pipeline_mode<synchronous>, transform_indices = @transform_8, window_bounds = array<i64: 12, 1, 32>}, {pipeline_mode = #tpu.pipeline_mode<synchronous>, transform_indices = @transform_9, window_bounds = array<i64: 12, 32, 32>}, {pipeline_mode = #tpu.pipeline_mode<synchronous>, transform_indices = @transform_10, window_bounds = array<i64: 12, 1, 32>}, {pipeline_mode = #tpu.pipeline_mode<synchronous>, transform_indices = @transform_11, window_bounds = array<i64: 12, 32, 8>}, {pipeline_mode = #tpu.pipeline_mode<synchronous>, transform_indices = @transform_12, window_bounds = array<i64: 12, 1, 8>}, {pipeline_mode = #tpu.pipeline_mode<synchronous>, transform_indices = @transform_13, window_bounds = array<i64: 32, 32>}, {pipeline_mode = #tpu.pipeline_mode<synchronous>, transform_indices = @transform_14, window_bounds = array<i64: 1, 32>}, {pipeline_mode = #tpu.pipeline_mode<synchronous>, transform_indices = @transform_15, window_bounds = array<i64: 32, 32>}, {transform_indices = @transform_16, window_bounds = array<i64: 1, 8, 128>}]} {
    %0 = arith.index_cast %arg0 : i32 to index
    %1 = memref.load %arg1[%0] : memref<2xi32, #tpu.memory_space<smem>>
    %2 = arith.index_cast %arg0 : i32 to index
    %3 = memref.load %arg2[%2] : memref<2xi32, #tpu.memory_space<smem>>
    %c0 = arith.constant 0 : index
    %4 = memref.load %arg3[%c0] : memref<1xi32, #tpu.memory_space<smem>>
    %c0_0 = arith.constant 0 : index
    %c0_1 = arith.constant 0 : index
    %c0_2 = arith.constant 0 : index
    %5 = vector.load %arg4[%c0_0, %c0_1, %c0_2] : memref<1x8x32xf32, #tpu.memory_space<vmem>>, vector<1x8x32xf32>
    %6 = vector.shape_cast %5 : vector<1x8x32xf32> to vector<8x32xf32>
    %c0_3 = arith.constant 0 : index
    %c0_4 = arith.constant 0 : index
    %c0_5 = arith.constant 0 : index
    %7 = vector.load %arg5[%c0_3, %c0_4, %c0_5] : memref<1x8x32xf32, #tpu.memory_space<vmem>>, vector<1x8x32xf32>
    %8 = vector.shape_cast %7 : vector<1x8x32xf32> to vector<8x32xf32>
    %c0_6 = arith.constant 0 : index
    %c0_7 = arith.constant 0 : index
    %c0_8 = arith.constant 0 : index
    %9 = vector.load %arg6[%c0_6, %c0_7, %c0_8] : memref<1x8x32xf32, #tpu.memory_space<vmem>>, vector<1x8x32xf32>
    %10 = vector.shape_cast %9 : vector<1x8x32xf32> to vector<8x32xf32>
    %c0_9 = arith.constant 0 : index
    %c0_10 = arith.constant 0 : index
    %c0_11 = arith.constant 0 : index
    %11 = vector.load %arg7[%c0_9, %c0_10, %c0_11] : memref<1x1x32xf32, #tpu.memory_space<vmem>>, vector<1x1x32xf32>
    %12 = vector.shape_cast %11 : vector<1x1x32xf32> to vector<1x32xf32>
    %c0_12 = arith.constant 0 : index
    %c0_13 = arith.constant 0 : index
    %13 = vector.load %arg8[%c0_12, %c0_13] : memref<32x384xf32, #tpu.memory_space<vmem>>, vector<32x384xf32>
    %cst = arith.constant dense<0.000000e+00> : vector<8x384xf32>
    %14 = tpu.matmul %8, %13, %cst {dimension_numbers = #tpu.dot_dimension_numbers<[1], [0], [0], [1], [0, 0, 1, 1], [], []>} : vector<8x32xf32>, vector<32x384xf32>, vector<8x384xf32> -> vector<8x384xf32>
    %c0_14 = arith.constant 0 : index
    %c0_15 = arith.constant 0 : index
    %15 = vector.load %arg8[%c0_14, %c0_15] : memref<32x384xf32, #tpu.memory_space<vmem>>, vector<32x384xf32>
    %cst_16 = arith.constant dense<0.000000e+00> : vector<8x384xf32>
    %16 = tpu.matmul %10, %15, %cst_16 {dimension_numbers = #tpu.dot_dimension_numbers<[1], [0], [0], [1], [0, 0, 1, 1], [], []>} : vector<8x32xf32>, vector<32x384xf32>, vector<8x384xf32> -> vector<8x384xf32>
    %c0_17 = arith.constant 0 : index
    %c0_18 = arith.constant 0 : index
    %17 = vector.load %arg9[%c0_17, %c0_18] : memref<32x12xf32, #tpu.memory_space<vmem>>, vector<32x12xf32>
    %cst_19 = arith.constant dense<0.000000e+00> : vector<8x12xf32>
    %18 = tpu.matmul %8, %17, %cst_19 {dimension_numbers = #tpu.dot_dimension_numbers<[1], [0], [0], [1], [0, 0, 1, 1], [], []>} : vector<8x32xf32>, vector<32x12xf32>, vector<8x12xf32> -> vector<8x12xf32>
    %c0_20 = arith.constant 0 : index
    %c0_21 = arith.constant 0 : index
    %19 = vector.load %arg9[%c0_20, %c0_21] : memref<32x12xf32, #tpu.memory_space<vmem>>, vector<32x12xf32>
    %cst_22 = arith.constant dense<0.000000e+00> : vector<8x12xf32>
    %20 = tpu.matmul %10, %19, %cst_22 {dimension_numbers = #tpu.dot_dimension_numbers<[1], [0], [0], [1], [0, 0, 1, 1], [], []>} : vector<8x32xf32>, vector<32x12xf32>, vector<8x12xf32> -> vector<8x12xf32>
    %c0_23 = arith.constant 0 : index
    %c0_24 = arith.constant 0 : index
    %21 = vector.load %arg10[%c0_23, %c0_24] : memref<32x384xf32, #tpu.memory_space<vmem>>, vector<32x384xf32>
    %cst_25 = arith.constant dense<0.000000e+00> : vector<8x384xf32>
    %22 = tpu.matmul %8, %21, %cst_25 {dimension_numbers = #tpu.dot_dimension_numbers<[1], [0], [0], [1], [0, 0, 1, 1], [], []>} : vector<8x32xf32>, vector<32x384xf32>, vector<8x384xf32> -> vector<8x384xf32>
    %c0_26 = arith.constant 0 : index
    %c0_27 = arith.constant 0 : index
    %23 = vector.load %arg10[%c0_26, %c0_27] : memref<32x384xf32, #tpu.memory_space<vmem>>, vector<32x384xf32>
    %cst_28 = arith.constant dense<0.000000e+00> : vector<8x384xf32>
    %24 = tpu.matmul %10, %23, %cst_28 {dimension_numbers = #tpu.dot_dimension_numbers<[1], [0], [0], [1], [0, 0, 1, 1], [], []>} : vector<8x32xf32>, vector<32x384xf32>, vector<8x384xf32> -> vector<8x384xf32>
    %25 = tpu.iota {dimensions = array<i32: 1>} : vector<1x8xi32>
    %26 = vector.broadcast %1 : i32 to vector<1x8xi32>
    %27 = arith.cmpi sge, %25, %26 : vector<1x8xi32>
    %28 = tpu.iota {dimensions = array<i32: 0>} : vector<8x1xi32>
    %29 = vector.broadcast %3 : i32 to vector<8x1xi32>
    %30 = arith.cmpi sge, %28, %29 : vector<8x1xi32>
    %31 = vector.broadcast %4 : i32 to vector<8x1xi32>
    %32 = arith.cmpi slt, %28, %31 : vector<8x1xi32>
    %33 = arith.extui %32 : vector<8x1xi1> to vector<8x1xi32>
    %34 = arith.sitofp %33 : vector<8x1xi32> to vector<8x1xf32>
    %c0_29 = arith.constant 0 : index
    %c0_30 = arith.constant 0 : index
    %35 = vector.load %arg17[%c0_29, %c0_30] : memref<32x32xf32, #tpu.memory_space<vmem>>, vector<32x32xf32>
    %cst_31 = arith.constant dense<0.000000e+00> : vector<8x32xf32>
    %36 = tpu.matmul %6, %35, %cst_31 {dimension_numbers = #tpu.dot_dimension_numbers<[1], [0], [0], [1], [0, 0, 1, 1], [], []>} : vector<8x32xf32>, vector<32x32xf32>, vector<8x32xf32> -> vector<8x32xf32>
    %c0_32 = arith.constant 0 : index
    %c0_33 = arith.constant 0 : index
    %37 = vector.load %arg18[%c0_32, %c0_33] : memref<1x32xf32, #tpu.memory_space<vmem>>, vector<1x32xf32>
    %38 = vector.broadcast %37 : vector<1x32xf32> to vector<8x32xf32>
    %39 = arith.addf %36, %38 : vector<8x32xf32>
    %cst_34 = arith.constant dense<0.000000e+00> : vector<1x8xf32>
    %40 = tpu.matmul %12, %39, %cst_34 {dimension_numbers = #tpu.dot_dimension_numbers<[1], [1], [0], [0], [0, 0, 1, 0], [], []>} : vector<1x32xf32>, vector<8x32xf32>, vector<1x8xf32> -> vector<1x8xf32>
    %cst_35 = arith.constant -1.000000e+02 : f32
    %41 = vector.broadcast %cst_35 : f32 to vector<1x8xf32>
    %42 = arith.select %27, %41, %40 : vector<1x8xi1>, vector<1x8xf32>
    %cst_36 = arith.constant dense<0xFF800000> : vector<1xf32>
    %43 = vector.multi_reduction <maximumf>, %42, %cst_36 [1] : vector<1x8xf32> to vector<1xf32>
    %44 = vector.shape_cast %43 : vector<1xf32> to vector<1x1xf32>
    %45 = vector.broadcast %44 : vector<1x1xf32> to vector<1x8xf32>
    %46 = arith.subf %42, %45 : vector<1x8xf32>
    %47 = math.exp %46 : vector<1x8xf32>
    %cst_37 = arith.constant dense<0.000000e+00> : vector<1xf32>
    %48 = vector.multi_reduction <add>, %47, %cst_37 [1] : vector<1x8xf32> to vector<1xf32>
    %49 = vector.shape_cast %48 : vector<1xf32> to vector<1x1xf32>
    %50 = vector.broadcast %49 : vector<1x1xf32> to vector<1x8xf32>
    %51 = arith.divf %47, %50 : vector<1x8xf32>
    %cst_38 = arith.constant dense<0.000000e+00> : vector<1x32xf32>
    %52 = tpu.matmul %51, %6, %cst_38 {dimension_numbers = #tpu.dot_dimension_numbers<[1], [0], [0], [1], [0, 0, 1, 1], [], []>} : vector<1x8xf32>, vector<8x32xf32>, vector<1x32xf32> -> vector<1x32xf32>
    %c0_39 = arith.constant 0 : index
    %c0_40 = arith.constant 0 : index
    %53 = vector.load %arg19[%c0_39, %c0_40] : memref<32x32xf32, #tpu.memory_space<vmem>>, vector<32x32xf32>
    %cst_41 = arith.constant dense<0.000000e+00> : vector<1x32xf32>
    %54 = tpu.matmul %52, %53, %cst_41 {dimension_numbers = #tpu.dot_dimension_numbers<[1], [0], [0], [1], [0, 0, 1, 1], [], []>} : vector<1x32xf32>, vector<32x32xf32>, vector<1x32xf32> -> vector<1x32xf32>
    %55 = vector.extract_strided_slice %14 {offsets = [0, 0], sizes = [8, 32], strides = [1, 1]} : vector<8x384xf32> to vector<8x32xf32>
    %56 = vector.extract_strided_slice %18 {offsets = [0, 0], sizes = [8, 1], strides = [1, 1]} : vector<8x12xf32> to vector<8x1xf32>
    %cst_42 = arith.constant dense<0.000000e+00> : vector<8x8xf32>
    %57 = tpu.matmul %55, %6, %cst_42 {dimension_numbers = #tpu.dot_dimension_numbers<[1], [1], [0], [0], [0, 0, 1, 0], [], []>} : vector<8x32xf32>, vector<8x32xf32>, vector<8x8xf32> -> vector<8x8xf32>
    %58 = vector.broadcast %56 : vector<8x1xf32> to vector<8x8xf32>
    %59 = arith.addf %57, %58 : vector<8x8xf32>
    %60 = vector.broadcast %27 : vector<1x8xi1> to vector<8x8xi1>
    %61 = vector.broadcast %30 : vector<8x1xi1> to vector<8x8xi1>
    %62 = arith.ori %60, %61 : vector<8x8xi1>
    %cst_43 = arith.constant -1.000000e+02 : f32
    %63 = vector.broadcast %cst_43 : f32 to vector<8x8xf32>
    %64 = arith.select %62, %63, %59 : vector<8x8xi1>, vector<8x8xf32>
    %cst_44 = arith.constant dense<0.000000e+00> : vector<8x32xf32>
    %65 = tpu.matmul %64, %6, %cst_44 {dimension_numbers = #tpu.dot_dimension_numbers<[1], [0], [0], [1], [0, 0, 1, 1], [], []>} : vector<8x8xf32>, vector<8x32xf32>, vector<8x32xf32> -> vector<8x32xf32>
    %66 = vector.broadcast %34 : vector<8x1xf32> to vector<8x32xf32>
    %67 = arith.mulf %65, %66 : vector<8x32xf32>
    %cst_45 = arith.constant dense<0.000000e+00> : vector<32xf32>
    %68 = vector.multi_reduction <add>, %67, %cst_45 [0] : vector<8x32xf32> to vector<32xf32>
    %69 = vector.shape_cast %68 : vector<32xf32> to vector<1x32xf32>
    %c0_46 = arith.constant 0 : index
    %c0_47 = arith.constant 0 : index
    %c0_48 = arith.constant 0 : index
    %70 = vector.load %arg11[%c0_46, %c0_47, %c0_48] : memref<12x32x32xf32, #tpu.memory_space<vmem>>, vector<1x32x32xf32>
    %71 = vector.shape_cast %70 : vector<1x32x32xf32> to vector<32x32xf32>
    %cst_49 = arith.constant dense<0.000000e+00> : vector<1x32xf32>
    %72 = tpu.matmul %69, %71, %cst_49 {dimension_numbers = #tpu.dot_dimension_numbers<[1], [0], [0], [1], [0, 0, 1, 1], [], []>} : vector<1x32xf32>, vector<32x32xf32>, vector<1x32xf32> -> vector<1x32xf32>
    %c0_50 = arith.constant 0 : index
    %c0_51 = arith.constant 0 : index
    %c0_52 = arith.constant 0 : index
    %73 = vector.load %arg12[%c0_50, %c0_51, %c0_52] : memref<12x1x32xf32, #tpu.memory_space<vmem>>, vector<1x1x32xf32>
    %74 = vector.shape_cast %73 : vector<1x1x32xf32> to vector<1x32xf32>
    %75 = arith.addf %72, %74 : vector<1x32xf32>
    %76 = math.tanh %75 : vector<1x32xf32>
    %c0_53 = arith.constant 0 : index
    %c0_54 = arith.constant 0 : index
    %c0_55 = arith.constant 0 : index
    %77 = vector.load %arg15[%c0_53, %c0_54, %c0_55] : memref<12x32x8xf32, #tpu.memory_space<vmem>>, vector<1x32x8xf32>
    %78 = vector.shape_cast %77 : vector<1x32x8xf32> to vector<32x8xf32>
    %cst_56 = arith.constant dense<0.000000e+00> : vector<1x8xf32>
    %79 = tpu.matmul %76, %78, %cst_56 {dimension_numbers = #tpu.dot_dimension_numbers<[1], [0], [0], [1], [0, 0, 1, 1], [], []>} : vector<1x32xf32>, vector<32x8xf32>, vector<1x8xf32> -> vector<1x8xf32>
    %c0_57 = arith.constant 0 : index
    %c0_58 = arith.constant 0 : index
    %c0_59 = arith.constant 0 : index
    %80 = vector.load %arg16[%c0_57, %c0_58, %c0_59] : memref<12x1x8xf32, #tpu.memory_space<vmem>>, vector<1x1x8xf32>
    %81 = vector.shape_cast %80 : vector<1x1x8xf32> to vector<1x8xf32>
    %82 = arith.addf %79, %81 : vector<1x8xf32>
    %cst_60 = arith.constant 0.000000e+00 : f32
    %83 = vector.broadcast %cst_60 : f32 to vector<7x8xf32>
    %84 = tpu.concatenate %82, %83 in 0 : vector<1x8xf32>, vector<7x8xf32> -> vector<8x8xf32>
    %85 = vector.extract_strided_slice %14 {offsets = [0, 32], sizes = [8, 32], strides = [1, 1]} : vector<8x384xf32> to vector<8x32xf32>
    %86 = vector.extract_strided_slice %18 {offsets = [0, 1], sizes = [8, 1], strides = [1, 1]} : vector<8x12xf32> to vector<8x1xf32>
    %cst_61 = arith.constant dense<0.000000e+00> : vector<8x8xf32>
    %87 = tpu.matmul %85, %6, %cst_61 {dimension_numbers = #tpu.dot_dimension_numbers<[1], [1], [0], [0], [0, 0, 1, 0], [], []>} : vector<8x32xf32>, vector<8x32xf32>, vector<8x8xf32> -> vector<8x8xf32>
    %88 = vector.broadcast %86 : vector<8x1xf32> to vector<8x8xf32>
    %89 = arith.addf %87, %88 : vector<8x8xf32>
    %90 = vector.broadcast %27 : vector<1x8xi1> to vector<8x8xi1>
    %91 = vector.broadcast %30 : vector<8x1xi1> to vector<8x8xi1>
    %92 = arith.ori %90, %91 : vector<8x8xi1>
    %cst_62 = arith.constant -1.000000e+02 : f32
    %93 = vector.broadcast %cst_62 : f32 to vector<8x8xf32>
    %94 = arith.select %92, %93, %89 : vector<8x8xi1>, vector<8x8xf32>
    %cst_63 = arith.constant dense<0.000000e+00> : vector<8x32xf32>
    %95 = tpu.matmul %94, %6, %cst_63 {dimension_numbers = #tpu.dot_dimension_numbers<[1], [0], [0], [1], [0, 0, 1, 1], [], []>} : vector<8x8xf32>, vector<8x32xf32>, vector<8x32xf32> -> vector<8x32xf32>
    %96 = vector.broadcast %34 : vector<8x1xf32> to vector<8x32xf32>
    %97 = arith.mulf %95, %96 : vector<8x32xf32>
    %cst_64 = arith.constant dense<0.000000e+00> : vector<32xf32>
    %98 = vector.multi_reduction <add>, %97, %cst_64 [0] : vector<8x32xf32> to vector<32xf32>
    %99 = vector.shape_cast %98 : vector<32xf32> to vector<1x32xf32>
    %c1 = arith.constant 1 : index
    %c0_65 = arith.constant 0 : index
    %c0_66 = arith.constant 0 : index
    %100 = vector.load %arg11[%c1, %c0_65, %c0_66] : memref<12x32x32xf32, #tpu.memory_space<vmem>>, vector<1x32x32xf32>
    %101 = vector.shape_cast %100 : vector<1x32x32xf32> to vector<32x32xf32>
    %cst_67 = arith.constant dense<0.000000e+00> : vector<1x32xf32>
    %102 = tpu.matmul %99, %101, %cst_67 {dimension_numbers = #tpu.dot_dimension_numbers<[1], [0], [0], [1], [0, 0, 1, 1], [], []>} : vector<1x32xf32>, vector<32x32xf32>, vector<1x32xf32> -> vector<1x32xf32>
    %c1_68 = arith.constant 1 : index
    %c0_69 = arith.constant 0 : index
    %c0_70 = arith.constant 0 : index
    %103 = vector.load %arg12[%c1_68, %c0_69, %c0_70] : memref<12x1x32xf32, #tpu.memory_space<vmem>>, vector<1x1x32xf32>
    %104 = vector.shape_cast %103 : vector<1x1x32xf32> to vector<1x32xf32>
    %105 = arith.addf %102, %104 : vector<1x32xf32>
    %106 = math.tanh %105 : vector<1x32xf32>
    %c1_71 = arith.constant 1 : index
    %c0_72 = arith.constant 0 : index
    %c0_73 = arith.constant 0 : index
    %107 = vector.load %arg15[%c1_71, %c0_72, %c0_73] : memref<12x32x8xf32, #tpu.memory_space<vmem>>, vector<1x32x8xf32>
    %108 = vector.shape_cast %107 : vector<1x32x8xf32> to vector<32x8xf32>
    %cst_74 = arith.constant dense<0.000000e+00> : vector<1x8xf32>
    %109 = tpu.matmul %106, %108, %cst_74 {dimension_numbers = #tpu.dot_dimension_numbers<[1], [0], [0], [1], [0, 0, 1, 1], [], []>} : vector<1x32xf32>, vector<32x8xf32>, vector<1x8xf32> -> vector<1x8xf32>
    %c1_75 = arith.constant 1 : index
    %c0_76 = arith.constant 0 : index
    %c0_77 = arith.constant 0 : index
    %110 = vector.load %arg16[%c1_75, %c0_76, %c0_77] : memref<12x1x8xf32, #tpu.memory_space<vmem>>, vector<1x1x8xf32>
    %111 = vector.shape_cast %110 : vector<1x1x8xf32> to vector<1x8xf32>
    %112 = arith.addf %109, %111 : vector<1x8xf32>
    %cst_78 = arith.constant 0.000000e+00 : f32
    %113 = vector.broadcast %cst_78 : f32 to vector<7x8xf32>
    %114 = tpu.concatenate %112, %113 in 0 : vector<1x8xf32>, vector<7x8xf32> -> vector<8x8xf32>
    %115 = vector.extract_strided_slice %14 {offsets = [0, 64], sizes = [8, 32], strides = [1, 1]} : vector<8x384xf32> to vector<8x32xf32>
    %116 = vector.extract_strided_slice %18 {offsets = [0, 2], sizes = [8, 1], strides = [1, 1]} : vector<8x12xf32> to vector<8x1xf32>
    %cst_79 = arith.constant dense<0.000000e+00> : vector<8x8xf32>
    %117 = tpu.matmul %115, %6, %cst_79 {dimension_numbers = #tpu.dot_dimension_numbers<[1], [1], [0], [0], [0, 0, 1, 0], [], []>} : vector<8x32xf32>, vector<8x32xf32>, vector<8x8xf32> -> vector<8x8xf32>
    %118 = vector.broadcast %116 : vector<8x1xf32> to vector<8x8xf32>
    %119 = arith.addf %117, %118 : vector<8x8xf32>
    %120 = vector.broadcast %27 : vector<1x8xi1> to vector<8x8xi1>
    %121 = vector.broadcast %30 : vector<8x1xi1> to vector<8x8xi1>
    %122 = arith.ori %120, %121 : vector<8x8xi1>
    %cst_80 = arith.constant -1.000000e+02 : f32
    %123 = vector.broadcast %cst_80 : f32 to vector<8x8xf32>
    %124 = arith.select %122, %123, %119 : vector<8x8xi1>, vector<8x8xf32>
    %cst_81 = arith.constant dense<0.000000e+00> : vector<8x32xf32>
    %125 = tpu.matmul %124, %6, %cst_81 {dimension_numbers = #tpu.dot_dimension_numbers<[1], [0], [0], [1], [0, 0, 1, 1], [], []>} : vector<8x8xf32>, vector<8x32xf32>, vector<8x32xf32> -> vector<8x32xf32>
    %126 = vector.broadcast %34 : vector<8x1xf32> to vector<8x32xf32>
    %127 = arith.mulf %125, %126 : vector<8x32xf32>
    %cst_82 = arith.constant dense<0.000000e+00> : vector<32xf32>
    %128 = vector.multi_reduction <add>, %127, %cst_82 [0] : vector<8x32xf32> to vector<32xf32>
    %129 = vector.shape_cast %128 : vector<32xf32> to vector<1x32xf32>
    %c2 = arith.constant 2 : index
    %c0_83 = arith.constant 0 : index
    %c0_84 = arith.constant 0 : index
    %130 = vector.load %arg11[%c2, %c0_83, %c0_84] : memref<12x32x32xf32, #tpu.memory_space<vmem>>, vector<1x32x32xf32>
    %131 = vector.shape_cast %130 : vector<1x32x32xf32> to vector<32x32xf32>
    %cst_85 = arith.constant dense<0.000000e+00> : vector<1x32xf32>
    %132 = tpu.matmul %129, %131, %cst_85 {dimension_numbers = #tpu.dot_dimension_numbers<[1], [0], [0], [1], [0, 0, 1, 1], [], []>} : vector<1x32xf32>, vector<32x32xf32>, vector<1x32xf32> -> vector<1x32xf32>
    %c2_86 = arith.constant 2 : index
    %c0_87 = arith.constant 0 : index
    %c0_88 = arith.constant 0 : index
    %133 = vector.load %arg12[%c2_86, %c0_87, %c0_88] : memref<12x1x32xf32, #tpu.memory_space<vmem>>, vector<1x1x32xf32>
    %134 = vector.shape_cast %133 : vector<1x1x32xf32> to vector<1x32xf32>
    %135 = arith.addf %132, %134 : vector<1x32xf32>
    %136 = math.tanh %135 : vector<1x32xf32>
    %c2_89 = arith.constant 2 : index
    %c0_90 = arith.constant 0 : index
    %c0_91 = arith.constant 0 : index
    %137 = vector.load %arg15[%c2_89, %c0_90, %c0_91] : memref<12x32x8xf32, #tpu.memory_space<vmem>>, vector<1x32x8xf32>
    %138 = vector.shape_cast %137 : vector<1x32x8xf32> to vector<32x8xf32>
    %cst_92 = arith.constant dense<0.000000e+00> : vector<1x8xf32>
    %139 = tpu.matmul %136, %138, %cst_92 {dimension_numbers = #tpu.dot_dimension_numbers<[1], [0], [0], [1], [0, 0, 1, 1], [], []>} : vector<1x32xf32>, vector<32x8xf32>, vector<1x8xf32> -> vector<1x8xf32>
    %c2_93 = arith.constant 2 : index
    %c0_94 = arith.constant 0 : index
    %c0_95 = arith.constant 0 : index
    %140 = vector.load %arg16[%c2_93, %c0_94, %c0_95] : memref<12x1x8xf32, #tpu.memory_space<vmem>>, vector<1x1x8xf32>
    %141 = vector.shape_cast %140 : vector<1x1x8xf32> to vector<1x8xf32>
    %142 = arith.addf %139, %141 : vector<1x8xf32>
    %cst_96 = arith.constant 0.000000e+00 : f32
    %143 = vector.broadcast %cst_96 : f32 to vector<7x8xf32>
    %144 = tpu.concatenate %142, %143 in 0 : vector<1x8xf32>, vector<7x8xf32> -> vector<8x8xf32>
    %145 = vector.extract_strided_slice %14 {offsets = [0, 96], sizes = [8, 32], strides = [1, 1]} : vector<8x384xf32> to vector<8x32xf32>
    %146 = vector.extract_strided_slice %18 {offsets = [0, 3], sizes = [8, 1], strides = [1, 1]} : vector<8x12xf32> to vector<8x1xf32>
    %cst_97 = arith.constant dense<0.000000e+00> : vector<8x8xf32>
    %147 = tpu.matmul %145, %6, %cst_97 {dimension_numbers = #tpu.dot_dimension_numbers<[1], [1], [0], [0], [0, 0, 1, 0], [], []>} : vector<8x32xf32>, vector<8x32xf32>, vector<8x8xf32> -> vector<8x8xf32>
    %148 = vector.broadcast %146 : vector<8x1xf32> to vector<8x8xf32>
    %149 = arith.addf %147, %148 : vector<8x8xf32>
    %150 = vector.broadcast %27 : vector<1x8xi1> to vector<8x8xi1>
    %151 = vector.broadcast %30 : vector<8x1xi1> to vector<8x8xi1>
    %152 = arith.ori %150, %151 : vector<8x8xi1>
    %cst_98 = arith.constant -1.000000e+02 : f32
    %153 = vector.broadcast %cst_98 : f32 to vector<8x8xf32>
    %154 = arith.select %152, %153, %149 : vector<8x8xi1>, vector<8x8xf32>
    %cst_99 = arith.constant dense<0.000000e+00> : vector<8x32xf32>
    %155 = tpu.matmul %154, %6, %cst_99 {dimension_numbers = #tpu.dot_dimension_numbers<[1], [0], [0], [1], [0, 0, 1, 1], [], []>} : vector<8x8xf32>, vector<8x32xf32>, vector<8x32xf32> -> vector<8x32xf32>
    %156 = vector.broadcast %34 : vector<8x1xf32> to vector<8x32xf32>
    %157 = arith.mulf %155, %156 : vector<8x32xf32>
    %cst_100 = arith.constant dense<0.000000e+00> : vector<32xf32>
    %158 = vector.multi_reduction <add>, %157, %cst_100 [0] : vector<8x32xf32> to vector<32xf32>
    %159 = vector.shape_cast %158 : vector<32xf32> to vector<1x32xf32>
    %c3 = arith.constant 3 : index
    %c0_101 = arith.constant 0 : index
    %c0_102 = arith.constant 0 : index
    %160 = vector.load %arg11[%c3, %c0_101, %c0_102] : memref<12x32x32xf32, #tpu.memory_space<vmem>>, vector<1x32x32xf32>
    %161 = vector.shape_cast %160 : vector<1x32x32xf32> to vector<32x32xf32>
    %cst_103 = arith.constant dense<0.000000e+00> : vector<1x32xf32>
    %162 = tpu.matmul %159, %161, %cst_103 {dimension_numbers = #tpu.dot_dimension_numbers<[1], [0], [0], [1], [0, 0, 1, 1], [], []>} : vector<1x32xf32>, vector<32x32xf32>, vector<1x32xf32> -> vector<1x32xf32>
    %c3_104 = arith.constant 3 : index
    %c0_105 = arith.constant 0 : index
    %c0_106 = arith.constant 0 : index
    %163 = vector.load %arg12[%c3_104, %c0_105, %c0_106] : memref<12x1x32xf32, #tpu.memory_space<vmem>>, vector<1x1x32xf32>
    %164 = vector.shape_cast %163 : vector<1x1x32xf32> to vector<1x32xf32>
    %165 = arith.addf %162, %164 : vector<1x32xf32>
    %166 = math.tanh %165 : vector<1x32xf32>
    %c3_107 = arith.constant 3 : index
    %c0_108 = arith.constant 0 : index
    %c0_109 = arith.constant 0 : index
    %167 = vector.load %arg15[%c3_107, %c0_108, %c0_109] : memref<12x32x8xf32, #tpu.memory_space<vmem>>, vector<1x32x8xf32>
    %168 = vector.shape_cast %167 : vector<1x32x8xf32> to vector<32x8xf32>
    %cst_110 = arith.constant dense<0.000000e+00> : vector<1x8xf32>
    %169 = tpu.matmul %166, %168, %cst_110 {dimension_numbers = #tpu.dot_dimension_numbers<[1], [0], [0], [1], [0, 0, 1, 1], [], []>} : vector<1x32xf32>, vector<32x8xf32>, vector<1x8xf32> -> vector<1x8xf32>
    %c3_111 = arith.constant 3 : index
    %c0_112 = arith.constant 0 : index
    %c0_113 = arith.constant 0 : index
    %170 = vector.load %arg16[%c3_111, %c0_112, %c0_113] : memref<12x1x8xf32, #tpu.memory_space<vmem>>, vector<1x1x8xf32>
    %171 = vector.shape_cast %170 : vector<1x1x8xf32> to vector<1x8xf32>
    %172 = arith.addf %169, %171 : vector<1x8xf32>
    %cst_114 = arith.constant 0.000000e+00 : f32
    %173 = vector.broadcast %cst_114 : f32 to vector<7x8xf32>
    %174 = tpu.concatenate %172, %173 in 0 : vector<1x8xf32>, vector<7x8xf32> -> vector<8x8xf32>
    %175 = vector.extract_strided_slice %14 {offsets = [0, 128], sizes = [8, 32], strides = [1, 1]} : vector<8x384xf32> to vector<8x32xf32>
    %176 = vector.extract_strided_slice %18 {offsets = [0, 4], sizes = [8, 1], strides = [1, 1]} : vector<8x12xf32> to vector<8x1xf32>
    %cst_115 = arith.constant dense<0.000000e+00> : vector<8x8xf32>
    %177 = tpu.matmul %175, %6, %cst_115 {dimension_numbers = #tpu.dot_dimension_numbers<[1], [1], [0], [0], [0, 0, 1, 0], [], []>} : vector<8x32xf32>, vector<8x32xf32>, vector<8x8xf32> -> vector<8x8xf32>
    %178 = vector.broadcast %176 : vector<8x1xf32> to vector<8x8xf32>
    %179 = arith.addf %177, %178 : vector<8x8xf32>
    %180 = vector.broadcast %27 : vector<1x8xi1> to vector<8x8xi1>
    %181 = vector.broadcast %30 : vector<8x1xi1> to vector<8x8xi1>
    %182 = arith.ori %180, %181 : vector<8x8xi1>
    %cst_116 = arith.constant -1.000000e+02 : f32
    %183 = vector.broadcast %cst_116 : f32 to vector<8x8xf32>
    %184 = arith.select %182, %183, %179 : vector<8x8xi1>, vector<8x8xf32>
    %cst_117 = arith.constant dense<0xFF800000> : vector<8xf32>
    %185 = vector.multi_reduction <maximumf>, %184, %cst_117 [1] : vector<8x8xf32> to vector<8xf32>
    %186 = vector.shape_cast %185 : vector<8xf32> to vector<8x1xf32>
    %187 = vector.broadcast %186 : vector<8x1xf32> to vector<8x8xf32>
    %188 = arith.subf %184, %187 : vector<8x8xf32>
    %189 = math.exp %188 : vector<8x8xf32>
    %cst_118 = arith.constant dense<0.000000e+00> : vector<8xf32>
    %190 = vector.multi_reduction <add>, %189, %cst_118 [1] : vector<8x8xf32> to vector<8xf32>
    %191 = vector.shape_cast %190 : vector<8xf32> to vector<8x1xf32>
    %192 = vector.broadcast %191 : vector<8x1xf32> to vector<8x8xf32>
    %193 = arith.divf %189, %192 : vector<8x8xf32>
    %cst_119 = arith.constant dense<0.000000e+00> : vector<8x32xf32>
    %194 = tpu.matmul %193, %6, %cst_119 {dimension_numbers = #tpu.dot_dimension_numbers<[1], [0], [0], [1], [0, 0, 1, 1], [], []>} : vector<8x8xf32>, vector<8x32xf32>, vector<8x32xf32> -> vector<8x32xf32>
    %195 = vector.broadcast %34 : vector<8x1xf32> to vector<8x32xf32>
    %196 = arith.mulf %194, %195 : vector<8x32xf32>
    %cst_120 = arith.constant dense<0.000000e+00> : vector<32xf32>
    %197 = vector.multi_reduction <add>, %196, %cst_120 [0] : vector<8x32xf32> to vector<32xf32>
    %198 = vector.shape_cast %197 : vector<32xf32> to vector<1x32xf32>
    %c4 = arith.constant 4 : index
    %c0_121 = arith.constant 0 : index
    %c0_122 = arith.constant 0 : index
    %199 = vector.load %arg11[%c4, %c0_121, %c0_122] : memref<12x32x32xf32, #tpu.memory_space<vmem>>, vector<1x32x32xf32>
    %200 = vector.shape_cast %199 : vector<1x32x32xf32> to vector<32x32xf32>
    %cst_123 = arith.constant dense<0.000000e+00> : vector<1x32xf32>
    %201 = tpu.matmul %198, %200, %cst_123 {dimension_numbers = #tpu.dot_dimension_numbers<[1], [0], [0], [1], [0, 0, 1, 1], [], []>} : vector<1x32xf32>, vector<32x32xf32>, vector<1x32xf32> -> vector<1x32xf32>
    %c4_124 = arith.constant 4 : index
    %c0_125 = arith.constant 0 : index
    %c0_126 = arith.constant 0 : index
    %202 = vector.load %arg12[%c4_124, %c0_125, %c0_126] : memref<12x1x32xf32, #tpu.memory_space<vmem>>, vector<1x1x32xf32>
    %203 = vector.shape_cast %202 : vector<1x1x32xf32> to vector<1x32xf32>
    %204 = arith.addf %201, %203 : vector<1x32xf32>
    %205 = math.tanh %204 : vector<1x32xf32>
    %c4_127 = arith.constant 4 : index
    %c0_128 = arith.constant 0 : index
    %c0_129 = arith.constant 0 : index
    %206 = vector.load %arg15[%c4_127, %c0_128, %c0_129] : memref<12x32x8xf32, #tpu.memory_space<vmem>>, vector<1x32x8xf32>
    %207 = vector.shape_cast %206 : vector<1x32x8xf32> to vector<32x8xf32>
    %cst_130 = arith.constant dense<0.000000e+00> : vector<1x8xf32>
    %208 = tpu.matmul %205, %207, %cst_130 {dimension_numbers = #tpu.dot_dimension_numbers<[1], [0], [0], [1], [0, 0, 1, 1], [], []>} : vector<1x32xf32>, vector<32x8xf32>, vector<1x8xf32> -> vector<1x8xf32>
    %c4_131 = arith.constant 4 : index
    %c0_132 = arith.constant 0 : index
    %c0_133 = arith.constant 0 : index
    %209 = vector.load %arg16[%c4_131, %c0_132, %c0_133] : memref<12x1x8xf32, #tpu.memory_space<vmem>>, vector<1x1x8xf32>
    %210 = vector.shape_cast %209 : vector<1x1x8xf32> to vector<1x8xf32>
    %211 = arith.addf %208, %210 : vector<1x8xf32>
    %cst_134 = arith.constant 0.000000e+00 : f32
    %212 = vector.broadcast %cst_134 : f32 to vector<7x8xf32>
    %213 = tpu.concatenate %211, %212 in 0 : vector<1x8xf32>, vector<7x8xf32> -> vector<8x8xf32>
    %214 = vector.extract_strided_slice %14 {offsets = [0, 160], sizes = [8, 32], strides = [1, 1]} : vector<8x384xf32> to vector<8x32xf32>
    %215 = vector.extract_strided_slice %18 {offsets = [0, 5], sizes = [8, 1], strides = [1, 1]} : vector<8x12xf32> to vector<8x1xf32>
    %216 = vector.extract_strided_slice %22 {offsets = [0, 160], sizes = [8, 32], strides = [1, 1]} : vector<8x384xf32> to vector<8x32xf32>
    %cst_135 = arith.constant dense<0.000000e+00> : vector<8x8xf32>
    %217 = tpu.matmul %214, %6, %cst_135 {dimension_numbers = #tpu.dot_dimension_numbers<[1], [1], [0], [0], [0, 0, 1, 0], [], []>} : vector<8x32xf32>, vector<8x32xf32>, vector<8x8xf32> -> vector<8x8xf32>
    %218 = vector.broadcast %215 : vector<8x1xf32> to vector<8x8xf32>
    %219 = arith.addf %217, %218 : vector<8x8xf32>
    %cst_136 = arith.constant -1.000000e+02 : f32
    %220 = vector.shape_cast %27 : vector<1x8xi1> to vector<1x8xi1>
    %221 = vector.broadcast %220 : vector<1x8xi1> to vector<8x8xi1>
    %222 = vector.broadcast %cst_136 : f32 to vector<8x8xf32>
    %223 = arith.select %221, %222, %219 : vector<8x8xi1>, vector<8x8xf32>
    %cst_137 = arith.constant dense<0xFF800000> : vector<8xf32>
    %224 = vector.multi_reduction <maximumf>, %223, %cst_137 [1] : vector<8x8xf32> to vector<8xf32>
    %225 = vector.shape_cast %224 : vector<8xf32> to vector<8x1xf32>
    %226 = vector.broadcast %225 : vector<8x1xf32> to vector<8x8xf32>
    %227 = arith.subf %223, %226 : vector<8x8xf32>
    %228 = math.exp %227 : vector<8x8xf32>
    %cst_138 = arith.constant dense<0.000000e+00> : vector<8xf32>
    %229 = vector.multi_reduction <add>, %228, %cst_138 [1] : vector<8x8xf32> to vector<8xf32>
    %230 = vector.shape_cast %229 : vector<8xf32> to vector<8x1xf32>
    %231 = vector.broadcast %230 : vector<8x1xf32> to vector<8x8xf32>
    %232 = arith.divf %228, %231 : vector<8x8xf32>
    %cst_139 = arith.constant dense<0.000000e+00> : vector<8x32xf32>
    %233 = tpu.matmul %232, %6, %cst_139 {dimension_numbers = #tpu.dot_dimension_numbers<[1], [0], [0], [1], [0, 0, 1, 1], [], []>} : vector<8x8xf32>, vector<8x32xf32>, vector<8x32xf32> -> vector<8x32xf32>
    %c5 = arith.constant 5 : index
    %c0_140 = arith.constant 0 : index
    %c0_141 = arith.constant 0 : index
    %234 = vector.load %arg11[%c5, %c0_140, %c0_141] : memref<12x32x32xf32, #tpu.memory_space<vmem>>, vector<1x32x32xf32>
    %235 = vector.shape_cast %234 : vector<1x32x32xf32> to vector<32x32xf32>
    %cst_142 = arith.constant dense<0.000000e+00> : vector<8x32xf32>
    %236 = tpu.matmul %233, %235, %cst_142 {dimension_numbers = #tpu.dot_dimension_numbers<[1], [0], [0], [1], [0, 0, 1, 1], [], []>} : vector<8x32xf32>, vector<32x32xf32>, vector<8x32xf32> -> vector<8x32xf32>
    %237 = arith.addf %236, %216 : vector<8x32xf32>
    %c5_143 = arith.constant 5 : index
    %c0_144 = arith.constant 0 : index
    %c0_145 = arith.constant 0 : index
    %238 = vector.load %arg12[%c5_143, %c0_144, %c0_145] : memref<12x1x32xf32, #tpu.memory_space<vmem>>, vector<1x1x32xf32>
    %239 = vector.shape_cast %238 : vector<1x1x32xf32> to vector<1x32xf32>
    %240 = vector.broadcast %239 : vector<1x32xf32> to vector<8x32xf32>
    %241 = arith.addf %237, %240 : vector<8x32xf32>
    %242 = math.tanh %241 : vector<8x32xf32>
    %c5_146 = arith.constant 5 : index
    %c0_147 = arith.constant 0 : index
    %c0_148 = arith.constant 0 : index
    %243 = vector.load %arg15[%c5_146, %c0_147, %c0_148] : memref<12x32x8xf32, #tpu.memory_space<vmem>>, vector<1x32x8xf32>
    %244 = vector.shape_cast %243 : vector<1x32x8xf32> to vector<32x8xf32>
    %cst_149 = arith.constant dense<0.000000e+00> : vector<8x8xf32>
    %245 = tpu.matmul %242, %244, %cst_149 {dimension_numbers = #tpu.dot_dimension_numbers<[1], [0], [0], [1], [0, 0, 1, 1], [], []>} : vector<8x32xf32>, vector<32x8xf32>, vector<8x8xf32> -> vector<8x8xf32>
    %c5_150 = arith.constant 5 : index
    %c0_151 = arith.constant 0 : index
    %c0_152 = arith.constant 0 : index
    %246 = vector.load %arg16[%c5_150, %c0_151, %c0_152] : memref<12x1x8xf32, #tpu.memory_space<vmem>>, vector<1x1x8xf32>
    %247 = vector.shape_cast %246 : vector<1x1x8xf32> to vector<1x8xf32>
    %248 = vector.broadcast %247 : vector<1x8xf32> to vector<8x8xf32>
    %249 = arith.addf %245, %248 : vector<8x8xf32>
    %250 = vector.extract_strided_slice %14 {offsets = [0, 192], sizes = [8, 32], strides = [1, 1]} : vector<8x384xf32> to vector<8x32xf32>
    %251 = vector.extract_strided_slice %18 {offsets = [0, 6], sizes = [8, 1], strides = [1, 1]} : vector<8x12xf32> to vector<8x1xf32>
    %252 = vector.extract_strided_slice %22 {offsets = [0, 192], sizes = [8, 32], strides = [1, 1]} : vector<8x384xf32> to vector<8x32xf32>
    %cst_153 = arith.constant dense<0.000000e+00> : vector<8x8xf32>
    %253 = tpu.matmul %250, %6, %cst_153 {dimension_numbers = #tpu.dot_dimension_numbers<[1], [1], [0], [0], [0, 0, 1, 0], [], []>} : vector<8x32xf32>, vector<8x32xf32>, vector<8x8xf32> -> vector<8x8xf32>
    %254 = vector.broadcast %251 : vector<8x1xf32> to vector<8x8xf32>
    %255 = arith.addf %253, %254 : vector<8x8xf32>
    %cst_154 = arith.constant -1.000000e+02 : f32
    %256 = vector.shape_cast %27 : vector<1x8xi1> to vector<1x8xi1>
    %257 = vector.broadcast %256 : vector<1x8xi1> to vector<8x8xi1>
    %258 = vector.broadcast %cst_154 : f32 to vector<8x8xf32>
    %259 = arith.select %257, %258, %255 : vector<8x8xi1>, vector<8x8xf32>
    %cst_155 = arith.constant dense<0xFF800000> : vector<8xf32>
    %260 = vector.multi_reduction <maximumf>, %259, %cst_155 [1] : vector<8x8xf32> to vector<8xf32>
    %261 = vector.shape_cast %260 : vector<8xf32> to vector<8x1xf32>
    %262 = vector.broadcast %261 : vector<8x1xf32> to vector<8x8xf32>
    %263 = arith.subf %259, %262 : vector<8x8xf32>
    %264 = math.exp %263 : vector<8x8xf32>
    %cst_156 = arith.constant dense<0.000000e+00> : vector<8xf32>
    %265 = vector.multi_reduction <add>, %264, %cst_156 [1] : vector<8x8xf32> to vector<8xf32>
    %266 = vector.shape_cast %265 : vector<8xf32> to vector<8x1xf32>
    %267 = vector.broadcast %266 : vector<8x1xf32> to vector<8x8xf32>
    %268 = arith.divf %264, %267 : vector<8x8xf32>
    %cst_157 = arith.constant dense<0.000000e+00> : vector<8x32xf32>
    %269 = tpu.matmul %268, %6, %cst_157 {dimension_numbers = #tpu.dot_dimension_numbers<[1], [0], [0], [1], [0, 0, 1, 1], [], []>} : vector<8x8xf32>, vector<8x32xf32>, vector<8x32xf32> -> vector<8x32xf32>
    %c6 = arith.constant 6 : index
    %c0_158 = arith.constant 0 : index
    %c0_159 = arith.constant 0 : index
    %270 = vector.load %arg11[%c6, %c0_158, %c0_159] : memref<12x32x32xf32, #tpu.memory_space<vmem>>, vector<1x32x32xf32>
    %271 = vector.shape_cast %270 : vector<1x32x32xf32> to vector<32x32xf32>
    %cst_160 = arith.constant dense<0.000000e+00> : vector<8x32xf32>
    %272 = tpu.matmul %269, %271, %cst_160 {dimension_numbers = #tpu.dot_dimension_numbers<[1], [0], [0], [1], [0, 0, 1, 1], [], []>} : vector<8x32xf32>, vector<32x32xf32>, vector<8x32xf32> -> vector<8x32xf32>
    %273 = arith.addf %272, %252 : vector<8x32xf32>
    %c6_161 = arith.constant 6 : index
    %c0_162 = arith.constant 0 : index
    %c0_163 = arith.constant 0 : index
    %274 = vector.load %arg12[%c6_161, %c0_162, %c0_163] : memref<12x1x32xf32, #tpu.memory_space<vmem>>, vector<1x1x32xf32>
    %275 = vector.shape_cast %274 : vector<1x1x32xf32> to vector<1x32xf32>
    %276 = vector.broadcast %275 : vector<1x32xf32> to vector<8x32xf32>
    %277 = arith.addf %273, %276 : vector<8x32xf32>
    %278 = math.tanh %277 : vector<8x32xf32>
    %c6_164 = arith.constant 6 : index
    %c0_165 = arith.constant 0 : index
    %c0_166 = arith.constant 0 : index
    %279 = vector.load %arg15[%c6_164, %c0_165, %c0_166] : memref<12x32x8xf32, #tpu.memory_space<vmem>>, vector<1x32x8xf32>
    %280 = vector.shape_cast %279 : vector<1x32x8xf32> to vector<32x8xf32>
    %cst_167 = arith.constant dense<0.000000e+00> : vector<8x8xf32>
    %281 = tpu.matmul %278, %280, %cst_167 {dimension_numbers = #tpu.dot_dimension_numbers<[1], [0], [0], [1], [0, 0, 1, 1], [], []>} : vector<8x32xf32>, vector<32x8xf32>, vector<8x8xf32> -> vector<8x8xf32>
    %c6_168 = arith.constant 6 : index
    %c0_169 = arith.constant 0 : index
    %c0_170 = arith.constant 0 : index
    %282 = vector.load %arg16[%c6_168, %c0_169, %c0_170] : memref<12x1x8xf32, #tpu.memory_space<vmem>>, vector<1x1x8xf32>
    %283 = vector.shape_cast %282 : vector<1x1x8xf32> to vector<1x8xf32>
    %284 = vector.broadcast %283 : vector<1x8xf32> to vector<8x8xf32>
    %285 = arith.addf %281, %284 : vector<8x8xf32>
    %286 = vector.extract_strided_slice %14 {offsets = [0, 224], sizes = [8, 32], strides = [1, 1]} : vector<8x384xf32> to vector<8x32xf32>
    %287 = vector.extract_strided_slice %18 {offsets = [0, 7], sizes = [8, 1], strides = [1, 1]} : vector<8x12xf32> to vector<8x1xf32>
    %288 = vector.extract_strided_slice %22 {offsets = [0, 224], sizes = [8, 32], strides = [1, 1]} : vector<8x384xf32> to vector<8x32xf32>
    %cst_171 = arith.constant dense<0.000000e+00> : vector<8x8xf32>
    %289 = tpu.matmul %286, %6, %cst_171 {dimension_numbers = #tpu.dot_dimension_numbers<[1], [1], [0], [0], [0, 0, 1, 0], [], []>} : vector<8x32xf32>, vector<8x32xf32>, vector<8x8xf32> -> vector<8x8xf32>
    %290 = vector.broadcast %287 : vector<8x1xf32> to vector<8x8xf32>
    %291 = arith.addf %289, %290 : vector<8x8xf32>
    %cst_172 = arith.constant -1.000000e+02 : f32
    %292 = vector.shape_cast %27 : vector<1x8xi1> to vector<1x8xi1>
    %293 = vector.broadcast %292 : vector<1x8xi1> to vector<8x8xi1>
    %294 = vector.broadcast %cst_172 : f32 to vector<8x8xf32>
    %295 = arith.select %293, %294, %291 : vector<8x8xi1>, vector<8x8xf32>
    %cst_173 = arith.constant dense<0xFF800000> : vector<8xf32>
    %296 = vector.multi_reduction <maximumf>, %295, %cst_173 [1] : vector<8x8xf32> to vector<8xf32>
    %297 = vector.shape_cast %296 : vector<8xf32> to vector<8x1xf32>
    %298 = vector.broadcast %297 : vector<8x1xf32> to vector<8x8xf32>
    %299 = arith.subf %295, %298 : vector<8x8xf32>
    %300 = math.exp %299 : vector<8x8xf32>
    %cst_174 = arith.constant dense<0.000000e+00> : vector<8xf32>
    %301 = vector.multi_reduction <add>, %300, %cst_174 [1] : vector<8x8xf32> to vector<8xf32>
    %302 = vector.shape_cast %301 : vector<8xf32> to vector<8x1xf32>
    %303 = vector.broadcast %302 : vector<8x1xf32> to vector<8x8xf32>
    %304 = arith.divf %300, %303 : vector<8x8xf32>
    %cst_175 = arith.constant dense<0.000000e+00> : vector<8x32xf32>
    %305 = tpu.matmul %304, %6, %cst_175 {dimension_numbers = #tpu.dot_dimension_numbers<[1], [0], [0], [1], [0, 0, 1, 1], [], []>} : vector<8x8xf32>, vector<8x32xf32>, vector<8x32xf32> -> vector<8x32xf32>
    %c7 = arith.constant 7 : index
    %c0_176 = arith.constant 0 : index
    %c0_177 = arith.constant 0 : index
    %306 = vector.load %arg11[%c7, %c0_176, %c0_177] : memref<12x32x32xf32, #tpu.memory_space<vmem>>, vector<1x32x32xf32>
    %307 = vector.shape_cast %306 : vector<1x32x32xf32> to vector<32x32xf32>
    %cst_178 = arith.constant dense<0.000000e+00> : vector<8x32xf32>
    %308 = tpu.matmul %305, %307, %cst_178 {dimension_numbers = #tpu.dot_dimension_numbers<[1], [0], [0], [1], [0, 0, 1, 1], [], []>} : vector<8x32xf32>, vector<32x32xf32>, vector<8x32xf32> -> vector<8x32xf32>
    %309 = arith.addf %308, %288 : vector<8x32xf32>
    %c7_179 = arith.constant 7 : index
    %c0_180 = arith.constant 0 : index
    %c0_181 = arith.constant 0 : index
    %310 = vector.load %arg12[%c7_179, %c0_180, %c0_181] : memref<12x1x32xf32, #tpu.memory_space<vmem>>, vector<1x1x32xf32>
    %311 = vector.shape_cast %310 : vector<1x1x32xf32> to vector<1x32xf32>
    %312 = vector.broadcast %311 : vector<1x32xf32> to vector<8x32xf32>
    %313 = arith.addf %309, %312 : vector<8x32xf32>
    %314 = math.tanh %313 : vector<8x32xf32>
    %c7_182 = arith.constant 7 : index
    %c0_183 = arith.constant 0 : index
    %c0_184 = arith.constant 0 : index
    %315 = vector.load %arg15[%c7_182, %c0_183, %c0_184] : memref<12x32x8xf32, #tpu.memory_space<vmem>>, vector<1x32x8xf32>
    %316 = vector.shape_cast %315 : vector<1x32x8xf32> to vector<32x8xf32>
    %cst_185 = arith.constant dense<0.000000e+00> : vector<8x8xf32>
    %317 = tpu.matmul %314, %316, %cst_185 {dimension_numbers = #tpu.dot_dimension_numbers<[1], [0], [0], [1], [0, 0, 1, 1], [], []>} : vector<8x32xf32>, vector<32x8xf32>, vector<8x8xf32> -> vector<8x8xf32>
    %c7_186 = arith.constant 7 : index
    %c0_187 = arith.constant 0 : index
    %c0_188 = arith.constant 0 : index
    %318 = vector.load %arg16[%c7_186, %c0_187, %c0_188] : memref<12x1x8xf32, #tpu.memory_space<vmem>>, vector<1x1x8xf32>
    %319 = vector.shape_cast %318 : vector<1x1x8xf32> to vector<1x8xf32>
    %320 = vector.broadcast %319 : vector<1x8xf32> to vector<8x8xf32>
    %321 = arith.addf %317, %320 : vector<8x8xf32>
    %322 = vector.extract_strided_slice %16 {offsets = [0, 256], sizes = [8, 32], strides = [1, 1]} : vector<8x384xf32> to vector<8x32xf32>
    %323 = vector.extract_strided_slice %20 {offsets = [0, 8], sizes = [8, 1], strides = [1, 1]} : vector<8x12xf32> to vector<8x1xf32>
    %324 = vector.extract_strided_slice %24 {offsets = [0, 256], sizes = [8, 32], strides = [1, 1]} : vector<8x384xf32> to vector<8x32xf32>
    %cst_189 = arith.constant dense<0.000000e+00> : vector<8x8xf32>
    %325 = tpu.matmul %322, %6, %cst_189 {dimension_numbers = #tpu.dot_dimension_numbers<[1], [1], [0], [0], [0, 0, 1, 0], [], []>} : vector<8x32xf32>, vector<8x32xf32>, vector<8x8xf32> -> vector<8x8xf32>
    %326 = vector.broadcast %323 : vector<8x1xf32> to vector<8x8xf32>
    %327 = arith.addf %325, %326 : vector<8x8xf32>
    %cst_190 = arith.constant -1.000000e+02 : f32
    %328 = vector.shape_cast %27 : vector<1x8xi1> to vector<1x8xi1>
    %329 = vector.broadcast %328 : vector<1x8xi1> to vector<8x8xi1>
    %330 = vector.broadcast %cst_190 : f32 to vector<8x8xf32>
    %331 = arith.select %329, %330, %327 : vector<8x8xi1>, vector<8x8xf32>
    %cst_191 = arith.constant dense<0xFF800000> : vector<8xf32>
    %332 = vector.multi_reduction <maximumf>, %331, %cst_191 [1] : vector<8x8xf32> to vector<8xf32>
    %333 = vector.shape_cast %332 : vector<8xf32> to vector<8x1xf32>
    %334 = vector.broadcast %333 : vector<8x1xf32> to vector<8x8xf32>
    %335 = arith.subf %331, %334 : vector<8x8xf32>
    %336 = math.exp %335 : vector<8x8xf32>
    %cst_192 = arith.constant dense<0.000000e+00> : vector<8xf32>
    %337 = vector.multi_reduction <add>, %336, %cst_192 [1] : vector<8x8xf32> to vector<8xf32>
    %338 = vector.shape_cast %337 : vector<8xf32> to vector<8x1xf32>
    %339 = vector.broadcast %338 : vector<8x1xf32> to vector<8x8xf32>
    %340 = arith.divf %336, %339 : vector<8x8xf32>
    %cst_193 = arith.constant dense<0.000000e+00> : vector<8x32xf32>
    %341 = tpu.matmul %340, %6, %cst_193 {dimension_numbers = #tpu.dot_dimension_numbers<[1], [0], [0], [1], [0, 0, 1, 1], [], []>} : vector<8x8xf32>, vector<8x32xf32>, vector<8x32xf32> -> vector<8x32xf32>
    %c8 = arith.constant 8 : index
    %c0_194 = arith.constant 0 : index
    %c0_195 = arith.constant 0 : index
    %342 = vector.load %arg11[%c8, %c0_194, %c0_195] : memref<12x32x32xf32, #tpu.memory_space<vmem>>, vector<1x32x32xf32>
    %343 = vector.shape_cast %342 : vector<1x32x32xf32> to vector<32x32xf32>
    %cst_196 = arith.constant dense<0.000000e+00> : vector<8x32xf32>
    %344 = tpu.matmul %341, %343, %cst_196 {dimension_numbers = #tpu.dot_dimension_numbers<[1], [0], [0], [1], [0, 0, 1, 1], [], []>} : vector<8x32xf32>, vector<32x32xf32>, vector<8x32xf32> -> vector<8x32xf32>
    %345 = arith.addf %344, %324 : vector<8x32xf32>
    %c8_197 = arith.constant 8 : index
    %c0_198 = arith.constant 0 : index
    %c0_199 = arith.constant 0 : index
    %346 = vector.load %arg12[%c8_197, %c0_198, %c0_199] : memref<12x1x32xf32, #tpu.memory_space<vmem>>, vector<1x1x32xf32>
    %347 = vector.shape_cast %346 : vector<1x1x32xf32> to vector<1x32xf32>
    %348 = vector.broadcast %347 : vector<1x32xf32> to vector<8x32xf32>
    %349 = arith.addf %345, %348 : vector<8x32xf32>
    %c8_200 = arith.constant 8 : index
    %c0_201 = arith.constant 0 : index
    %c0_202 = arith.constant 0 : index
    %350 = vector.load %arg13[%c8_200, %c0_201, %c0_202] : memref<12x32x32xf32, #tpu.memory_space<vmem>>, vector<1x32x32xf32>
    %351 = vector.shape_cast %350 : vector<1x32x32xf32> to vector<32x32xf32>
    %cst_203 = arith.constant dense<0.000000e+00> : vector<8x32xf32>
    %352 = tpu.matmul %349, %351, %cst_203 {dimension_numbers = #tpu.dot_dimension_numbers<[1], [0], [0], [1], [0, 0, 1, 1], [], []>} : vector<8x32xf32>, vector<32x32xf32>, vector<8x32xf32> -> vector<8x32xf32>
    %c8_204 = arith.constant 8 : index
    %c0_205 = arith.constant 0 : index
    %c0_206 = arith.constant 0 : index
    %353 = vector.load %arg14[%c8_204, %c0_205, %c0_206] : memref<12x1x32xf32, #tpu.memory_space<vmem>>, vector<1x1x32xf32>
    %354 = vector.shape_cast %353 : vector<1x1x32xf32> to vector<1x32xf32>
    %355 = vector.broadcast %354 : vector<1x32xf32> to vector<8x32xf32>
    %356 = arith.addf %352, %355 : vector<8x32xf32>
    %357 = math.tanh %356 : vector<8x32xf32>
    %c8_207 = arith.constant 8 : index
    %c0_208 = arith.constant 0 : index
    %c0_209 = arith.constant 0 : index
    %358 = vector.load %arg15[%c8_207, %c0_208, %c0_209] : memref<12x32x8xf32, #tpu.memory_space<vmem>>, vector<1x32x8xf32>
    %359 = vector.shape_cast %358 : vector<1x32x8xf32> to vector<32x8xf32>
    %cst_210 = arith.constant dense<0.000000e+00> : vector<8x8xf32>
    %360 = tpu.matmul %357, %359, %cst_210 {dimension_numbers = #tpu.dot_dimension_numbers<[1], [0], [0], [1], [0, 0, 1, 1], [], []>} : vector<8x32xf32>, vector<32x8xf32>, vector<8x8xf32> -> vector<8x8xf32>
    %c8_211 = arith.constant 8 : index
    %c0_212 = arith.constant 0 : index
    %c0_213 = arith.constant 0 : index
    %361 = vector.load %arg16[%c8_211, %c0_212, %c0_213] : memref<12x1x8xf32, #tpu.memory_space<vmem>>, vector<1x1x8xf32>
    %362 = vector.shape_cast %361 : vector<1x1x8xf32> to vector<1x8xf32>
    %363 = vector.broadcast %362 : vector<1x8xf32> to vector<8x8xf32>
    %364 = arith.addf %360, %363 : vector<8x8xf32>
    %365 = vector.extract_strided_slice %16 {offsets = [0, 288], sizes = [8, 32], strides = [1, 1]} : vector<8x384xf32> to vector<8x32xf32>
    %366 = vector.extract_strided_slice %20 {offsets = [0, 9], sizes = [8, 1], strides = [1, 1]} : vector<8x12xf32> to vector<8x1xf32>
    %367 = vector.extract_strided_slice %24 {offsets = [0, 288], sizes = [8, 32], strides = [1, 1]} : vector<8x384xf32> to vector<8x32xf32>
    %cst_214 = arith.constant dense<0.000000e+00> : vector<8x8xf32>
    %368 = tpu.matmul %365, %6, %cst_214 {dimension_numbers = #tpu.dot_dimension_numbers<[1], [1], [0], [0], [0, 0, 1, 0], [], []>} : vector<8x32xf32>, vector<8x32xf32>, vector<8x8xf32> -> vector<8x8xf32>
    %369 = vector.broadcast %366 : vector<8x1xf32> to vector<8x8xf32>
    %370 = arith.addf %368, %369 : vector<8x8xf32>
    %cst_215 = arith.constant -1.000000e+02 : f32
    %371 = vector.shape_cast %27 : vector<1x8xi1> to vector<1x8xi1>
    %372 = vector.broadcast %371 : vector<1x8xi1> to vector<8x8xi1>
    %373 = vector.broadcast %cst_215 : f32 to vector<8x8xf32>
    %374 = arith.select %372, %373, %370 : vector<8x8xi1>, vector<8x8xf32>
    %cst_216 = arith.constant dense<0xFF800000> : vector<8xf32>
    %375 = vector.multi_reduction <maximumf>, %374, %cst_216 [1] : vector<8x8xf32> to vector<8xf32>
    %376 = vector.shape_cast %375 : vector<8xf32> to vector<8x1xf32>
    %377 = vector.broadcast %376 : vector<8x1xf32> to vector<8x8xf32>
    %378 = arith.subf %374, %377 : vector<8x8xf32>
    %379 = math.exp %378 : vector<8x8xf32>
    %cst_217 = arith.constant dense<0.000000e+00> : vector<8xf32>
    %380 = vector.multi_reduction <add>, %379, %cst_217 [1] : vector<8x8xf32> to vector<8xf32>
    %381 = vector.shape_cast %380 : vector<8xf32> to vector<8x1xf32>
    %382 = vector.broadcast %381 : vector<8x1xf32> to vector<8x8xf32>
    %383 = arith.divf %379, %382 : vector<8x8xf32>
    %cst_218 = arith.constant dense<0.000000e+00> : vector<8x32xf32>
    %384 = tpu.matmul %383, %6, %cst_218 {dimension_numbers = #tpu.dot_dimension_numbers<[1], [0], [0], [1], [0, 0, 1, 1], [], []>} : vector<8x8xf32>, vector<8x32xf32>, vector<8x32xf32> -> vector<8x32xf32>
    %c9 = arith.constant 9 : index
    %c0_219 = arith.constant 0 : index
    %c0_220 = arith.constant 0 : index
    %385 = vector.load %arg11[%c9, %c0_219, %c0_220] : memref<12x32x32xf32, #tpu.memory_space<vmem>>, vector<1x32x32xf32>
    %386 = vector.shape_cast %385 : vector<1x32x32xf32> to vector<32x32xf32>
    %cst_221 = arith.constant dense<0.000000e+00> : vector<8x32xf32>
    %387 = tpu.matmul %384, %386, %cst_221 {dimension_numbers = #tpu.dot_dimension_numbers<[1], [0], [0], [1], [0, 0, 1, 1], [], []>} : vector<8x32xf32>, vector<32x32xf32>, vector<8x32xf32> -> vector<8x32xf32>
    %388 = arith.addf %387, %367 : vector<8x32xf32>
    %c9_222 = arith.constant 9 : index
    %c0_223 = arith.constant 0 : index
    %c0_224 = arith.constant 0 : index
    %389 = vector.load %arg12[%c9_222, %c0_223, %c0_224] : memref<12x1x32xf32, #tpu.memory_space<vmem>>, vector<1x1x32xf32>
    %390 = vector.shape_cast %389 : vector<1x1x32xf32> to vector<1x32xf32>
    %391 = vector.broadcast %390 : vector<1x32xf32> to vector<8x32xf32>
    %392 = arith.addf %388, %391 : vector<8x32xf32>
    %c9_225 = arith.constant 9 : index
    %c0_226 = arith.constant 0 : index
    %c0_227 = arith.constant 0 : index
    %393 = vector.load %arg13[%c9_225, %c0_226, %c0_227] : memref<12x32x32xf32, #tpu.memory_space<vmem>>, vector<1x32x32xf32>
    %394 = vector.shape_cast %393 : vector<1x32x32xf32> to vector<32x32xf32>
    %cst_228 = arith.constant dense<0.000000e+00> : vector<8x32xf32>
    %395 = tpu.matmul %392, %394, %cst_228 {dimension_numbers = #tpu.dot_dimension_numbers<[1], [0], [0], [1], [0, 0, 1, 1], [], []>} : vector<8x32xf32>, vector<32x32xf32>, vector<8x32xf32> -> vector<8x32xf32>
    %c9_229 = arith.constant 9 : index
    %c0_230 = arith.constant 0 : index
    %c0_231 = arith.constant 0 : index
    %396 = vector.load %arg14[%c9_229, %c0_230, %c0_231] : memref<12x1x32xf32, #tpu.memory_space<vmem>>, vector<1x1x32xf32>
    %397 = vector.shape_cast %396 : vector<1x1x32xf32> to vector<1x32xf32>
    %398 = vector.broadcast %397 : vector<1x32xf32> to vector<8x32xf32>
    %399 = arith.addf %395, %398 : vector<8x32xf32>
    %400 = math.tanh %399 : vector<8x32xf32>
    %c9_232 = arith.constant 9 : index
    %c0_233 = arith.constant 0 : index
    %c0_234 = arith.constant 0 : index
    %401 = vector.load %arg15[%c9_232, %c0_233, %c0_234] : memref<12x32x8xf32, #tpu.memory_space<vmem>>, vector<1x32x8xf32>
    %402 = vector.shape_cast %401 : vector<1x32x8xf32> to vector<32x8xf32>
    %cst_235 = arith.constant dense<0.000000e+00> : vector<8x8xf32>
    %403 = tpu.matmul %400, %402, %cst_235 {dimension_numbers = #tpu.dot_dimension_numbers<[1], [0], [0], [1], [0, 0, 1, 1], [], []>} : vector<8x32xf32>, vector<32x8xf32>, vector<8x8xf32> -> vector<8x8xf32>
    %c9_236 = arith.constant 9 : index
    %c0_237 = arith.constant 0 : index
    %c0_238 = arith.constant 0 : index
    %404 = vector.load %arg16[%c9_236, %c0_237, %c0_238] : memref<12x1x8xf32, #tpu.memory_space<vmem>>, vector<1x1x8xf32>
    %405 = vector.shape_cast %404 : vector<1x1x8xf32> to vector<1x8xf32>
    %406 = vector.broadcast %405 : vector<1x8xf32> to vector<8x8xf32>
    %407 = arith.addf %403, %406 : vector<8x8xf32>
    %408 = vector.extract_strided_slice %16 {offsets = [0, 320], sizes = [8, 32], strides = [1, 1]} : vector<8x384xf32> to vector<8x32xf32>
    %409 = vector.extract_strided_slice %20 {offsets = [0, 10], sizes = [8, 1], strides = [1, 1]} : vector<8x12xf32> to vector<8x1xf32>
    %410 = vector.extract_strided_slice %24 {offsets = [0, 320], sizes = [8, 32], strides = [1, 1]} : vector<8x384xf32> to vector<8x32xf32>
    %cst_239 = arith.constant dense<0.000000e+00> : vector<8x8xf32>
    %411 = tpu.matmul %408, %6, %cst_239 {dimension_numbers = #tpu.dot_dimension_numbers<[1], [1], [0], [0], [0, 0, 1, 0], [], []>} : vector<8x32xf32>, vector<8x32xf32>, vector<8x8xf32> -> vector<8x8xf32>
    %412 = vector.broadcast %409 : vector<8x1xf32> to vector<8x8xf32>
    %413 = arith.addf %411, %412 : vector<8x8xf32>
    %cst_240 = arith.constant -1.000000e+02 : f32
    %414 = vector.shape_cast %27 : vector<1x8xi1> to vector<1x8xi1>
    %415 = vector.broadcast %414 : vector<1x8xi1> to vector<8x8xi1>
    %416 = vector.broadcast %cst_240 : f32 to vector<8x8xf32>
    %417 = arith.select %415, %416, %413 : vector<8x8xi1>, vector<8x8xf32>
    %cst_241 = arith.constant dense<0xFF800000> : vector<8xf32>
    %418 = vector.multi_reduction <maximumf>, %417, %cst_241 [1] : vector<8x8xf32> to vector<8xf32>
    %419 = vector.shape_cast %418 : vector<8xf32> to vector<8x1xf32>
    %420 = vector.broadcast %419 : vector<8x1xf32> to vector<8x8xf32>
    %421 = arith.subf %417, %420 : vector<8x8xf32>
    %422 = math.exp %421 : vector<8x8xf32>
    %cst_242 = arith.constant dense<0.000000e+00> : vector<8xf32>
    %423 = vector.multi_reduction <add>, %422, %cst_242 [1] : vector<8x8xf32> to vector<8xf32>
    %424 = vector.shape_cast %423 : vector<8xf32> to vector<8x1xf32>
    %425 = vector.broadcast %424 : vector<8x1xf32> to vector<8x8xf32>
    %426 = arith.divf %422, %425 : vector<8x8xf32>
    %cst_243 = arith.constant dense<0.000000e+00> : vector<8x32xf32>
    %427 = tpu.matmul %426, %6, %cst_243 {dimension_numbers = #tpu.dot_dimension_numbers<[1], [0], [0], [1], [0, 0, 1, 1], [], []>} : vector<8x8xf32>, vector<8x32xf32>, vector<8x32xf32> -> vector<8x32xf32>
    %c10 = arith.constant 10 : index
    %c0_244 = arith.constant 0 : index
    %c0_245 = arith.constant 0 : index
    %428 = vector.load %arg11[%c10, %c0_244, %c0_245] : memref<12x32x32xf32, #tpu.memory_space<vmem>>, vector<1x32x32xf32>
    %429 = vector.shape_cast %428 : vector<1x32x32xf32> to vector<32x32xf32>
    %cst_246 = arith.constant dense<0.000000e+00> : vector<8x32xf32>
    %430 = tpu.matmul %427, %429, %cst_246 {dimension_numbers = #tpu.dot_dimension_numbers<[1], [0], [0], [1], [0, 0, 1, 1], [], []>} : vector<8x32xf32>, vector<32x32xf32>, vector<8x32xf32> -> vector<8x32xf32>
    %431 = arith.addf %430, %410 : vector<8x32xf32>
    %c10_247 = arith.constant 10 : index
    %c0_248 = arith.constant 0 : index
    %c0_249 = arith.constant 0 : index
    %432 = vector.load %arg12[%c10_247, %c0_248, %c0_249] : memref<12x1x32xf32, #tpu.memory_space<vmem>>, vector<1x1x32xf32>
    %433 = vector.shape_cast %432 : vector<1x1x32xf32> to vector<1x32xf32>
    %434 = vector.broadcast %433 : vector<1x32xf32> to vector<8x32xf32>
    %435 = arith.addf %431, %434 : vector<8x32xf32>
    %c10_250 = arith.constant 10 : index
    %c0_251 = arith.constant 0 : index
    %c0_252 = arith.constant 0 : index
    %436 = vector.load %arg13[%c10_250, %c0_251, %c0_252] : memref<12x32x32xf32, #tpu.memory_space<vmem>>, vector<1x32x32xf32>
    %437 = vector.shape_cast %436 : vector<1x32x32xf32> to vector<32x32xf32>
    %cst_253 = arith.constant dense<0.000000e+00> : vector<8x32xf32>
    %438 = tpu.matmul %435, %437, %cst_253 {dimension_numbers = #tpu.dot_dimension_numbers<[1], [0], [0], [1], [0, 0, 1, 1], [], []>} : vector<8x32xf32>, vector<32x32xf32>, vector<8x32xf32> -> vector<8x32xf32>
    %c10_254 = arith.constant 10 : index
    %c0_255 = arith.constant 0 : index
    %c0_256 = arith.constant 0 : index
    %439 = vector.load %arg14[%c10_254, %c0_255, %c0_256] : memref<12x1x32xf32, #tpu.memory_space<vmem>>, vector<1x1x32xf32>
    %440 = vector.shape_cast %439 : vector<1x1x32xf32> to vector<1x32xf32>
    %441 = vector.broadcast %440 : vector<1x32xf32> to vector<8x32xf32>
    %442 = arith.addf %438, %441 : vector<8x32xf32>
    %443 = math.tanh %442 : vector<8x32xf32>
    %c10_257 = arith.constant 10 : index
    %c0_258 = arith.constant 0 : index
    %c0_259 = arith.constant 0 : index
    %444 = vector.load %arg15[%c10_257, %c0_258, %c0_259] : memref<12x32x8xf32, #tpu.memory_space<vmem>>, vector<1x32x8xf32>
    %445 = vector.shape_cast %444 : vector<1x32x8xf32> to vector<32x8xf32>
    %cst_260 = arith.constant dense<0.000000e+00> : vector<8x8xf32>
    %446 = tpu.matmul %443, %445, %cst_260 {dimension_numbers = #tpu.dot_dimension_numbers<[1], [0], [0], [1], [0, 0, 1, 1], [], []>} : vector<8x32xf32>, vector<32x8xf32>, vector<8x8xf32> -> vector<8x8xf32>
    %c10_261 = arith.constant 10 : index
    %c0_262 = arith.constant 0 : index
    %c0_263 = arith.constant 0 : index
    %447 = vector.load %arg16[%c10_261, %c0_262, %c0_263] : memref<12x1x8xf32, #tpu.memory_space<vmem>>, vector<1x1x8xf32>
    %448 = vector.shape_cast %447 : vector<1x1x8xf32> to vector<1x8xf32>
    %449 = vector.broadcast %448 : vector<1x8xf32> to vector<8x8xf32>
    %450 = arith.addf %446, %449 : vector<8x8xf32>
    %451 = vector.extract_strided_slice %14 {offsets = [0, 352], sizes = [8, 32], strides = [1, 1]} : vector<8x384xf32> to vector<8x32xf32>
    %452 = vector.extract_strided_slice %18 {offsets = [0, 11], sizes = [8, 1], strides = [1, 1]} : vector<8x12xf32> to vector<8x1xf32>
    %453 = vector.extract_strided_slice %22 {offsets = [0, 352], sizes = [8, 32], strides = [1, 1]} : vector<8x384xf32> to vector<8x32xf32>
    %cst_264 = arith.constant dense<0.000000e+00> : vector<8x8xf32>
    %454 = tpu.matmul %451, %6, %cst_264 {dimension_numbers = #tpu.dot_dimension_numbers<[1], [1], [0], [0], [0, 0, 1, 0], [], []>} : vector<8x32xf32>, vector<8x32xf32>, vector<8x8xf32> -> vector<8x8xf32>
    %455 = vector.broadcast %452 : vector<8x1xf32> to vector<8x8xf32>
    %456 = arith.addf %454, %455 : vector<8x8xf32>
    %cst_265 = arith.constant -1.000000e+02 : f32
    %457 = vector.shape_cast %27 : vector<1x8xi1> to vector<1x8xi1>
    %458 = vector.broadcast %457 : vector<1x8xi1> to vector<8x8xi1>
    %459 = vector.broadcast %cst_265 : f32 to vector<8x8xf32>
    %460 = arith.select %458, %459, %456 : vector<8x8xi1>, vector<8x8xf32>
    %cst_266 = arith.constant dense<0xFF800000> : vector<8xf32>
    %461 = vector.multi_reduction <maximumf>, %460, %cst_266 [1] : vector<8x8xf32> to vector<8xf32>
    %462 = vector.shape_cast %461 : vector<8xf32> to vector<8x1xf32>
    %463 = vector.broadcast %462 : vector<8x1xf32> to vector<8x8xf32>
    %464 = arith.subf %460, %463 : vector<8x8xf32>
    %465 = math.exp %464 : vector<8x8xf32>
    %cst_267 = arith.constant dense<0.000000e+00> : vector<8xf32>
    %466 = vector.multi_reduction <add>, %465, %cst_267 [1] : vector<8x8xf32> to vector<8xf32>
    %467 = vector.shape_cast %466 : vector<8xf32> to vector<8x1xf32>
    %468 = vector.broadcast %467 : vector<8x1xf32> to vector<8x8xf32>
    %469 = arith.divf %465, %468 : vector<8x8xf32>
    %cst_268 = arith.constant dense<0.000000e+00> : vector<8x32xf32>
    %470 = tpu.matmul %469, %6, %cst_268 {dimension_numbers = #tpu.dot_dimension_numbers<[1], [0], [0], [1], [0, 0, 1, 1], [], []>} : vector<8x8xf32>, vector<8x32xf32>, vector<8x32xf32> -> vector<8x32xf32>
    %c11 = arith.constant 11 : index
    %c0_269 = arith.constant 0 : index
    %c0_270 = arith.constant 0 : index
    %471 = vector.load %arg11[%c11, %c0_269, %c0_270] : memref<12x32x32xf32, #tpu.memory_space<vmem>>, vector<1x32x32xf32>
    %472 = vector.shape_cast %471 : vector<1x32x32xf32> to vector<32x32xf32>
    %cst_271 = arith.constant dense<0.000000e+00> : vector<8x32xf32>
    %473 = tpu.matmul %470, %472, %cst_271 {dimension_numbers = #tpu.dot_dimension_numbers<[1], [0], [0], [1], [0, 0, 1, 1], [], []>} : vector<8x32xf32>, vector<32x32xf32>, vector<8x32xf32> -> vector<8x32xf32>
    %474 = arith.addf %473, %453 : vector<8x32xf32>
    %c11_272 = arith.constant 11 : index
    %c0_273 = arith.constant 0 : index
    %c0_274 = arith.constant 0 : index
    %475 = vector.load %arg12[%c11_272, %c0_273, %c0_274] : memref<12x1x32xf32, #tpu.memory_space<vmem>>, vector<1x1x32xf32>
    %476 = vector.shape_cast %475 : vector<1x1x32xf32> to vector<1x32xf32>
    %477 = vector.broadcast %476 : vector<1x32xf32> to vector<8x32xf32>
    %478 = arith.addf %474, %477 : vector<8x32xf32>
    %479 = vector.broadcast %54 : vector<1x32xf32> to vector<8x32xf32>
    %480 = arith.addf %478, %479 : vector<8x32xf32>
    %cst_275 = arith.constant 0.000000e+00 : f32
    %481 = vector.broadcast %cst_275 : f32 to vector<8x32xf32>
    %482 = arith.maximumf %480, %481 : vector<8x32xf32>
    %c11_276 = arith.constant 11 : index
    %c0_277 = arith.constant 0 : index
    %c0_278 = arith.constant 0 : index
    %483 = vector.load %arg15[%c11_276, %c0_277, %c0_278] : memref<12x32x8xf32, #tpu.memory_space<vmem>>, vector<1x32x8xf32>
    %484 = vector.shape_cast %483 : vector<1x32x8xf32> to vector<32x8xf32>
    %cst_279 = arith.constant dense<0.000000e+00> : vector<8x8xf32>
    %485 = tpu.matmul %482, %484, %cst_279 {dimension_numbers = #tpu.dot_dimension_numbers<[1], [0], [0], [1], [0, 0, 1, 1], [], []>} : vector<8x32xf32>, vector<32x8xf32>, vector<8x8xf32> -> vector<8x8xf32>
    %c11_280 = arith.constant 11 : index
    %c0_281 = arith.constant 0 : index
    %c0_282 = arith.constant 0 : index
    %486 = vector.load %arg16[%c11_280, %c0_281, %c0_282] : memref<12x1x8xf32, #tpu.memory_space<vmem>>, vector<1x1x8xf32>
    %487 = vector.shape_cast %486 : vector<1x1x8xf32> to vector<1x8xf32>
    %488 = vector.broadcast %487 : vector<1x8xf32> to vector<8x8xf32>
    %489 = arith.addf %485, %488 : vector<8x8xf32>
    %cst_283 = arith.constant 0.000000e+00 : f32
    %490 = vector.broadcast %cst_283 : f32 to vector<8x32xf32>
    %491 = tpu.concatenate %84, %114, %144, %174, %213, %249, %285, %321, %364, %407, %450, %489, %490 in 1 : vector<8x8xf32>, vector<8x8xf32>, vector<8x8xf32>, vector<8x8xf32>, vector<8x8xf32>, vector<8x8xf32>, vector<8x8xf32>, vector<8x8xf32>, vector<8x8xf32>, vector<8x8xf32>, vector<8x8xf32>, vector<8x8xf32>, vector<8x32xf32> -> vector<8x128xf32>
    %c0_284 = arith.constant 0 : index
    %c0_285 = arith.constant 0 : index
    %c0_286 = arith.constant 0 : index
    %492 = vector.load %arg20[%c0_284, %c0_285, %c0_286] : memref<1x8x128xf32, #tpu.memory_space<vmem>>, vector<1x8x128xf32>
    %493 = vector.shape_cast %492 : vector<1x8x128xf32> to vector<8x128xf32>
    %494 = vector.shape_cast %491 : vector<8x128xf32> to vector<1x8x128xf32>
    tpu.vector_store %arg20[%c0_284, %c0_285, %c0_286], %494 {strides = array<i32>} : memref<1x8x128xf32, #tpu.memory_space<vmem>>, vector<1x8x128xf32>,
    return
  }
  func.func @transform_0(%arg0: i32, %arg1: memref<2xi32, #tpu.memory_space<smem>>, %arg2: memref<2xi32, #tpu.memory_space<smem>>, %arg3: memref<1xi32, #tpu.memory_space<smem>>) -> (i32, i32, i32) {
    %c0_i32 = arith.constant 0 : i32
    %c0_i32_0 = arith.constant 0 : i32
    %c0_i32_1 = arith.constant 0 : i32
    return %arg0, %c0_i32, %c0_i32_0 : i32, i32, i32
  }
  func.func @transform_1(%arg0: i32, %arg1: memref<2xi32, #tpu.memory_space<smem>>, %arg2: memref<2xi32, #tpu.memory_space<smem>>, %arg3: memref<1xi32, #tpu.memory_space<smem>>) -> (i32, i32, i32) {
    %c0_i32 = arith.constant 0 : i32
    %c0_i32_0 = arith.constant 0 : i32
    %c0_i32_1 = arith.constant 0 : i32
    return %arg0, %c0_i32, %c0_i32_0 : i32, i32, i32
  }
  func.func @transform_2(%arg0: i32, %arg1: memref<2xi32, #tpu.memory_space<smem>>, %arg2: memref<2xi32, #tpu.memory_space<smem>>, %arg3: memref<1xi32, #tpu.memory_space<smem>>) -> (i32, i32, i32) {
    %c0_i32 = arith.constant 0 : i32
    %c0_i32_0 = arith.constant 0 : i32
    %c0_i32_1 = arith.constant 0 : i32
    return %arg0, %c0_i32, %c0_i32_0 : i32, i32, i32
  }
  func.func @transform_3(%arg0: i32, %arg1: memref<2xi32, #tpu.memory_space<smem>>, %arg2: memref<2xi32, #tpu.memory_space<smem>>, %arg3: memref<1xi32, #tpu.memory_space<smem>>) -> (i32, i32, i32) {
    %c0_i32 = arith.constant 0 : i32
    %c0_i32_0 = arith.constant 0 : i32
    %c0_i32_1 = arith.constant 0 : i32
    return %arg0, %c0_i32, %c0_i32_0 : i32, i32, i32
  }
  func.func @transform_4(%arg0: i32, %arg1: memref<2xi32, #tpu.memory_space<smem>>, %arg2: memref<2xi32, #tpu.memory_space<smem>>, %arg3: memref<1xi32, #tpu.memory_space<smem>>) -> (i32, i32) {
    %c0_i32 = arith.constant 0 : i32
    %c0_i32_0 = arith.constant 0 : i32
    %c0_i32_1 = arith.constant 0 : i32
    return %c0_i32, %c0_i32_0 : i32, i32
  }
  func.func @transform_5(%arg0: i32, %arg1: memref<2xi32, #tpu.memory_space<smem>>, %arg2: memref<2xi32, #tpu.memory_space<smem>>, %arg3: memref<1xi32, #tpu.memory_space<smem>>) -> (i32, i32) {
    %c0_i32 = arith.constant 0 : i32
    %c0_i32_0 = arith.constant 0 : i32
    %c0_i32_1 = arith.constant 0 : i32
    return %c0_i32, %c0_i32_0 : i32, i32
  }
  func.func @transform_6(%arg0: i32, %arg1: memref<2xi32, #tpu.memory_space<smem>>, %arg2: memref<2xi32, #tpu.memory_space<smem>>, %arg3: memref<1xi32, #tpu.memory_space<smem>>) -> (i32, i32) {
    %c0_i32 = arith.constant 0 : i32
    %c0_i32_0 = arith.constant 0 : i32
    %c0_i32_1 = arith.constant 0 : i32
    return %c0_i32, %c0_i32_0 : i32, i32
  }
  func.func @transform_7(%arg0: i32, %arg1: memref<2xi32, #tpu.memory_space<smem>>, %arg2: memref<2xi32, #tpu.memory_space<smem>>, %arg3: memref<1xi32, #tpu.memory_space<smem>>) -> (i32, i32, i32) {
    %c0_i32 = arith.constant 0 : i32
    %c0_i32_0 = arith.constant 0 : i32
    %c0_i32_1 = arith.constant 0 : i32
    %c0_i32_2 = arith.constant 0 : i32
    return %c0_i32, %c0_i32_0, %c0_i32_1 : i32, i32, i32
  }
  func.func @transform_8(%arg0: i32, %arg1: memref<2xi32, #tpu.memory_space<smem>>, %arg2: memref<2xi32, #tpu.memory_space<smem>>, %arg3: memref<1xi32, #tpu.memory_space<smem>>) -> (i32, i32, i32) {
    %c0_i32 = arith.constant 0 : i32
    %c0_i32_0 = arith.constant 0 : i32
    %c0_i32_1 = arith.constant 0 : i32
    %c0_i32_2 = arith.constant 0 : i32
    return %c0_i32, %c0_i32_0, %c0_i32_1 : i32, i32, i32
  }
  func.func @transform_9(%arg0: i32, %arg1: memref<2xi32, #tpu.memory_space<smem>>, %arg2: memref<2xi32, #tpu.memory_space<smem>>, %arg3: memref<1xi32, #tpu.memory_space<smem>>) -> (i32, i32, i32) {
    %c0_i32 = arith.constant 0 : i32
    %c0_i32_0 = arith.constant 0 : i32
    %c0_i32_1 = arith.constant 0 : i32
    %c0_i32_2 = arith.constant 0 : i32
    return %c0_i32, %c0_i32_0, %c0_i32_1 : i32, i32, i32
  }
  func.func @transform_10(%arg0: i32, %arg1: memref<2xi32, #tpu.memory_space<smem>>, %arg2: memref<2xi32, #tpu.memory_space<smem>>, %arg3: memref<1xi32, #tpu.memory_space<smem>>) -> (i32, i32, i32) {
    %c0_i32 = arith.constant 0 : i32
    %c0_i32_0 = arith.constant 0 : i32
    %c0_i32_1 = arith.constant 0 : i32
    %c0_i32_2 = arith.constant 0 : i32
    return %c0_i32, %c0_i32_0, %c0_i32_1 : i32, i32, i32
  }
  func.func @transform_11(%arg0: i32, %arg1: memref<2xi32, #tpu.memory_space<smem>>, %arg2: memref<2xi32, #tpu.memory_space<smem>>, %arg3: memref<1xi32, #tpu.memory_space<smem>>) -> (i32, i32, i32) {
    %c0_i32 = arith.constant 0 : i32
    %c0_i32_0 = arith.constant 0 : i32
    %c0_i32_1 = arith.constant 0 : i32
    %c0_i32_2 = arith.constant 0 : i32
    return %c0_i32, %c0_i32_0, %c0_i32_1 : i32, i32, i32
  }
  func.func @transform_12(%arg0: i32, %arg1: memref<2xi32, #tpu.memory_space<smem>>, %arg2: memref<2xi32, #tpu.memory_space<smem>>, %arg3: memref<1xi32, #tpu.memory_space<smem>>) -> (i32, i32, i32) {
    %c0_i32 = arith.constant 0 : i32
    %c0_i32_0 = arith.constant 0 : i32
    %c0_i32_1 = arith.constant 0 : i32
    %c0_i32_2 = arith.constant 0 : i32
    return %c0_i32, %c0_i32_0, %c0_i32_1 : i32, i32, i32
  }
  func.func @transform_13(%arg0: i32, %arg1: memref<2xi32, #tpu.memory_space<smem>>, %arg2: memref<2xi32, #tpu.memory_space<smem>>, %arg3: memref<1xi32, #tpu.memory_space<smem>>) -> (i32, i32) {
    %c0_i32 = arith.constant 0 : i32
    %c0_i32_0 = arith.constant 0 : i32
    %c0_i32_1 = arith.constant 0 : i32
    return %c0_i32, %c0_i32_0 : i32, i32
  }
  func.func @transform_14(%arg0: i32, %arg1: memref<2xi32, #tpu.memory_space<smem>>, %arg2: memref<2xi32, #tpu.memory_space<smem>>, %arg3: memref<1xi32, #tpu.memory_space<smem>>) -> (i32, i32) {
    %c0_i32 = arith.constant 0 : i32
    %c0_i32_0 = arith.constant 0 : i32
    %c0_i32_1 = arith.constant 0 : i32
    return %c0_i32, %c0_i32_0 : i32, i32
  }
  func.func @transform_15(%arg0: i32, %arg1: memref<2xi32, #tpu.memory_space<smem>>, %arg2: memref<2xi32, #tpu.memory_space<smem>>, %arg3: memref<1xi32, #tpu.memory_space<smem>>) -> (i32, i32) {
    %c0_i32 = arith.constant 0 : i32
    %c0_i32_0 = arith.constant 0 : i32
    %c0_i32_1 = arith.constant 0 : i32
    return %c0_i32, %c0_i32_0 : i32, i32
  }
  func.func @transform_16(%arg0: i32, %arg1: memref<2xi32, #tpu.memory_space<smem>>, %arg2: memref<2xi32, #tpu.memory_space<smem>>, %arg3: memref<1xi32, #tpu.memory_space<smem>>) -> (i32, i32, i32) {
    %c0_i32 = arith.constant 0 : i32
    %c0_i32_0 = arith.constant 0 : i32
    %c0_i32_1 = arith.constant 0 : i32
    return %arg0, %c0_i32, %c0_i32_0 : i32, i32, i32
  }
}

</mosaic_0001>

<llo_original>
// kernel: forward.5
$region0: #{forward.5}
  #allocation0 [shape = 'u32[]', space=smem, size = 0x4, offset = 0x4, fixed_abs, tag = 'smem constant byte address 0x4 - core index']
  #allocation1 [shape = 'u32[144,128]{1,0:T(1,128)}', space=vmem, size = 0x12000, scoped, tag = 'internal scratch']
  #allocation2 [shape = 'f32[2,32]{1,0:T(2,128)}', space=vmem, size = 0x400, scoped, tag = 'scratch operand']
  #allocation3 [shape = 'f32[2,32]{1,0:T(2,128)}', space=vmem, size = 0x400, scoped, tag = 'scratch operand']
  %s0 = inlined_call_operand.vmem [shape: f32[5,2,128], index: 0, kind: input, shape index: {}]
  %s1 = inlined_call_operand.vmem [shape: f32[5,2,1], index: 1, kind: input, shape index: {}]
  %s2 = inlined_call_operand.vmem [shape: f32[32,128], index: 2, kind: input, shape index: {}]
  %s3 = inlined_call_operand.vmem [shape: f32[5,2,32], index: 3, kind: output, shape index: {}]
  %s4 = sld [smem:[#allocation0]]
  $region49: #{forward.5} parent=0
    _
  %s6 = ssub.s32 1, %s4
  %s7 = scalar_select 0, %s6, %s4
  loop: start=0, step=1, limit=7
  $region2: #{forward.5} parent=0 // loop_pre_header
    _
  $region3: #{forward.5} parent=0 // loop_header
    %s9 = sphi 0, %s13
    %p10 = scmp.ge.s32.totalorder %s9, 7
    %s19 = sphi 0, %s21
    %s22 = sphi 0, %s19
    %s23 = sphi 0, %s22
    %s39 = sphi 0, %s23
    %s45 = sphi 0, %s47
    %s48 = sphi 0, %s45
    %s49 = sphi 0, %s48
    %s65 = sphi 0, %s49
    %s69 = sphi 0, %s69
    %s71 = sphi 0, %s69
    %s72 = sphi 0, %s71
    %s86 = sphi 0, %s72
    %s92 = sphi 0, %s94
    %s95 = sphi 0, %s92
    %s96 = sphi 0, %s95
    %s112 = sphi 0, %s96
  $region4: #{forward.5} parent=0 // loop_header_branch
    %12 = sbr.rel (%p10) target = $region8
  $region5: #{forward.5} parent=0 // loop_body
    %s14 = ssub.s32 %s9, 1
    %s15 = ssub.s32 %s9, 2
    %s16 = sadd.s32 %s9, 1
    %s17 = ssub.s32 %s9, %s16
    %p18 = scmp.eq.s32.totalorder %s17, 0
    %s20 = sadd.s32 %s19, 1
    %s21 = scalar_select %p18, %s19, %s20
    %p24 = pneg %p18
    %p25 = scmp.eq.s32.totalorder %s9, 4
    %p26 = por %p24, %p25
    %p27 = scmp.ne.s32.totalorder %s19, %s22
    %p28 = scmp.eq.s32.totalorder %s9, 0
    %p29 = por %p27, %p28
    %p30 = scmp.ne.s32.totalorder %s19, %s22
    %p31 = scmp.eq.s32.totalorder %s14, 4
    %p32 = por %p30, %p31
    %p33 = scmp.ne.s32.totalorder %s22, %s23
    %p34 = scmp.eq.s32.totalorder %s14, 0
    %p35 = por %p33, %p34
    %p36 = scmp.ne.s32.totalorder %s22, %s23
    %p37 = scmp.eq.s32.totalorder %s15, 4
    %p38 = por %p36, %p37
    %p40 = scmp.ne.s32.totalorder %s23, %s39
    %p41 = scmp.eq.s32.totalorder %s15, 0
    %p42 = por %p40, %p41
    %s43 = ssub.s32 %s9, %s16
    %p44 = scmp.eq.s32.totalorder %s43, 0
    %s46 = sadd.s32 %s45, 1
    %s47 = scalar_select %p44, %s45, %s46
    %p50 = pneg %p44
    %p51 = scmp.eq.s32.totalorder %s9, 4
    %p52 = por %p50, %p51
    %p53 = scmp.ne.s32.totalorder %s45, %s48
    %p54 = scmp.eq.s32.totalorder %s9, 0
    %p55 = por %p53, %p54
    %p56 = scmp.ne.s32.totalorder %s45, %s48
    %p57 = scmp.eq.s32.totalorder %s14, 4
    %p58 = por %p56, %p57
    %p59 = scmp.ne.s32.totalorder %s48, %s49
    %p60 = scmp.eq.s32.totalorder %s14, 0
    %p61 = por %p59, %p60
    %p62 = scmp.ne.s32.totalorder %s48, %s49
    %p63 = scmp.eq.s32.totalorder %s15, 4
    %p64 = por %p62, %p63
    %p66 = scmp.ne.s32.totalorder %s49, %s65
    %p67 = scmp.eq.s32.totalorder %s15, 0
    %p68 = por %p66, %p67
    %s70 = sadd.s32 %s69, 1
    %p73 = scmp.eq.s32.totalorder %s9, 4
    %p74 = scmp.ne.s32.totalorder %s69, %s71
    %p75 = scmp.eq.s32.totalorder %s9, 0
    %p76 = por %p74, %p75
    %p77 = scmp.ne.s32.totalorder %s69, %s71
    %p78 = scmp.eq.s32.totalorder %s14, 4
    %p79 = por %p77, %p78
    %p80 = scmp.ne.s32.totalorder %s71, %s72
    %p81 = scmp.eq.s32.totalorder %s14, 0
    %p82 = por %p80, %p81
    %p83 = scmp.ne.s32.totalorder %s71, %s72
    %p84 = scmp.eq.s32.totalorder %s15, 4
    %p85 = por %p83, %p84
    %p87 = scmp.ne.s32.totalorder %s72, %s86
    %p88 = scmp.eq.s32.totalorder %s15, 0
    %p89 = por %p87, %p88
    %s90 = ssub.s32 %s9, %s16
    %p91 = scmp.eq.s32.totalorder %s90, 0
    %s93 = sadd.s32 %s92, 1
    %s94 = scalar_select %p91, %s92, %s93
    %p97 = pneg %p91
    %p98 = scmp.eq.s32.totalorder %s9, 4
    %p99 = por %p97, %p98
    %p100 = scmp.ne.s32.totalorder %s92, %s95
    %p101 = scmp.eq.s32.totalorder %s9, 0
    %p102 = por %p100, %p101
    %p103 = scmp.ne.s32.totalorder %s92, %s95
    %p104 = scmp.eq.s32.totalorder %s14, 4
    %p105 = por %p103, %p104
    %p106 = scmp.ne.s32.totalorder %s95, %s96
    %p107 = scmp.eq.s32.totalorder %s14, 0
    %p108 = por %p106, %p107
    %p109 = scmp.ne.s32.totalorder %s95, %s96
    %p110 = scmp.eq.s32.totalorder %s15, 4
    %p111 = por %p109, %p110
    %p113 = scmp.ne.s32.totalorder %s96, %s112
    %p114 = scmp.eq.s32.totalorder %s15, 0
    %p115 = por %p113, %p114
    %p116 = scmp.le.s32.totalorder 1, %s9
    %p117 = scmp.lt.s32.totalorder %s9, 6
    %p118 = pnand %p116, %p117
    %p119 = pneg %p118
    // Predicated region
    $region9: #{forward.5} parent=5 // pred_check
      _
    $region10: #{forward.5} parent=5 // pred_check_branch
      %121 = sbr.rel (%p118) target = $region12
    $region11: #{forward.5} parent=5 // pred_region
      %s122 = ssub.s32 %s9, 1
      // Predicated region
      $region13: #{forward.5} parent=11 // pred_check
        %p123 = pneg %p82
      $region14: #{forward.5} parent=11 // pred_check_branch
        %125 = sbr.rel (%p123) target = $region16
      $region15: #{forward.5} parent=11 // pred_region
        _
      $region16: #{forward.5} parent=11 // pred_fallthru
        _
    $region12: #{forward.5} parent=5 // pred_fallthru
      _
    %p126 = scmp.lt.s32.totalorder %s9, 5
    // Predicated region
    $region17: #{forward.5} parent=5 // pred_check
      %p127 = pneg %p126
    $region18: #{forward.5} parent=5 // pred_check_branch
      %129 = sbr.rel (%p127) target = $region20
    $region19: #{forward.5} parent=5 // pred_region
      // Predicated region
      $region21: #{forward.5} parent=19 // pred_check
        %p130 = pneg %p29
      $region22: #{forward.5} parent=19 // pred_check_branch
        %132 = sbr.rel (%p130) target = $region24
      $region23: #{forward.5} parent=19 // pred_region
        %p133 = scmp.lt.s32.totalorder %s9, 4
        %s134 = scalar_select %p133, %s9, 4
        %s135 = smul.addr %s134, 2
        %s136 = scalar_lea.vmem %s0, %s135
      $region24: #{forward.5} parent=19 // pred_fallthru
        _
      // Predicated region
      $region25: #{forward.5} parent=19 // pred_check
        %p137 = pneg %p55
      $region26: #{forward.5} parent=19 // pred_check_branch
        %139 = sbr.rel (%p137) target = $region28
      $region27: #{forward.5} parent=19 // pred_region
        %p140 = scmp.lt.s32.totalorder %s9, 4
        %s141 = scalar_select %p140, %s9, 4
        %s142 = smul.addr %s141, 2
        %s143 = scalar_lea.vmem %s1, %s142
      $region28: #{forward.5} parent=19 // pred_fallthru
        _
    $region20: #{forward.5} parent=5 // pred_fallthru
      _
    %p144 = scmp.le.s32.totalorder 1, %s9
    %p145 = scmp.lt.s32.totalorder %s9, 6
    %p146 = pnand %p144, %p145
    %p147 = pneg %p146
    // Predicated region
    $region29: #{forward.5} parent=5 // pred_check
      _
    $region30: #{forward.5} parent=5 // pred_check_branch
      %149 = sbr.rel (%p146) target = $region32
    $region31: #{forward.5} parent=5 // pred_region
      %s150 = ssub.s32 %s9, 1
      %p151 = scmp.lt.s32.totalorder %s14, 4
      %s152 = scalar_select %p151, %s14, 4
      %s153 = smul.addr %s152, 2
      %s154 = scalar_lea.vmem %s0, %s153
      %p155 = pneg %p35
      %p156 = pneg %p32
      %p157 = scmp.lt.s32.totalorder %s14, 4
      %s158 = scalar_select %p157, %s14, 4
      %s159 = smul.addr %s158, 2
      %s160 = scalar_lea.vmem %s1, %s159
      %p161 = pneg %p61
      %p162 = pneg %p58
      %p163 = pneg %p82
      %p164 = pneg %p79
      %p165 = pneg %p108
      %p166 = pneg %p105
      %p167 = scmp.lt.s32.totalorder %s14, 4
      %s168 = scalar_select %p167, %s14, 4
      %s169 = smul.addr %s168, 2
      %s170 = scalar_lea.vmem %s3, %s169
      %p171 = scmp.lt.s32.totalorder %s14, 4
      %s172 = scalar_select %p171, %s14, 4
      %s173 = smul.addr %s172, 2
      %s174 = scalar_lea.vmem %s0, %s173
      %p175 = scmp.lt.s32.totalorder %s14, 4
      %s176 = scalar_select %p175, %s14, 4
      %s177 = smul.addr %s176, 2
      %s178 = scalar_lea.vmem %s1, %s177
      %p179 = scmp.lt.s32.totalorder %s14, 4
      %s180 = scalar_select %p179, %s14, 4
      %s181 = smul.addr %s180, 2
      %s182 = scalar_lea.vmem %s3, %s181
      %p183 = scmp.eq.s32.totalorder %s14, 0
      // Predicated region
      $region33: #{forward.5} parent=31 // pred_check
        %p184 = pneg %p183
      $region34: #{forward.5} parent=31 // pred_check_branch
        %186 = sbr.rel (%p184) target = $region36
      $region35: #{forward.5} parent=31 // pred_region
        %vm187 = vcmask 254976
        %188 = vst.msk [vmem:[#allocation2] sm:$0x3] %vm187, 0.0
        %189 = vst.msk [vmem:[#allocation3] sm:$0x3] %vm187, 0.0
      $region36: #{forward.5} parent=31 // pred_fallthru
        _
      %v190 = vld [vmem:[%s174] sm:$0x3]
      %v191 = vld [vmem:[%s178] sm:$0x3]
      %v192 = vld [vmem:[#allocation2] sm:$0x3]
      %v193 = vld [vmem:[#allocation3] sm:$0x3]
      %v194 = vld [vmem:[%s2] sm:$0xff]
      %v195 = vld [vmem:[%s2 + $0x8] sm:$0xff]
      %v196 = vld [vmem:[%s2 + $0x10] sm:$0xff]
      %v197 = vld [vmem:[%s2 + $0x18] sm:$0xff]
      %vm198 = vcmask 261120
      %v200 = vsel %vm198, %v192, 0
      %202 = vmatprep.subr.mxu0 0.0
      %203 = vmatpush1.msra.mxu0 0.0
      %204 = vmatprep.subr.mxu0 0.0
      %205 = vmatpush1.msra.mxu0 0.0
      %206 = vmatprep.subr.mxu0 0.0
      %207 = vmatpush1.msra.mxu0 0.0
      %208 = vmatprep.subr.mxu0 0.0
      %209 = vmatpush1.msra.mxu0 0.0
      %210 = vmatprep.subr.mxu0 0.0
      %211 = vmatpush1.msra.mxu0 0.0
      %212 = vmatprep.subr.mxu0 0.0
      %213 = vmatpush1.msra.mxu0 0.0
      %214 = vmatprep.subr.mxu0 0.0
      %215 = vmatpush1.msra.mxu0 0.0
      %216 = vmatprep.subr.mxu0 0.0
      %217 = vmatpush1.msra.mxu0 0.0
      %218 = vmatprep.subr.mxu0 0.0
      %219 = vmatpush1.msra.mxu0 0.0
      %220 = vmatprep.subr.mxu0 0.0
      %221 = vmatpush1.msra.mxu0 0.0
      %222 = vmatprep.subr.mxu0 0.0
      %223 = vmatpush1.msra.mxu0 0.0
      %224 = vmatprep.subr.mxu0 0.0
      %225 = vmatpush1.msra.mxu0 0.0
      %226 = vmatprep.subr.mxu0 0.0
      %227 = vmatpush1.msra.mxu0 %v197
      %228 = vmatprep.subr.mxu0 0.0
      %229 = vmatpush1.msra.mxu0 %v196
      %230 = vmatprep.subr.mxu0 0.0
      %231 = vmatpush1.msra.mxu0 %v195
      %232 = vmatprep.subr.mxu0 0.0
      %233 = vmatpush1.msra.mxu0 %v194
      %234 = vmatprep.subr.mxu0 0.0
      %235 = vmatpush2.msra.mxu0 0.0
      %236 = vmatprep.subr.mxu0 0.0
      %237 = vmatpush2.msra.mxu0 0.0
      %238 = vmatprep.subr.mxu0 0.0
      %239 = vmatpush2.msra.mxu0 0.0
      %240 = vmatprep.subr.mxu0 0.0
      %241 = vmatpush2.msra.mxu0 0.0
      %242 = vmatprep.subr.mxu0 0.0
      %243 = vmatpush2.msra.mxu0 0.0
      %244 = vmatprep.subr.mxu0 0.0
      %245 = vmatpush2.msra.mxu0 0.0
      %246 = vmatprep.subr.mxu0 0.0
      %247 = vmatpush2.msra.mxu0 0.0
      %248 = vmatprep.subr.mxu0 0.0
      %249 = vmatpush2.msra.mxu0 0.0
      %250 = vmatprep.subr.mxu0 0.0
      %251 = vmatpush2.msra.mxu0 0.0
      %252 = vmatprep.subr.mxu0 0.0
      %253 = vmatpush2.msra.mxu0 0.0
      %254 = vmatprep.subr.mxu0 0.0
      %255 = vmatpush2.msra.mxu0 0.0
      %256 = vmatprep.subr.mxu0 0.0
      %257 = vmatpush2.msra.mxu0 0.0
      %258 = vmatprep.subr.mxu0 0.0
      %259 = vmatpush2.msra.mxu0 0.0
      %260 = vmatprep.subr.mxu0 0.0
      %261 = vmatpush2.msra.mxu0 0.0
      %262 = vmatprep.subr.mxu0 0.0
      %263 = vmatpush2.msra.mxu0 0.0
      %264 = vmatprep.subr.mxu0 0.0
      %265 = vmatpush2.msra.mxu0 0.0
      %266 = vmatprep.mubr.f32.mxu0 0.0
      %267 = vmatmul.mubr.f32.gmra.mxu0 %v200
      %v268 = vpop.f32.mrf.mxu0
      %v269 = vadd.f32 0.0, %v268
      %v270 = vpop.f32.mrf.mxu0
      %271 = vdwg.mxu0
      %v272 = vadd.f32 %v190, %v269
      %v273 = vsub.f32 0.0, %v272
      %v274 = vmul.f32 %v273, 1.442695
      %v275 = vpow.pop %v274
      %v276 = vadd.f32 %v275, 1.0
      %v277 = vrcp.pop %v276
      %v278 = vmul.f32 1.0, %v277
      %v279 = vtanh.pop %v272
      %281 = vrot.lane.b32.xlu0 %v193, 16
      %v282 = vpop.permute.xlu0 %281
      %v284 = vmul.f32 %v278, %v282
      %286 = vrot.lane.b32.xlu0 %v279, 96
      %v287 = vpop.permute.xlu0 %286
      %v289 = vmul.f32 %v278, %v287
      %291 = vrot.lane.b32.xlu0 %v289, 16
      %v292 = vpop.permute.xlu0 %291
      %v294 = vadd.f32 %v284, %v292
      %v295 = vtanh.pop %v294
      %297 = vrot.lane.b32.xlu0 %v295, 32
      %v298 = vpop.permute.xlu0 %297
      %v300 = vmul.f32 %v278, %v298
      %301 = vrot.lane.b32.xlu0 %v193, 64
      %v302 = vpop.permute.xlu0 %301
      %v304 = vmul.f32 %v278, %v302
      %v305 = vadd.f32 %v304, %v292
      %v306 = vtanh.pop %v305
      %308 = vrot.lane.b32.xlu0 %v306, 32
      %v309 = vpop.permute.xlu0 %308
      %v311 = vmul.f32 %v278, %v309
      %313 = vrot.lane.b32.xlu0 %v300, 80
      %v314 = vpop.permute.xlu0 %313
      %317 = vrot.lane.b32.xlu0 %v311, 32
      %v318 = vpop.permute.xlu0 %317
      %vm320 = vcmask 130048
      %v321 = vsel %vm320, %v314, %v318
      %323 = vrot.lane.b32.xlu0 %v294, 112
      %v324 = vpop.permute.xlu0 %323
      %327 = vrot.lane.b32.xlu0 %v305, 64
      %v328 = vpop.permute.xlu0 %327
      %v330 = vsel %vm320, %v324, %v328
      %332 = vset.pattern.permute.xlu0 0
      %333 = vperm.xlu0 %332, %v191
      %v334 = vpop.permute.xlu0 %333
      %v336 = vmul.f32 %v334, %v321
      %v337 = vsub.f32 1.0, %v191
      %339 = vset.pattern.permute.xlu0 0
      %340 = vperm.xlu0 %339, %v337
      %v341 = vpop.permute.xlu0 %340
      %v343 = vmul.f32 %v341, %v192
      %v344 = vadd.f32 %v336, %v343
      %vm345 = vcmask 254976
      %346 = vst.msk [vmem:[#allocation2] sm:$0x3] %vm345, %v344
      %v347 = vmul.f32 %v334, %v330
      %v348 = vmul.f32 %v341, %v193
      %v349 = vadd.f32 %v347, %v348
      %350 = vst.msk [vmem:[#allocation3] sm:$0x3] %vm345, %v349
      %351 = vst.msk [vmem:[%s182] sm:$0x3] %vm345, %v336
      %p352 = scmp.lt.s32.totalorder %s14, 4
      %s353 = scalar_select %p352, %s14, 4
      %s354 = smul.addr %s353, 2
      %s355 = scalar_lea.vmem %s3, %s354
      // Predicated region
      $region37: #{forward.5} parent=31 // pred_check
        %p356 = pneg %p105
      $region38: #{forward.5} parent=31 // pred_check_branch
        %358 = sbr.rel (%p356) target = $region40
      $region39: #{forward.5} parent=31 // pred_region
        _
      $region40: #{forward.5} parent=31 // pred_fallthru
        _
    $region32: #{forward.5} parent=5 // pred_fallthru
      _
    %p359 = scmp.le.s32.totalorder 2, %s9
    // Predicated region
    $region41: #{forward.5} parent=5 // pred_check
      %p360 = pneg %p359
    $region42: #{forward.5} parent=5 // pred_check_branch
      %362 = sbr.rel (%p360) target = $region44
    $region43: #{forward.5} parent=5 // pred_region
      %s363 = ssub.s32 %s9, 2
      // Predicated region
      $region45: #{forward.5} parent=43 // pred_check
        %p364 = pneg %p111
      $region46: #{forward.5} parent=43 // pred_check_branch
        %366 = sbr.rel (%p364) target = $region48
      $region47: #{forward.5} parent=43 // pred_region
        %p367 = scmp.lt.s32.totalorder %s15, 4
        %s368 = scalar_select %p367, %s15, 4
        %s369 = smul.addr %s368, 2
        %s370 = scalar_lea.vmem %s3, %s369
      $region48: #{forward.5} parent=43 // pred_fallthru
        _
    $region44: #{forward.5} parent=5 // pred_fallthru
      _
  $region6: #{forward.5} parent=0 // loop_footer
    %s13 = sadd.s32 1, %s9
  $region7: #{forward.5} parent=0 // loop_footer_branch
    %8 = sbr.rel target = $region3
  $region8: #{forward.5} parent=0 // loop_exit
    _

// kernel: forward.7
$region0: #{forward.7}
  #allocation0 [shape = 'u32[]', space=smem, size = 0x4, offset = 0x4, fixed_abs, tag = 'smem constant byte address 0x4 - core index']
  #allocation1 [shape = 'u32[144,128]{1,0:T(1,128)}', space=vmem, size = 0x12000, scoped, tag = 'internal scratch']
  #allocation2 [shape = 'f32[2,32]{1,0:T(2,128)}', space=vmem, size = 0x400, scoped, tag = 'scratch operand']
  #allocation3 [shape = 'f32[2,32]{1,0:T(2,128)}', space=vmem, size = 0x400, scoped, tag = 'scratch operand']
  %s0 = inlined_call_operand.vmem [shape: f32[8,2,128], index: 0, kind: input, shape index: {}]
  %s1 = inlined_call_operand.vmem [shape: f32[8,2,1], index: 1, kind: input, shape index: {}]
  %s2 = inlined_call_operand.vmem [shape: f32[32,128], index: 2, kind: input, shape index: {}]
  %s3 = inlined_call_operand.vmem [shape: f32[8,2,32], index: 3, kind: output, shape index: {}]
  %s4 = sld [smem:[#allocation0]]
  $region49: #{forward.7} parent=0
    _
  %s6 = ssub.s32 1, %s4
  %s7 = scalar_select 0, %s6, %s4
  loop: start=0, step=1, limit=10
  $region2: #{forward.7} parent=0 // loop_pre_header
    _
  $region3: #{forward.7} parent=0 // loop_header
    %s9 = sphi 0, %s13
    %p10 = scmp.ge.s32.totalorder %s9, 10
    %s19 = sphi 0, %s21
    %s22 = sphi 0, %s19
    %s23 = sphi 0, %s22
    %s39 = sphi 0, %s23
    %s45 = sphi 0, %s47
    %s48 = sphi 0, %s45
    %s49 = sphi 0, %s48
    %s65 = sphi 0, %s49
    %s69 = sphi 0, %s69
    %s71 = sphi 0, %s69
    %s72 = sphi 0, %s71
    %s86 = sphi 0, %s72
    %s92 = sphi 0, %s94
    %s95 = sphi 0, %s92
    %s96 = sphi 0, %s95
    %s112 = sphi 0, %s96
  $region4: #{forward.7} parent=0 // loop_header_branch
    %12 = sbr.rel (%p10) target = $region8
  $region5: #{forward.7} parent=0 // loop_body
    %s14 = ssub.s32 %s9, 1
    %s15 = ssub.s32 %s9, 2
    %s16 = sadd.s32 %s9, 1
    %s17 = ssub.s32 %s9, %s16
    %p18 = scmp.eq.s32.totalorder %s17, 0
    %s20 = sadd.s32 %s19, 1
    %s21 = scalar_select %p18, %s19, %s20
    %p24 = pneg %p18
    %p25 = scmp.eq.s32.totalorder %s9, 7
    %p26 = por %p24, %p25
    %p27 = scmp.ne.s32.totalorder %s19, %s22
    %p28 = scmp.eq.s32.totalorder %s9, 0
    %p29 = por %p27, %p28
    %p30 = scmp.ne.s32.totalorder %s19, %s22
    %p31 = scmp.eq.s32.totalorder %s14, 7
    %p32 = por %p30, %p31
    %p33 = scmp.ne.s32.totalorder %s22, %s23
    %p34 = scmp.eq.s32.totalorder %s14, 0
    %p35 = por %p33, %p34
    %p36 = scmp.ne.s32.totalorder %s22, %s23
    %p37 = scmp.eq.s32.totalorder %s15, 7
    %p38 = por %p36, %p37
    %p40 = scmp.ne.s32.totalorder %s23, %s39
    %p41 = scmp.eq.s32.totalorder %s15, 0
    %p42 = por %p40, %p41
    %s43 = ssub.s32 %s9, %s16
    %p44 = scmp.eq.s32.totalorder %s43, 0
    %s46 = sadd.s32 %s45, 1
    %s47 = scalar_select %p44, %s45, %s46
    %p50 = pneg %p44
    %p51 = scmp.eq.s32.totalorder %s9, 7
    %p52 = por %p50, %p51
    %p53 = scmp.ne.s32.totalorder %s45, %s48
    %p54 = scmp.eq.s32.totalorder %s9, 0
    %p55 = por %p53, %p54
    %p56 = scmp.ne.s32.totalorder %s45, %s48
    %p57 = scmp.eq.s32.totalorder %s14, 7
    %p58 = por %p56, %p57
    %p59 = scmp.ne.s32.totalorder %s48, %s49
    %p60 = scmp.eq.s32.totalorder %s14, 0
    %p61 = por %p59, %p60
    %p62 = scmp.ne.s32.totalorder %s48, %s49
    %p63 = scmp.eq.s32.totalorder %s15, 7
    %p64 = por %p62, %p63
    %p66 = scmp.ne.s32.totalorder %s49, %s65
    %p67 = scmp.eq.s32.totalorder %s15, 0
    %p68 = por %p66, %p67
    %s70 = sadd.s32 %s69, 1
    %p73 = scmp.eq.s32.totalorder %s9, 7
    %p74 = scmp.ne.s32.totalorder %s69, %s71
    %p75 = scmp.eq.s32.totalorder %s9, 0
    %p76 = por %p74, %p75
    %p77 = scmp.ne.s32.totalorder %s69, %s71
    %p78 = scmp.eq.s32.totalorder %s14, 7
    %p79 = por %p77, %p78
    %p80 = scmp.ne.s32.totalorder %s71, %s72
    %p81 = scmp.eq.s32.totalorder %s14, 0
    %p82 = por %p80, %p81
    %p83 = scmp.ne.s32.totalorder %s71, %s72
    %p84 = scmp.eq.s32.totalorder %s15, 7
    %p85 = por %p83, %p84
    %p87 = scmp.ne.s32.totalorder %s72, %s86
    %p88 = scmp.eq.s32.totalorder %s15, 0
    %p89 = por %p87, %p88
    %s90 = ssub.s32 %s9, %s16
    %p91 = scmp.eq.s32.totalorder %s90, 0
    %s93 = sadd.s32 %s92, 1
    %s94 = scalar_select %p91, %s92, %s93
    %p97 = pneg %p91
    %p98 = scmp.eq.s32.totalorder %s9, 7
    %p99 = por %p97, %p98
    %p100 = scmp.ne.s32.totalorder %s92, %s95
    %p101 = scmp.eq.s32.totalorder %s9, 0
    %p102 = por %p100, %p101
    %p103 = scmp.ne.s32.totalorder %s92, %s95
    %p104 = scmp.eq.s32.totalorder %s14, 7
    %p105 = por %p103, %p104
    %p106 = scmp.ne.s32.totalorder %s95, %s96
    %p107 = scmp.eq.s32.totalorder %s14, 0
    %p108 = por %p106, %p107
    %p109 = scmp.ne.s32.totalorder %s95, %s96
    %p110 = scmp.eq.s32.totalorder %s15, 7
    %p111 = por %p109, %p110
    %p113 = scmp.ne.s32.totalorder %s96, %s112
    %p114 = scmp.eq.s32.totalorder %s15, 0
    %p115 = por %p113, %p114
    %p116 = scmp.le.s32.totalorder 1, %s9
    %p117 = scmp.lt.s32.totalorder %s9, 9
    %p118 = pnand %p116, %p117
    %p119 = pneg %p118
    // Predicated region
    $region9: #{forward.7} parent=5 // pred_check
      _
    $region10: #{forward.7} parent=5 // pred_check_branch
      %121 = sbr.rel (%p118) target = $region12
    $region11: #{forward.7} parent=5 // pred_region
      %s122 = ssub.s32 %s9, 1
      // Predicated region
      $region13: #{forward.7} parent=11 // pred_check
        %p123 = pneg %p82
      $region14: #{forward.7} parent=11 // pred_check_branch
        %125 = sbr.rel (%p123) target = $region16
      $region15: #{forward.7} parent=11 // pred_region
        _
      $region16: #{forward.7} parent=11 // pred_fallthru
        _
    $region12: #{forward.7} parent=5 // pred_fallthru
      _
    %p126 = scmp.lt.s32.totalorder %s9, 8
    // Predicated region
    $region17: #{forward.7} parent=5 // pred_check
      %p127 = pneg %p126
    $region18: #{forward.7} parent=5 // pred_check_branch
      %129 = sbr.rel (%p127) target = $region20
    $region19: #{forward.7} parent=5 // pred_region
      // Predicated region
      $region21: #{forward.7} parent=19 // pred_check
        %p130 = pneg %p29
      $region22: #{forward.7} parent=19 // pred_check_branch
        %132 = sbr.rel (%p130) target = $region24
      $region23: #{forward.7} parent=19 // pred_region
        %p133 = scmp.lt.s32.totalorder %s9, 7
        %s134 = scalar_select %p133, %s9, 7
        %s135 = smul.addr %s134, 2
        %s136 = scalar_lea.vmem %s0, %s135
      $region24: #{forward.7} parent=19 // pred_fallthru
        _
      // Predicated region
      $region25: #{forward.7} parent=19 // pred_check
        %p137 = pneg %p55
      $region26: #{forward.7} parent=19 // pred_check_branch
        %139 = sbr.rel (%p137) target = $region28
      $region27: #{forward.7} parent=19 // pred_region
        %p140 = scmp.lt.s32.totalorder %s9, 7
        %s141 = scalar_select %p140, %s9, 7
        %s142 = smul.addr %s141, 2
        %s143 = scalar_lea.vmem %s1, %s142
      $region28: #{forward.7} parent=19 // pred_fallthru
        _
    $region20: #{forward.7} parent=5 // pred_fallthru
      _
    %p144 = scmp.le.s32.totalorder 1, %s9
    %p145 = scmp.lt.s32.totalorder %s9, 9
    %p146 = pnand %p144, %p145
    %p147 = pneg %p146
    // Predicated region
    $region29: #{forward.7} parent=5 // pred_check
      _
    $region30: #{forward.7} parent=5 // pred_check_branch
      %149 = sbr.rel (%p146) target = $region32
    $region31: #{forward.7} parent=5 // pred_region
      %s150 = ssub.s32 %s9, 1
      %p151 = scmp.lt.s32.totalorder %s14, 7
      %s152 = scalar_select %p151, %s14, 7
      %s153 = smul.addr %s152, 2
      %s154 = scalar_lea.vmem %s0, %s153
      %p155 = pneg %p35
      %p156 = pneg %p32
      %p157 = scmp.lt.s32.totalorder %s14, 7
      %s158 = scalar_select %p157, %s14, 7
      %s159 = smul.addr %s158, 2
      %s160 = scalar_lea.vmem %s1, %s159
      %p161 = pneg %p61
      %p162 = pneg %p58
      %p163 = pneg %p82
      %p164 = pneg %p79
      %p165 = pneg %p108
      %p166 = pneg %p105
      %p167 = scmp.lt.s32.totalorder %s14, 7
      %s168 = scalar_select %p167, %s14, 7
      %s169 = smul.addr %s168, 2
      %s170 = scalar_lea.vmem %s3, %s169
      %p171 = scmp.lt.s32.totalorder %s14, 7
      %s172 = scalar_select %p171, %s14, 7
      %s173 = smul.addr %s172, 2
      %s174 = scalar_lea.vmem %s0, %s173
      %p175 = scmp.lt.s32.totalorder %s14, 7
      %s176 = scalar_select %p175, %s14, 7
      %s177 = smul.addr %s176, 2
      %s178 = scalar_lea.vmem %s1, %s177
      %p179 = scmp.lt.s32.totalorder %s14, 7
      %s180 = scalar_select %p179, %s14, 7
      %s181 = smul.addr %s180, 2
      %s182 = scalar_lea.vmem %s3, %s181
      %p183 = scmp.eq.s32.totalorder %s14, 0
      // Predicated region
      $region33: #{forward.7} parent=31 // pred_check
        %p184 = pneg %p183
      $region34: #{forward.7} parent=31 // pred_check_branch
        %186 = sbr.rel (%p184) target = $region36
      $region35: #{forward.7} parent=31 // pred_region
        %vm187 = vcmask 254976
        %188 = vst.msk [vmem:[#allocation2] sm:$0x3] %vm187, 0.0
        %189 = vst.msk [vmem:[#allocation3] sm:$0x3] %vm187, 0.0
      $region36: #{forward.7} parent=31 // pred_fallthru
        _
      %v190 = vld [vmem:[%s174] sm:$0x3]
      %v191 = vld [vmem:[%s178] sm:$0x3]
      %v192 = vld [vmem:[#allocation2] sm:$0x3]
      %v193 = vld [vmem:[#allocation3] sm:$0x3]
      %v194 = vld [vmem:[%s2] sm:$0xff]
      %v195 = vld [vmem:[%s2 + $0x8] sm:$0xff]
      %v196 = vld [vmem:[%s2 + $0x10] sm:$0xff]
      %v197 = vld [vmem:[%s2 + $0x18] sm:$0xff]
      %vm198 = vcmask 261120
      %v200 = vsel %vm198, %v192, 0
      %202 = vmatprep.subr.mxu0 0.0
      %203 = vmatpush1.msra.mxu0 0.0
      %204 = vmatprep.subr.mxu0 0.0
      %205 = vmatpush1.msra.mxu0 0.0
      %206 = vmatprep.subr.mxu0 0.0
      %207 = vmatpush1.msra.mxu0 0.0
      %208 = vmatprep.subr.mxu0 0.0
      %209 = vmatpush1.msra.mxu0 0.0
      %210 = vmatprep.subr.mxu0 0.0
      %211 = vmatpush1.msra.mxu0 0.0
      %212 = vmatprep.subr.mxu0 0.0
      %213 = vmatpush1.msra.mxu0 0.0
      %214 = vmatprep.subr.mxu0 0.0
      %215 = vmatpush1.msra.mxu0 0.0
      %216 = vmatprep.subr.mxu0 0.0
      %217 = vmatpush1.msra.mxu0 0.0
      %218 = vmatprep.subr.mxu0 0.0
      %219 = vmatpush1.msra.mxu0 0.0
      %220 = vmatprep.subr.mxu0 0.0
      %221 = vmatpush1.msra.mxu0 0.0
      %222 = vmatprep.subr.mxu0 0.0
      %223 = vmatpush1.msra.mxu0 0.0
      %224 = vmatprep.subr.mxu0 0.0
      %225 = vmatpush1.msra.mxu0 0.0
      %226 = vmatprep.subr.mxu0 0.0
      %227 = vmatpush1.msra.mxu0 %v197
      %228 = vmatprep.subr.mxu0 0.0
      %229 = vmatpush1.msra.mxu0 %v196
      %230 = vmatprep.subr.mxu0 0.0
      %231 = vmatpush1.msra.mxu0 %v195
      %232 = vmatprep.subr.mxu0 0.0
      %233 = vmatpush1.msra.mxu0 %v194
      %234 = vmatprep.subr.mxu0 0.0
      %235 = vmatpush2.msra.mxu0 0.0
      %236 = vmatprep.subr.mxu0 0.0
      %237 = vmatpush2.msra.mxu0 0.0
      %238 = vmatprep.subr.mxu0 0.0
      %239 = vmatpush2.msra.mxu0 0.0
      %240 = vmatprep.subr.mxu0 0.0
      %241 = vmatpush2.msra.mxu0 0.0
      %242 = vmatprep.subr.mxu0 0.0
      %243 = vmatpush2.msra.mxu0 0.0
      %244 = vmatprep.subr.mxu0 0.0
      %245 = vmatpush2.msra.mxu0 0.0
      %246 = vmatprep.subr.mxu0 0.0
      %247 = vmatpush2.msra.mxu0 0.0
      %248 = vmatprep.subr.mxu0 0.0
      %249 = vmatpush2.msra.mxu0 0.0
      %250 = vmatprep.subr.mxu0 0.0
      %251 = vmatpush2.msra.mxu0 0.0
      %252 = vmatprep.subr.mxu0 0.0
      %253 = vmatpush2.msra.mxu0 0.0
      %254 = vmatprep.subr.mxu0 0.0
      %255 = vmatpush2.msra.mxu0 0.0
      %256 = vmatprep.subr.mxu0 0.0
      %257 = vmatpush2.msra.mxu0 0.0
      %258 = vmatprep.subr.mxu0 0.0
      %259 = vmatpush2.msra.mxu0 0.0
      %260 = vmatprep.subr.mxu0 0.0
      %261 = vmatpush2.msra.mxu0 0.0
      %262 = vmatprep.subr.mxu0 0.0
      %263 = vmatpush2.msra.mxu0 0.0
      %264 = vmatprep.subr.mxu0 0.0
      %265 = vmatpush2.msra.mxu0 0.0
      %266 = vmatprep.mubr.f32.mxu0 0.0
      %267 = vmatmul.mubr.f32.gmra.mxu0 %v200
      %v268 = vpop.f32.mrf.mxu0
      %v269 = vadd.f32 0.0, %v268
      %v270 = vpop.f32.mrf.mxu0
      %271 = vdwg.mxu0
      %v272 = vadd.f32 %v190, %v269
      %v273 = vsub.f32 0.0, %v272
      %v274 = vmul.f32 %v273, 1.442695
      %v275 = vpow.pop %v274
      %v276 = vadd.f32 %v275, 1.0
      %v277 = vrcp.pop %v276
      %v278 = vmul.f32 1.0, %v277
      %v279 = vtanh.pop %v272
      %281 = vrot.lane.b32.xlu0 %v193, 16
      %v282 = vpop.permute.xlu0 %281
      %v284 = vmul.f32 %v278, %v282
      %286 = vrot.lane.b32.xlu0 %v279, 96
      %v287 = vpop.permute.xlu0 %286
      %v289 = vmul.f32 %v278, %v287
      %291 = vrot.lane.b32.xlu0 %v289, 16
      %v292 = vpop.permute.xlu0 %291
      %v294 = vadd.f32 %v284, %v292
      %v295 = vtanh.pop %v294
      %297 = vrot.lane.b32.xlu0 %v295, 32
      %v298 = vpop.permute.xlu0 %297
      %v300 = vmul.f32 %v278, %v298
      %301 = vrot.lane.b32.xlu0 %v193, 64
      %v302 = vpop.permute.xlu0 %301
      %v304 = vmul.f32 %v278, %v302
      %v305 = vadd.f32 %v304, %v292
      %v306 = vtanh.pop %v305
      %308 = vrot.lane.b32.xlu0 %v306, 32
      %v309 = vpop.permute.xlu0 %308
      %v311 = vmul.f32 %v278, %v309
      %313 = vrot.lane.b32.xlu0 %v300, 80
      %v314 = vpop.permute.xlu0 %313
      %317 = vrot.lane.b32.xlu0 %v311, 32
      %v318 = vpop.permute.xlu0 %317
      %vm320 = vcmask 130048
      %v321 = vsel %vm320, %v314, %v318
      %323 = vrot.lane.b32.xlu0 %v294, 112
      %v324 = vpop.permute.xlu0 %323
      %327 = vrot.lane.b32.xlu0 %v305, 64
      %v328 = vpop.permute.xlu0 %327
      %v330 = vsel %vm320, %v324, %v328
      %332 = vset.pattern.permute.xlu0 0
      %333 = vperm.xlu0 %332, %v191
      %v334 = vpop.permute.xlu0 %333
      %v336 = vmul.f32 %v334, %v321
      %v337 = vsub.f32 1.0, %v191
      %339 = vset.pattern.permute.xlu0 0
      %340 = vperm.xlu0 %339, %v337
      %v341 = vpop.permute.xlu0 %340
      %v343 = vmul.f32 %v341, %v192
      %v344 = vadd.f32 %v336, %v343
      %vm345 = vcmask 254976
      %346 = vst.msk [vmem:[#allocation2] sm:$0x3] %vm345, %v344
      %v347 = vmul.f32 %v334, %v330
      %v348 = vmul.f32 %v341, %v193
      %v349 = vadd.f32 %v347, %v348
      %350 = vst.msk [vmem:[#allocation3] sm:$0x3] %vm345, %v349
      %351 = vst.msk [vmem:[%s182] sm:$0x3] %vm345, %v336
      %p352 = scmp.lt.s32.totalorder %s14, 7
      %s353 = scalar_select %p352, %s14, 7
      %s354 = smul.addr %s353, 2
      %s355 = scalar_lea.vmem %s3, %s354
      // Predicated region
      $region37: #{forward.7} parent=31 // pred_check
        %p356 = pneg %p105
      $region38: #{forward.7} parent=31 // pred_check_branch
        %358 = sbr.rel (%p356) target = $region40
      $region39: #{forward.7} parent=31 // pred_region
        _
      $region40: #{forward.7} parent=31 // pred_fallthru
        _
    $region32: #{forward.7} parent=5 // pred_fallthru
      _
    %p359 = scmp.le.s32.totalorder 2, %s9
    // Predicated region
    $region41: #{forward.7} parent=5 // pred_check
      %p360 = pneg %p359
    $region42: #{forward.7} parent=5 // pred_check_branch
      %362 = sbr.rel (%p360) target = $region44
    $region43: #{forward.7} parent=5 // pred_region
      %s363 = ssub.s32 %s9, 2
      // Predicated region
      $region45: #{forward.7} parent=43 // pred_check
        %p364 = pneg %p111
      $region46: #{forward.7} parent=43 // pred_check_branch
        %366 = sbr.rel (%p364) target = $region48
      $region47: #{forward.7} parent=43 // pred_region
        %p367 = scmp.lt.s32.totalorder %s15, 7
        %s368 = scalar_select %p367, %s15, 7
        %s369 = smul.addr %s368, 2
        %s370 = scalar_lea.vmem %s3, %s369
      $region48: #{forward.7} parent=43 // pred_fallthru
        _
    $region44: #{forward.7} parent=5 // pred_fallthru
      _
  $region6: #{forward.7} parent=0 // loop_footer
    %s13 = sadd.s32 1, %s9
  $region7: #{forward.7} parent=0 // loop_footer_branch
    %8 = sbr.rel target = $region3
  $region8: #{forward.7} parent=0 // loop_exit
    _

// kernel: forward.9
$region0: #{forward.9}
  #allocation0 [shape = 'u32[]', space=smem, size = 0x4, offset = 0x4, fixed_abs, tag = 'smem constant byte address 0x4 - core index']
  #allocation1 [shape = 'u32[144,128]{1,0:T(1,128)}', space=vmem, size = 0x12000, scoped, tag = 'internal scratch']
  #allocation2 [shape = 's32[1]{0}', space=sflag, size = 0x4, scoped, tag = 'scoped memory for forward.9']
  #allocation3 [shape = 'u8[512]{0}', space=smem, size = 0x200, scoped, tag = 'prefetched SMEM operand 0']
  #allocation4 [shape = 'u8[512]{0}', space=smem, size = 0x200, scoped, tag = 'prefetched SMEM operand 1']
  #allocation5 [shape = 's32[1]{0:T(128)S(6)}', space=smem, size = 0x200, scoped, tag = 'prefetched SMEM operand 2']
  %s0 = inlined_call_operand.vmem [shape: s32[2], index: 0, kind: input, shape index: {}]
  %s1 = inlined_call_operand.vmem [shape: s32[2], index: 1, kind: input, shape index: {}]
  %s2 = inlined_call_operand.<no memory space> [shape: s32[1], index: 2, kind: input, shape index: {}]
  %s3 = inlined_call_operand.vmem [shape: f32[2,8,32], index: 3, kind: input, shape index: {}]
  %s4 = inlined_call_operand.vmem [shape: f32[2,8,32], index: 4, kind: input, shape index: {}]
  %s5 = inlined_call_operand.vmem [shape: f32[2,8,32], index: 5, kind: input, shape index: {}]
  %s6 = inlined_call_operand.vmem [shape: f32[2,1,32], index: 6, kind: input, shape index: {}]
  %s7 = inlined_call_operand.vmem [shape: f32[32,384], index: 7, kind: input, shape index: {}]
  %s8 = inlined_call_operand.vmem [shape: f32[32,12], index: 8, kind: input, shape index: {}]
  %s9 = inlined_call_operand.vmem [shape: f32[32,384], index: 9, kind: input, shape index: {}]
  %s10 = inlined_call_operand.vmem [shape: f32[12,32,32], index: 10, kind: input, shape index: {}]
  %s11 = inlined_call_operand.vmem [shape: f32[12,1,32], index: 11, kind: input, shape index: {}]
  %s12 = inlined_call_operand.vmem [shape: f32[12,32,32], index: 12, kind: input, shape index: {}]
  %s13 = inlined_call_operand.vmem [shape: f32[12,1,32], index: 13, kind: input, shape index: {}]
  %s14 = inlined_call_operand.vmem [shape: f32[12,32,8], index: 14, kind: input, shape index: {}]
  %s15 = inlined_call_operand.vmem [shape: f32[12,1,8], index: 15, kind: input, shape index: {}]
  %s16 = inlined_call_operand.vmem [shape: f32[32,32], index: 16, kind: input, shape index: {}]
  %s17 = inlined_call_operand.vmem [shape: f32[1,32], index: 17, kind: input, shape index: {}]
  %s18 = inlined_call_operand.vmem [shape: f32[32,32], index: 18, kind: input, shape index: {}]
  %s19 = inlined_call_operand.vmem [shape: f32[2,8,128], index: 19, kind: output, shape index: {}]
  %s20 = sld [smem:[#allocation0]]
  $region97: #{forward.9} parent=0
    _
  %s22 = ssub.s32 1, %s20
  %s23 = scalar_select 0, %s22, %s20
  %s24 = sshll.u32 %s0, 4
  %s25 = int_to_ptr.vmem [resolvable:$true] %s24
  %27 = dma.vmem_to_smem %s25, 16, [#allocation3], [#allocation2]
  %s28 = sshll.u32 %s1, 4
  %s29 = int_to_ptr.vmem [resolvable:$true] %s28
  %31 = dma.vmem_to_smem %s29, 16, [#allocation4], [#allocation2]
  %32 = sst [smem:[#allocation5]] %s2
  %33 = dma.done [#allocation2], 32
  %34 = sfence
  loop: start=0, step=1, limit=4
  $region2: #{forward.9} parent=0 // loop_pre_header
    _
  $region3: #{forward.9} parent=0 // loop_header
    %s36 = sphi 0, %s40
    %p37 = scmp.ge.s32.totalorder %s36, 4
    %s46 = sphi 0, %s48
    %s49 = sphi 0, %s46
    %s50 = sphi 0, %s49
    %s66 = sphi 0, %s50
    %s72 = sphi 0, %s74
    %s75 = sphi 0, %s72
    %s76 = sphi 0, %s75
    %s92 = sphi 0, %s76
    %s98 = sphi 0, %s100
    %s101 = sphi 0, %s98
    %s102 = sphi 0, %s101
    %s118 = sphi 0, %s102
    %s124 = sphi 0, %s126
    %s127 = sphi 0, %s124
    %s128 = sphi 0, %s127
    %s144 = sphi 0, %s128
    %s148 = sphi 0, %s148
    %s150 = sphi 0, %s148
    %s151 = sphi 0, %s150
    %s165 = sphi 0, %s151
    %s169 = sphi 0, %s169
    %s171 = sphi 0, %s169
    %s172 = sphi 0, %s171
    %s186 = sphi 0, %s172
    %s190 = sphi 0, %s190
    %s192 = sphi 0, %s190
    %s193 = sphi 0, %s192
    %s207 = sphi 0, %s193
    %s211 = sphi 0, %s211
    %s213 = sphi 0, %s211
    %s214 = sphi 0, %s213
    %s228 = sphi 0, %s214
    %s232 = sphi 0, %s232
    %s234 = sphi 0, %s232
    %s235 = sphi 0, %s234
    %s249 = sphi 0, %s235
    %s253 = sphi 0, %s253
    %s255 = sphi 0, %s253
    %s256 = sphi 0, %s255
    %s270 = sphi 0, %s256
    %s274 = sphi 0, %s274
    %s276 = sphi 0, %s274
    %s277 = sphi 0, %s276
    %s291 = sphi 0, %s277
    %s295 = sphi 0, %s295
    %s297 = sphi 0, %s295
    %s298 = sphi 0, %s297
    %s312 = sphi 0, %s298
    %s316 = sphi 0, %s316
    %s318 = sphi 0, %s316
    %s319 = sphi 0, %s318
    %s333 = sphi 0, %s319
    %s337 = sphi 0, %s337
    %s339 = sphi 0, %s337
    %s340 = sphi 0, %s339
    %s354 = sphi 0, %s340
    %s358 = sphi 0, %s358
    %s360 = sphi 0, %s358
    %s361 = sphi 0, %s360
    %s375 = sphi 0, %s361
    %s379 = sphi 0, %s379
    %s381 = sphi 0, %s379
    %s382 = sphi 0, %s381
    %s396 = sphi 0, %s382
    %s402 = sphi 0, %s404
    %s405 = sphi 0, %s402
    %s406 = sphi 0, %s405
    %s422 = sphi 0, %s406
  $region4: #{forward.9} parent=0 // loop_header_branch
    %39 = sbr.rel (%p37) target = $region8
  $region5: #{forward.9} parent=0 // loop_body
    %s41 = ssub.s32 %s36, 1
    %s42 = ssub.s32 %s36, 2
    %s43 = sadd.s32 %s36, 1
    %s44 = ssub.s32 %s36, %s43
    %p45 = scmp.eq.s32.totalorder %s44, 0
    %s47 = sadd.s32 %s46, 1
    %s48 = scalar_select %p45, %s46, %s47
    %p51 = pneg %p45
    %p52 = scmp.eq.s32.totalorder %s36, 1
    %p53 = por %p51, %p52
    %p54 = scmp.ne.s32.totalorder %s46, %s49
    %p55 = scmp.eq.s32.totalorder %s36, 0
    %p56 = por %p54, %p55
    %p57 = scmp.ne.s32.totalorder %s46, %s49
    %p58 = scmp.eq.s32.totalorder %s41, 1
    %p59 = por %p57, %p58
    %p60 = scmp.ne.s32.totalorder %s49, %s50
    %p61 = scmp.eq.s32.totalorder %s41, 0
    %p62 = por %p60, %p61
    %p63 = scmp.ne.s32.totalorder %s49, %s50
    %p64 = scmp.eq.s32.totalorder %s42, 1
    %p65 = por %p63, %p64
    %p67 = scmp.ne.s32.totalorder %s50, %s66
    %p68 = scmp.eq.s32.totalorder %s42, 0
    %p69 = por %p67, %p68
    %s70 = ssub.s32 %s36, %s43
    %p71 = scmp.eq.s32.totalorder %s70, 0
    %s73 = sadd.s32 %s72, 1
    %s74 = scalar_select %p71, %s72, %s73
    %p77 = pneg %p71
    %p78 = scmp.eq.s32.totalorder %s36, 1
    %p79 = por %p77, %p78
    %p80 = scmp.ne.s32.totalorder %s72, %s75
    %p81 = scmp.eq.s32.totalorder %s36, 0
    %p82 = por %p80, %p81
    %p83 = scmp.ne.s32.totalorder %s72, %s75
    %p84 = scmp.eq.s32.totalorder %s41, 1
    %p85 = por %p83, %p84
    %p86 = scmp.ne.s32.totalorder %s75, %s76
    %p87 = scmp.eq.s32.totalorder %s41, 0
    %p88 = por %p86, %p87
    %p89 = scmp.ne.s32.totalorder %s75, %s76
    %p90 = scmp.eq.s32.totalorder %s42, 1
    %p91 = por %p89, %p90
    %p93 = scmp.ne.s32.totalorder %s76, %s92
    %p94 = scmp.eq.s32.totalorder %s42, 0
    %p95 = por %p93, %p94
    %s96 = ssub.s32 %s36, %s43
    %p97 = scmp.eq.s32.totalorder %s96, 0
    %s99 = sadd.s32 %s98, 1
    %s100 = scalar_select %p97, %s98, %s99
    %p103 = pneg %p97
    %p104 = scmp.eq.s32.totalorder %s36, 1
    %p105 = por %p103, %p104
    %p106 = scmp.ne.s32.totalorder %s98, %s101
    %p107 = scmp.eq.s32.totalorder %s36, 0
    %p108 = por %p106, %p107
    %p109 = scmp.ne.s32.totalorder %s98, %s101
    %p110 = scmp.eq.s32.totalorder %s41, 1
    %p111 = por %p109, %p110
    %p112 = scmp.ne.s32.totalorder %s101, %s102
    %p113 = scmp.eq.s32.totalorder %s41, 0
    %p114 = por %p112, %p113
    %p115 = scmp.ne.s32.totalorder %s101, %s102
    %p116 = scmp.eq.s32.totalorder %s42, 1
    %p117 = por %p115, %p116
    %p119 = scmp.ne.s32.totalorder %s102, %s118
    %p120 = scmp.eq.s32.totalorder %s42, 0
    %p121 = por %p119, %p120
    %s122 = ssub.s32 %s36, %s43
    %p123 = scmp.eq.s32.totalorder %s122, 0
    %s125 = sadd.s32 %s124, 1
    %s126 = scalar_select %p123, %s124, %s125
    %p129 = pneg %p123
    %p130 = scmp.eq.s32.totalorder %s36, 1
    %p131 = por %p129, %p130
    %p132 = scmp.ne.s32.totalorder %s124, %s127
    %p133 = scmp.eq.s32.totalorder %s36, 0
    %p134 = por %p132, %p133
    %p135 = scmp.ne.s32.totalorder %s124, %s127
    %p136 = scmp.eq.s32.totalorder %s41, 1
    %p137 = por %p135, %p136
    %p138 = scmp.ne.s32.totalorder %s127, %s128
    %p139 = scmp.eq.s32.totalorder %s41, 0
    %p140 = por %p138, %p139
    %p141 = scmp.ne.s32.totalorder %s127, %s128
    %p142 = scmp.eq.s32.totalorder %s42, 1
    %p143 = por %p141, %p142
    %p145 = scmp.ne.s32.totalorder %s128, %s144
    %p146 = scmp.eq.s32.totalorder %s42, 0
    %p147 = por %p145, %p146
    %s149 = sadd.s32 %s148, 1
    %p152 = scmp.eq.s32.totalorder %s36, 1
    %p153 = scmp.ne.s32.totalorder %s148, %s150
    %p154 = scmp.eq.s32.totalorder %s36, 0
    %p155 = por %p153, %p154
    %p156 = scmp.ne.s32.totalorder %s148, %s150
    %p157 = scmp.eq.s32.totalorder %s41, 1
    %p158 = por %p156, %p157
    %p159 = scmp.ne.s32.totalorder %s150, %s151
    %p160 = scmp.eq.s32.totalorder %s41, 0
    %p161 = por %p159, %p160
    %p162 = scmp.ne.s32.totalorder %s150, %s151
    %p163 = scmp.eq.s32.totalorder %s42, 1
    %p164 = por %p162, %p163
    %p166 = scmp.ne.s32.totalorder %s151, %s165
    %p167 = scmp.eq.s32.totalorder %s42, 0
    %p168 = por %p166, %p167
    %s170 = sadd.s32 %s169, 1
    %p173 = scmp.eq.s32.totalorder %s36, 1
    %p174 = scmp.ne.s32.totalorder %s169, %s171
    %p175 = scmp.eq.s32.totalorder %s36, 0
    %p176 = por %p174, %p175
    %p177 = scmp.ne.s32.totalorder %s169, %s171
    %p178 = scmp.eq.s32.totalorder %s41, 1
    %p179 = por %p177, %p178
    %p180 = scmp.ne.s32.totalorder %s171, %s172
    %p181 = scmp.eq.s32.totalorder %s41, 0
    %p182 = por %p180, %p181
    %p183 = scmp.ne.s32.totalorder %s171, %s172
    %p184 = scmp.eq.s32.totalorder %s42, 1
    %p185 = por %p183, %p184
    %p187 = scmp.ne.s32.totalorder %s172, %s186
    %p188 = scmp.eq.s32.totalorder %s42, 0
    %p189 = por %p187, %p188
    %s191 = sadd.s32 %s190, 1
    %p194 = scmp.eq.s32.totalorder %s36, 1
    %p195 = scmp.ne.s32.totalorder %s190, %s192
    %p196 = scmp.eq.s32.totalorder %s36, 0
    %p197 = por %p195, %p196
    %p198 = scmp.ne.s32.totalorder %s190, %s192
    %p199 = scmp.eq.s32.totalorder %s41, 1
    %p200 = por %p198, %p199
    %p201 = scmp.ne.s32.totalorder %s192, %s193
    %p202 = scmp.eq.s32.totalorder %s41, 0
    %p203 = por %p201, %p202
    %p204 = scmp.ne.s32.totalorder %s192, %s193
    %p205 = scmp.eq.s32.totalorder %s42, 1
    %p206 = por %p204, %p205
    %p208 = scmp.ne.s32.totalorder %s193, %s207
    %p209 = scmp.eq.s32.totalorder %s42, 0
    %p210 = por %p208, %p209
    %s212 = sadd.s32 %s211, 1
    %p215 = scmp.eq.s32.totalorder %s36, 1
    %p216 = scmp.ne.s32.totalorder %s211, %s213
    %p217 = scmp.eq.s32.totalorder %s36, 0
    %p218 = por %p216, %p217
    %p219 = scmp.ne.s32.totalorder %s211, %s213
    %p220 = scmp.eq.s32.totalorder %s41, 1
    %p221 = por %p219, %p220
    %p222 = scmp.ne.s32.totalorder %s213, %s214
    %p223 = scmp.eq.s32.totalorder %s41, 0
    %p224 = por %p222, %p223
    %p225 = scmp.ne.s32.totalorder %s213, %s214
    %p226 = scmp.eq.s32.totalorder %s42, 1
    %p227 = por %p225, %p226
    %p229 = scmp.ne.s32.totalorder %s214, %s228
    %p230 = scmp.eq.s32.totalorder %s42, 0
    %p231 = por %p229, %p230
    %s233 = sadd.s32 %s232, 1
    %p236 = scmp.eq.s32.totalorder %s36, 1
    %p237 = scmp.ne.s32.totalorder %s232, %s234
    %p238 = scmp.eq.s32.totalorder %s36, 0
    %p239 = por %p237, %p238
    %p240 = scmp.ne.s32.totalorder %s232, %s234
    %p241 = scmp.eq.s32.totalorder %s41, 1
    %p242 = por %p240, %p241
    %p243 = scmp.ne.s32.totalorder %s234, %s235
    %p244 = scmp.eq.s32.totalorder %s41, 0
    %p245 = por %p243, %p244
    %p246 = scmp.ne.s32.totalorder %s234, %s235
    %p247 = scmp.eq.s32.totalorder %s42, 1
    %p248 = por %p246, %p247
    %p250 = scmp.ne.s32.totalorder %s235, %s249
    %p251 = scmp.eq.s32.totalorder %s42, 0
    %p252 = por %p250, %p251
    %s254 = sadd.s32 %s253, 1
    %p257 = scmp.eq.s32.totalorder %s36, 1
    %p258 = scmp.ne.s32.totalorder %s253, %s255
    %p259 = scmp.eq.s32.totalorder %s36, 0
    %p260 = por %p258, %p259
    %p261 = scmp.ne.s32.totalorder %s253, %s255
    %p262 = scmp.eq.s32.totalorder %s41, 1
    %p263 = por %p261, %p262
    %p264 = scmp.ne.s32.totalorder %s255, %s256
    %p265 = scmp.eq.s32.totalorder %s41, 0
    %p266 = por %p264, %p265
    %p267 = scmp.ne.s32.totalorder %s255, %s256
    %p268 = scmp.eq.s32.totalorder %s42, 1
    %p269 = por %p267, %p268
    %p271 = scmp.ne.s32.totalorder %s256, %s270
    %p272 = scmp.eq.s32.totalorder %s42, 0
    %p273 = por %p271, %p272
    %s275 = sadd.s32 %s274, 1
    %p278 = scmp.eq.s32.totalorder %s36, 1
    %p279 = scmp.ne.s32.totalorder %s274, %s276
    %p280 = scmp.eq.s32.totalorder %s36, 0
    %p281 = por %p279, %p280
    %p282 = scmp.ne.s32.totalorder %s274, %s276
    %p283 = scmp.eq.s32.totalorder %s41, 1
    %p284 = por %p282, %p283
    %p285 = scmp.ne.s32.totalorder %s276, %s277
    %p286 = scmp.eq.s32.totalorder %s41, 0
    %p287 = por %p285, %p286
    %p288 = scmp.ne.s32.totalorder %s276, %s277
    %p289 = scmp.eq.s32.totalorder %s42, 1
    %p290 = por %p288, %p289
    %p292 = scmp.ne.s32.totalorder %s277, %s291
    %p293 = scmp.eq.s32.totalorder %s42, 0
    %p294 = por %p292, %p293
    %s296 = sadd.s32 %s295, 1
    %p299 = scmp.eq.s32.totalorder %s36, 1
    %p300 = scmp.ne.s32.totalorder %s295, %s297
    %p301 = scmp.eq.s32.totalorder %s36, 0
    %p302 = por %p300, %p301
    %p303 = scmp.ne.s32.totalorder %s295, %s297
    %p304 = scmp.eq.s32.totalorder %s41, 1
    %p305 = por %p303, %p304
    %p306 = scmp.ne.s32.totalorder %s297, %s298
    %p307 = scmp.eq.s32.totalorder %s41, 0
    %p308 = por %p306, %p307
    %p309 = scmp.ne.s32.totalorder %s297, %s298
    %p310 = scmp.eq.s32.totalorder %s42, 1
    %p311 = por %p309, %p310
    %p313 = scmp.ne.s32.totalorder %s298, %s312
    %p314 = scmp.eq.s32.totalorder %s42, 0
    %p315 = por %p313, %p314
    %s317 = sadd.s32 %s316, 1
    %p320 = scmp.eq.s32.totalorder %s36, 1
    %p321 = scmp.ne.s32.totalorder %s316, %s318
    %p322 = scmp.eq.s32.totalorder %s36, 0
    %p323 = por %p321, %p322
    %p324 = scmp.ne.s32.totalorder %s316, %s318
    %p325 = scmp.eq.s32.totalorder %s41, 1
    %p326 = por %p324, %p325
    %p327 = scmp.ne.s32.totalorder %s318, %s319
    %p328 = scmp.eq.s32.totalorder %s41, 0
    %p329 = por %p327, %p328
    %p330 = scmp.ne.s32.totalorder %s318, %s319
    %p331 = scmp.eq.s32.totalorder %s42, 1
    %p332 = por %p330, %p331
    %p334 = scmp.ne.s32.totalorder %s319, %s333
    %p335 = scmp.eq.s32.totalorder %s42, 0
    %p336 = por %p334, %p335
    %s338 = sadd.s32 %s337, 1
    %p341 = scmp.eq.s32.totalorder %s36, 1
    %p342 = scmp.ne.s32.totalorder %s337, %s339
    %p343 = scmp.eq.s32.totalorder %s36, 0
    %p344 = por %p342, %p343
    %p345 = scmp.ne.s32.totalorder %s337, %s339
    %p346 = scmp.eq.s32.totalorder %s41, 1
    %p347 = por %p345, %p346
    %p348 = scmp.ne.s32.totalorder %s339, %s340
    %p349 = scmp.eq.s32.totalorder %s41, 0
    %p350 = por %p348, %p349
    %p351 = scmp.ne.s32.totalorder %s339, %s340
    %p352 = scmp.eq.s32.totalorder %s42, 1
    %p353 = por %p351, %p352
    %p355 = scmp.ne.s32.totalorder %s340, %s354
    %p356 = scmp.eq.s32.totalorder %s42, 0
    %p357 = por %p355, %p356
    %s359 = sadd.s32 %s358, 1
    %p362 = scmp.eq.s32.totalorder %s36, 1
    %p363 = scmp.ne.s32.totalorder %s358, %s360
    %p364 = scmp.eq.s32.totalorder %s36, 0
    %p365 = por %p363, %p364
    %p366 = scmp.ne.s32.totalorder %s358, %s360
    %p367 = scmp.eq.s32.totalorder %s41, 1
    %p368 = por %p366, %p367
    %p369 = scmp.ne.s32.totalorder %s360, %s361
    %p370 = scmp.eq.s32.totalorder %s41, 0
    %p371 = por %p369, %p370
    %p372 = scmp.ne.s32.totalorder %s360, %s361
    %p373 = scmp.eq.s32.totalorder %s42, 1
    %p374 = por %p372, %p373
    %p376 = scmp.ne.s32.totalorder %s361, %s375
    %p377 = scmp.eq.s32.totalorder %s42, 0
    %p378 = por %p376, %p377
    %s380 = sadd.s32 %s379, 1
    %p383 = scmp.eq.s32.totalorder %s36, 1
    %p384 = scmp.ne.s32.totalorder %s379, %s381
    %p385 = scmp.eq.s32.totalorder %s36, 0
    %p386 = por %p384, %p385
    %p387 = scmp.ne.s32.totalorder %s379, %s381
    %p388 = scmp.eq.s32.totalorder %s41, 1
    %p389 = por %p387, %p388
    %p390 = scmp.ne.s32.totalorder %s381, %s382
    %p391 = scmp.eq.s32.totalorder %s41, 0
    %p392 = por %p390, %p391
    %p393 = scmp.ne.s32.totalorder %s381, %s382
    %p394 = scmp.eq.s32.totalorder %s42, 1
    %p395 = por %p393, %p394
    %p397 = scmp.ne.s32.totalorder %s382, %s396
    %p398 = scmp.eq.s32.totalorder %s42, 0
    %p399 = por %p397, %p398
    %s400 = ssub.s32 %s36, %s43
    %p401 = scmp.eq.s32.totalorder %s400, 0
    %s403 = sadd.s32 %s402, 1
    %s404 = scalar_select %p401, %s402, %s403
    %p407 = pneg %p401
    %p408 = scmp.eq.s32.totalorder %s36, 1
    %p409 = por %p407, %p408
    %p410 = scmp.ne.s32.totalorder %s402, %s405
    %p411 = scmp.eq.s32.totalorder %s36, 0
    %p412 = por %p410, %p411
    %p413 = scmp.ne.s32.totalorder %s402, %s405
    %p414 = scmp.eq.s32.totalorder %s41, 1
    %p415 = por %p413, %p414
    %p416 = scmp.ne.s32.totalorder %s405, %s406
    %p417 = scmp.eq.s32.totalorder %s41, 0
    %p418 = por %p416, %p417
    %p419 = scmp.ne.s32.totalorder %s405, %s406
    %p420 = scmp.eq.s32.totalorder %s42, 1
    %p421 = por %p419, %p420
    %p423 = scmp.ne.s32.totalorder %s406, %s422
    %p424 = scmp.eq.s32.totalorder %s42, 0
    %p425 = por %p423, %p424
    %p426 = scmp.le.s32.totalorder 1, %s36
    %p427 = scmp.lt.s32.totalorder %s36, 3
    %p428 = pnand %p426, %p427
    %p429 = pneg %p428
    // Predicated region
    $region9: #{forward.9} parent=5 // pred_check
      _
    $region10: #{forward.9} parent=5 // pred_check_branch
      %431 = sbr.rel (%p428) target = $region12
    $region11: #{forward.9} parent=5 // pred_region
      %s432 = ssub.s32 %s36, 1
      // Predicated region
      $region13: #{forward.9} parent=11 // pred_check
        %p433 = pneg %p161
      $region14: #{forward.9} parent=11 // pred_check_branch
        %435 = sbr.rel (%p433) target = $region16
      $region15: #{forward.9} parent=11 // pred_region
        _
      $region16: #{forward.9} parent=11 // pred_fallthru
        _
      // Predicated region
      $region17: #{forward.9} parent=11 // pred_check
        %p436 = pneg %p182
      $region18: #{forward.9} parent=11 // pred_check_branch
        %438 = sbr.rel (%p436) target = $region20
      $region19: #{forward.9} parent=11 // pred_region
        _
      $region20: #{forward.9} parent=11 // pred_fallthru
        _
      // Predicated region
      $region21: #{forward.9} parent=11 // pred_check
        %p439 = pneg %p203
      $region22: #{forward.9} parent=11 // pred_check_branch
        %441 = sbr.rel (%p439) target = $region24
      $region23: #{forward.9} parent=11 // pred_region
        _
      $region24: #{forward.9} parent=11 // pred_fallthru
        _
      // Predicated region
      $region25: #{forward.9} parent=11 // pred_check
        %p442 = pneg %p224
      $region26: #{forward.9} parent=11 // pred_check_branch
        %444 = sbr.rel (%p442) target = $region28
      $region27: #{forward.9} parent=11 // pred_region
        _
      $region28: #{forward.9} parent=11 // pred_fallthru
        _
      // Predicated region
      $region29: #{forward.9} parent=11 // pred_check
        %p445 = pneg %p245
      $region30: #{forward.9} parent=11 // pred_check_branch
        %447 = sbr.rel (%p445) target = $region32
      $region31: #{forward.9} parent=11 // pred_region
        _
      $region32: #{forward.9} parent=11 // pred_fallthru
        _
      // Predicated region
      $region33: #{forward.9} parent=11 // pred_check
        %p448 = pneg %p266
      $region34: #{forward.9} parent=11 // pred_check_branch
        %450 = sbr.rel (%p448) target = $region36
      $region35: #{forward.9} parent=11 // pred_region
        _
      $region36: #{forward.9} parent=11 // pred_fallthru
        _
      // Predicated region
      $region37: #{forward.9} parent=11 // pred_check
        %p451 = pneg %p287
      $region38: #{forward.9} parent=11 // pred_check_branch
        %453 = sbr.rel (%p451) target = $region40
      $region39: #{forward.9} parent=11 // pred_region
        _
      $region40: #{forward.9} parent=11 // pred_fallthru
        _
      // Predicated region
      $region41: #{forward.9} parent=11 // pred_check
        %p454 = pneg %p308
      $region42: #{forward.9} parent=11 // pred_check_branch
        %456 = sbr.rel (%p454) target = $region44
      $region43: #{forward.9} parent=11 // pred_region
        _
      $region44: #{forward.9} parent=11 // pred_fallthru
        _
      // Predicated region
      $region45: #{forward.9} parent=11 // pred_check
        %p457 = pneg %p329
      $region46: #{forward.9} parent=11 // pred_check_branch
        %459 = sbr.rel (%p457) target = $region48
      $region47: #{forward.9} parent=11 // pred_region
        _
      $region48: #{forward.9} parent=11 // pred_fallthru
        _
      // Predicated region
      $region49: #{forward.9} parent=11 // pred_check
        %p460 = pneg %p350
      $region50: #{forward.9} parent=11 // pred_check_branch
        %462 = sbr.rel (%p460) target = $region52
      $region51: #{forward.9} parent=11 // pred_region
        _
      $region52: #{forward.9} parent=11 // pred_fallthru
        _
      // Predicated region
      $region53: #{forward.9} parent=11 // pred_check
        %p463 = pneg %p371
      $region54: #{forward.9} parent=11 // pred_check_branch
        %465 = sbr.rel (%p463) target = $region56
      $region55: #{forward.9} parent=11 // pred_region
        _
      $region56: #{forward.9} parent=11 // pred_fallthru
        _
      // Predicated region
      $region57: #{forward.9} parent=11 // pred_check
        %p466 = pneg %p392
      $region58: #{forward.9} parent=11 // pred_check_branch
        %468 = sbr.rel (%p466) target = $region60
      $region59: #{forward.9} parent=11 // pred_region
        _
      $region60: #{forward.9} parent=11 // pred_fallthru
        _
    $region12: #{forward.9} parent=5 // pred_fallthru
      _
    %p469 = scmp.lt.s32.totalorder %s36, 2
    // Predicated region
    $region61: #{forward.9} parent=5 // pred_check
      %p470 = pneg %p469
    $region62: #{forward.9} parent=5 // pred_check_branch
      %472 = sbr.rel (%p470) target = $region64
    $region63: #{forward.9} parent=5 // pred_region
      // Predicated region
      $region65: #{forward.9} parent=63 // pred_check
        %p473 = pneg %p56
      $region66: #{forward.9} parent=63 // pred_check_branch
        %475 = sbr.rel (%p473) target = $region68
      $region67: #{forward.9} parent=63 // pred_region
        %p476 = scmp.lt.s32.totalorder %s36, 1
        %s477 = scalar_select %p476, %s36, 1
        %s478 = smul.addr %s477, 8
        %s479 = scalar_lea.vmem %s3, %s478
      $region68: #{forward.9} parent=63 // pred_fallthru
        _
      // Predicated region
      $region69: #{forward.9} parent=63 // pred_check
        %p480 = pneg %p82
      $region70: #{forward.9} parent=63 // pred_check_branch
        %482 = sbr.rel (%p480) target = $region72
      $region71: #{forward.9} parent=63 // pred_region
        %p483 = scmp.lt.s32.totalorder %s36, 1
        %s484 = scalar_select %p483, %s36, 1
        %s485 = smul.addr %s484, 8
        %s486 = scalar_lea.vmem %s4, %s485
      $region72: #{forward.9} parent=63 // pred_fallthru
        _
      // Predicated region
      $region73: #{forward.9} parent=63 // pred_check
        %p487 = pneg %p108
      $region74: #{forward.9} parent=63 // pred_check_branch
        %489 = sbr.rel (%p487) target = $region76
      $region75: #{forward.9} parent=63 // pred_region
        %p490 = scmp.lt.s32.totalorder %s36, 1
        %s491 = scalar_select %p490, %s36, 1
        %s492 = smul.addr %s491, 8
        %s493 = scalar_lea.vmem %s5, %s492
      $region76: #{forward.9} parent=63 // pred_fallthru
        _
      // Predicated region
      $region77: #{forward.9} parent=63 // pred_check
        %p494 = pneg %p134
      $region78: #{forward.9} parent=63 // pred_check_branch
        %496 = sbr.rel (%p494) target = $region80
      $region79: #{forward.9} parent=63 // pred_region
        %p497 = scmp.lt.s32.totalorder %s36, 1
        %s498 = scalar_select %p497, %s36, 1
        %s499 = scalar_lea.vmem %s6, %s498
      $region80: #{forward.9} parent=63 // pred_fallthru
        _
    $region64: #{forward.9} parent=5 // pred_fallthru
      _
    %p500 = scmp.le.s32.totalorder 1, %s36
    %p501 = scmp.lt.s32.totalorder %s36, 3
    %p502 = pnand %p500, %p501
    %p503 = pneg %p502
    // Predicated region
    $region81: #{forward.9} parent=5 // pred_check
      _
    $region82: #{forward.9} parent=5 // pred_check_branch
      %505 = sbr.rel (%p502) target = $region84
    $region83: #{forward.9} parent=5 // pred_region
      %s506 = ssub.s32 %s36, 1
      %p507 = scmp.lt.s32.totalorder %s41, 1
      %s508 = scalar_select %p507, %s41, 1
      %s509 = smul.addr %s508, 8
      %s510 = scalar_lea.vmem %s3, %s509
      %p511 = pneg %p62
      %p512 = pneg %p59
      %p513 = scmp.lt.s32.totalorder %s41, 1
      %s514 = scalar_select %p513, %s41, 1
      %s515 = smul.addr %s514, 8
      %s516 = scalar_lea.vmem %s4, %s515
      %p517 = pneg %p88
      %p518 = pneg %p85
      %p519 = scmp.lt.s32.totalorder %s41, 1
      %s520 = scalar_select %p519, %s41, 1
      %s521 = smul.addr %s520, 8
      %s522 = scalar_lea.vmem %s5, %s521
      %p523 = pneg %p114
      %p524 = pneg %p111
      %p525 = scmp.lt.s32.totalorder %s41, 1
      %s526 = scalar_select %p525, %s41, 1
      %s527 = scalar_lea.vmem %s6, %s526
      %p528 = pneg %p140
      %p529 = pneg %p137
      %p530 = pneg %p161
      %p531 = pneg %p158
      %p532 = pneg %p182
      %p533 = pneg %p179
      %p534 = pneg %p203
      %p535 = pneg %p200
      %p536 = pneg %p224
      %p537 = pneg %p221
      %p538 = pneg %p245
      %p539 = pneg %p242
      %p540 = pneg %p266
      %p541 = pneg %p263
      %p542 = pneg %p287
      %p543 = pneg %p284
      %p544 = pneg %p308
      %p545 = pneg %p305
      %p546 = pneg %p329
      %p547 = pneg %p326
      %p548 = pneg %p350
      %p549 = pneg %p347
      %p550 = pneg %p371
      %p551 = pneg %p368
      %p552 = pneg %p392
      %p553 = pneg %p389
      %p554 = pneg %p418
      %p555 = pneg %p415
      %p556 = scmp.lt.s32.totalorder %s41, 1
      %s557 = scalar_select %p556, %s41, 1
      %s558 = smul.addr %s557, 8
      %s559 = scalar_lea.vmem %s19, %s558
      %p560 = scmp.lt.s32.totalorder %s41, 1
      %s561 = scalar_select %p560, %s41, 1
      %s562 = smul.addr %s561, 8
      %s563 = scalar_lea.vmem %s3, %s562
      %p564 = scmp.lt.s32.totalorder %s41, 1
      %s565 = scalar_select %p564, %s41, 1
      %s566 = smul.addr %s565, 8
      %s567 = scalar_lea.vmem %s4, %s566
      %p568 = scmp.lt.s32.totalorder %s41, 1
      %s569 = scalar_select %p568, %s41, 1
      %s570 = smul.addr %s569, 8
      %s571 = scalar_lea.vmem %s5, %s570
      %p572 = scmp.lt.s32.totalorder %s41, 1
      %s573 = scalar_select %p572, %s41, 1
      %s574 = scalar_lea.vmem %s6, %s573
      %p575 = scmp.lt.s32.totalorder %s41, 1
      %s576 = scalar_select %p575, %s41, 1
      %s577 = smul.addr %s576, 8
      %s578 = scalar_lea.vmem %s19, %s577
      %s579 = sld [smem:[#allocation3 + %s41]]
      %s580 = sld [smem:[#allocation4 + %s41]]
      %s581 = sld [smem:[#allocation5]]
      %v582 = vld [vmem:[%s563] sm:$0xff]
      %v583 = vld [vmem:[%s567] sm:$0xff]
      %v584 = vld [vmem:[%s571] sm:$0xff]
      %v585 = vld [vmem:[%s574] sm:$0x1]
      %v586 = vld [vmem:[%s7] sm:$0xff]
      %v587 = vld [vmem:[%s7 + $0x8] sm:$0xff]
      %v588 = vld [vmem:[%s7 + $0x10] sm:$0xff]
      %v589 = vld [vmem:[%s7 + $0x18] sm:$0xff]
      %v590 = vld [vmem:[%s7 + $0x20] sm:$0xff]
      %v591 = vld [vmem:[%s7 + $0x28] sm:$0xff]
      %v592 = vld [vmem:[%s7 + $0x30] sm:$0xff]
      %v593 = vld [vmem:[%s7 + $0x38] sm:$0xff]
      %v594 = vld [vmem:[%s7 + $0x40] sm:$0xff]
      %v595 = vld [vmem:[%s7 + $0x48] sm:$0xff]
      %v596 = vld [vmem:[%s7 + $0x50] sm:$0xff]
      %v597 = vld [vmem:[%s7 + $0x58] sm:$0xff]
      %vm598 = vcmask 261120
      %v600 = vsel %vm598, %v583, 0
      %602 = vmatprep.subr.mxu0 0.0
      %603 = vmatpush1.msra.mxu0 0.0
      %604 = vmatprep.subr.mxu0 0.0
      %605 = vmatpush1.msra.mxu0 0.0
      %606 = vmatprep.subr.mxu0 0.0
      %607 = vmatpush1.msra.mxu0 0.0
      %608 = vmatprep.subr.mxu0 0.0
      %609 = vmatpush1.msra.mxu0 0.0
      %610 = vmatprep.subr.mxu0 0.0
      %611 = vmatpush1.msra.mxu0 0.0
      %612 = vmatprep.subr.mxu0 0.0
      %613 = vmatpush1.msra.mxu0 0.0
      %614 = vmatprep.subr.mxu0 0.0
      %615 = vmatpush1.msra.mxu0 0.0
      %616 = vmatprep.subr.mxu0 0.0
      %617 = vmatpush1.msra.mxu0 0.0
      %618 = vmatprep.subr.mxu0 0.0
      %619 = vmatpush1.msra.mxu0 0.0
      %620 = vmatprep.subr.mxu0 0.0
      %621 = vmatpush1.msra.mxu0 0.0
      %622 = vmatprep.subr.mxu0 0.0
      %623 = vmatpush1.msra.mxu0 0.0
      %624 = vmatprep.subr.mxu0 0.0
      %625 = vmatpush1.msra.mxu0 0.0
      %626 = vmatprep.subr.mxu0 %v596
      %627 = vmatpush1.msra.mxu0 %v595
      %628 = vmatprep.subr.mxu0 %v593
      %629 = vmatpush1.msra.mxu0 %v592
      %630 = vmatprep.subr.mxu0 %v590
      %631 = vmatpush1.msra.mxu0 %v589
      %632 = vmatprep.subr.mxu0 %v587
      %633 = vmatpush1.msra.mxu0 %v586
      %634 = vmatprep.subr.mxu0 0.0
      %635 = vmatpush2.msra.mxu0 0.0
      %636 = vmatprep.subr.mxu0 0.0
      %637 = vmatpush2.msra.mxu0 0.0
      %638 = vmatprep.subr.mxu0 0.0
      %639 = vmatpush2.msra.mxu0 0.0
      %640 = vmatprep.subr.mxu0 0.0
      %641 = vmatpush2.msra.mxu0 0.0
      %642 = vmatprep.subr.mxu0 0.0
      %643 = vmatpush2.msra.mxu0 0.0
      %644 = vmatprep.subr.mxu0 0.0
      %645 = vmatpush2.msra.mxu0 0.0
      %646 = vmatprep.subr.mxu0 0.0
      %647 = vmatpush2.msra.mxu0 0.0
      %648 = vmatprep.subr.mxu0 0.0
      %649 = vmatpush2.msra.mxu0 0.0
      %650 = vmatprep.subr.mxu0 0.0
      %651 = vmatpush2.msra.mxu0 0.0
      %652 = vmatprep.subr.mxu0 0.0
      %653 = vmatpush2.msra.mxu0 0.0
      %654 = vmatprep.subr.mxu0 0.0
      %655 = vmatpush2.msra.mxu0 0.0
      %656 = vmatprep.subr.mxu0 0.0
      %657 = vmatpush2.msra.mxu0 0.0
      %658 = vmatprep.subr.mxu0 0.0
      %659 = vmatpush2.msra.mxu0 0.0
      %660 = vmatprep.subr.mxu0 0.0
      %661 = vmatpush2.msra.mxu0 0.0
      %662 = vmatprep.subr.mxu0 0.0
      %663 = vmatpush2.msra.mxu0 0.0
      %664 = vmatprep.subr.mxu0 0.0
      %665 = vmatpush2.msra.mxu0 0.0
      %666 = vmatprep.mubr.f32.mxu0 0.0
      %667 = vmatmul.mubr.f32.gmra.mxu0 %v600
      %v668 = vpop.f32.mrf.mxu0
      %v669 = vadd.f32 0.0, %v668
      %v670 = vpop.f32.mrf.mxu0
      %v671 = vadd.f32 0.0, %v670
      %672 = vdwg.mxu0
      %673 = vmatprep.subr.mxu0 0.0
      %674 = vmatpush1.msra.mxu0 0.0
      %675 = vmatprep.subr.mxu0 0.0
      %676 = vmatpush1.msra.mxu0 0.0
      %677 = vmatprep.subr.mxu0 0.0
      %678 = vmatpush1.msra.mxu0 0.0
      %679 = vmatprep.subr.mxu0 0.0
      %680 = vmatpush1.msra.mxu0 0.0
      %681 = vmatprep.subr.mxu0 0.0
      %682 = vmatpush1.msra.mxu0 0.0
      %683 = vmatprep.subr.mxu0 0.0
      %684 = vmatpush1.msra.mxu0 0.0
      %685 = vmatprep.subr.mxu0 0.0
      %686 = vmatpush1.msra.mxu0 0.0
      %687 = vmatprep.subr.mxu0 0.0
      %688 = vmatpush1.msra.mxu0 0.0
      %689 = vmatprep.subr.mxu0 0.0
      %690 = vmatpush1.msra.mxu0 0.0
      %691 = vmatprep.subr.mxu0 0.0
      %692 = vmatpush1.msra.mxu0 0.0
      %693 = vmatprep.subr.mxu0 0.0
      %694 = vmatpush1.msra.mxu0 0.0
      %695 = vmatprep.subr.mxu0 0.0
      %696 = vmatpush1.msra.mxu0 0.0
      %697 = vmatprep.subr.mxu0 0.0
      %698 = vmatpush1.msra.mxu0 %v597
      %699 = vmatprep.subr.mxu0 0.0
      %700 = vmatpush1.msra.mxu0 %v594
      %701 = vmatprep.subr.mxu0 0.0
      %702 = vmatpush1.msra.mxu0 %v591
      %703 = vmatprep.subr.mxu0 0.0
      %704 = vmatpush1.msra.mxu0 %v588
      %705 = vmatprep.subr.mxu0 0.0
      %706 = vmatpush2.msra.mxu0 0.0
      %707 = vmatprep.subr.mxu0 0.0
      %708 = vmatpush2.msra.mxu0 0.0
      %709 = vmatprep.subr.mxu0 0.0
      %710 = vmatpush2.msra.mxu0 0.0
      %711 = vmatprep.subr.mxu0 0.0
      %712 = vmatpush2.msra.mxu0 0.0
      %713 = vmatprep.subr.mxu0 0.0
      %714 = vmatpush2.msra.mxu0 0.0
      %715 = vmatprep.subr.mxu0 0.0
      %716 = vmatpush2.msra.mxu0 0.0
      %717 = vmatprep.subr.mxu0 0.0
      %718 = vmatpush2.msra.mxu0 0.0
      %719 = vmatprep.subr.mxu0 0.0
      %720 = vmatpush2.msra.mxu0 0.0
      %721 = vmatprep.subr.mxu0 0.0
      %722 = vmatpush2.msra.mxu0 0.0
      %723 = vmatprep.subr.mxu0 0.0
      %724 = vmatpush2.msra.mxu0 0.0
      %725 = vmatprep.subr.mxu0 0.0
      %726 = vmatpush2.msra.mxu0 0.0
      %727 = vmatprep.subr.mxu0 0.0
      %728 = vmatpush2.msra.mxu0 0.0
      %729 = vmatprep.subr.mxu0 0.0
      %730 = vmatpush2.msra.mxu0 0.0
      %731 = vmatprep.subr.mxu0 0.0
      %732 = vmatpush2.msra.mxu0 0.0
      %733 = vmatprep.subr.mxu0 0.0
      %734 = vmatpush2.msra.mxu0 0.0
      %735 = vmatprep.subr.mxu0 0.0
      %736 = vmatpush2.msra.mxu0 0.0
      %737 = vmatprep.mubr.f32.mxu0 0.0
      %738 = vmatmul.mubr.f32.gmra.mxu0 %v600
      %v739 = vpop.f32.mrf.mxu0
      %v740 = vadd.f32 0.0, %v739
      %v741 = vpop.f32.mrf.mxu0
      %742 = vdwg.mxu0
      %v744 = vsel %vm598, %v584, 0
      %746 = vmatprep.subr.mxu0 0.0
      %747 = vmatpush1.msra.mxu0 0.0
      %748 = vmatprep.subr.mxu0 0.0
      %749 = vmatpush1.msra.mxu0 0.0
      %750 = vmatprep.subr.mxu0 0.0
      %751 = vmatpush1.msra.mxu0 0.0
      %752 = vmatprep.subr.mxu0 0.0
      %753 = vmatpush1.msra.mxu0 0.0
      %754 = vmatprep.subr.mxu0 0.0
      %755 = vmatpush1.msra.mxu0 0.0
      %756 = vmatprep.subr.mxu0 0.0
      %757 = vmatpush1.msra.mxu0 0.0
      %758 = vmatprep.subr.mxu0 0.0
      %759 = vmatpush1.msra.mxu0 0.0
      %760 = vmatprep.subr.mxu0 0.0
      %761 = vmatpush1.msra.mxu0 0.0
      %762 = vmatprep.subr.mxu0 0.0
      %763 = vmatpush1.msra.mxu0 0.0
      %764 = vmatprep.subr.mxu0 0.0
      %765 = vmatpush1.msra.mxu0 0.0
      %766 = vmatprep.subr.mxu0 0.0
      %767 = vmatpush1.msra.mxu0 0.0
      %768 = vmatprep.subr.mxu0 0.0
      %769 = vmatpush1.msra.mxu0 0.0
      %770 = vmatprep.subr.mxu0 0.0
      %771 = vmatpush1.msra.mxu0 %v597
      %772 = vmatprep.subr.mxu0 0.0
      %773 = vmatpush1.msra.mxu0 %v594
      %774 = vmatprep.subr.mxu0 0.0
      %775 = vmatpush1.msra.mxu0 %v591
      %776 = vmatprep.subr.mxu0 0.0
      %777 = vmatpush1.msra.mxu0 %v588
      %778 = vmatprep.subr.mxu0 0.0
      %779 = vmatpush2.msra.mxu0 0.0
      %780 = vmatprep.subr.mxu0 0.0
      %781 = vmatpush2.msra.mxu0 0.0
      %782 = vmatprep.subr.mxu0 0.0
      %783 = vmatpush2.msra.mxu0 0.0
      %784 = vmatprep.subr.mxu0 0.0
      %785 = vmatpush2.msra.mxu0 0.0
      %786 = vmatprep.subr.mxu0 0.0
      %787 = vmatpush2.msra.mxu0 0.0
      %788 = vmatprep.subr.mxu0 0.0
      %789 = vmatpush2.msra.mxu0 0.0
      %790 = vmatprep.subr.mxu0 0.0
      %791 = vmatpush2.msra.mxu0 0.0
      %792 = vmatprep.subr.mxu0 0.0
      %793 = vmatpush2.msra.mxu0 0.0
      %794 = vmatprep.subr.mxu0 0.0
      %795 = vmatpush2.msra.mxu0 0.0
      %796 = vmatprep.subr.mxu0 0.0
      %797 = vmatpush2.msra.mxu0 0.0
      %798 = vmatprep.subr.mxu0 0.0
      %799 = vmatpush2.msra.mxu0 0.0
      %800 = vmatprep.subr.mxu0 0.0
      %801 = vmatpush2.msra.mxu0 0.0
      %802 = vmatprep.subr.mxu0 0.0
      %803 = vmatpush2.msra.mxu0 0.0
      %804 = vmatprep.subr.mxu0 0.0
      %805 = vmatpush2.msra.mxu0 0.0
      %806 = vmatprep.subr.mxu0 0.0
      %807 = vmatpush2.msra.mxu0 0.0
      %808 = vmatprep.subr.mxu0 0.0
      %809 = vmatpush2.msra.mxu0 0.0
      %810 = vmatprep.mubr.f32.mxu0 0.0
      %811 = vmatmul.mubr.f32.gmra.mxu0 %v744
      %v812 = vpop.f32.mrf.mxu0
      %v813 = vadd.f32 0.0, %v812
      %v814 = vpop.f32.mrf.mxu0
      %815 = vdwg.mxu0
      %v816 = vld [vmem:[%s8] sm:$0xff]
      %v817 = vld [vmem:[%s8 + $0x8] sm:$0xff]
      %v818 = vld [vmem:[%s8 + $0x10] sm:$0xff]
      %v819 = vld [vmem:[%s8 + $0x18] sm:$0xff]
      %820 = vmatprep.subr.mxu0 0.0
      %821 = vmatpush1.msra.mxu0 0.0
      %822 = vmatprep.subr.mxu0 0.0
      %823 = vmatpush1.msra.mxu0 0.0
      %824 = vmatprep.subr.mxu0 0.0
      %825 = vmatpush1.msra.mxu0 0.0
      %826 = vmatprep.subr.mxu0 0.0
      %827 = vmatpush1.msra.mxu0 0.0
      %828 = vmatprep.subr.mxu0 0.0
      %829 = vmatpush1.msra.mxu0 0.0
      %830 = vmatprep.subr.mxu0 0.0
      %831 = vmatpush1.msra.mxu0 0.0
      %832 = vmatprep.subr.mxu0 0.0
      %833 = vmatpush1.msra.mxu0 0.0
      %834 = vmatprep.subr.mxu0 0.0
      %835 = vmatpush1.msra.mxu0 0.0
      %836 = vmatprep.subr.mxu0 0.0
      %837 = vmatpush1.msra.mxu0 0.0
      %838 = vmatprep.subr.mxu0 0.0
      %839 = vmatpush1.msra.mxu0 0.0
      %840 = vmatprep.subr.mxu0 0.0
      %841 = vmatpush1.msra.mxu0 0.0
      %842 = vmatprep.subr.mxu0 0.0
      %843 = vmatpush1.msra.mxu0 0.0
      %844 = vmatprep.subr.mxu0 0.0
      %845 = vmatpush1.msra.mxu0 %v819
      %846 = vmatprep.subr.mxu0 0.0
      %847 = vmatpush1.msra.mxu0 %v818
      %848 = vmatprep.subr.mxu0 0.0
      %849 = vmatpush1.msra.mxu0 %v817
      %850 = vmatprep.subr.mxu0 0.0
      %851 = vmatpush1.msra.mxu0 %v816
      %852 = vmatprep.subr.mxu0 0.0
      %853 = vmatpush2.msra.mxu0 0.0
      %854 = vmatprep.subr.mxu0 0.0
      %855 = vmatpush2.msra.mxu0 0.0
      %856 = vmatprep.subr.mxu0 0.0
      %857 = vmatpush2.msra.mxu0 0.0
      %858 = vmatprep.subr.mxu0 0.0
      %859 = vmatpush2.msra.mxu0 0.0
      %860 = vmatprep.subr.mxu0 0.0
      %861 = vmatpush2.msra.mxu0 0.0
      %862 = vmatprep.subr.mxu0 0.0
      %863 = vmatpush2.msra.mxu0 0.0
      %864 = vmatprep.subr.mxu0 0.0
      %865 = vmatpush2.msra.mxu0 0.0
      %866 = vmatprep.subr.mxu0 0.0
      %867 = vmatpush2.msra.mxu0 0.0
      %868 = vmatprep.subr.mxu0 0.0
      %869 = vmatpush2.msra.mxu0 0.0
      %870 = vmatprep.subr.mxu0 0.0
      %871 = vmatpush2.msra.mxu0 0.0
      %872 = vmatprep.subr.mxu0 0.0
      %873 = vmatpush2.msra.mxu0 0.0
      %874 = vmatprep.subr.mxu0 0.0
      %875 = vmatpush2.msra.mxu0 0.0
      %876 = vmatprep.subr.mxu0 0.0
      %877 = vmatpush2.msra.mxu0 0.0
      %878 = vmatprep.subr.mxu0 0.0
      %879 = vmatpush2.msra.mxu0 0.0
      %880 = vmatprep.subr.mxu0 0.0
      %881 = vmatpush2.msra.mxu0 0.0
      %882 = vmatprep.subr.mxu0 0.0
      %883 = vmatpush2.msra.mxu0 0.0
      %884 = vmatprep.mubr.f32.mxu0 0.0
      %885 = vmatmul.mubr.f32.gmra.mxu0 %v600
      %v886 = vpop.f32.mrf.mxu0
      %v887 = vadd.f32 0.0, %v886
      %v888 = vpop.f32.mrf.mxu0
      %889 = vdwg.mxu0
      %890 = vmatprep.subr.mxu0 0.0
      %891 = vmatpush1.msra.mxu0 0.0
      %892 = vmatprep.subr.mxu0 0.0
      %893 = vmatpush1.msra.mxu0 0.0
      %894 = vmatprep.subr.mxu0 0.0
      %895 = vmatpush1.msra.mxu0 0.0
      %896 = vmatprep.subr.mxu0 0.0
      %897 = vmatpush1.msra.mxu0 0.0
      %898 = vmatprep.subr.mxu0 0.0
      %899 = vmatpush1.msra.mxu0 0.0
      %900 = vmatprep.subr.mxu0 0.0
      %901 = vmatpush1.msra.mxu0 0.0
      %902 = vmatprep.subr.mxu0 0.0
      %903 = vmatpush1.msra.mxu0 0.0
      %904 = vmatprep.subr.mxu0 0.0
      %905 = vmatpush1.msra.mxu0 0.0
      %906 = vmatprep.subr.mxu0 0.0
      %907 = vmatpush1.msra.mxu0 0.0
      %908 = vmatprep.subr.mxu0 0.0
      %909 = vmatpush1.msra.mxu0 0.0
      %910 = vmatprep.subr.mxu0 0.0
      %911 = vmatpush1.msra.mxu0 0.0
      %912 = vmatprep.subr.mxu0 0.0
      %913 = vmatpush1.msra.mxu0 0.0
      %914 = vmatprep.subr.mxu0 0.0
      %915 = vmatpush1.msra.mxu0 %v819
      %916 = vmatprep.subr.mxu0 0.0
      %917 = vmatpush1.msra.mxu0 %v818
      %918 = vmatprep.subr.mxu0 0.0
      %919 = vmatpush1.msra.mxu0 %v817
      %920 = vmatprep.subr.mxu0 0.0
      %921 = vmatpush1.msra.mxu0 %v816
      %922 = vmatprep.subr.mxu0 0.0
      %923 = vmatpush2.msra.mxu0 0.0
      %924 = vmatprep.subr.mxu0 0.0
      %925 = vmatpush2.msra.mxu0 0.0
      %926 = vmatprep.subr.mxu0 0.0
      %927 = vmatpush2.msra.mxu0 0.0
      %928 = vmatprep.subr.mxu0 0.0
      %929 = vmatpush2.msra.mxu0 0.0
      %930 = vmatprep.subr.mxu0 0.0
      %931 = vmatpush2.msra.mxu0 0.0
      %932 = vmatprep.subr.mxu0 0.0
      %933 = vmatpush2.msra.mxu0 0.0
      %934 = vmatprep.subr.mxu0 0.0
      %935 = vmatpush2.msra.mxu0 0.0
      %936 = vmatprep.subr.mxu0 0.0
      %937 = vmatpush2.msra.mxu0 0.0
      %938 = vmatprep.subr.mxu0 0.0
      %939 = vmatpush2.msra.mxu0 0.0
      %940 = vmatprep.subr.mxu0 0.0
      %941 = vmatpush2.msra.mxu0 0.0
      %942 = vmatprep.subr.mxu0 0.0
      %943 = vmatpush2.msra.mxu0 0.0
      %944 = vmatprep.subr.mxu0 0.0
      %945 = vmatpush2.msra.mxu0 0.0
      %946 = vmatprep.subr.mxu0 0.0
      %947 = vmatpush2.msra.mxu0 0.0
      %948 = vmatprep.subr.mxu0 0.0
      %949 = vmatpush2.msra.mxu0 0.0
      %950 = vmatprep.subr.mxu0 0.0
      %951 = vmatpush2.msra.mxu0 0.0
      %952 = vmatprep.subr.mxu0 0.0
      %953 = vmatpush2.msra.mxu0 0.0
      %954 = vmatprep.mubr.f32.mxu0 0.0
      %955 = vmatmul.mubr.f32.gmra.mxu0 %v744
      %v956 = vpop.f32.mrf.mxu0
      %v957 = vadd.f32 0.0, %v956
      %v958 = vpop.f32.mrf.mxu0
      %959 = vdwg.mxu0
      %v960 = vld [vmem:[%s9] sm:$0xff]
      %v961 = vld [vmem:[%s9 + $0x8] sm:$0xff]
      %v962 = vld [vmem:[%s9 + $0x10] sm:$0xff]
      %v963 = vld [vmem:[%s9 + $0x18] sm:$0xff]
      %v964 = vld [vmem:[%s9 + $0x20] sm:$0xff]
      %v965 = vld [vmem:[%s9 + $0x28] sm:$0xff]
      %v966 = vld [vmem:[%s9 + $0x30] sm:$0xff]
      %v967 = vld [vmem:[%s9 + $0x38] sm:$0xff]
      %v968 = vld [vmem:[%s9 + $0x40] sm:$0xff]
      %v969 = vld [vmem:[%s9 + $0x48] sm:$0xff]
      %v970 = vld [vmem:[%s9 + $0x50] sm:$0xff]
      %v971 = vld [vmem:[%s9 + $0x58] sm:$0xff]
      %972 = vmatprep.subr.mxu0 0.0
      %973 = vmatpush1.msra.mxu0 0.0
      %974 = vmatprep.subr.mxu0 0.0
      %975 = vmatpush1.msra.mxu0 0.0
      %976 = vmatprep.subr.mxu0 0.0
      %977 = vmatpush1.msra.mxu0 0.0
      %978 = vmatprep.subr.mxu0 0.0
      %979 = vmatpush1.msra.mxu0 0.0
      %980 = vmatprep.subr.mxu0 0.0
      %981 = vmatpush1.msra.mxu0 0.0
      %982 = vmatprep.subr.mxu0 0.0
      %983 = vmatpush1.msra.mxu0 0.0
      %984 = vmatprep.subr.mxu0 0.0
      %985 = vmatpush1.msra.mxu0 0.0
      %986 = vmatprep.subr.mxu0 0.0
      %987 = vmatpush1.msra.mxu0 0.0
      %988 = vmatprep.subr.mxu0 0.0
      %989 = vmatpush1.msra.mxu0 0.0
      %990 = vmatprep.subr.mxu0 0.0
      %991 = vmatpush1.msra.mxu0 0.0
      %992 = vmatprep.subr.mxu0 0.0
      %993 = vmatpush1.msra.mxu0 0.0
      %994 = vmatprep.subr.mxu0 0.0
      %995 = vmatpush1.msra.mxu0 0.0
      %996 = vmatprep.subr.mxu0 %v970
      %997 = vmatpush1.msra.mxu0 %v969
      %998 = vmatprep.subr.mxu0 %v967
      %999 = vmatpush1.msra.mxu0 %v966
      %1000 = vmatprep.subr.mxu0 %v964
      %1001 = vmatpush1.msra.mxu0 %v963
      %1002 = vmatprep.subr.mxu0 %v961
      %1003 = vmatpush1.msra.mxu0 %v960
      %1004 = vmatprep.subr.mxu0 0.0
      %1005 = vmatpush2.msra.mxu0 0.0
      %1006 = vmatprep.subr.mxu0 0.0
      %1007 = vmatpush2.msra.mxu0 0.0
      %1008 = vmatprep.subr.mxu0 0.0
      %1009 = vmatpush2.msra.mxu0 0.0
      %1010 = vmatprep.subr.mxu0 0.0
      %1011 = vmatpush2.msra.mxu0 0.0
      %1012 = vmatprep.subr.mxu0 0.0
      %1013 = vmatpush2.msra.mxu0 0.0
      %1014 = vmatprep.subr.mxu0 0.0
      %1015 = vmatpush2.msra.mxu0 0.0
      %1016 = vmatprep.subr.mxu0 0.0
      %1017 = vmatpush2.msra.mxu0 0.0
      %1018 = vmatprep.subr.mxu0 0.0
      %1019 = vmatpush2.msra.mxu0 0.0
      %1020 = vmatprep.subr.mxu0 0.0
      %1021 = vmatpush2.msra.mxu0 0.0
      %1022 = vmatprep.subr.mxu0 0.0
      %1023 = vmatpush2.msra.mxu0 0.0
      %1024 = vmatprep.subr.mxu0 0.0
      %1025 = vmatpush2.msra.mxu0 0.0
      %1026 = vmatprep.subr.mxu0 0.0
      %1027 = vmatpush2.msra.mxu0 0.0
      %1028 = vmatprep.subr.mxu0 0.0
      %1029 = vmatpush2.msra.mxu0 0.0
      %1030 = vmatprep.subr.mxu0 0.0
      %1031 = vmatpush2.msra.mxu0 0.0
      %1032 = vmatprep.subr.mxu0 0.0
      %1033 = vmatpush2.msra.mxu0 0.0
      %1034 = vmatprep.subr.mxu0 0.0
      %1035 = vmatpush2.msra.mxu0 0.0
      %1036 = vmatprep.mubr.f32.mxu0 0.0
      %1037 = vmatmul.mubr.f32.gmra.mxu0 %v600
      %v1038 = vpop.f32.mrf.mxu0
      %v1039 = vpop.f32.mrf.mxu0
      %v1040 = vadd.f32 0.0, %v1039
      %1041 = vdwg.mxu0
      %1042 = vmatprep.subr.mxu0 0.0
      %1043 = vmatpush1.msra.mxu0 0.0
      %1044 = vmatprep.subr.mxu0 0.0
      %1045 = vmatpush1.msra.mxu0 0.0
      %1046 = vmatprep.subr.mxu0 0.0
      %1047 = vmatpush1.msra.mxu0 0.0
      %1048 = vmatprep.subr.mxu0 0.0
      %1049 = vmatpush1.msra.mxu0 0.0
      %1050 = vmatprep.subr.mxu0 0.0
      %1051 = vmatpush1.msra.mxu0 0.0
      %1052 = vmatprep.subr.mxu0 0.0
      %1053 = vmatpush1.msra.mxu0 0.0
      %1054 = vmatprep.subr.mxu0 0.0
      %1055 = vmatpush1.msra.mxu0 0.0
      %1056 = vmatprep.subr.mxu0 0.0
      %1057 = vmatpush1.msra.mxu0 0.0
      %1058 = vmatprep.subr.mxu0 0.0
      %1059 = vmatpush1.msra.mxu0 0.0
      %1060 = vmatprep.subr.mxu0 0.0
      %1061 = vmatpush1.msra.mxu0 0.0
      %1062 = vmatprep.subr.mxu0 0.0
      %1063 = vmatpush1.msra.mxu0 0.0
      %1064 = vmatprep.subr.mxu0 0.0
      %1065 = vmatpush1.msra.mxu0 0.0
      %1066 = vmatprep.subr.mxu0 0.0
      %1067 = vmatpush1.msra.mxu0 %v971
      %1068 = vmatprep.subr.mxu0 0.0
      %1069 = vmatpush1.msra.mxu0 %v968
      %1070 = vmatprep.subr.mxu0 0.0
      %1071 = vmatpush1.msra.mxu0 %v965
      %1072 = vmatprep.subr.mxu0 0.0
      %1073 = vmatpush1.msra.mxu0 %v962
      %1074 = vmatprep.subr.mxu0 0.0
      %1075 = vmatpush2.msra.mxu0 0.0
      %1076 = vmatprep.subr.mxu0 0.0
      %1077 = vmatpush2.msra.mxu0 0.0
      %1078 = vmatprep.subr.mxu0 0.0
      %1079 = vmatpush2.msra.mxu0 0.0
      %1080 = vmatprep.subr.mxu0 0.0
      %1081 = vmatpush2.msra.mxu0 0.0
      %1082 = vmatprep.subr.mxu0 0.0
      %1083 = vmatpush2.msra.mxu0 0.0
      %1084 = vmatprep.subr.mxu0 0.0
      %1085 = vmatpush2.msra.mxu0 0.0
      %1086 = vmatprep.subr.mxu0 0.0
      %1087 = vmatpush2.msra.mxu0 0.0
      %1088 = vmatprep.subr.mxu0 0.0
      %1089 = vmatpush2.msra.mxu0 0.0
      %1090 = vmatprep.subr.mxu0 0.0
      %1091 = vmatpush2.msra.mxu0 0.0
      %1092 = vmatprep.subr.mxu0 0.0
      %1093 = vmatpush2.msra.mxu0 0.0
      %1094 = vmatprep.subr.mxu0 0.0
      %1095 = vmatpush2.msra.mxu0 0.0
      %1096 = vmatprep.subr.mxu0 0.0
      %1097 = vmatpush2.msra.mxu0 0.0
      %1098 = vmatprep.subr.mxu0 0.0
      %1099 = vmatpush2.msra.mxu0 0.0
      %1100 = vmatprep.subr.mxu0 0.0
      %1101 = vmatpush2.msra.mxu0 0.0
      %1102 = vmatprep.subr.mxu0 0.0
      %1103 = vmatpush2.msra.mxu0 0.0
      %1104 = vmatprep.subr.mxu0 0.0
      %1105 = vmatpush2.msra.mxu0 0.0
      %1106 = vmatprep.mubr.f32.mxu0 0.0
      %1107 = vmatmul.mubr.f32.gmra.mxu0 %v600
      %v1108 = vpop.f32.mrf.mxu0
      %v1109 = vadd.f32 0.0, %v1108
      %v1110 = vpop.f32.mrf.mxu0
      %1111 = vdwg.mxu0
      %1112 = vmatprep.subr.mxu0 0.0
      %1113 = vmatpush1.msra.mxu0 0.0
      %1114 = vmatprep.subr.mxu0 0.0
      %1115 = vmatpush1.msra.mxu0 0.0
      %1116 = vmatprep.subr.mxu0 0.0
      %1117 = vmatpush1.msra.mxu0 0.0
      %1118 = vmatprep.subr.mxu0 0.0
      %1119 = vmatpush1.msra.mxu0 0.0
      %1120 = vmatprep.subr.mxu0 0.0
      %1121 = vmatpush1.msra.mxu0 0.0
      %1122 = vmatprep.subr.mxu0 0.0
      %1123 = vmatpush1.msra.mxu0 0.0
      %1124 = vmatprep.subr.mxu0 0.0
      %1125 = vmatpush1.msra.mxu0 0.0
      %1126 = vmatprep.subr.mxu0 0.0
      %1127 = vmatpush1.msra.mxu0 0.0
      %1128 = vmatprep.subr.mxu0 0.0
      %1129 = vmatpush1.msra.mxu0 0.0
      %1130 = vmatprep.subr.mxu0 0.0
      %1131 = vmatpush1.msra.mxu0 0.0
      %1132 = vmatprep.subr.mxu0 0.0
      %1133 = vmatpush1.msra.mxu0 0.0
      %1134 = vmatprep.subr.mxu0 0.0
      %1135 = vmatpush1.msra.mxu0 0.0
      %1136 = vmatprep.subr.mxu0 0.0
      %1137 = vmatpush1.msra.mxu0 %v971
      %1138 = vmatprep.subr.mxu0 0.0
      %1139 = vmatpush1.msra.mxu0 %v968
      %1140 = vmatprep.subr.mxu0 0.0
      %1141 = vmatpush1.msra.mxu0 %v965
      %1142 = vmatprep.subr.mxu0 0.0
      %1143 = vmatpush1.msra.mxu0 %v962
      %1144 = vmatprep.subr.mxu0 0.0
      %1145 = vmatpush2.msra.mxu0 0.0
      %1146 = vmatprep.subr.mxu0 0.0
      %1147 = vmatpush2.msra.mxu0 0.0
      %1148 = vmatprep.subr.mxu0 0.0
      %1149 = vmatpush2.msra.mxu0 0.0
      %1150 = vmatprep.subr.mxu0 0.0
      %1151 = vmatpush2.msra.mxu0 0.0
      %1152 = vmatprep.subr.mxu0 0.0
      %1153 = vmatpush2.msra.mxu0 0.0
      %1154 = vmatprep.subr.mxu0 0.0
      %1155 = vmatpush2.msra.mxu0 0.0
      %1156 = vmatprep.subr.mxu0 0.0
      %1157 = vmatpush2.msra.mxu0 0.0
      %1158 = vmatprep.subr.mxu0 0.0
      %1159 = vmatpush2.msra.mxu0 0.0
      %1160 = vmatprep.subr.mxu0 0.0
      %1161 = vmatpush2.msra.mxu0 0.0
      %1162 = vmatprep.subr.mxu0 0.0
      %1163 = vmatpush2.msra.mxu0 0.0
      %1164 = vmatprep.subr.mxu0 0.0
      %1165 = vmatpush2.msra.mxu0 0.0
      %1166 = vmatprep.subr.mxu0 0.0
      %1167 = vmatpush2.msra.mxu0 0.0
      %1168 = vmatprep.subr.mxu0 0.0
      %1169 = vmatpush2.msra.mxu0 0.0
      %1170 = vmatprep.subr.mxu0 0.0
      %1171 = vmatpush2.msra.mxu0 0.0
      %1172 = vmatprep.subr.mxu0 0.0
      %1173 = vmatpush2.msra.mxu0 0.0
      %1174 = vmatprep.subr.mxu0 0.0
      %1175 = vmatpush2.msra.mxu0 0.0
      %1176 = vmatprep.mubr.f32.mxu0 0.0
      %1177 = vmatmul.mubr.f32.gmra.mxu0 %v744
      %v1178 = vpop.f32.mrf.mxu0
      %v1179 = vadd.f32 0.0, %v1178
      %v1180 = vpop.f32.mrf.mxu0
      %1181 = vdwg.mxu0
      %v1182 = vlaneseq
      %v1183 = vand.u32 %v1182, 127
      %v1184 = vstv %s579
      %vm1185 = vcmp.ge.s32.totalorder %v1183, %v1184
      %v1186 = vlaneseq
      %v1187 = vshrl.u32 %v1186, 7
      %v1188 = vstv %s580
      %vm1189 = vcmp.ge.s32.totalorder %v1187, %v1188
      %v1190 = vstv %s581
      %vm1191 = vcmp.lt.s32.totalorder %v1187, %v1190
      %v1192 = vsel %vm1191, 1, 0
      %v1193 = vcvt.s32.f32 %v1192
      %v1194 = vld [vmem:[%s16] sm:$0xff]
      %v1195 = vld [vmem:[%s16 + $0x8] sm:$0xff]
      %v1196 = vld [vmem:[%s16 + $0x10] sm:$0xff]
      %v1197 = vld [vmem:[%s16 + $0x18] sm:$0xff]
      %v1198 = vld [vmem:[%s17] sm:$0x1]
      %v1200 = vlaneseq
      %v1201 = vshrl.u32 %v1200, 7
      %v1202 = vsub.s32 0, %v1201
      %v1203 = vrot.slane %v1198, %v1202
      %v1206 = vsel %vm598, %v582, 0
      %1208 = vmatprep.subr.mxu0 0.0
      %1209 = vmatpush1.msra.mxu0 0.0
      %1210 = vmatprep.subr.mxu0 0.0
      %1211 = vmatpush1.msra.mxu0 0.0
      %1212 = vmatprep.subr.mxu0 0.0
      %1213 = vmatpush1.msra.mxu0 0.0
      %1214 = vmatprep.subr.mxu0 0.0
      %1215 = vmatpush1.msra.mxu0 0.0
      %1216 = vmatprep.subr.mxu0 0.0
      %1217 = vmatpush1.msra.mxu0 0.0
      %1218 = vmatprep.subr.mxu0 0.0
      %1219 = vmatpush1.msra.mxu0 0.0
      %1220 = vmatprep.subr.mxu0 0.0
      %1221 = vmatpush1.msra.mxu0 0.0
      %1222 = vmatprep.subr.mxu0 0.0
      %1223 = vmatpush1.msra.mxu0 0.0
      %1224 = vmatprep.subr.mxu0 0.0
      %1225 = vmatpush1.msra.mxu0 0.0
      %1226 = vmatprep.subr.mxu0 0.0
      %1227 = vmatpush1.msra.mxu0 0.0
      %1228 = vmatprep.subr.mxu0 0.0
      %1229 = vmatpush1.msra.mxu0 0.0
      %1230 = vmatprep.subr.mxu0 0.0
      %1231 = vmatpush1.msra.mxu0 0.0
      %1232 = vmatprep.subr.mxu0 0.0
      %1233 = vmatpush1.msra.mxu0 %v1197
      %1234 = vmatprep.subr.mxu0 0.0
      %1235 = vmatpush1.msra.mxu0 %v1196
      %1236 = vmatprep.subr.mxu0 0.0
      %1237 = vmatpush1.msra.mxu0 %v1195
      %1238 = vmatprep.subr.mxu0 0.0
      %1239 = vmatpush1.msra.mxu0 %v1194
      %1240 = vmatprep.subr.mxu0 0.0
      %1241 = vmatpush2.msra.mxu0 0.0
      %1242 = vmatprep.subr.mxu0 0.0
      %1243 = vmatpush2.msra.mxu0 0.0
      %1244 = vmatprep.subr.mxu0 0.0
      %1245 = vmatpush2.msra.mxu0 0.0
      %1246 = vmatprep.subr.mxu0 0.0
      %1247 = vmatpush2.msra.mxu0 0.0
      %1248 = vmatprep.subr.mxu0 0.0
      %1249 = vmatpush2.msra.mxu0 0.0
      %1250 = vmatprep.subr.mxu0 0.0
      %1251 = vmatpush2.msra.mxu0 0.0
      %1252 = vmatprep.subr.mxu0 0.0
      %1253 = vmatpush2.msra.mxu0 0.0
      %1254 = vmatprep.subr.mxu0 0.0
      %1255 = vmatpush2.msra.mxu0 0.0
      %1256 = vmatprep.subr.mxu0 0.0
      %1257 = vmatpush2.msra.mxu0 0.0
      %1258 = vmatprep.subr.mxu0 0.0
      %1259 = vmatpush2.msra.mxu0 0.0
      %1260 = vmatprep.subr.mxu0 0.0
      %1261 = vmatpush2.msra.mxu0 0.0
      %1262 = vmatprep.subr.mxu0 0.0
      %1263 = vmatpush2.msra.mxu0 0.0
      %1264 = vmatprep.subr.mxu0 0.0
      %1265 = vmatpush2.msra.mxu0 0.0
      %1266 = vmatprep.subr.mxu0 0.0
      %1267 = vmatpush2.msra.mxu0 0.0
      %1268 = vmatprep.subr.mxu0 0.0
      %1269 = vmatpush2.msra.mxu0 0.0
      %1270 = vmatprep.subr.mxu0 0.0
      %1271 = vmatpush2.msra.mxu0 0.0
      %1272 = vmatprep.mubr.f32.mxu0 0.0
      %1273 = vmatmul.mubr.f32.gmra.mxu0 %v1206
      %v1274 = vpop.f32.mrf.mxu0
      %v1275 = vadd.f32 %v1203, %v1274
      %v1276 = vpop.f32.mrf.mxu0
      %1277 = vdwg.mxu0
      %v1279 = vsel %vm598, %v585, 0
      %v1282 = vsel %vm598, %v1275, 0
      %1284 = vmatprep.subr.mxu0 0.0
      %1285 = vmatpush1.xpose.msra.mxu0 0.0
      %1286 = vmatprep.subr.mxu0 0.0
      %1287 = vmatpush1.xpose.msra.mxu0 0.0
      %1288 = vmatprep.subr.mxu0 0.0
      %1289 = vmatpush1.xpose.msra.mxu0 0.0
      %1290 = vmatprep.subr.mxu0 0.0
      %1291 = vmatpush1.xpose.msra.mxu0 0.0
      %1292 = vmatprep.subr.mxu0 0.0
      %1293 = vmatpush1.xpose.msra.mxu0 0.0
      %1294 = vmatprep.subr.mxu0 0.0
      %1295 = vmatpush1.xpose.msra.mxu0 0.0
      %1296 = vmatprep.subr.mxu0 0.0
      %1297 = vmatpush1.xpose.msra.mxu0 0.0
      %1298 = vmatprep.subr.mxu0 0.0
      %1299 = vmatpush1.xpose.msra.mxu0 0.0
      %1300 = vmatprep.subr.mxu0 0.0
      %1301 = vmatpush1.xpose.msra.mxu0 0.0
      %1302 = vmatprep.subr.mxu0 0.0
      %1303 = vmatpush1.xpose.msra.mxu0 0.0
      %1304 = vmatprep.subr.mxu0 0.0
      %1305 = vmatpush1.xpose.msra.mxu0 0.0
      %1306 = vmatprep.subr.mxu0 0.0
      %1307 = vmatpush1.xpose.msra.mxu0 0.0
      %1308 = vmatprep.subr.mxu0 0.0
      %1309 = vmatpush1.xpose.msra.mxu0 0.0
      %1310 = vmatprep.subr.mxu0 0.0
      %1311 = vmatpush1.xpose.msra.mxu0 0.0
      %1312 = vmatprep.subr.mxu0 0.0
      %1313 = vmatpush1.xpose.msra.mxu0 0.0
      %1314 = vmatprep.subr.mxu0 0.0
      %1315 = vmatpush1.xpose.msra.mxu0 %v1282
      %1316 = vmatprep.subr.mxu0 0.0
      %1317 = vmatpush2.xpose.msra.mxu0 0.0
      %1318 = vmatprep.subr.mxu0 0.0
      %1319 = vmatpush2.xpose.msra.mxu0 0.0
      %1320 = vmatprep.subr.mxu0 0.0
      %1321 = vmatpush2.xpose.msra.mxu0 0.0
      %1322 = vmatprep.subr.mxu0 0.0
      %1323 = vmatpush2.xpose.msra.mxu0 0.0
      %1324 = vmatprep.subr.mxu0 0.0
      %1325 = vmatpush2.xpose.msra.mxu0 0.0
      %1326 = vmatprep.subr.mxu0 0.0
      %1327 = vmatpush2.xpose.msra.mxu0 0.0
      %1328 = vmatprep.subr.mxu0 0.0
      %1329 = vmatpush2.xpose.msra.mxu0 0.0
      %1330 = vmatprep.subr.mxu0 0.0
      %1331 = vmatpush2.xpose.msra.mxu0 0.0
      %1332 = vmatprep.subr.mxu0 0.0
      %1333 = vmatpush2.xpose.msra.mxu0 0.0
      %1334 = vmatprep.subr.mxu0 0.0
      %1335 = vmatpush2.xpose.msra.mxu0 0.0
      %1336 = vmatprep.subr.mxu0 0.0
      %1337 = vmatpush2.xpose.msra.mxu0 0.0
      %1338 = vmatprep.subr.mxu0 0.0
      %1339 = vmatpush2.xpose.msra.mxu0 0.0
      %1340 = vmatprep.subr.mxu0 0.0
      %1341 = vmatpush2.xpose.msra.mxu0 0.0
      %1342 = vmatprep.subr.mxu0 0.0
      %1343 = vmatpush2.xpose.msra.mxu0 0.0
      %1344 = vmatprep.subr.mxu0 0.0
      %1345 = vmatpush2.xpose.msra.mxu0 0.0
      %1346 = vmatprep.subr.mxu0 0.0
      %1347 = vmatpush2.xpose.msra.mxu0 0.0
      %1348 = vmatprep.mubr.f32.mxu0 0.0
      %1349 = vmatmul.mubr.f32.gmra.mxu0 %v1279
      %v1350 = vpop.f32.mrf.mxu0
      %v1351 = vadd.f32 0.0, %v1350
      %v1352 = vpop.f32.mrf.mxu0
      %1353 = vdwg.mxu0
      %v1354 = vsel %vm1185, -100.0, %v1351
      %vm1355 = vcmask 57344
      %v1356 = vsel %vm1355, %v1354, -inf
      %1357 = vmax.xlane.f32.xlu0 %v1356
      %v1358 = vpop.xlane.xlu0 %1357
      %v1359 = vsub.f32 %v1354, %v1358
      %v1360 = vmul.f32 %v1359, 1.442695
      %v1361 = vpow.pop %v1360
      %v1362 = vsel %vm1355, %v1361, 0.0
      %1363 = vadd.xlane.f32.xlu0 %v1362
      %v1364 = vpop.xlane.xlu0 %1363
      %v1365 = vrcp.pop %v1364
      %v1366 = vmul.f32 %v1361, %v1365
      %vm1367 = vcmask 64512
      %v1369 = vsel %vm1367, %v1366, 0
      %1371 = vmatprep.subr.mxu0 0.0
      %1372 = vmatpush1.msra.mxu0 0.0
      %1373 = vmatprep.subr.mxu0 0.0
      %1374 = vmatpush1.msra.mxu0 0.0
      %1375 = vmatprep.subr.mxu0 0.0
      %1376 = vmatpush1.msra.mxu0 0.0
      %1377 = vmatprep.subr.mxu0 0.0
      %1378 = vmatpush1.msra.mxu0 0.0
      %1379 = vmatprep.subr.mxu0 0.0
      %1380 = vmatpush1.msra.mxu0 0.0
      %1381 = vmatprep.subr.mxu0 0.0
      %1382 = vmatpush1.msra.mxu0 0.0
      %1383 = vmatprep.subr.mxu0 0.0
      %1384 = vmatpush1.msra.mxu0 0.0
      %1385 = vmatprep.subr.mxu0 0.0
      %1386 = vmatpush1.msra.mxu0 0.0
      %1387 = vmatprep.subr.mxu0 0.0
      %1388 = vmatpush1.msra.mxu0 0.0
      %1389 = vmatprep.subr.mxu0 0.0
      %1390 = vmatpush1.msra.mxu0 0.0
      %1391 = vmatprep.subr.mxu0 0.0
      %1392 = vmatpush1.msra.mxu0 0.0
      %1393 = vmatprep.subr.mxu0 0.0
      %1394 = vmatpush1.msra.mxu0 0.0
      %1395 = vmatprep.subr.mxu0 0.0
      %1396 = vmatpush1.msra.mxu0 0.0
      %1397 = vmatprep.subr.mxu0 0.0
      %1398 = vmatpush1.msra.mxu0 0.0
      %1399 = vmatprep.subr.mxu0 0.0
      %1400 = vmatpush1.msra.mxu0 0.0
      %1401 = vmatprep.subr.mxu0 0.0
      %1402 = vmatpush1.msra.mxu0 %v582
      %1403 = vmatprep.subr.mxu0 0.0
      %1404 = vmatpush2.msra.mxu0 0.0
      %1405 = vmatprep.subr.mxu0 0.0
      %1406 = vmatpush2.msra.mxu0 0.0
      %1407 = vmatprep.subr.mxu0 0.0
      %1408 = vmatpush2.msra.mxu0 0.0
      %1409 = vmatprep.subr.mxu0 0.0
      %1410 = vmatpush2.msra.mxu0 0.0
      %1411 = vmatprep.subr.mxu0 0.0
      %1412 = vmatpush2.msra.mxu0 0.0
      %1413 = vmatprep.subr.mxu0 0.0
      %1414 = vmatpush2.msra.mxu0 0.0
      %1415 = vmatprep.subr.mxu0 0.0
      %1416 = vmatpush2.msra.mxu0 0.0
      %1417 = vmatprep.subr.mxu0 0.0
      %1418 = vmatpush2.msra.mxu0 0.0
      %1419 = vmatprep.subr.mxu0 0.0
      %1420 = vmatpush2.msra.mxu0 0.0
      %1421 = vmatprep.subr.mxu0 0.0
      %1422 = vmatpush2.msra.mxu0 0.0
      %1423 = vmatprep.subr.mxu0 0.0
      %1424 = vmatpush2.msra.mxu0 0.0
      %1425 = vmatprep.subr.mxu0 0.0
      %1426 = vmatpush2.msra.mxu0 0.0
      %1427 = vmatprep.subr.mxu0 0.0
      %1428 = vmatpush2.msra.mxu0 0.0
      %1429 = vmatprep.subr.mxu0 0.0
      %1430 = vmatpush2.msra.mxu0 0.0
      %1431 = vmatprep.subr.mxu0 0.0
      %1432 = vmatpush2.msra.mxu0 0.0
      %1433 = vmatprep.subr.mxu0 0.0
      %1434 = vmatpush2.msra.mxu0 0.0
      %1435 = vmatprep.mubr.f32.mxu0 0.0
      %1436 = vmatmul.mubr.f32.gmra.mxu0 %v1369
      %v1437 = vpop.f32.mrf.mxu0
      %v1438 = vadd.f32 0.0, %v1437
      %v1439 = vpop.f32.mrf.mxu0
      %1440 = vdwg.mxu0
      %v1441 = vld [vmem:[%s18] sm:$0xff]
      %v1442 = vld [vmem:[%s18 + $0x8] sm:$0xff]
      %v1443 = vld [vmem:[%s18 + $0x10] sm:$0xff]
      %v1444 = vld [vmem:[%s18 + $0x18] sm:$0xff]
      %v1446 = vsel %vm598, %v1438, 0
      %1448 = vmatprep.subr.mxu0 0.0
      %1449 = vmatpush1.msra.mxu0 0.0
      %1450 = vmatprep.subr.mxu0 0.0
      %1451 = vmatpush1.msra.mxu0 0.0
      %1452 = vmatprep.subr.mxu0 0.0
      %1453 = vmatpush1.msra.mxu0 0.0
      %1454 = vmatprep.subr.mxu0 0.0
      %1455 = vmatpush1.msra.mxu0 0.0
      %1456 = vmatprep.subr.mxu0 0.0
      %1457 = vmatpush1.msra.mxu0 0.0
      %1458 = vmatprep.subr.mxu0 0.0
      %1459 = vmatpush1.msra.mxu0 0.0
      %1460 = vmatprep.subr.mxu0 0.0
      %1461 = vmatpush1.msra.mxu0 0.0
      %1462 = vmatprep.subr.mxu0 0.0
      %1463 = vmatpush1.msra.mxu0 0.0
      %1464 = vmatprep.subr.mxu0 0.0
      %1465 = vmatpush1.msra.mxu0 0.0
      %1466 = vmatprep.subr.mxu0 0.0
      %1467 = vmatpush1.msra.mxu0 0.0
      %1468 = vmatprep.subr.mxu0 0.0
      %1469 = vmatpush1.msra.mxu0 0.0
      %1470 = vmatprep.subr.mxu0 0.0
      %1471 = vmatpush1.msra.mxu0 0.0
      %1472 = vmatprep.subr.mxu0 0.0
      %1473 = vmatpush1.msra.mxu0 %v1444
      %1474 = vmatprep.subr.mxu0 0.0
      %1475 = vmatpush1.msra.mxu0 %v1443
      %1476 = vmatprep.subr.mxu0 0.0
      %1477 = vmatpush1.msra.mxu0 %v1442
      %1478 = vmatprep.subr.mxu0 0.0
      %1479 = vmatpush1.msra.mxu0 %v1441
      %1480 = vmatprep.subr.mxu0 0.0
      %1481 = vmatpush2.msra.mxu0 0.0
      %1482 = vmatprep.subr.mxu0 0.0
      %1483 = vmatpush2.msra.mxu0 0.0
      %1484 = vmatprep.subr.mxu0 0.0
      %1485 = vmatpush2.msra.mxu0 0.0
      %1486 = vmatprep.subr.mxu0 0.0
      %1487 = vmatpush2.msra.mxu0 0.0
      %1488 = vmatprep.subr.mxu0 0.0
      %1489 = vmatpush2.msra.mxu0 0.0
      %1490 = vmatprep.subr.mxu0 0.0
      %1491 = vmatpush2.msra.mxu0 0.0
      %1492 = vmatprep.subr.mxu0 0.0
      %1493 = vmatpush2.msra.mxu0 0.0
      %1494 = vmatprep.subr.mxu0 0.0
      %1495 = vmatpush2.msra.mxu0 0.0
      %1496 = vmatprep.subr.mxu0 0.0
      %1497 = vmatpush2.msra.mxu0 0.0
      %1498 = vmatprep.subr.mxu0 0.0
      %1499 = vmatpush2.msra.mxu0 0.0
      %1500 = vmatprep.subr.mxu0 0.0
      %1501 = vmatpush2.msra.mxu0 0.0
      %1502 = vmatprep.subr.mxu0 0.0
      %1503 = vmatpush2.msra.mxu0 0.0
      %1504 = vmatprep.subr.mxu0 0.0
      %1505 = vmatpush2.msra.mxu0 0.0
      %1506 = vmatprep.subr.mxu0 0.0
      %1507 = vmatpush2.msra.mxu0 0.0
      %1508 = vmatprep.subr.mxu0 0.0
      %1509 = vmatpush2.msra.mxu0 0.0
      %1510 = vmatprep.subr.mxu0 0.0
      %1511 = vmatpush2.msra.mxu0 0.0
      %1512 = vmatprep.mubr.f32.mxu0 0.0
      %1513 = vmatmul.mubr.f32.gmra.mxu0 %v1446
      %v1514 = vpop.f32.mrf.mxu0
      %v1515 = vadd.f32 0.0, %v1514
      %v1516 = vpop.f32.mrf.mxu0
      %1517 = vdwg.mxu0
      %1519 = vset.pattern.permute.xlu0 0
      %1520 = vperm.xlu0 %1519, %v887
      %v1521 = vpop.permute.xlu0 %1520
      %v1524 = vsel %vm598, %v669, 0
      %1526 = vmatprep.subr.mxu0 0.0
      %1527 = vmatpush1.xpose.msra.mxu0 0.0
      %1528 = vmatprep.subr.mxu0 0.0
      %1529 = vmatpush1.xpose.msra.mxu0 0.0
      %1530 = vmatprep.subr.mxu0 0.0
      %1531 = vmatpush1.xpose.msra.mxu0 0.0
      %1532 = vmatprep.subr.mxu0 0.0
      %1533 = vmatpush1.xpose.msra.mxu0 0.0
      %1534 = vmatprep.subr.mxu0 0.0
      %1535 = vmatpush1.xpose.msra.mxu0 0.0
      %1536 = vmatprep.subr.mxu0 0.0
      %1537 = vmatpush1.xpose.msra.mxu0 0.0
      %1538 = vmatprep.subr.mxu0 0.0
      %1539 = vmatpush1.xpose.msra.mxu0 0.0
      %1540 = vmatprep.subr.mxu0 0.0
      %1541 = vmatpush1.xpose.msra.mxu0 0.0
      %1542 = vmatprep.subr.mxu0 0.0
      %1543 = vmatpush1.xpose.msra.mxu0 0.0
      %1544 = vmatprep.subr.mxu0 0.0
      %1545 = vmatpush1.xpose.msra.mxu0 0.0
      %1546 = vmatprep.subr.mxu0 0.0
      %1547 = vmatpush1.xpose.msra.mxu0 0.0
      %1548 = vmatprep.subr.mxu0 0.0
      %1549 = vmatpush1.xpose.msra.mxu0 0.0
      %1550 = vmatprep.subr.mxu0 0.0
      %1551 = vmatpush1.xpose.msra.mxu0 0.0
      %1552 = vmatprep.subr.mxu0 0.0
      %1553 = vmatpush1.xpose.msra.mxu0 0.0
      %1554 = vmatprep.subr.mxu0 0.0
      %1555 = vmatpush1.xpose.msra.mxu0 0.0
      %1556 = vmatprep.subr.mxu0 0.0
      %1557 = vmatpush1.xpose.msra.mxu0 %v1206
      %1558 = vmatprep.subr.mxu0 0.0
      %1559 = vmatpush2.xpose.msra.mxu0 0.0
      %1560 = vmatprep.subr.mxu0 0.0
      %1561 = vmatpush2.xpose.msra.mxu0 0.0
      %1562 = vmatprep.subr.mxu0 0.0
      %1563 = vmatpush2.xpose.msra.mxu0 0.0
      %1564 = vmatprep.subr.mxu0 0.0
      %1565 = vmatpush2.xpose.msra.mxu0 0.0
      %1566 = vmatprep.subr.mxu0 0.0
      %1567 = vmatpush2.xpose.msra.mxu0 0.0
      %1568 = vmatprep.subr.mxu0 0.0
      %1569 = vmatpush2.xpose.msra.mxu0 0.0
      %1570 = vmatprep.subr.mxu0 0.0
      %1571 = vmatpush2.xpose.msra.mxu0 0.0
      %1572 = vmatprep.subr.mxu0 0.0
      %1573 = vmatpush2.xpose.msra.mxu0 0.0
      %1574 = vmatprep.subr.mxu0 0.0
      %1575 = vmatpush2.xpose.msra.mxu0 0.0
      %1576 = vmatprep.subr.mxu0 0.0
      %1577 = vmatpush2.xpose.msra.mxu0 0.0
      %1578 = vmatprep.subr.mxu0 0.0
      %1579 = vmatpush2.xpose.msra.mxu0 0.0
      %1580 = vmatprep.subr.mxu0 0.0
      %1581 = vmatpush2.xpose.msra.mxu0 0.0
      %1582 = vmatprep.subr.mxu0 0.0
      %1583 = vmatpush2.xpose.msra.mxu0 0.0
      %1584 = vmatprep.subr.mxu0 0.0
      %1585 = vmatpush2.xpose.msra.mxu0 0.0
      %1586 = vmatprep.subr.mxu0 0.0
      %1587 = vmatpush2.xpose.msra.mxu0 0.0
      %1588 = vmatprep.subr.mxu0 0.0
      %1589 = vmatpush2.xpose.msra.mxu0 0.0
      %1590 = vmatprep.mubr.f32.mxu0 0.0
      %1591 = vmatmul.mubr.f32.gmra.mxu0 %v1524
      %v1592 = vpop.f32.mrf.mxu0
      %v1593 = vadd.f32 %v1521, %v1592
      %v1594 = vpop.f32.mrf.mxu0
      %1595 = vdwg.mxu0
      %v1596 = vsel %vm1185, 1, 0
      %vm1597 = vcmp.eq.s32.totalorder %v1596, 1
      %v1598 = vsel %vm1189, 1, 0
      %vm1599 = vcmp.eq.s32.totalorder %v1598, 1
      %vm1600 = vmor %vm1597, %vm1599
      %v1601 = vsel %vm1600, -100.0, %v1593
      %v1603 = vsel %vm1367, %v1601, 0
      %1605 = vmatprep.subr.mxu0 0.0
      %1606 = vmatpush1.msra.mxu0 0.0
      %1607 = vmatprep.subr.mxu0 0.0
      %1608 = vmatpush1.msra.mxu0 0.0
      %1609 = vmatprep.subr.mxu0 0.0
      %1610 = vmatpush1.msra.mxu0 0.0
      %1611 = vmatprep.subr.mxu0 0.0
      %1612 = vmatpush1.msra.mxu0 0.0
      %1613 = vmatprep.subr.mxu0 0.0
      %1614 = vmatpush1.msra.mxu0 0.0
      %1615 = vmatprep.subr.mxu0 0.0
      %1616 = vmatpush1.msra.mxu0 0.0
      %1617 = vmatprep.subr.mxu0 0.0
      %1618 = vmatpush1.msra.mxu0 0.0
      %1619 = vmatprep.subr.mxu0 0.0
      %1620 = vmatpush1.msra.mxu0 0.0
      %1621 = vmatprep.subr.mxu0 0.0
      %1622 = vmatpush1.msra.mxu0 0.0
      %1623 = vmatprep.subr.mxu0 0.0
      %1624 = vmatpush1.msra.mxu0 0.0
      %1625 = vmatprep.subr.mxu0 0.0
      %1626 = vmatpush1.msra.mxu0 0.0
      %1627 = vmatprep.subr.mxu0 0.0
      %1628 = vmatpush1.msra.mxu0 0.0
      %1629 = vmatprep.subr.mxu0 0.0
      %1630 = vmatpush1.msra.mxu0 0.0
      %1631 = vmatprep.subr.mxu0 0.0
      %1632 = vmatpush1.msra.mxu0 0.0
      %1633 = vmatprep.subr.mxu0 0.0
      %1634 = vmatpush1.msra.mxu0 0.0
      %1635 = vmatprep.subr.mxu0 0.0
      %1636 = vmatpush1.msra.mxu0 %v582
      %1637 = vmatprep.subr.mxu0 0.0
      %1638 = vmatpush2.msra.mxu0 0.0
      %1639 = vmatprep.subr.mxu0 0.0
      %1640 = vmatpush2.msra.mxu0 0.0
      %1641 = vmatprep.subr.mxu0 0.0
      %1642 = vmatpush2.msra.mxu0 0.0
      %1643 = vmatprep.subr.mxu0 0.0
      %1644 = vmatpush2.msra.mxu0 0.0
      %1645 = vmatprep.subr.mxu0 0.0
      %1646 = vmatpush2.msra.mxu0 0.0
      %1647 = vmatprep.subr.mxu0 0.0
      %1648 = vmatpush2.msra.mxu0 0.0
      %1649 = vmatprep.subr.mxu0 0.0
      %1650 = vmatpush2.msra.mxu0 0.0
      %1651 = vmatprep.subr.mxu0 0.0
      %1652 = vmatpush2.msra.mxu0 0.0
      %1653 = vmatprep.subr.mxu0 0.0
      %1654 = vmatpush2.msra.mxu0 0.0
      %1655 = vmatprep.subr.mxu0 0.0
      %1656 = vmatpush2.msra.mxu0 0.0
      %1657 = vmatprep.subr.mxu0 0.0
      %1658 = vmatpush2.msra.mxu0 0.0
      %1659 = vmatprep.subr.mxu0 0.0
      %1660 = vmatpush2.msra.mxu0 0.0
      %1661 = vmatprep.subr.mxu0 0.0
      %1662 = vmatpush2.msra.mxu0 0.0
      %1663 = vmatprep.subr.mxu0 0.0
      %1664 = vmatpush2.msra.mxu0 0.0
      %1665 = vmatprep.subr.mxu0 0.0
      %1666 = vmatpush2.msra.mxu0 0.0
      %1667 = vmatprep.subr.mxu0 0.0
      %1668 = vmatpush2.msra.mxu0 0.0
      %1669 = vmatprep.mubr.f32.mxu0 0.0
      %1670 = vmatmul.mubr.f32.gmra.mxu0 %v1603
      %v1671 = vpop.f32.mrf.mxu0
      %v1672 = vadd.f32 0.0, %v1671
      %v1673 = vpop.f32.mrf.mxu0
      %1674 = vdwg.mxu0
      %v1675 = vmul.f32 %v1672, %v1193
      %v1676 = vsel %vm598, %v1675, 0.0
      %v1677 = vrot.slane %v1676, 4
      %v1678 = vadd.f32 %v1676, %v1677
      %v1679 = vrot.slane %v1678, 2
      %v1680 = vadd.f32 %v1678, %v1679
      %v1681 = vrot.slane %v1680, 1
      %v1682 = vadd.f32 %v1680, %v1681
      %v1683 = vld [vmem:[%s10] sm:$0xff]
      %v1684 = vld [vmem:[%s10 + $0x8] sm:$0xff]
      %v1685 = vld [vmem:[%s10 + $0x10] sm:$0xff]
      %v1686 = vld [vmem:[%s10 + $0x18] sm:$0xff]
      %v1687 = vld [vmem:[%s11] sm:$0x1]
      %v1689 = vsel %vm598, %v1682, 0
      %1691 = vmatprep.subr.mxu0 0.0
      %1692 = vmatpush1.msra.mxu0 0.0
      %1693 = vmatprep.subr.mxu0 0.0
      %1694 = vmatpush1.msra.mxu0 0.0
      %1695 = vmatprep.subr.mxu0 0.0
      %1696 = vmatpush1.msra.mxu0 0.0
      %1697 = vmatprep.subr.mxu0 0.0
      %1698 = vmatpush1.msra.mxu0 0.0
      %1699 = vmatprep.subr.mxu0 0.0
      %1700 = vmatpush1.msra.mxu0 0.0
      %1701 = vmatprep.subr.mxu0 0.0
      %1702 = vmatpush1.msra.mxu0 0.0
      %1703 = vmatprep.subr.mxu0 0.0
      %1704 = vmatpush1.msra.mxu0 0.0
      %1705 = vmatprep.subr.mxu0 0.0
      %1706 = vmatpush1.msra.mxu0 0.0
      %1707 = vmatprep.subr.mxu0 0.0
      %1708 = vmatpush1.msra.mxu0 0.0
      %1709 = vmatprep.subr.mxu0 0.0
      %1710 = vmatpush1.msra.mxu0 0.0
      %1711 = vmatprep.subr.mxu0 0.0
      %1712 = vmatpush1.msra.mxu0 0.0
      %1713 = vmatprep.subr.mxu0 0.0
      %1714 = vmatpush1.msra.mxu0 0.0
      %1715 = vmatprep.subr.mxu0 0.0
      %1716 = vmatpush1.msra.mxu0 %v1686
      %1717 = vmatprep.subr.mxu0 0.0
      %1718 = vmatpush1.msra.mxu0 %v1685
      %1719 = vmatprep.subr.mxu0 0.0
      %1720 = vmatpush1.msra.mxu0 %v1684
      %1721 = vmatprep.subr.mxu0 0.0
      %1722 = vmatpush1.msra.mxu0 %v1683
      %1723 = vmatprep.subr.mxu0 0.0
      %1724 = vmatpush2.msra.mxu0 0.0
      %1725 = vmatprep.subr.mxu0 0.0
      %1726 = vmatpush2.msra.mxu0 0.0
      %1727 = vmatprep.subr.mxu0 0.0
      %1728 = vmatpush2.msra.mxu0 0.0
      %1729 = vmatprep.subr.mxu0 0.0
      %1730 = vmatpush2.msra.mxu0 0.0
      %1731 = vmatprep.subr.mxu0 0.0
      %1732 = vmatpush2.msra.mxu0 0.0
      %1733 = vmatprep.subr.mxu0 0.0
      %1734 = vmatpush2.msra.mxu0 0.0
      %1735 = vmatprep.subr.mxu0 0.0
      %1736 = vmatpush2.msra.mxu0 0.0
      %1737 = vmatprep.subr.mxu0 0.0
      %1738 = vmatpush2.msra.mxu0 0.0
      %1739 = vmatprep.subr.mxu0 0.0
      %1740 = vmatpush2.msra.mxu0 0.0
      %1741 = vmatprep.subr.mxu0 0.0
      %1742 = vmatpush2.msra.mxu0 0.0
      %1743 = vmatprep.subr.mxu0 0.0
      %1744 = vmatpush2.msra.mxu0 0.0
      %1745 = vmatprep.subr.mxu0 0.0
      %1746 = vmatpush2.msra.mxu0 0.0
      %1747 = vmatprep.subr.mxu0 0.0
      %1748 = vmatpush2.msra.mxu0 0.0
      %1749 = vmatprep.subr.mxu0 0.0
      %1750 = vmatpush2.msra.mxu0 0.0
      %1751 = vmatprep.subr.mxu0 0.0
      %1752 = vmatpush2.msra.mxu0 0.0
      %1753 = vmatprep.subr.mxu0 0.0
      %1754 = vmatpush2.msra.mxu0 0.0
      %1755 = vmatprep.mubr.f32.mxu0 0.0
      %1756 = vmatmul.mubr.f32.gmra.mxu0 %v1689
      %v1757 = vpop.f32.mrf.mxu0
      %v1758 = vadd.f32 %v1687, %v1757
      %v1759 = vpop.f32.mrf.mxu0
      %1760 = vdwg.mxu0
      %v1761 = vtanh.pop %v1758
      %v1762 = vld [vmem:[%s14] sm:$0xff]
      %v1763 = vld [vmem:[%s14 + $0x8] sm:$0xff]
      %v1764 = vld [vmem:[%s14 + $0x10] sm:$0xff]
      %v1765 = vld [vmem:[%s14 + $0x18] sm:$0xff]
      %v1766 = vld [vmem:[%s15] sm:$0x1]
      %v1768 = vsel %vm598, %v1761, 0
      %1770 = vmatprep.subr.mxu0 0.0
      %1771 = vmatpush1.msra.mxu0 0.0
      %1772 = vmatprep.subr.mxu0 0.0
      %1773 = vmatpush1.msra.mxu0 0.0
      %1774 = vmatprep.subr.mxu0 0.0
      %1775 = vmatpush1.msra.mxu0 0.0
      %1776 = vmatprep.subr.mxu0 0.0
      %1777 = vmatpush1.msra.mxu0 0.0
      %1778 = vmatprep.subr.mxu0 0.0
      %1779 = vmatpush1.msra.mxu0 0.0
      %1780 = vmatprep.subr.mxu0 0.0
      %1781 = vmatpush1.msra.mxu0 0.0
      %1782 = vmatprep.subr.mxu0 0.0
      %1783 = vmatpush1.msra.mxu0 0.0
      %1784 = vmatprep.subr.mxu0 0.0
      %1785 = vmatpush1.msra.mxu0 0.0
      %1786 = vmatprep.subr.mxu0 0.0
      %1787 = vmatpush1.msra.mxu0 0.0
      %1788 = vmatprep.subr.mxu0 0.0
      %1789 = vmatpush1.msra.mxu0 0.0
      %1790 = vmatprep.subr.mxu0 0.0
      %1791 = vmatpush1.msra.mxu0 0.0
      %1792 = vmatprep.subr.mxu0 0.0
      %1793 = vmatpush1.msra.mxu0 0.0
      %1794 = vmatprep.subr.mxu0 0.0
      %1795 = vmatpush1.msra.mxu0 %v1765
      %1796 = vmatprep.subr.mxu0 0.0
      %1797 = vmatpush1.msra.mxu0 %v1764
      %1798 = vmatprep.subr.mxu0 0.0
      %1799 = vmatpush1.msra.mxu0 %v1763
      %1800 = vmatprep.subr.mxu0 0.0
      %1801 = vmatpush1.msra.mxu0 %v1762
      %1802 = vmatprep.subr.mxu0 0.0
      %1803 = vmatpush2.msra.mxu0 0.0
      %1804 = vmatprep.subr.mxu0 0.0
      %1805 = vmatpush2.msra.mxu0 0.0
      %1806 = vmatprep.subr.mxu0 0.0
      %1807 = vmatpush2.msra.mxu0 0.0
      %1808 = vmatprep.subr.mxu0 0.0
      %1809 = vmatpush2.msra.mxu0 0.0
      %1810 = vmatprep.subr.mxu0 0.0
      %1811 = vmatpush2.msra.mxu0 0.0
      %1812 = vmatprep.subr.mxu0 0.0
      %1813 = vmatpush2.msra.mxu0 0.0
      %1814 = vmatprep.subr.mxu0 0.0
      %1815 = vmatpush2.msra.mxu0 0.0
      %1816 = vmatprep.subr.mxu0 0.0
      %1817 = vmatpush2.msra.mxu0 0.0
      %1818 = vmatprep.subr.mxu0 0.0
      %1819 = vmatpush2.msra.mxu0 0.0
      %1820 = vmatprep.subr.mxu0 0.0
      %1821 = vmatpush2.msra.mxu0 0.0
      %1822 = vmatprep.subr.mxu0 0.0
      %1823 = vmatpush2.msra.mxu0 0.0
      %1824 = vmatprep.subr.mxu0 0.0
      %1825 = vmatpush2.msra.mxu0 0.0
      %1826 = vmatprep.subr.mxu0 0.0
      %1827 = vmatpush2.msra.mxu0 0.0
      %1828 = vmatprep.subr.mxu0 0.0
      %1829 = vmatpush2.msra.mxu0 0.0
      %1830 = vmatprep.subr.mxu0 0.0
      %1831 = vmatpush2.msra.mxu0 0.0
      %1832 = vmatprep.subr.mxu0 0.0
      %1833 = vmatpush2.msra.mxu0 0.0
      %1834 = vmatprep.mubr.f32.mxu0 0.0
      %1835 = vmatmul.mubr.f32.gmra.mxu0 %v1768
      %v1836 = vpop.f32.mrf.mxu0
      %v1837 = vadd.f32 %v1766, %v1836
      %v1838 = vpop.f32.mrf.mxu0
      %1839 = vdwg.mxu0
      %vm1840 = vcmask 1040384
      %v1841 = vsel %vm1840, %v1837, 0.0
      %1842 = vset.pattern.permute.xlu0 1
      %1843 = vperm.xlu0 %1842, %v887
      %v1844 = vpop.permute.xlu0 %1843
      %1846 = vrot.lane.b32.xlu0 %v669, 96
      %v1847 = vpop.permute.xlu0 %1846
      %v1848 = vsel %vm598, %v1847, 0
      %1850 = vmatprep.subr.mxu0 0.0
      %1851 = vmatpush1.xpose.msra.mxu0 0.0
      %1852 = vmatprep.subr.mxu0 0.0
      %1853 = vmatpush1.xpose.msra.mxu0 0.0
      %1854 = vmatprep.subr.mxu0 0.0
      %1855 = vmatpush1.xpose.msra.mxu0 0.0
      %1856 = vmatprep.subr.mxu0 0.0
      %1857 = vmatpush1.xpose.msra.mxu0 0.0
      %1858 = vmatprep.subr.mxu0 0.0
      %1859 = vmatpush1.xpose.msra.mxu0 0.0
      %1860 = vmatprep.subr.mxu0 0.0
      %1861 = vmatpush1.xpose.msra.mxu0 0.0
      %1862 = vmatprep.subr.mxu0 0.0
      %1863 = vmatpush1.xpose.msra.mxu0 0.0
      %1864 = vmatprep.subr.mxu0 0.0
      %1865 = vmatpush1.xpose.msra.mxu0 0.0
      %1866 = vmatprep.subr.mxu0 0.0
      %1867 = vmatpush1.xpose.msra.mxu0 0.0
      %1868 = vmatprep.subr.mxu0 0.0
      %1869 = vmatpush1.xpose.msra.mxu0 0.0
      %1870 = vmatprep.subr.mxu0 0.0
      %1871 = vmatpush1.xpose.msra.mxu0 0.0
      %1872 = vmatprep.subr.mxu0 0.0
      %1873 = vmatpush1.xpose.msra.mxu0 0.0
      %1874 = vmatprep.subr.mxu0 0.0
      %1875 = vmatpush1.xpose.msra.mxu0 0.0
      %1876 = vmatprep.subr.mxu0 0.0
      %1877 = vmatpush1.xpose.msra.mxu0 0.0
      %1878 = vmatprep.subr.mxu0 0.0
      %1879 = vmatpush1.xpose.msra.mxu0 0.0
      %1880 = vmatprep.subr.mxu0 0.0
      %1881 = vmatpush1.xpose.msra.mxu0 %v1206
      %1882 = vmatprep.subr.mxu0 0.0
      %1883 = vmatpush2.xpose.msra.mxu0 0.0
      %1884 = vmatprep.subr.mxu0 0.0
      %1885 = vmatpush2.xpose.msra.mxu0 0.0
      %1886 = vmatprep.subr.mxu0 0.0
      %1887 = vmatpush2.xpose.msra.mxu0 0.0
      %1888 = vmatprep.subr.mxu0 0.0
      %1889 = vmatpush2.xpose.msra.mxu0 0.0
      %1890 = vmatprep.subr.mxu0 0.0
      %1891 = vmatpush2.xpose.msra.mxu0 0.0
      %1892 = vmatprep.subr.mxu0 0.0
      %1893 = vmatpush2.xpose.msra.mxu0 0.0
      %1894 = vmatprep.subr.mxu0 0.0
      %1895 = vmatpush2.xpose.msra.mxu0 0.0
      %1896 = vmatprep.subr.mxu0 0.0
      %1897 = vmatpush2.xpose.msra.mxu0 0.0
      %1898 = vmatprep.subr.mxu0 0.0
      %1899 = vmatpush2.xpose.msra.mxu0 0.0
      %1900 = vmatprep.subr.mxu0 0.0
      %1901 = vmatpush2.xpose.msra.mxu0 0.0
      %1902 = vmatprep.subr.mxu0 0.0
      %1903 = vmatpush2.xpose.msra.mxu0 0.0
      %1904 = vmatprep.subr.mxu0 0.0
      %1905 = vmatpush2.xpose.msra.mxu0 0.0
      %1906 = vmatprep.subr.mxu0 0.0
      %1907 = vmatpush2.xpose.msra.mxu0 0.0
      %1908 = vmatprep.subr.mxu0 0.0
      %1909 = vmatpush2.xpose.msra.mxu0 0.0
      %1910 = vmatprep.subr.mxu0 0.0
      %1911 = vmatpush2.xpose.msra.mxu0 0.0
      %1912 = vmatprep.subr.mxu0 0.0
      %1913 = vmatpush2.xpose.msra.mxu0 0.0
      %1914 = vmatprep.mubr.f32.mxu0 0.0
      %1915 = vmatmul.mubr.f32.gmra.mxu0 %v1848
      %v1916 = vpop.f32.mrf.mxu0
      %v1917 = vadd.f32 %v1844, %v1916
      %v1918 = vpop.f32.mrf.mxu0
      %1919 = vdwg.mxu0
      %v1920 = vsel %vm1600, -100.0, %v1917
      %v1922 = vsel %vm1367, %v1920, 0
      %1924 = vmatprep.subr.mxu0 0.0
      %1925 = vmatpush1.msra.mxu0 0.0
      %1926 = vmatprep.subr.mxu0 0.0
      %1927 = vmatpush1.msra.mxu0 0.0
      %1928 = vmatprep.subr.mxu0 0.0
      %1929 = vmatpush1.msra.mxu0 0.0
      %1930 = vmatprep.subr.mxu0 0.0
      %1931 = vmatpush1.msra.mxu0 0.0
      %1932 = vmatprep.subr.mxu0 0.0
      %1933 = vmatpush1.msra.mxu0 0.0
      %1934 = vmatprep.subr.mxu0 0.0
      %1935 = vmatpush1.msra.mxu0 0.0
      %1936 = vmatprep.subr.mxu0 0.0
      %1937 = vmatpush1.msra.mxu0 0.0
      %1938 = vmatprep.subr.mxu0 0.0
      %1939 = vmatpush1.msra.mxu0 0.0
      %1940 = vmatprep.subr.mxu0 0.0
      %1941 = vmatpush1.msra.mxu0 0.0
      %1942 = vmatprep.subr.mxu0 0.0
      %1943 = vmatpush1.msra.mxu0 0.0
      %1944 = vmatprep.subr.mxu0 0.0
      %1945 = vmatpush1.msra.mxu0 0.0
      %1946 = vmatprep.subr.mxu0 0.0
      %1947 = vmatpush1.msra.mxu0 0.0
      %1948 = vmatprep.subr.mxu0 0.0
      %1949 = vmatpush1.msra.mxu0 0.0
      %1950 = vmatprep.subr.mxu0 0.0
      %1951 = vmatpush1.msra.mxu0 0.0
      %1952 = vmatprep.subr.mxu0 0.0
      %1953 = vmatpush1.msra.mxu0 0.0
      %1954 = vmatprep.subr.mxu0 0.0
      %1955 = vmatpush1.msra.mxu0 %v582
      %1956 = vmatprep.subr.mxu0 0.0
      %1957 = vmatpush2.msra.mxu0 0.0
      %1958 = vmatprep.subr.mxu0 0.0
      %1959 = vmatpush2.msra.mxu0 0.0
      %1960 = vmatprep.subr.mxu0 0.0
      %1961 = vmatpush2.msra.mxu0 0.0
      %1962 = vmatprep.subr.mxu0 0.0
      %1963 = vmatpush2.msra.mxu0 0.0
      %1964 = vmatprep.subr.mxu0 0.0
      %1965 = vmatpush2.msra.mxu0 0.0
      %1966 = vmatprep.subr.mxu0 0.0
      %1967 = vmatpush2.msra.mxu0 0.0
      %1968 = vmatprep.subr.mxu0 0.0
      %1969 = vmatpush2.msra.mxu0 0.0
      %1970 = vmatprep.subr.mxu0 0.0
      %1971 = vmatpush2.msra.mxu0 0.0
      %1972 = vmatprep.subr.mxu0 0.0
      %1973 = vmatpush2.msra.mxu0 0.0
      %1974 = vmatprep.subr.mxu0 0.0
      %1975 = vmatpush2.msra.mxu0 0.0
      %1976 = vmatprep.subr.mxu0 0.0
      %1977 = vmatpush2.msra.mxu0 0.0
      %1978 = vmatprep.subr.mxu0 0.0
      %1979 = vmatpush2.msra.mxu0 0.0
      %1980 = vmatprep.subr.mxu0 0.0
      %1981 = vmatpush2.msra.mxu0 0.0
      %1982 = vmatprep.subr.mxu0 0.0
      %1983 = vmatpush2.msra.mxu0 0.0
      %1984 = vmatprep.subr.mxu0 0.0
      %1985 = vmatpush2.msra.mxu0 0.0
      %1986 = vmatprep.subr.mxu0 0.0
      %1987 = vmatpush2.msra.mxu0 0.0
      %1988 = vmatprep.mubr.f32.mxu0 0.0
      %1989 = vmatmul.mubr.f32.gmra.mxu0 %v1922
      %v1990 = vpop.f32.mrf.mxu0
      %v1991 = vadd.f32 0.0, %v1990
      %v1992 = vpop.f32.mrf.mxu0
      %1993 = vdwg.mxu0
      %v1994 = vmul.f32 %v1991, %v1193
      %v1995 = vsel %vm598, %v1994, 0.0
      %v1996 = vrot.slane %v1995, 4
      %v1997 = vadd.f32 %v1995, %v1996
      %v1998 = vrot.slane %v1997, 2
      %v1999 = vadd.f32 %v1997, %v1998
      %v2000 = vrot.slane %v1999, 1
      %v2001 = vadd.f32 %v1999, %v2000
      %s2002 = scalar_lea.vmem %s10, 32
      %v2003 = vld [vmem:[%s2002] sm:$0xff]
      %v2004 = vld [vmem:[%s2002 + $0x8] sm:$0xff]
      %v2005 = vld [vmem:[%s2002 + $0x10] sm:$0xff]
      %v2006 = vld [vmem:[%s2002 + $0x18] sm:$0xff]
      %s2007 = scalar_lea.vmem %s11, 1
      %v2008 = vld [vmem:[%s2007] sm:$0x1]
      %v2010 = vsel %vm598, %v2001, 0
      %2012 = vmatprep.subr.mxu0 0.0
      %2013 = vmatpush1.msra.mxu0 0.0
      %2014 = vmatprep.subr.mxu0 0.0
      %2015 = vmatpush1.msra.mxu0 0.0
      %2016 = vmatprep.subr.mxu0 0.0
      %2017 = vmatpush1.msra.mxu0 0.0
      %2018 = vmatprep.subr.mxu0 0.0
      %2019 = vmatpush1.msra.mxu0 0.0
      %2020 = vmatprep.subr.mxu0 0.0
      %2021 = vmatpush1.msra.mxu0 0.0
      %2022 = vmatprep.subr.mxu0 0.0
      %2023 = vmatpush1.msra.mxu0 0.0
      %2024 = vmatprep.subr.mxu0 0.0
      %2025 = vmatpush1.msra.mxu0 0.0
      %2026 = vmatprep.subr.mxu0 0.0
      %2027 = vmatpush1.msra.mxu0 0.0
      %2028 = vmatprep.subr.mxu0 0.0
      %2029 = vmatpush1.msra.mxu0 0.0
      %2030 = vmatprep.subr.mxu0 0.0
      %2031 = vmatpush1.msra.mxu0 0.0
      %2032 = vmatprep.subr.mxu0 0.0
      %2033 = vmatpush1.msra.mxu0 0.0
      %2034 = vmatprep.subr.mxu0 0.0
      %2035 = vmatpush1.msra.mxu0 0.0
      %2036 = vmatprep.subr.mxu0 0.0
      %2037 = vmatpush1.msra.mxu0 %v2006
      %2038 = vmatprep.subr.mxu0 0.0
      %2039 = vmatpush1.msra.mxu0 %v2005
      %2040 = vmatprep.subr.mxu0 0.0
      %2041 = vmatpush1.msra.mxu0 %v2004
      %2042 = vmatprep.subr.mxu0 0.0
      %2043 = vmatpush1.msra.mxu0 %v2003
      %2044 = vmatprep.subr.mxu0 0.0
      %2045 = vmatpush2.msra.mxu0 0.0
      %2046 = vmatprep.subr.mxu0 0.0
      %2047 = vmatpush2.msra.mxu0 0.0
      %2048 = vmatprep.subr.mxu0 0.0
      %2049 = vmatpush2.msra.mxu0 0.0
      %2050 = vmatprep.subr.mxu0 0.0
      %2051 = vmatpush2.msra.mxu0 0.0
      %2052 = vmatprep.subr.mxu0 0.0
      %2053 = vmatpush2.msra.mxu0 0.0
      %2054 = vmatprep.subr.mxu0 0.0
      %2055 = vmatpush2.msra.mxu0 0.0
      %2056 = vmatprep.subr.mxu0 0.0
      %2057 = vmatpush2.msra.mxu0 0.0
      %2058 = vmatprep.subr.mxu0 0.0
      %2059 = vmatpush2.msra.mxu0 0.0
      %2060 = vmatprep.subr.mxu0 0.0
      %2061 = vmatpush2.msra.mxu0 0.0
      %2062 = vmatprep.subr.mxu0 0.0
      %2063 = vmatpush2.msra.mxu0 0.0
      %2064 = vmatprep.subr.mxu0 0.0
      %2065 = vmatpush2.msra.mxu0 0.0
      %2066 = vmatprep.subr.mxu0 0.0
      %2067 = vmatpush2.msra.mxu0 0.0
      %2068 = vmatprep.subr.mxu0 0.0
      %2069 = vmatpush2.msra.mxu0 0.0
      %2070 = vmatprep.subr.mxu0 0.0
      %2071 = vmatpush2.msra.mxu0 0.0
      %2072 = vmatprep.subr.mxu0 0.0
      %2073 = vmatpush2.msra.mxu0 0.0
      %2074 = vmatprep.subr.mxu0 0.0
      %2075 = vmatpush2.msra.mxu0 0.0
      %2076 = vmatprep.mubr.f32.mxu0 0.0
      %2077 = vmatmul.mubr.f32.gmra.mxu0 %v2010
      %v2078 = vpop.f32.mrf.mxu0
      %v2079 = vadd.f32 %v2008, %v2078
      %v2080 = vpop.f32.mrf.mxu0
      %2081 = vdwg.mxu0
      %v2082 = vtanh.pop %v2079
      %s2083 = scalar_lea.vmem %s14, 32
      %v2084 = vld [vmem:[%s2083] sm:$0xff]
      %v2085 = vld [vmem:[%s2083 + $0x8] sm:$0xff]
      %v2086 = vld [vmem:[%s2083 + $0x10] sm:$0xff]
      %v2087 = vld [vmem:[%s2083 + $0x18] sm:$0xff]
      %s2088 = scalar_lea.vmem %s15, 1
      %v2089 = vld [vmem:[%s2088] sm:$0x1]
      %v2091 = vsel %vm598, %v2082, 0
      %2093 = vmatprep.subr.mxu0 0.0
      %2094 = vmatpush1.msra.mxu0 0.0
      %2095 = vmatprep.subr.mxu0 0.0
      %2096 = vmatpush1.msra.mxu0 0.0
      %2097 = vmatprep.subr.mxu0 0.0
      %2098 = vmatpush1.msra.mxu0 0.0
      %2099 = vmatprep.subr.mxu0 0.0
      %2100 = vmatpush1.msra.mxu0 0.0
      %2101 = vmatprep.subr.mxu0 0.0
      %2102 = vmatpush1.msra.mxu0 0.0
      %2103 = vmatprep.subr.mxu0 0.0
      %2104 = vmatpush1.msra.mxu0 0.0
      %2105 = vmatprep.subr.mxu0 0.0
      %2106 = vmatpush1.msra.mxu0 0.0
      %2107 = vmatprep.subr.mxu0 0.0
      %2108 = vmatpush1.msra.mxu0 0.0
      %2109 = vmatprep.subr.mxu0 0.0
      %2110 = vmatpush1.msra.mxu0 0.0
      %2111 = vmatprep.subr.mxu0 0.0
      %2112 = vmatpush1.msra.mxu0 0.0
      %2113 = vmatprep.subr.mxu0 0.0
      %2114 = vmatpush1.msra.mxu0 0.0
      %2115 = vmatprep.subr.mxu0 0.0
      %2116 = vmatpush1.msra.mxu0 0.0
      %2117 = vmatprep.subr.mxu0 0.0
      %2118 = vmatpush1.msra.mxu0 %v2087
      %2119 = vmatprep.subr.mxu0 0.0
      %2120 = vmatpush1.msra.mxu0 %v2086
      %2121 = vmatprep.subr.mxu0 0.0
      %2122 = vmatpush1.msra.mxu0 %v2085
      %2123 = vmatprep.subr.mxu0 0.0
      %2124 = vmatpush1.msra.mxu0 %v2084
      %2125 = vmatprep.subr.mxu0 0.0
      %2126 = vmatpush2.msra.mxu0 0.0
      %2127 = vmatprep.subr.mxu0 0.0
      %2128 = vmatpush2.msra.mxu0 0.0
      %2129 = vmatprep.subr.mxu0 0.0
      %2130 = vmatpush2.msra.mxu0 0.0
      %2131 = vmatprep.subr.mxu0 0.0
      %2132 = vmatpush2.msra.mxu0 0.0
      %2133 = vmatprep.subr.mxu0 0.0
      %2134 = vmatpush2.msra.mxu0 0.0
      %2135 = vmatprep.subr.mxu0 0.0
      %2136 = vmatpush2.msra.mxu0 0.0
      %2137 = vmatprep.subr.mxu0 0.0
      %2138 = vmatpush2.msra.mxu0 0.0
      %2139 = vmatprep.subr.mxu0 0.0
      %2140 = vmatpush2.msra.mxu0 0.0
      %2141 = vmatprep.subr.mxu0 0.0
      %2142 = vmatpush2.msra.mxu0 0.0
      %2143 = vmatprep.subr.mxu0 0.0
      %2144 = vmatpush2.msra.mxu0 0.0
      %2145 = vmatprep.subr.mxu0 0.0
      %2146 = vmatpush2.msra.mxu0 0.0
      %2147 = vmatprep.subr.mxu0 0.0
      %2148 = vmatpush2.msra.mxu0 0.0
      %2149 = vmatprep.subr.mxu0 0.0
      %2150 = vmatpush2.msra.mxu0 0.0
      %2151 = vmatprep.subr.mxu0 0.0
      %2152 = vmatpush2.msra.mxu0 0.0
      %2153 = vmatprep.subr.mxu0 0.0
      %2154 = vmatpush2.msra.mxu0 0.0
      %2155 = vmatprep.subr.mxu0 0.0
      %2156 = vmatpush2.msra.mxu0 0.0
      %2157 = vmatprep.mubr.f32.mxu0 0.0
      %2158 = vmatmul.mubr.f32.gmra.mxu0 %v2091
      %v2159 = vpop.f32.mrf.mxu0
      %v2160 = vadd.f32 %v2089, %v2159
      %v2161 = vpop.f32.mrf.mxu0
      %2162 = vdwg.mxu0
      %v2163 = vsel %vm1840, %v2160, 0.0
      %2164 = vset.pattern.permute.xlu0 2
      %2165 = vperm.xlu0 %2164, %v887
      %v2166 = vpop.permute.xlu0 %2165
      %2168 = vrot.lane.b32.xlu0 %v669, 64
      %v2169 = vpop.permute.xlu0 %2168
      %v2170 = vsel %vm598, %v2169, 0
      %2172 = vmatprep.subr.mxu0 0.0
      %2173 = vmatpush1.xpose.msra.mxu0 0.0
      %2174 = vmatprep.subr.mxu0 0.0
      %2175 = vmatpush1.xpose.msra.mxu0 0.0
      %2176 = vmatprep.subr.mxu0 0.0
      %2177 = vmatpush1.xpose.msra.mxu0 0.0
      %2178 = vmatprep.subr.mxu0 0.0
      %2179 = vmatpush1.xpose.msra.mxu0 0.0
      %2180 = vmatprep.subr.mxu0 0.0
      %2181 = vmatpush1.xpose.msra.mxu0 0.0
      %2182 = vmatprep.subr.mxu0 0.0
      %2183 = vmatpush1.xpose.msra.mxu0 0.0
      %2184 = vmatprep.subr.mxu0 0.0
      %2185 = vmatpush1.xpose.msra.mxu0 0.0
      %2186 = vmatprep.subr.mxu0 0.0
      %2187 = vmatpush1.xpose.msra.mxu0 0.0
      %2188 = vmatprep.subr.mxu0 0.0
      %2189 = vmatpush1.xpose.msra.mxu0 0.0
      %2190 = vmatprep.subr.mxu0 0.0
      %2191 = vmatpush1.xpose.msra.mxu0 0.0
      %2192 = vmatprep.subr.mxu0 0.0
      %2193 = vmatpush1.xpose.msra.mxu0 0.0
      %2194 = vmatprep.subr.mxu0 0.0
      %2195 = vmatpush1.xpose.msra.mxu0 0.0
      %2196 = vmatprep.subr.mxu0 0.0
      %2197 = vmatpush1.xpose.msra.mxu0 0.0
      %2198 = vmatprep.subr.mxu0 0.0
      %2199 = vmatpush1.xpose.msra.mxu0 0.0
      %2200 = vmatprep.subr.mxu0 0.0
      %2201 = vmatpush1.xpose.msra.mxu0 0.0
      %2202 = vmatprep.subr.mxu0 0.0
      %2203 = vmatpush1.xpose.msra.mxu0 %v1206
      %2204 = vmatprep.subr.mxu0 0.0
      %2205 = vmatpush2.xpose.msra.mxu0 0.0
      %2206 = vmatprep.subr.mxu0 0.0
      %2207 = vmatpush2.xpose.msra.mxu0 0.0
      %2208 = vmatprep.subr.mxu0 0.0
      %2209 = vmatpush2.xpose.msra.mxu0 0.0
      %2210 = vmatprep.subr.mxu0 0.0
      %2211 = vmatpush2.xpose.msra.mxu0 0.0
      %2212 = vmatprep.subr.mxu0 0.0
      %2213 = vmatpush2.xpose.msra.mxu0 0.0
      %2214 = vmatprep.subr.mxu0 0.0
      %2215 = vmatpush2.xpose.msra.mxu0 0.0
      %2216 = vmatprep.subr.mxu0 0.0
      %2217 = vmatpush2.xpose.msra.mxu0 0.0
      %2218 = vmatprep.subr.mxu0 0.0
      %2219 = vmatpush2.xpose.msra.mxu0 0.0
      %2220 = vmatprep.subr.mxu0 0.0
      %2221 = vmatpush2.xpose.msra.mxu0 0.0
      %2222 = vmatprep.subr.mxu0 0.0
      %2223 = vmatpush2.xpose.msra.mxu0 0.0
      %2224 = vmatprep.subr.mxu0 0.0
      %2225 = vmatpush2.xpose.msra.mxu0 0.0
      %2226 = vmatprep.subr.mxu0 0.0
      %2227 = vmatpush2.xpose.msra.mxu0 0.0
      %2228 = vmatprep.subr.mxu0 0.0
      %2229 = vmatpush2.xpose.msra.mxu0 0.0
      %2230 = vmatprep.subr.mxu0 0.0
      %2231 = vmatpush2.xpose.msra.mxu0 0.0
      %2232 = vmatprep.subr.mxu0 0.0
      %2233 = vmatpush2.xpose.msra.mxu0 0.0
      %2234 = vmatprep.subr.mxu0 0.0
      %2235 = vmatpush2.xpose.msra.mxu0 0.0
      %2236 = vmatprep.mubr.f32.mxu0 0.0
      %2237 = vmatmul.mubr.f32.gmra.mxu0 %v2170
      %v2238 = vpop.f32.mrf.mxu0
      %v2239 = vadd.f32 %v2166, %v2238
      %v2240 = vpop.f32.mrf.mxu0
      %2241 = vdwg.mxu0
      %v2242 = vsel %vm1600, -100.0, %v2239
      %v2244 = vsel %vm1367, %v2242, 0
      %2246 = vmatprep.subr.mxu0 0.0
      %2247 = vmatpush1.msra.mxu0 0.0
      %2248 = vmatprep.subr.mxu0 0.0
      %2249 = vmatpush1.msra.mxu0 0.0
      %2250 = vmatprep.subr.mxu0 0.0
      %2251 = vmatpush1.msra.mxu0 0.0
      %2252 = vmatprep.subr.mxu0 0.0
      %2253 = vmatpush1.msra.mxu0 0.0
      %2254 = vmatprep.subr.mxu0 0.0
      %2255 = vmatpush1.msra.mxu0 0.0
      %2256 = vmatprep.subr.mxu0 0.0
      %2257 = vmatpush1.msra.mxu0 0.0
      %2258 = vmatprep.subr.mxu0 0.0
      %2259 = vmatpush1.msra.mxu0 0.0
      %2260 = vmatprep.subr.mxu0 0.0
      %2261 = vmatpush1.msra.mxu0 0.0
      %2262 = vmatprep.subr.mxu0 0.0
      %2263 = vmatpush1.msra.mxu0 0.0
      %2264 = vmatprep.subr.mxu0 0.0
      %2265 = vmatpush1.msra.mxu0 0.0
      %2266 = vmatprep.subr.mxu0 0.0
      %2267 = vmatpush1.msra.mxu0 0.0
      %2268 = vmatprep.subr.mxu0 0.0
      %2269 = vmatpush1.msra.mxu0 0.0
      %2270 = vmatprep.subr.mxu0 0.0
      %2271 = vmatpush1.msra.mxu0 0.0
      %2272 = vmatprep.subr.mxu0 0.0
      %2273 = vmatpush1.msra.mxu0 0.0
      %2274 = vmatprep.subr.mxu0 0.0
      %2275 = vmatpush1.msra.mxu0 0.0
      %2276 = vmatprep.subr.mxu0 0.0
      %2277 = vmatpush1.msra.mxu0 %v582
      %2278 = vmatprep.subr.mxu0 0.0
      %2279 = vmatpush2.msra.mxu0 0.0
      %2280 = vmatprep.subr.mxu0 0.0
      %2281 = vmatpush2.msra.mxu0 0.0
      %2282 = vmatprep.subr.mxu0 0.0
      %2283 = vmatpush2.msra.mxu0 0.0
      %2284 = vmatprep.subr.mxu0 0.0
      %2285 = vmatpush2.msra.mxu0 0.0
      %2286 = vmatprep.subr.mxu0 0.0
      %2287 = vmatpush2.msra.mxu0 0.0
      %2288 = vmatprep.subr.mxu0 0.0
      %2289 = vmatpush2.msra.mxu0 0.0
      %2290 = vmatprep.subr.mxu0 0.0
      %2291 = vmatpush2.msra.mxu0 0.0
      %2292 = vmatprep.subr.mxu0 0.0
      %2293 = vmatpush2.msra.mxu0 0.0
      %2294 = vmatprep.subr.mxu0 0.0
      %2295 = vmatpush2.msra.mxu0 0.0
      %2296 = vmatprep.subr.mxu0 0.0
      %2297 = vmatpush2.msra.mxu0 0.0
      %2298 = vmatprep.subr.mxu0 0.0
      %2299 = vmatpush2.msra.mxu0 0.0
      %2300 = vmatprep.subr.mxu0 0.0
      %2301 = vmatpush2.msra.mxu0 0.0
      %2302 = vmatprep.subr.mxu0 0.0
      %2303 = vmatpush2.msra.mxu0 0.0
      %2304 = vmatprep.subr.mxu0 0.0
      %2305 = vmatpush2.msra.mxu0 0.0
      %2306 = vmatprep.subr.mxu0 0.0
      %2307 = vmatpush2.msra.mxu0 0.0
      %2308 = vmatprep.subr.mxu0 0.0
      %2309 = vmatpush2.msra.mxu0 0.0
      %2310 = vmatprep.mubr.f32.mxu0 0.0
      %2311 = vmatmul.mubr.f32.gmra.mxu0 %v2244
      %v2312 = vpop.f32.mrf.mxu0
      %v2313 = vadd.f32 0.0, %v2312
      %v2314 = vpop.f32.mrf.mxu0
      %2315 = vdwg.mxu0
      %v2316 = vmul.f32 %v2313, %v1193
      %v2317 = vsel %vm598, %v2316, 0.0
      %v2318 = vrot.slane %v2317, 4
      %v2319 = vadd.f32 %v2317, %v2318
      %v2320 = vrot.slane %v2319, 2
      %v2321 = vadd.f32 %v2319, %v2320
      %v2322 = vrot.slane %v2321, 1
      %v2323 = vadd.f32 %v2321, %v2322
      %s2324 = scalar_lea.vmem %s10, 64
      %v2325 = vld [vmem:[%s2324] sm:$0xff]
      %v2326 = vld [vmem:[%s2324 + $0x8] sm:$0xff]
      %v2327 = vld [vmem:[%s2324 + $0x10] sm:$0xff]
      %v2328 = vld [vmem:[%s2324 + $0x18] sm:$0xff]
      %s2329 = scalar_lea.vmem %s11, 2
      %v2330 = vld [vmem:[%s2329] sm:$0x1]
      %v2332 = vsel %vm598, %v2323, 0
      %2334 = vmatprep.subr.mxu0 0.0
      %2335 = vmatpush1.msra.mxu0 0.0
      %2336 = vmatprep.subr.mxu0 0.0
      %2337 = vmatpush1.msra.mxu0 0.0
      %2338 = vmatprep.subr.mxu0 0.0
      %2339 = vmatpush1.msra.mxu0 0.0
      %2340 = vmatprep.subr.mxu0 0.0
      %2341 = vmatpush1.msra.mxu0 0.0
      %2342 = vmatprep.subr.mxu0 0.0
      %2343 = vmatpush1.msra.mxu0 0.0
      %2344 = vmatprep.subr.mxu0 0.0
      %2345 = vmatpush1.msra.mxu0 0.0
      %2346 = vmatprep.subr.mxu0 0.0
      %2347 = vmatpush1.msra.mxu0 0.0
      %2348 = vmatprep.subr.mxu0 0.0
      %2349 = vmatpush1.msra.mxu0 0.0
      %2350 = vmatprep.subr.mxu0 0.0
      %2351 = vmatpush1.msra.mxu0 0.0
      %2352 = vmatprep.subr.mxu0 0.0
      %2353 = vmatpush1.msra.mxu0 0.0
      %2354 = vmatprep.subr.mxu0 0.0
      %2355 = vmatpush1.msra.mxu0 0.0
      %2356 = vmatprep.subr.mxu0 0.0
      %2357 = vmatpush1.msra.mxu0 0.0
      %2358 = vmatprep.subr.mxu0 0.0
      %2359 = vmatpush1.msra.mxu0 %v2328
      %2360 = vmatprep.subr.mxu0 0.0
      %2361 = vmatpush1.msra.mxu0 %v2327
      %2362 = vmatprep.subr.mxu0 0.0
      %2363 = vmatpush1.msra.mxu0 %v2326
      %2364 = vmatprep.subr.mxu0 0.0
      %2365 = vmatpush1.msra.mxu0 %v2325
      %2366 = vmatprep.subr.mxu0 0.0
      %2367 = vmatpush2.msra.mxu0 0.0
      %2368 = vmatprep.subr.mxu0 0.0
      %2369 = vmatpush2.msra.mxu0 0.0
      %2370 = vmatprep.subr.mxu0 0.0
      %2371 = vmatpush2.msra.mxu0 0.0
      %2372 = vmatprep.subr.mxu0 0.0
      %2373 = vmatpush2.msra.mxu0 0.0
      %2374 = vmatprep.subr.mxu0 0.0
      %2375 = vmatpush2.msra.mxu0 0.0
      %2376 = vmatprep.subr.mxu0 0.0
      %2377 = vmatpush2.msra.mxu0 0.0
      %2378 = vmatprep.subr.mxu0 0.0
      %2379 = vmatpush2.msra.mxu0 0.0
      %2380 = vmatprep.subr.mxu0 0.0
      %2381 = vmatpush2.msra.mxu0 0.0
      %2382 = vmatprep.subr.mxu0 0.0
      %2383 = vmatpush2.msra.mxu0 0.0
      %2384 = vmatprep.subr.mxu0 0.0
      %2385 = vmatpush2.msra.mxu0 0.0
      %2386 = vmatprep.subr.mxu0 0.0
      %2387 = vmatpush2.msra.mxu0 0.0
      %2388 = vmatprep.subr.mxu0 0.0
      %2389 = vmatpush2.msra.mxu0 0.0
      %2390 = vmatprep.subr.mxu0 0.0
      %2391 = vmatpush2.msra.mxu0 0.0
      %2392 = vmatprep.subr.mxu0 0.0
      %2393 = vmatpush2.msra.mxu0 0.0
      %2394 = vmatprep.subr.mxu0 0.0
      %2395 = vmatpush2.msra.mxu0 0.0
      %2396 = vmatprep.subr.mxu0 0.0
      %2397 = vmatpush2.msra.mxu0 0.0
      %2398 = vmatprep.mubr.f32.mxu0 0.0
      %2399 = vmatmul.mubr.f32.gmra.mxu0 %v2332
      %v2400 = vpop.f32.mrf.mxu0
      %v2401 = vadd.f32 %v2330, %v2400
      %v2402 = vpop.f32.mrf.mxu0
      %2403 = vdwg.mxu0
      %v2404 = vtanh.pop %v2401
      %s2405 = scalar_lea.vmem %s14, 64
      %v2406 = vld [vmem:[%s2405] sm:$0xff]
      %v2407 = vld [vmem:[%s2405 + $0x8] sm:$0xff]
      %v2408 = vld [vmem:[%s2405 + $0x10] sm:$0xff]
      %v2409 = vld [vmem:[%s2405 + $0x18] sm:$0xff]
      %s2410 = scalar_lea.vmem %s15, 2
      %v2411 = vld [vmem:[%s2410] sm:$0x1]
      %v2413 = vsel %vm598, %v2404, 0
      %2415 = vmatprep.subr.mxu0 0.0
      %2416 = vmatpush1.msra.mxu0 0.0
      %2417 = vmatprep.subr.mxu0 0.0
      %2418 = vmatpush1.msra.mxu0 0.0
      %2419 = vmatprep.subr.mxu0 0.0
      %2420 = vmatpush1.msra.mxu0 0.0
      %2421 = vmatprep.subr.mxu0 0.0
      %2422 = vmatpush1.msra.mxu0 0.0
      %2423 = vmatprep.subr.mxu0 0.0
      %2424 = vmatpush1.msra.mxu0 0.0
      %2425 = vmatprep.subr.mxu0 0.0
      %2426 = vmatpush1.msra.mxu0 0.0
      %2427 = vmatprep.subr.mxu0 0.0
      %2428 = vmatpush1.msra.mxu0 0.0
      %2429 = vmatprep.subr.mxu0 0.0
      %2430 = vmatpush1.msra.mxu0 0.0
      %2431 = vmatprep.subr.mxu0 0.0
      %2432 = vmatpush1.msra.mxu0 0.0
      %2433 = vmatprep.subr.mxu0 0.0
      %2434 = vmatpush1.msra.mxu0 0.0
      %2435 = vmatprep.subr.mxu0 0.0
      %2436 = vmatpush1.msra.mxu0 0.0
      %2437 = vmatprep.subr.mxu0 0.0
      %2438 = vmatpush1.msra.mxu0 0.0
      %2439 = vmatprep.subr.mxu0 0.0
      %2440 = vmatpush1.msra.mxu0 %v2409
      %2441 = vmatprep.subr.mxu0 0.0
      %2442 = vmatpush1.msra.mxu0 %v2408
      %2443 = vmatprep.subr.mxu0 0.0
      %2444 = vmatpush1.msra.mxu0 %v2407
      %2445 = vmatprep.subr.mxu0 0.0
      %2446 = vmatpush1.msra.mxu0 %v2406
      %2447 = vmatprep.subr.mxu0 0.0
      %2448 = vmatpush2.msra.mxu0 0.0
      %2449 = vmatprep.subr.mxu0 0.0
      %2450 = vmatpush2.msra.mxu0 0.0
      %2451 = vmatprep.subr.mxu0 0.0
      %2452 = vmatpush2.msra.mxu0 0.0
      %2453 = vmatprep.subr.mxu0 0.0
      %2454 = vmatpush2.msra.mxu0 0.0
      %2455 = vmatprep.subr.mxu0 0.0
      %2456 = vmatpush2.msra.mxu0 0.0
      %2457 = vmatprep.subr.mxu0 0.0
      %2458 = vmatpush2.msra.mxu0 0.0
      %2459 = vmatprep.subr.mxu0 0.0
      %2460 = vmatpush2.msra.mxu0 0.0
      %2461 = vmatprep.subr.mxu0 0.0
      %2462 = vmatpush2.msra.mxu0 0.0
      %2463 = vmatprep.subr.mxu0 0.0
      %2464 = vmatpush2.msra.mxu0 0.0
      %2465 = vmatprep.subr.mxu0 0.0
      %2466 = vmatpush2.msra.mxu0 0.0
      %2467 = vmatprep.subr.mxu0 0.0
      %2468 = vmatpush2.msra.mxu0 0.0
      %2469 = vmatprep.subr.mxu0 0.0
      %2470 = vmatpush2.msra.mxu0 0.0
      %2471 = vmatprep.subr.mxu0 0.0
      %2472 = vmatpush2.msra.mxu0 0.0
      %2473 = vmatprep.subr.mxu0 0.0
      %2474 = vmatpush2.msra.mxu0 0.0
      %2475 = vmatprep.subr.mxu0 0.0
      %2476 = vmatpush2.msra.mxu0 0.0
      %2477 = vmatprep.subr.mxu0 0.0
      %2478 = vmatpush2.msra.mxu0 0.0
      %2479 = vmatprep.mubr.f32.mxu0 0.0
      %2480 = vmatmul.mubr.f32.gmra.mxu0 %v2413
      %v2481 = vpop.f32.mrf.mxu0
      %v2482 = vadd.f32 %v2411, %v2481
      %v2483 = vpop.f32.mrf.mxu0
      %2484 = vdwg.mxu0
      %v2485 = vsel %vm1840, %v2482, 0.0
      %2486 = vset.pattern.permute.xlu0 3
      %2487 = vperm.xlu0 %2486, %v887
      %v2488 = vpop.permute.xlu0 %2487
      %2490 = vrot.lane.b32.xlu0 %v669, 32
      %v2491 = vpop.permute.xlu0 %2490
      %v2492 = vsel %vm598, %v2491, 0
      %2494 = vmatprep.subr.mxu0 0.0
      %2495 = vmatpush1.xpose.msra.mxu0 0.0
      %2496 = vmatprep.subr.mxu0 0.0
      %2497 = vmatpush1.xpose.msra.mxu0 0.0
      %2498 = vmatprep.subr.mxu0 0.0
      %2499 = vmatpush1.xpose.msra.mxu0 0.0
      %2500 = vmatprep.subr.mxu0 0.0
      %2501 = vmatpush1.xpose.msra.mxu0 0.0
      %2502 = vmatprep.subr.mxu0 0.0
      %2503 = vmatpush1.xpose.msra.mxu0 0.0
      %2504 = vmatprep.subr.mxu0 0.0
      %2505 = vmatpush1.xpose.msra.mxu0 0.0
      %2506 = vmatprep.subr.mxu0 0.0
      %2507 = vmatpush1.xpose.msra.mxu0 0.0
      %2508 = vmatprep.subr.mxu0 0.0
      %2509 = vmatpush1.xpose.msra.mxu0 0.0
      %2510 = vmatprep.subr.mxu0 0.0
      %2511 = vmatpush1.xpose.msra.mxu0 0.0
      %2512 = vmatprep.subr.mxu0 0.0
      %2513 = vmatpush1.xpose.msra.mxu0 0.0
      %2514 = vmatprep.subr.mxu0 0.0
      %2515 = vmatpush1.xpose.msra.mxu0 0.0
      %2516 = vmatprep.subr.mxu0 0.0
      %2517 = vmatpush1.xpose.msra.mxu0 0.0
      %2518 = vmatprep.subr.mxu0 0.0
      %2519 = vmatpush1.xpose.msra.mxu0 0.0
      %2520 = vmatprep.subr.mxu0 0.0
      %2521 = vmatpush1.xpose.msra.mxu0 0.0
      %2522 = vmatprep.subr.mxu0 0.0
      %2523 = vmatpush1.xpose.msra.mxu0 0.0
      %2524 = vmatprep.subr.mxu0 0.0
      %2525 = vmatpush1.xpose.msra.mxu0 %v1206
      %2526 = vmatprep.subr.mxu0 0.0
      %2527 = vmatpush2.xpose.msra.mxu0 0.0
      %2528 = vmatprep.subr.mxu0 0.0
      %2529 = vmatpush2.xpose.msra.mxu0 0.0
      %2530 = vmatprep.subr.mxu0 0.0
      %2531 = vmatpush2.xpose.msra.mxu0 0.0
      %2532 = vmatprep.subr.mxu0 0.0
      %2533 = vmatpush2.xpose.msra.mxu0 0.0
      %2534 = vmatprep.subr.mxu0 0.0
      %2535 = vmatpush2.xpose.msra.mxu0 0.0
      %2536 = vmatprep.subr.mxu0 0.0
      %2537 = vmatpush2.xpose.msra.mxu0 0.0
      %2538 = vmatprep.subr.mxu0 0.0
      %2539 = vmatpush2.xpose.msra.mxu0 0.0
      %2540 = vmatprep.subr.mxu0 0.0
      %2541 = vmatpush2.xpose.msra.mxu0 0.0
      %2542 = vmatprep.subr.mxu0 0.0
      %2543 = vmatpush2.xpose.msra.mxu0 0.0
      %2544 = vmatprep.subr.mxu0 0.0
      %2545 = vmatpush2.xpose.msra.mxu0 0.0
      %2546 = vmatprep.subr.mxu0 0.0
      %2547 = vmatpush2.xpose.msra.mxu0 0.0
      %2548 = vmatprep.subr.mxu0 0.0
      %2549 = vmatpush2.xpose.msra.mxu0 0.0
      %2550 = vmatprep.subr.mxu0 0.0
      %2551 = vmatpush2.xpose.msra.mxu0 0.0
      %2552 = vmatprep.subr.mxu0 0.0
      %2553 = vmatpush2.xpose.msra.mxu0 0.0
      %2554 = vmatprep.subr.mxu0 0.0
      %2555 = vmatpush2.xpose.msra.mxu0 0.0
      %2556 = vmatprep.subr.mxu0 0.0
      %2557 = vmatpush2.xpose.msra.mxu0 0.0
      %2558 = vmatprep.mubr.f32.mxu0 0.0
      %2559 = vmatmul.mubr.f32.gmra.mxu0 %v2492
      %v2560 = vpop.f32.mrf.mxu0
      %v2561 = vadd.f32 %v2488, %v2560
      %v2562 = vpop.f32.mrf.mxu0
      %2563 = vdwg.mxu0
      %v2564 = vsel %vm1600, -100.0, %v2561
      %v2566 = vsel %vm1367, %v2564, 0
      %2568 = vmatprep.subr.mxu0 0.0
      %2569 = vmatpush1.msra.mxu0 0.0
      %2570 = vmatprep.subr.mxu0 0.0
      %2571 = vmatpush1.msra.mxu0 0.0
      %2572 = vmatprep.subr.mxu0 0.0
      %2573 = vmatpush1.msra.mxu0 0.0
      %2574 = vmatprep.subr.mxu0 0.0
      %2575 = vmatpush1.msra.mxu0 0.0
      %2576 = vmatprep.subr.mxu0 0.0
      %2577 = vmatpush1.msra.mxu0 0.0
      %2578 = vmatprep.subr.mxu0 0.0
      %2579 = vmatpush1.msra.mxu0 0.0
      %2580 = vmatprep.subr.mxu0 0.0
      %2581 = vmatpush1.msra.mxu0 0.0
      %2582 = vmatprep.subr.mxu0 0.0
      %2583 = vmatpush1.msra.mxu0 0.0
      %2584 = vmatprep.subr.mxu0 0.0
      %2585 = vmatpush1.msra.mxu0 0.0
      %2586 = vmatprep.subr.mxu0 0.0
      %2587 = vmatpush1.msra.mxu0 0.0
      %2588 = vmatprep.subr.mxu0 0.0
      %2589 = vmatpush1.msra.mxu0 0.0
      %2590 = vmatprep.subr.mxu0 0.0
      %2591 = vmatpush1.msra.mxu0 0.0
      %2592 = vmatprep.subr.mxu0 0.0
      %2593 = vmatpush1.msra.mxu0 0.0
      %2594 = vmatprep.subr.mxu0 0.0
      %2595 = vmatpush1.msra.mxu0 0.0
      %2596 = vmatprep.subr.mxu0 0.0
      %2597 = vmatpush1.msra.mxu0 0.0
      %2598 = vmatprep.subr.mxu0 0.0
      %2599 = vmatpush1.msra.mxu0 %v582
      %2600 = vmatprep.subr.mxu0 0.0
      %2601 = vmatpush2.msra.mxu0 0.0
      %2602 = vmatprep.subr.mxu0 0.0
      %2603 = vmatpush2.msra.mxu0 0.0
      %2604 = vmatprep.subr.mxu0 0.0
      %2605 = vmatpush2.msra.mxu0 0.0
      %2606 = vmatprep.subr.mxu0 0.0
      %2607 = vmatpush2.msra.mxu0 0.0
      %2608 = vmatprep.subr.mxu0 0.0
      %2609 = vmatpush2.msra.mxu0 0.0
      %2610 = vmatprep.subr.mxu0 0.0
      %2611 = vmatpush2.msra.mxu0 0.0
      %2612 = vmatprep.subr.mxu0 0.0
      %2613 = vmatpush2.msra.mxu0 0.0
      %2614 = vmatprep.subr.mxu0 0.0
      %2615 = vmatpush2.msra.mxu0 0.0
      %2616 = vmatprep.subr.mxu0 0.0
      %2617 = vmatpush2.msra.mxu0 0.0
      %2618 = vmatprep.subr.mxu0 0.0
      %2619 = vmatpush2.msra.mxu0 0.0
      %2620 = vmatprep.subr.mxu0 0.0
      %2621 = vmatpush2.msra.mxu0 0.0
      %2622 = vmatprep.subr.mxu0 0.0
      %2623 = vmatpush2.msra.mxu0 0.0
      %2624 = vmatprep.subr.mxu0 0.0
      %2625 = vmatpush2.msra.mxu0 0.0
      %2626 = vmatprep.subr.mxu0 0.0
      %2627 = vmatpush2.msra.mxu0 0.0
      %2628 = vmatprep.subr.mxu0 0.0
      %2629 = vmatpush2.msra.mxu0 0.0
      %2630 = vmatprep.subr.mxu0 0.0
      %2631 = vmatpush2.msra.mxu0 0.0
      %2632 = vmatprep.mubr.f32.mxu0 0.0
      %2633 = vmatmul.mubr.f32.gmra.mxu0 %v2566
      %v2634 = vpop.f32.mrf.mxu0
      %v2635 = vadd.f32 0.0, %v2634
      %v2636 = vpop.f32.mrf.mxu0
      %2637 = vdwg.mxu0
      %v2638 = vmul.f32 %v2635, %v1193
      %v2639 = vsel %vm598, %v2638, 0.0
      %v2640 = vrot.slane %v2639, 4
      %v2641 = vadd.f32 %v2639, %v2640
      %v2642 = vrot.slane %v2641, 2
      %v2643 = vadd.f32 %v2641, %v2642
      %v2644 = vrot.slane %v2643, 1
      %v2645 = vadd.f32 %v2643, %v2644
      %s2646 = scalar_lea.vmem %s10, 96
      %v2647 = vld [vmem:[%s2646] sm:$0xff]
      %v2648 = vld [vmem:[%s2646 + $0x8] sm:$0xff]
      %v2649 = vld [vmem:[%s2646 + $0x10] sm:$0xff]
      %v2650 = vld [vmem:[%s2646 + $0x18] sm:$0xff]
      %s2651 = scalar_lea.vmem %s11, 3
      %v2652 = vld [vmem:[%s2651] sm:$0x1]
      %v2654 = vsel %vm598, %v2645, 0
      %2656 = vmatprep.subr.mxu0 0.0
      %2657 = vmatpush1.msra.mxu0 0.0
      %2658 = vmatprep.subr.mxu0 0.0
      %2659 = vmatpush1.msra.mxu0 0.0
      %2660 = vmatprep.subr.mxu0 0.0
      %2661 = vmatpush1.msra.mxu0 0.0
      %2662 = vmatprep.subr.mxu0 0.0
      %2663 = vmatpush1.msra.mxu0 0.0
      %2664 = vmatprep.subr.mxu0 0.0
      %2665 = vmatpush1.msra.mxu0 0.0
      %2666 = vmatprep.subr.mxu0 0.0
      %2667 = vmatpush1.msra.mxu0 0.0
      %2668 = vmatprep.subr.mxu0 0.0
      %2669 = vmatpush1.msra.mxu0 0.0
      %2670 = vmatprep.subr.mxu0 0.0
      %2671 = vmatpush1.msra.mxu0 0.0
      %2672 = vmatprep.subr.mxu0 0.0
      %2673 = vmatpush1.msra.mxu0 0.0
      %2674 = vmatprep.subr.mxu0 0.0
      %2675 = vmatpush1.msra.mxu0 0.0
      %2676 = vmatprep.subr.mxu0 0.0
      %2677 = vmatpush1.msra.mxu0 0.0
      %2678 = vmatprep.subr.mxu0 0.0
      %2679 = vmatpush1.msra.mxu0 0.0
      %2680 = vmatprep.subr.mxu0 0.0
      %2681 = vmatpush1.msra.mxu0 %v2650
      %2682 = vmatprep.subr.mxu0 0.0
      %2683 = vmatpush1.msra.mxu0 %v2649
      %2684 = vmatprep.subr.mxu0 0.0
      %2685 = vmatpush1.msra.mxu0 %v2648
      %2686 = vmatprep.subr.mxu0 0.0
      %2687 = vmatpush1.msra.mxu0 %v2647
      %2688 = vmatprep.subr.mxu0 0.0
      %2689 = vmatpush2.msra.mxu0 0.0
      %2690 = vmatprep.subr.mxu0 0.0
      %2691 = vmatpush2.msra.mxu0 0.0
      %2692 = vmatprep.subr.mxu0 0.0
      %2693 = vmatpush2.msra.mxu0 0.0
      %2694 = vmatprep.subr.mxu0 0.0
      %2695 = vmatpush2.msra.mxu0 0.0
      %2696 = vmatprep.subr.mxu0 0.0
      %2697 = vmatpush2.msra.mxu0 0.0
      %2698 = vmatprep.subr.mxu0 0.0
      %2699 = vmatpush2.msra.mxu0 0.0
      %2700 = vmatprep.subr.mxu0 0.0
      %2701 = vmatpush2.msra.mxu0 0.0
      %2702 = vmatprep.subr.mxu0 0.0
      %2703 = vmatpush2.msra.mxu0 0.0
      %2704 = vmatprep.subr.mxu0 0.0
      %2705 = vmatpush2.msra.mxu0 0.0
      %2706 = vmatprep.subr.mxu0 0.0
      %2707 = vmatpush2.msra.mxu0 0.0
      %2708 = vmatprep.subr.mxu0 0.0
      %2709 = vmatpush2.msra.mxu0 0.0
      %2710 = vmatprep.subr.mxu0 0.0
      %2711 = vmatpush2.msra.mxu0 0.0
      %2712 = vmatprep.subr.mxu0 0.0
      %2713 = vmatpush2.msra.mxu0 0.0
      %2714 = vmatprep.subr.mxu0 0.0
      %2715 = vmatpush2.msra.mxu0 0.0
      %2716 = vmatprep.subr.mxu0 0.0
      %2717 = vmatpush2.msra.mxu0 0.0
      %2718 = vmatprep.subr.mxu0 0.0
      %2719 = vmatpush2.msra.mxu0 0.0
      %2720 = vmatprep.mubr.f32.mxu0 0.0
      %2721 = vmatmul.mubr.f32.gmra.mxu0 %v2654
      %v2722 = vpop.f32.mrf.mxu0
      %v2723 = vadd.f32 %v2652, %v2722
      %v2724 = vpop.f32.mrf.mxu0
      %2725 = vdwg.mxu0
      %v2726 = vtanh.pop %v2723
      %s2727 = scalar_lea.vmem %s14, 96
      %v2728 = vld [vmem:[%s2727] sm:$0xff]
      %v2729 = vld [vmem:[%s2727 + $0x8] sm:$0xff]
      %v2730 = vld [vmem:[%s2727 + $0x10] sm:$0xff]
      %v2731 = vld [vmem:[%s2727 + $0x18] sm:$0xff]
      %s2732 = scalar_lea.vmem %s15, 3
      %v2733 = vld [vmem:[%s2732] sm:$0x1]
      %v2735 = vsel %vm598, %v2726, 0
      %2737 = vmatprep.subr.mxu0 0.0
      %2738 = vmatpush1.msra.mxu0 0.0
      %2739 = vmatprep.subr.mxu0 0.0
      %2740 = vmatpush1.msra.mxu0 0.0
      %2741 = vmatprep.subr.mxu0 0.0
      %2742 = vmatpush1.msra.mxu0 0.0
      %2743 = vmatprep.subr.mxu0 0.0
      %2744 = vmatpush1.msra.mxu0 0.0
      %2745 = vmatprep.subr.mxu0 0.0
      %2746 = vmatpush1.msra.mxu0 0.0
      %2747 = vmatprep.subr.mxu0 0.0
      %2748 = vmatpush1.msra.mxu0 0.0
      %2749 = vmatprep.subr.mxu0 0.0
      %2750 = vmatpush1.msra.mxu0 0.0
      %2751 = vmatprep.subr.mxu0 0.0
      %2752 = vmatpush1.msra.mxu0 0.0
      %2753 = vmatprep.subr.mxu0 0.0
      %2754 = vmatpush1.msra.mxu0 0.0
      %2755 = vmatprep.subr.mxu0 0.0
      %2756 = vmatpush1.msra.mxu0 0.0
      %2757 = vmatprep.subr.mxu0 0.0
      %2758 = vmatpush1.msra.mxu0 0.0
      %2759 = vmatprep.subr.mxu0 0.0
      %2760 = vmatpush1.msra.mxu0 0.0
      %2761 = vmatprep.subr.mxu0 0.0
      %2762 = vmatpush1.msra.mxu0 %v2731
      %2763 = vmatprep.subr.mxu0 0.0
      %2764 = vmatpush1.msra.mxu0 %v2730
      %2765 = vmatprep.subr.mxu0 0.0
      %2766 = vmatpush1.msra.mxu0 %v2729
      %2767 = vmatprep.subr.mxu0 0.0
      %2768 = vmatpush1.msra.mxu0 %v2728
      %2769 = vmatprep.subr.mxu0 0.0
      %2770 = vmatpush2.msra.mxu0 0.0
      %2771 = vmatprep.subr.mxu0 0.0
      %2772 = vmatpush2.msra.mxu0 0.0
      %2773 = vmatprep.subr.mxu0 0.0
      %2774 = vmatpush2.msra.mxu0 0.0
      %2775 = vmatprep.subr.mxu0 0.0
      %2776 = vmatpush2.msra.mxu0 0.0
      %2777 = vmatprep.subr.mxu0 0.0
      %2778 = vmatpush2.msra.mxu0 0.0
      %2779 = vmatprep.subr.mxu0 0.0
      %2780 = vmatpush2.msra.mxu0 0.0
      %2781 = vmatprep.subr.mxu0 0.0
      %2782 = vmatpush2.msra.mxu0 0.0
      %2783 = vmatprep.subr.mxu0 0.0
      %2784 = vmatpush2.msra.mxu0 0.0
      %2785 = vmatprep.subr.mxu0 0.0
      %2786 = vmatpush2.msra.mxu0 0.0
      %2787 = vmatprep.subr.mxu0 0.0
      %2788 = vmatpush2.msra.mxu0 0.0
      %2789 = vmatprep.subr.mxu0 0.0
      %2790 = vmatpush2.msra.mxu0 0.0
      %2791 = vmatprep.subr.mxu0 0.0
      %2792 = vmatpush2.msra.mxu0 0.0
      %2793 = vmatprep.subr.mxu0 0.0
      %2794 = vmatpush2.msra.mxu0 0.0
      %2795 = vmatprep.subr.mxu0 0.0
      %2796 = vmatpush2.msra.mxu0 0.0
      %2797 = vmatprep.subr.mxu0 0.0
      %2798 = vmatpush2.msra.mxu0 0.0
      %2799 = vmatprep.subr.mxu0 0.0
      %2800 = vmatpush2.msra.mxu0 0.0
      %2801 = vmatprep.mubr.f32.mxu0 0.0
      %2802 = vmatmul.mubr.f32.gmra.mxu0 %v2735
      %v2803 = vpop.f32.mrf.mxu0
      %v2804 = vadd.f32 %v2733, %v2803
      %v2805 = vpop.f32.mrf.mxu0
      %2806 = vdwg.mxu0
      %v2807 = vsel %vm1840, %v2804, 0.0
      %2808 = vset.pattern.permute.xlu0 4
      %2809 = vperm.xlu0 %2808, %v887
      %v2810 = vpop.permute.xlu0 %2809
      %v2813 = vsel %vm598, %v671, 0
      %2815 = vmatprep.subr.mxu0 0.0
      %2816 = vmatpush1.xpose.msra.mxu0 0.0
      %2817 = vmatprep.subr.mxu0 0.0
      %2818 = vmatpush1.xpose.msra.mxu0 0.0
      %2819 = vmatprep.subr.mxu0 0.0
      %2820 = vmatpush1.xpose.msra.mxu0 0.0
      %2821 = vmatprep.subr.mxu0 0.0
      %2822 = vmatpush1.xpose.msra.mxu0 0.0
      %2823 = vmatprep.subr.mxu0 0.0
      %2824 = vmatpush1.xpose.msra.mxu0 0.0
      %2825 = vmatprep.subr.mxu0 0.0
      %2826 = vmatpush1.xpose.msra.mxu0 0.0
      %2827 = vmatprep.subr.mxu0 0.0
      %2828 = vmatpush1.xpose.msra.mxu0 0.0
      %2829 = vmatprep.subr.mxu0 0.0
      %2830 = vmatpush1.xpose.msra.mxu0 0.0
      %2831 = vmatprep.subr.mxu0 0.0
      %2832 = vmatpush1.xpose.msra.mxu0 0.0
      %2833 = vmatprep.subr.mxu0 0.0
      %2834 = vmatpush1.xpose.msra.mxu0 0.0
      %2835 = vmatprep.subr.mxu0 0.0
      %2836 = vmatpush1.xpose.msra.mxu0 0.0
      %2837 = vmatprep.subr.mxu0 0.0
      %2838 = vmatpush1.xpose.msra.mxu0 0.0
      %2839 = vmatprep.subr.mxu0 0.0
      %2840 = vmatpush1.xpose.msra.mxu0 0.0
      %2841 = vmatprep.subr.mxu0 0.0
      %2842 = vmatpush1.xpose.msra.mxu0 0.0
      %2843 = vmatprep.subr.mxu0 0.0
      %2844 = vmatpush1.xpose.msra.mxu0 0.0
      %2845 = vmatprep.subr.mxu0 0.0
      %2846 = vmatpush1.xpose.msra.mxu0 %v1206
      %2847 = vmatprep.subr.mxu0 0.0
      %2848 = vmatpush2.xpose.msra.mxu0 0.0
      %2849 = vmatprep.subr.mxu0 0.0
      %2850 = vmatpush2.xpose.msra.mxu0 0.0
      %2851 = vmatprep.subr.mxu0 0.0
      %2852 = vmatpush2.xpose.msra.mxu0 0.0
      %2853 = vmatprep.subr.mxu0 0.0
      %2854 = vmatpush2.xpose.msra.mxu0 0.0
      %2855 = vmatprep.subr.mxu0 0.0
      %2856 = vmatpush2.xpose.msra.mxu0 0.0
      %2857 = vmatprep.subr.mxu0 0.0
      %2858 = vmatpush2.xpose.msra.mxu0 0.0
      %2859 = vmatprep.subr.mxu0 0.0
      %2860 = vmatpush2.xpose.msra.mxu0 0.0
      %2861 = vmatprep.subr.mxu0 0.0
      %2862 = vmatpush2.xpose.msra.mxu0 0.0
      %2863 = vmatprep.subr.mxu0 0.0
      %2864 = vmatpush2.xpose.msra.mxu0 0.0
      %2865 = vmatprep.subr.mxu0 0.0
      %2866 = vmatpush2.xpose.msra.mxu0 0.0
      %2867 = vmatprep.subr.mxu0 0.0
      %2868 = vmatpush2.xpose.msra.mxu0 0.0
      %2869 = vmatprep.subr.mxu0 0.0
      %2870 = vmatpush2.xpose.msra.mxu0 0.0
      %2871 = vmatprep.subr.mxu0 0.0
      %2872 = vmatpush2.xpose.msra.mxu0 0.0
      %2873 = vmatprep.subr.mxu0 0.0
      %2874 = vmatpush2.xpose.msra.mxu0 0.0
      %2875 = vmatprep.subr.mxu0 0.0
      %2876 = vmatpush2.xpose.msra.mxu0 0.0
      %2877 = vmatprep.subr.mxu0 0.0
      %2878 = vmatpush2.xpose.msra.mxu0 0.0
      %2879 = vmatprep.mubr.f32.mxu0 0.0
      %2880 = vmatmul.mubr.f32.gmra.mxu0 %v2813
      %v2881 = vpop.f32.mrf.mxu0
      %v2882 = vadd.f32 %v2810, %v2881
      %v2883 = vpop.f32.mrf.mxu0
      %2884 = vdwg.mxu0
      %v2885 = vsel %vm1600, -100.0, %v2882
      %v2886 = vsel %vm1367, %v2885, -inf
      %2887 = vmax.xlane.f32.xlu0 %v2886
      %v2888 = vpop.xlane.xlu0 %2887
      %v2889 = vsub.f32 %v2885, %v2888
      %v2890 = vmul.f32 %v2889, 1.442695
      %v2891 = vpow.pop %v2890
      %v2892 = vsel %vm1367, %v2891, 0.0
      %2893 = vadd.xlane.f32.xlu0 %v2892
      %v2894 = vpop.xlane.xlu0 %2893
      %v2895 = vrcp.pop %v2894
      %v2896 = vmul.f32 %v2891, %v2895
      %v2898 = vsel %vm1367, %v2896, 0
      %2900 = vmatprep.subr.mxu0 0.0
      %2901 = vmatpush1.msra.mxu0 0.0
      %2902 = vmatprep.subr.mxu0 0.0
      %2903 = vmatpush1.msra.mxu0 0.0
      %2904 = vmatprep.subr.mxu0 0.0
      %2905 = vmatpush1.msra.mxu0 0.0
      %2906 = vmatprep.subr.mxu0 0.0
      %2907 = vmatpush1.msra.mxu0 0.0
      %2908 = vmatprep.subr.mxu0 0.0
      %2909 = vmatpush1.msra.mxu0 0.0
      %2910 = vmatprep.subr.mxu0 0.0
      %2911 = vmatpush1.msra.mxu0 0.0
      %2912 = vmatprep.subr.mxu0 0.0
      %2913 = vmatpush1.msra.mxu0 0.0
      %2914 = vmatprep.subr.mxu0 0.0
      %2915 = vmatpush1.msra.mxu0 0.0
      %2916 = vmatprep.subr.mxu0 0.0
      %2917 = vmatpush1.msra.mxu0 0.0
      %2918 = vmatprep.subr.mxu0 0.0
      %2919 = vmatpush1.msra.mxu0 0.0
      %2920 = vmatprep.subr.mxu0 0.0
      %2921 = vmatpush1.msra.mxu0 0.0
      %2922 = vmatprep.subr.mxu0 0.0
      %2923 = vmatpush1.msra.mxu0 0.0
      %2924 = vmatprep.subr.mxu0 0.0
      %2925 = vmatpush1.msra.mxu0 0.0
      %2926 = vmatprep.subr.mxu0 0.0
      %2927 = vmatpush1.msra.mxu0 0.0
      %2928 = vmatprep.subr.mxu0 0.0
      %2929 = vmatpush1.msra.mxu0 0.0
      %2930 = vmatprep.subr.mxu0 0.0
      %2931 = vmatpush1.msra.mxu0 %v582
      %2932 = vmatprep.subr.mxu0 0.0
      %2933 = vmatpush2.msra.mxu0 0.0
      %2934 = vmatprep.subr.mxu0 0.0
      %2935 = vmatpush2.msra.mxu0 0.0
      %2936 = vmatprep.subr.mxu0 0.0
      %2937 = vmatpush2.msra.mxu0 0.0
      %2938 = vmatprep.subr.mxu0 0.0
      %2939 = vmatpush2.msra.mxu0 0.0
      %2940 = vmatprep.subr.mxu0 0.0
      %2941 = vmatpush2.msra.mxu0 0.0
      %2942 = vmatprep.subr.mxu0 0.0
      %2943 = vmatpush2.msra.mxu0 0.0
      %2944 = vmatprep.subr.mxu0 0.0
      %2945 = vmatpush2.msra.mxu0 0.0
      %2946 = vmatprep.subr.mxu0 0.0
      %2947 = vmatpush2.msra.mxu0 0.0
      %2948 = vmatprep.subr.mxu0 0.0
      %2949 = vmatpush2.msra.mxu0 0.0
      %2950 = vmatprep.subr.mxu0 0.0
      %2951 = vmatpush2.msra.mxu0 0.0
      %2952 = vmatprep.subr.mxu0 0.0
      %2953 = vmatpush2.msra.mxu0 0.0
      %2954 = vmatprep.subr.mxu0 0.0
      %2955 = vmatpush2.msra.mxu0 0.0
      %2956 = vmatprep.subr.mxu0 0.0
      %2957 = vmatpush2.msra.mxu0 0.0
      %2958 = vmatprep.subr.mxu0 0.0
      %2959 = vmatpush2.msra.mxu0 0.0
      %2960 = vmatprep.subr.mxu0 0.0
      %2961 = vmatpush2.msra.mxu0 0.0
      %2962 = vmatprep.subr.mxu0 0.0
      %2963 = vmatpush2.msra.mxu0 0.0
      %2964 = vmatprep.mubr.f32.mxu0 0.0
      %2965 = vmatmul.mubr.f32.gmra.mxu0 %v2898
      %v2966 = vpop.f32.mrf.mxu0
      %v2967 = vadd.f32 0.0, %v2966
      %v2968 = vpop.f32.mrf.mxu0
      %2969 = vdwg.mxu0
      %v2970 = vmul.f32 %v2967, %v1193
      %v2971 = vsel %vm598, %v2970, 0.0
      %v2972 = vrot.slane %v2971, 4
      %v2973 = vadd.f32 %v2971, %v2972
      %v2974 = vrot.slane %v2973, 2
      %v2975 = vadd.f32 %v2973, %v2974
      %v2976 = vrot.slane %v2975, 1
      %v2977 = vadd.f32 %v2975, %v2976
      %s2978 = scalar_lea.vmem %s10, 128
      %v2979 = vld [vmem:[%s2978] sm:$0xff]
      %v2980 = vld [vmem:[%s2978 + $0x8] sm:$0xff]
      %v2981 = vld [vmem:[%s2978 + $0x10] sm:$0xff]
      %v2982 = vld [vmem:[%s2978 + $0x18] sm:$0xff]
      %s2983 = scalar_lea.vmem %s11, 4
      %v2984 = vld [vmem:[%s2983] sm:$0x1]
      %v2986 = vsel %vm598, %v2977, 0
      %2988 = vmatprep.subr.mxu0 0.0
      %2989 = vmatpush1.msra.mxu0 0.0
      %2990 = vmatprep.subr.mxu0 0.0
      %2991 = vmatpush1.msra.mxu0 0.0
      %2992 = vmatprep.subr.mxu0 0.0
      %2993 = vmatpush1.msra.mxu0 0.0
      %2994 = vmatprep.subr.mxu0 0.0
      %2995 = vmatpush1.msra.mxu0 0.0
      %2996 = vmatprep.subr.mxu0 0.0
      %2997 = vmatpush1.msra.mxu0 0.0
      %2998 = vmatprep.subr.mxu0 0.0
      %2999 = vmatpush1.msra.mxu0 0.0
      %3000 = vmatprep.subr.mxu0 0.0
      %3001 = vmatpush1.msra.mxu0 0.0
      %3002 = vmatprep.subr.mxu0 0.0
      %3003 = vmatpush1.msra.mxu0 0.0
      %3004 = vmatprep.subr.mxu0 0.0
      %3005 = vmatpush1.msra.mxu0 0.0
      %3006 = vmatprep.subr.mxu0 0.0
      %3007 = vmatpush1.msra.mxu0 0.0
      %3008 = vmatprep.subr.mxu0 0.0
      %3009 = vmatpush1.msra.mxu0 0.0
      %3010 = vmatprep.subr.mxu0 0.0
      %3011 = vmatpush1.msra.mxu0 0.0
      %3012 = vmatprep.subr.mxu0 0.0
      %3013 = vmatpush1.msra.mxu0 %v2982
      %3014 = vmatprep.subr.mxu0 0.0
      %3015 = vmatpush1.msra.mxu0 %v2981
      %3016 = vmatprep.subr.mxu0 0.0
      %3017 = vmatpush1.msra.mxu0 %v2980
      %3018 = vmatprep.subr.mxu0 0.0
      %3019 = vmatpush1.msra.mxu0 %v2979
      %3020 = vmatprep.subr.mxu0 0.0
      %3021 = vmatpush2.msra.mxu0 0.0
      %3022 = vmatprep.subr.mxu0 0.0
      %3023 = vmatpush2.msra.mxu0 0.0
      %3024 = vmatprep.subr.mxu0 0.0
      %3025 = vmatpush2.msra.mxu0 0.0
      %3026 = vmatprep.subr.mxu0 0.0
      %3027 = vmatpush2.msra.mxu0 0.0
      %3028 = vmatprep.subr.mxu0 0.0
      %3029 = vmatpush2.msra.mxu0 0.0
      %3030 = vmatprep.subr.mxu0 0.0
      %3031 = vmatpush2.msra.mxu0 0.0
      %3032 = vmatprep.subr.mxu0 0.0
      %3033 = vmatpush2.msra.mxu0 0.0
      %3034 = vmatprep.subr.mxu0 0.0
      %3035 = vmatpush2.msra.mxu0 0.0
      %3036 = vmatprep.subr.mxu0 0.0
      %3037 = vmatpush2.msra.mxu0 0.0
      %3038 = vmatprep.subr.mxu0 0.0
      %3039 = vmatpush2.msra.mxu0 0.0
      %3040 = vmatprep.subr.mxu0 0.0
      %3041 = vmatpush2.msra.mxu0 0.0
      %3042 = vmatprep.subr.mxu0 0.0
      %3043 = vmatpush2.msra.mxu0 0.0
      %3044 = vmatprep.subr.mxu0 0.0
      %3045 = vmatpush2.msra.mxu0 0.0
      %3046 = vmatprep.subr.mxu0 0.0
      %3047 = vmatpush2.msra.mxu0 0.0
      %3048 = vmatprep.subr.mxu0 0.0
      %3049 = vmatpush2.msra.mxu0 0.0
      %3050 = vmatprep.subr.mxu0 0.0
      %3051 = vmatpush2.msra.mxu0 0.0
      %3052 = vmatprep.mubr.f32.mxu0 0.0
      %3053 = vmatmul.mubr.f32.gmra.mxu0 %v2986
      %v3054 = vpop.f32.mrf.mxu0
      %v3055 = vadd.f32 %v2984, %v3054
      %v3056 = vpop.f32.mrf.mxu0
      %3057 = vdwg.mxu0
      %v3058 = vtanh.pop %v3055
      %s3059 = scalar_lea.vmem %s14, 128
      %v3060 = vld [vmem:[%s3059] sm:$0xff]
      %v3061 = vld [vmem:[%s3059 + $0x8] sm:$0xff]
      %v3062 = vld [vmem:[%s3059 + $0x10] sm:$0xff]
      %v3063 = vld [vmem:[%s3059 + $0x18] sm:$0xff]
      %s3064 = scalar_lea.vmem %s15, 4
      %v3065 = vld [vmem:[%s3064] sm:$0x1]
      %v3067 = vsel %vm598, %v3058, 0
      %3069 = vmatprep.subr.mxu0 0.0
      %3070 = vmatpush1.msra.mxu0 0.0
      %3071 = vmatprep.subr.mxu0 0.0
      %3072 = vmatpush1.msra.mxu0 0.0
      %3073 = vmatprep.subr.mxu0 0.0
      %3074 = vmatpush1.msra.mxu0 0.0
      %3075 = vmatprep.subr.mxu0 0.0
      %3076 = vmatpush1.msra.mxu0 0.0
      %3077 = vmatprep.subr.mxu0 0.0
      %3078 = vmatpush1.msra.mxu0 0.0
      %3079 = vmatprep.subr.mxu0 0.0
      %3080 = vmatpush1.msra.mxu0 0.0
      %3081 = vmatprep.subr.mxu0 0.0
      %3082 = vmatpush1.msra.mxu0 0.0
      %3083 = vmatprep.subr.mxu0 0.0
      %3084 = vmatpush1.msra.mxu0 0.0
      %3085 = vmatprep.subr.mxu0 0.0
      %3086 = vmatpush1.msra.mxu0 0.0
      %3087 = vmatprep.subr.mxu0 0.0
      %3088 = vmatpush1.msra.mxu0 0.0
      %3089 = vmatprep.subr.mxu0 0.0
      %3090 = vmatpush1.msra.mxu0 0.0
      %3091 = vmatprep.subr.mxu0 0.0
      %3092 = vmatpush1.msra.mxu0 0.0
      %3093 = vmatprep.subr.mxu0 0.0
      %3094 = vmatpush1.msra.mxu0 %v3063
      %3095 = vmatprep.subr.mxu0 0.0
      %3096 = vmatpush1.msra.mxu0 %v3062
      %3097 = vmatprep.subr.mxu0 0.0
      %3098 = vmatpush1.msra.mxu0 %v3061
      %3099 = vmatprep.subr.mxu0 0.0
      %3100 = vmatpush1.msra.mxu0 %v3060
      %3101 = vmatprep.subr.mxu0 0.0
      %3102 = vmatpush2.msra.mxu0 0.0
      %3103 = vmatprep.subr.mxu0 0.0
      %3104 = vmatpush2.msra.mxu0 0.0
      %3105 = vmatprep.subr.mxu0 0.0
      %3106 = vmatpush2.msra.mxu0 0.0
      %3107 = vmatprep.subr.mxu0 0.0
      %3108 = vmatpush2.msra.mxu0 0.0
      %3109 = vmatprep.subr.mxu0 0.0
      %3110 = vmatpush2.msra.mxu0 0.0
      %3111 = vmatprep.subr.mxu0 0.0
      %3112 = vmatpush2.msra.mxu0 0.0
      %3113 = vmatprep.subr.mxu0 0.0
      %3114 = vmatpush2.msra.mxu0 0.0
      %3115 = vmatprep.subr.mxu0 0.0
      %3116 = vmatpush2.msra.mxu0 0.0
      %3117 = vmatprep.subr.mxu0 0.0
      %3118 = vmatpush2.msra.mxu0 0.0
      %3119 = vmatprep.subr.mxu0 0.0
      %3120 = vmatpush2.msra.mxu0 0.0
      %3121 = vmatprep.subr.mxu0 0.0
      %3122 = vmatpush2.msra.mxu0 0.0
      %3123 = vmatprep.subr.mxu0 0.0
      %3124 = vmatpush2.msra.mxu0 0.0
      %3125 = vmatprep.subr.mxu0 0.0
      %3126 = vmatpush2.msra.mxu0 0.0
      %3127 = vmatprep.subr.mxu0 0.0
      %3128 = vmatpush2.msra.mxu0 0.0
      %3129 = vmatprep.subr.mxu0 0.0
      %3130 = vmatpush2.msra.mxu0 0.0
      %3131 = vmatprep.subr.mxu0 0.0
      %3132 = vmatpush2.msra.mxu0 0.0
      %3133 = vmatprep.mubr.f32.mxu0 0.0
      %3134 = vmatmul.mubr.f32.gmra.mxu0 %v3067
      %v3135 = vpop.f32.mrf.mxu0
      %v3136 = vadd.f32 %v3065, %v3135
      %v3137 = vpop.f32.mrf.mxu0
      %3138 = vdwg.mxu0
      %v3139 = vsel %vm1840, %v3136, 0.0
      %3140 = vset.pattern.permute.xlu0 5
      %3141 = vperm.xlu0 %3140, %v887
      %v3142 = vpop.permute.xlu0 %3141
      %3144 = vrot.lane.b32.xlu0 %v671, 96
      %v3145 = vpop.permute.xlu0 %3144
      %v3146 = vsel %vm598, %v3145, 0
      %3148 = vmatprep.subr.mxu0 0.0
      %3149 = vmatpush1.xpose.msra.mxu0 0.0
      %3150 = vmatprep.subr.mxu0 0.0
      %3151 = vmatpush1.xpose.msra.mxu0 0.0
      %3152 = vmatprep.subr.mxu0 0.0
      %3153 = vmatpush1.xpose.msra.mxu0 0.0
      %3154 = vmatprep.subr.mxu0 0.0
      %3155 = vmatpush1.xpose.msra.mxu0 0.0
      %3156 = vmatprep.subr.mxu0 0.0
      %3157 = vmatpush1.xpose.msra.mxu0 0.0
      %3158 = vmatprep.subr.mxu0 0.0
      %3159 = vmatpush1.xpose.msra.mxu0 0.0
      %3160 = vmatprep.subr.mxu0 0.0
      %3161 = vmatpush1.xpose.msra.mxu0 0.0
      %3162 = vmatprep.subr.mxu0 0.0
      %3163 = vmatpush1.xpose.msra.mxu0 0.0
      %3164 = vmatprep.subr.mxu0 0.0
      %3165 = vmatpush1.xpose.msra.mxu0 0.0
      %3166 = vmatprep.subr.mxu0 0.0
      %3167 = vmatpush1.xpose.msra.mxu0 0.0
      %3168 = vmatprep.subr.mxu0 0.0
      %3169 = vmatpush1.xpose.msra.mxu0 0.0
      %3170 = vmatprep.subr.mxu0 0.0
      %3171 = vmatpush1.xpose.msra.mxu0 0.0
      %3172 = vmatprep.subr.mxu0 0.0
      %3173 = vmatpush1.xpose.msra.mxu0 0.0
      %3174 = vmatprep.subr.mxu0 0.0
      %3175 = vmatpush1.xpose.msra.mxu0 0.0
      %3176 = vmatprep.subr.mxu0 0.0
      %3177 = vmatpush1.xpose.msra.mxu0 0.0
      %3178 = vmatprep.subr.mxu0 0.0
      %3179 = vmatpush1.xpose.msra.mxu0 %v1206
      %3180 = vmatprep.subr.mxu0 0.0
      %3181 = vmatpush2.xpose.msra.mxu0 0.0
      %3182 = vmatprep.subr.mxu0 0.0
      %3183 = vmatpush2.xpose.msra.mxu0 0.0
      %3184 = vmatprep.subr.mxu0 0.0
      %3185 = vmatpush2.xpose.msra.mxu0 0.0
      %3186 = vmatprep.subr.mxu0 0.0
      %3187 = vmatpush2.xpose.msra.mxu0 0.0
      %3188 = vmatprep.subr.mxu0 0.0
      %3189 = vmatpush2.xpose.msra.mxu0 0.0
      %3190 = vmatprep.subr.mxu0 0.0
      %3191 = vmatpush2.xpose.msra.mxu0 0.0
      %3192 = vmatprep.subr.mxu0 0.0
      %3193 = vmatpush2.xpose.msra.mxu0 0.0
      %3194 = vmatprep.subr.mxu0 0.0
      %3195 = vmatpush2.xpose.msra.mxu0 0.0
      %3196 = vmatprep.subr.mxu0 0.0
      %3197 = vmatpush2.xpose.msra.mxu0 0.0
      %3198 = vmatprep.subr.mxu0 0.0
      %3199 = vmatpush2.xpose.msra.mxu0 0.0
      %3200 = vmatprep.subr.mxu0 0.0
      %3201 = vmatpush2.xpose.msra.mxu0 0.0
      %3202 = vmatprep.subr.mxu0 0.0
      %3203 = vmatpush2.xpose.msra.mxu0 0.0
      %3204 = vmatprep.subr.mxu0 0.0
      %3205 = vmatpush2.xpose.msra.mxu0 0.0
      %3206 = vmatprep.subr.mxu0 0.0
      %3207 = vmatpush2.xpose.msra.mxu0 0.0
      %3208 = vmatprep.subr.mxu0 0.0
      %3209 = vmatpush2.xpose.msra.mxu0 0.0
      %3210 = vmatprep.subr.mxu0 0.0
      %3211 = vmatpush2.xpose.msra.mxu0 0.0
      %3212 = vmatprep.mubr.f32.mxu0 0.0
      %3213 = vmatmul.mubr.f32.gmra.mxu0 %v3146
      %v3214 = vpop.f32.mrf.mxu0
      %v3215 = vadd.f32 %v3142, %v3214
      %v3216 = vpop.f32.mrf.mxu0
      %3217 = vdwg.mxu0
      %v3218 = vsel %vm1597, -100.0, %v3215
      %v3219 = vsel %vm1367, %v3218, -inf
      %3220 = vmax.xlane.f32.xlu0 %v3219
      %v3221 = vpop.xlane.xlu0 %3220
      %v3222 = vsub.f32 %v3218, %v3221
      %v3223 = vmul.f32 %v3222, 1.442695
      %v3224 = vpow.pop %v3223
      %v3225 = vsel %vm1367, %v3224, 0.0
      %3226 = vadd.xlane.f32.xlu0 %v3225
      %v3227 = vpop.xlane.xlu0 %3226
      %v3228 = vrcp.pop %v3227
      %v3229 = vmul.f32 %v3224, %v3228
      %v3231 = vsel %vm1367, %v3229, 0
      %3233 = vmatprep.subr.mxu0 0.0
      %3234 = vmatpush1.msra.mxu0 0.0
      %3235 = vmatprep.subr.mxu0 0.0
      %3236 = vmatpush1.msra.mxu0 0.0
      %3237 = vmatprep.subr.mxu0 0.0
      %3238 = vmatpush1.msra.mxu0 0.0
      %3239 = vmatprep.subr.mxu0 0.0
      %3240 = vmatpush1.msra.mxu0 0.0
      %3241 = vmatprep.subr.mxu0 0.0
      %3242 = vmatpush1.msra.mxu0 0.0
      %3243 = vmatprep.subr.mxu0 0.0
      %3244 = vmatpush1.msra.mxu0 0.0
      %3245 = vmatprep.subr.mxu0 0.0
      %3246 = vmatpush1.msra.mxu0 0.0
      %3247 = vmatprep.subr.mxu0 0.0
      %3248 = vmatpush1.msra.mxu0 0.0
      %3249 = vmatprep.subr.mxu0 0.0
      %3250 = vmatpush1.msra.mxu0 0.0
      %3251 = vmatprep.subr.mxu0 0.0
      %3252 = vmatpush1.msra.mxu0 0.0
      %3253 = vmatprep.subr.mxu0 0.0
      %3254 = vmatpush1.msra.mxu0 0.0
      %3255 = vmatprep.subr.mxu0 0.0
      %3256 = vmatpush1.msra.mxu0 0.0
      %3257 = vmatprep.subr.mxu0 0.0
      %3258 = vmatpush1.msra.mxu0 0.0
      %3259 = vmatprep.subr.mxu0 0.0
      %3260 = vmatpush1.msra.mxu0 0.0
      %3261 = vmatprep.subr.mxu0 0.0
      %3262 = vmatpush1.msra.mxu0 0.0
      %3263 = vmatprep.subr.mxu0 0.0
      %3264 = vmatpush1.msra.mxu0 %v582
      %3265 = vmatprep.subr.mxu0 0.0
      %3266 = vmatpush2.msra.mxu0 0.0
      %3267 = vmatprep.subr.mxu0 0.0
      %3268 = vmatpush2.msra.mxu0 0.0
      %3269 = vmatprep.subr.mxu0 0.0
      %3270 = vmatpush2.msra.mxu0 0.0
      %3271 = vmatprep.subr.mxu0 0.0
      %3272 = vmatpush2.msra.mxu0 0.0
      %3273 = vmatprep.subr.mxu0 0.0
      %3274 = vmatpush2.msra.mxu0 0.0
      %3275 = vmatprep.subr.mxu0 0.0
      %3276 = vmatpush2.msra.mxu0 0.0
      %3277 = vmatprep.subr.mxu0 0.0
      %3278 = vmatpush2.msra.mxu0 0.0
      %3279 = vmatprep.subr.mxu0 0.0
      %3280 = vmatpush2.msra.mxu0 0.0
      %3281 = vmatprep.subr.mxu0 0.0
      %3282 = vmatpush2.msra.mxu0 0.0
      %3283 = vmatprep.subr.mxu0 0.0
      %3284 = vmatpush2.msra.mxu0 0.0
      %3285 = vmatprep.subr.mxu0 0.0
      %3286 = vmatpush2.msra.mxu0 0.0
      %3287 = vmatprep.subr.mxu0 0.0
      %3288 = vmatpush2.msra.mxu0 0.0
      %3289 = vmatprep.subr.mxu0 0.0
      %3290 = vmatpush2.msra.mxu0 0.0
      %3291 = vmatprep.subr.mxu0 0.0
      %3292 = vmatpush2.msra.mxu0 0.0
      %3293 = vmatprep.subr.mxu0 0.0
      %3294 = vmatpush2.msra.mxu0 0.0
      %3295 = vmatprep.subr.mxu0 0.0
      %3296 = vmatpush2.msra.mxu0 0.0
      %3297 = vmatprep.mubr.f32.mxu0 0.0
      %3298 = vmatmul.mubr.f32.gmra.mxu0 %v3231
      %v3299 = vpop.f32.mrf.mxu0
      %v3300 = vadd.f32 0.0, %v3299
      %v3301 = vpop.f32.mrf.mxu0
      %3302 = vdwg.mxu0
      %s3303 = scalar_lea.vmem %s10, 160
      %v3304 = vld [vmem:[%s3303] sm:$0xff]
      %v3305 = vld [vmem:[%s3303 + $0x8] sm:$0xff]
      %v3306 = vld [vmem:[%s3303 + $0x10] sm:$0xff]
      %v3307 = vld [vmem:[%s3303 + $0x18] sm:$0xff]
      %3309 = vrot.lane.b32.xlu0 %v1040, 96
      %v3310 = vpop.permute.xlu0 %3309
      %v3313 = vsel %vm598, %v3300, 0
      %3315 = vmatprep.subr.mxu0 0.0
      %3316 = vmatpush1.msra.mxu0 0.0
      %3317 = vmatprep.subr.mxu0 0.0
      %3318 = vmatpush1.msra.mxu0 0.0
      %3319 = vmatprep.subr.mxu0 0.0
      %3320 = vmatpush1.msra.mxu0 0.0
      %3321 = vmatprep.subr.mxu0 0.0
      %3322 = vmatpush1.msra.mxu0 0.0
      %3323 = vmatprep.subr.mxu0 0.0
      %3324 = vmatpush1.msra.mxu0 0.0
      %3325 = vmatprep.subr.mxu0 0.0
      %3326 = vmatpush1.msra.mxu0 0.0
      %3327 = vmatprep.subr.mxu0 0.0
      %3328 = vmatpush1.msra.mxu0 0.0
      %3329 = vmatprep.subr.mxu0 0.0
      %3330 = vmatpush1.msra.mxu0 0.0
      %3331 = vmatprep.subr.mxu0 0.0
      %3332 = vmatpush1.msra.mxu0 0.0
      %3333 = vmatprep.subr.mxu0 0.0
      %3334 = vmatpush1.msra.mxu0 0.0
      %3335 = vmatprep.subr.mxu0 0.0
      %3336 = vmatpush1.msra.mxu0 0.0
      %3337 = vmatprep.subr.mxu0 0.0
      %3338 = vmatpush1.msra.mxu0 0.0
      %3339 = vmatprep.subr.mxu0 0.0
      %3340 = vmatpush1.msra.mxu0 %v3307
      %3341 = vmatprep.subr.mxu0 0.0
      %3342 = vmatpush1.msra.mxu0 %v3306
      %3343 = vmatprep.subr.mxu0 0.0
      %3344 = vmatpush1.msra.mxu0 %v3305
      %3345 = vmatprep.subr.mxu0 0.0
      %3346 = vmatpush1.msra.mxu0 %v3304
      %3347 = vmatprep.subr.mxu0 0.0
      %3348 = vmatpush2.msra.mxu0 0.0
      %3349 = vmatprep.subr.mxu0 0.0
      %3350 = vmatpush2.msra.mxu0 0.0
      %3351 = vmatprep.subr.mxu0 0.0
      %3352 = vmatpush2.msra.mxu0 0.0
      %3353 = vmatprep.subr.mxu0 0.0
      %3354 = vmatpush2.msra.mxu0 0.0
      %3355 = vmatprep.subr.mxu0 0.0
      %3356 = vmatpush2.msra.mxu0 0.0
      %3357 = vmatprep.subr.mxu0 0.0
      %3358 = vmatpush2.msra.mxu0 0.0
      %3359 = vmatprep.subr.mxu0 0.0
      %3360 = vmatpush2.msra.mxu0 0.0
      %3361 = vmatprep.subr.mxu0 0.0
      %3362 = vmatpush2.msra.mxu0 0.0
      %3363 = vmatprep.subr.mxu0 0.0
      %3364 = vmatpush2.msra.mxu0 0.0
      %3365 = vmatprep.subr.mxu0 0.0
      %3366 = vmatpush2.msra.mxu0 0.0
      %3367 = vmatprep.subr.mxu0 0.0
      %3368 = vmatpush2.msra.mxu0 0.0
      %3369 = vmatprep.subr.mxu0 0.0
      %3370 = vmatpush2.msra.mxu0 0.0
      %3371 = vmatprep.subr.mxu0 0.0
      %3372 = vmatpush2.msra.mxu0 0.0
      %3373 = vmatprep.subr.mxu0 0.0
      %3374 = vmatpush2.msra.mxu0 0.0
      %3375 = vmatprep.subr.mxu0 0.0
      %3376 = vmatpush2.msra.mxu0 0.0
      %3377 = vmatprep.subr.mxu0 0.0
      %3378 = vmatpush2.msra.mxu0 0.0
      %3379 = vmatprep.mubr.f32.mxu0 0.0
      %3380 = vmatmul.mubr.f32.gmra.mxu0 %v3313
      %v3381 = vpop.f32.mrf.mxu0
      %v3382 = vadd.f32 %v3310, %v3381
      %v3383 = vpop.f32.mrf.mxu0
      %3384 = vdwg.mxu0
      %s3385 = scalar_lea.vmem %s11, 5
      %v3386 = vld [vmem:[%s3385] sm:$0x1]
      %v3388 = vlaneseq
      %v3389 = vshrl.u32 %v3388, 7
      %v3390 = vsub.s32 0, %v3389
      %v3391 = vrot.slane %v3386, %v3390
      %v3393 = vadd.f32 %v3382, %v3391
      %v3394 = vtanh.pop %v3393
      %s3395 = scalar_lea.vmem %s14, 160
      %v3396 = vld [vmem:[%s3395] sm:$0xff]
      %v3397 = vld [vmem:[%s3395 + $0x8] sm:$0xff]
      %v3398 = vld [vmem:[%s3395 + $0x10] sm:$0xff]
      %v3399 = vld [vmem:[%s3395 + $0x18] sm:$0xff]
      %s3400 = scalar_lea.vmem %s15, 5
      %v3401 = vld [vmem:[%s3400] sm:$0x1]
      %v3403 = vlaneseq
      %v3404 = vshrl.u32 %v3403, 7
      %v3405 = vsub.s32 0, %v3404
      %v3406 = vrot.slane %v3401, %v3405
      %v3409 = vsel %vm598, %v3394, 0
      %3411 = vmatprep.subr.mxu0 0.0
      %3412 = vmatpush1.msra.mxu0 0.0
      %3413 = vmatprep.subr.mxu0 0.0
      %3414 = vmatpush1.msra.mxu0 0.0
      %3415 = vmatprep.subr.mxu0 0.0
      %3416 = vmatpush1.msra.mxu0 0.0
      %3417 = vmatprep.subr.mxu0 0.0
      %3418 = vmatpush1.msra.mxu0 0.0
      %3419 = vmatprep.subr.mxu0 0.0
      %3420 = vmatpush1.msra.mxu0 0.0
      %3421 = vmatprep.subr.mxu0 0.0
      %3422 = vmatpush1.msra.mxu0 0.0
      %3423 = vmatprep.subr.mxu0 0.0
      %3424 = vmatpush1.msra.mxu0 0.0
      %3425 = vmatprep.subr.mxu0 0.0
      %3426 = vmatpush1.msra.mxu0 0.0
      %3427 = vmatprep.subr.mxu0 0.0
      %3428 = vmatpush1.msra.mxu0 0.0
      %3429 = vmatprep.subr.mxu0 0.0
      %3430 = vmatpush1.msra.mxu0 0.0
      %3431 = vmatprep.subr.mxu0 0.0
      %3432 = vmatpush1.msra.mxu0 0.0
      %3433 = vmatprep.subr.mxu0 0.0
      %3434 = vmatpush1.msra.mxu0 0.0
      %3435 = vmatprep.subr.mxu0 0.0
      %3436 = vmatpush1.msra.mxu0 %v3399
      %3437 = vmatprep.subr.mxu0 0.0
      %3438 = vmatpush1.msra.mxu0 %v3398
      %3439 = vmatprep.subr.mxu0 0.0
      %3440 = vmatpush1.msra.mxu0 %v3397
      %3441 = vmatprep.subr.mxu0 0.0
      %3442 = vmatpush1.msra.mxu0 %v3396
      %3443 = vmatprep.subr.mxu0 0.0
      %3444 = vmatpush2.msra.mxu0 0.0
      %3445 = vmatprep.subr.mxu0 0.0
      %3446 = vmatpush2.msra.mxu0 0.0
      %3447 = vmatprep.subr.mxu0 0.0
      %3448 = vmatpush2.msra.mxu0 0.0
      %3449 = vmatprep.subr.mxu0 0.0
      %3450 = vmatpush2.msra.mxu0 0.0
      %3451 = vmatprep.subr.mxu0 0.0
      %3452 = vmatpush2.msra.mxu0 0.0
      %3453 = vmatprep.subr.mxu0 0.0
      %3454 = vmatpush2.msra.mxu0 0.0
      %3455 = vmatprep.subr.mxu0 0.0
      %3456 = vmatpush2.msra.mxu0 0.0
      %3457 = vmatprep.subr.mxu0 0.0
      %3458 = vmatpush2.msra.mxu0 0.0
      %3459 = vmatprep.subr.mxu0 0.0
      %3460 = vmatpush2.msra.mxu0 0.0
      %3461 = vmatprep.subr.mxu0 0.0
      %3462 = vmatpush2.msra.mxu0 0.0
      %3463 = vmatprep.subr.mxu0 0.0
      %3464 = vmatpush2.msra.mxu0 0.0
      %3465 = vmatprep.subr.mxu0 0.0
      %3466 = vmatpush2.msra.mxu0 0.0
      %3467 = vmatprep.subr.mxu0 0.0
      %3468 = vmatpush2.msra.mxu0 0.0
      %3469 = vmatprep.subr.mxu0 0.0
      %3470 = vmatpush2.msra.mxu0 0.0
      %3471 = vmatprep.subr.mxu0 0.0
      %3472 = vmatpush2.msra.mxu0 0.0
      %3473 = vmatprep.subr.mxu0 0.0
      %3474 = vmatpush2.msra.mxu0 0.0
      %3475 = vmatprep.mubr.f32.mxu0 0.0
      %3476 = vmatmul.mubr.f32.gmra.mxu0 %v3409
      %v3477 = vpop.f32.mrf.mxu0
      %v3478 = vadd.f32 %v3406, %v3477
      %v3479 = vpop.f32.mrf.mxu0
      %3480 = vdwg.mxu0
      %3481 = vset.pattern.permute.xlu0 6
      %3482 = vperm.xlu0 %3481, %v887
      %v3483 = vpop.permute.xlu0 %3482
      %3485 = vrot.lane.b32.xlu0 %v671, 64
      %v3486 = vpop.permute.xlu0 %3485
      %v3487 = vsel %vm598, %v3486, 0
      %3489 = vmatprep.subr.mxu0 0.0
      %3490 = vmatpush1.xpose.msra.mxu0 0.0
      %3491 = vmatprep.subr.mxu0 0.0
      %3492 = vmatpush1.xpose.msra.mxu0 0.0
      %3493 = vmatprep.subr.mxu0 0.0
      %3494 = vmatpush1.xpose.msra.mxu0 0.0
      %3495 = vmatprep.subr.mxu0 0.0
      %3496 = vmatpush1.xpose.msra.mxu0 0.0
      %3497 = vmatprep.subr.mxu0 0.0
      %3498 = vmatpush1.xpose.msra.mxu0 0.0
      %3499 = vmatprep.subr.mxu0 0.0
      %3500 = vmatpush1.xpose.msra.mxu0 0.0
      %3501 = vmatprep.subr.mxu0 0.0
      %3502 = vmatpush1.xpose.msra.mxu0 0.0
      %3503 = vmatprep.subr.mxu0 0.0
      %3504 = vmatpush1.xpose.msra.mxu0 0.0
      %3505 = vmatprep.subr.mxu0 0.0
      %3506 = vmatpush1.xpose.msra.mxu0 0.0
      %3507 = vmatprep.subr.mxu0 0.0
      %3508 = vmatpush1.xpose.msra.mxu0 0.0
      %3509 = vmatprep.subr.mxu0 0.0
      %3510 = vmatpush1.xpose.msra.mxu0 0.0
      %3511 = vmatprep.subr.mxu0 0.0
      %3512 = vmatpush1.xpose.msra.mxu0 0.0
      %3513 = vmatprep.subr.mxu0 0.0
      %3514 = vmatpush1.xpose.msra.mxu0 0.0
      %3515 = vmatprep.subr.mxu0 0.0
      %3516 = vmatpush1.xpose.msra.mxu0 0.0
      %3517 = vmatprep.subr.mxu0 0.0
      %3518 = vmatpush1.xpose.msra.mxu0 0.0
      %3519 = vmatprep.subr.mxu0 0.0
      %3520 = vmatpush1.xpose.msra.mxu0 %v1206
      %3521 = vmatprep.subr.mxu0 0.0
      %3522 = vmatpush2.xpose.msra.mxu0 0.0
      %3523 = vmatprep.subr.mxu0 0.0
      %3524 = vmatpush2.xpose.msra.mxu0 0.0
      %3525 = vmatprep.subr.mxu0 0.0
      %3526 = vmatpush2.xpose.msra.mxu0 0.0
      %3527 = vmatprep.subr.mxu0 0.0
      %3528 = vmatpush2.xpose.msra.mxu0 0.0
      %3529 = vmatprep.subr.mxu0 0.0
      %3530 = vmatpush2.xpose.msra.mxu0 0.0
      %3531 = vmatprep.subr.mxu0 0.0
      %3532 = vmatpush2.xpose.msra.mxu0 0.0
      %3533 = vmatprep.subr.mxu0 0.0
      %3534 = vmatpush2.xpose.msra.mxu0 0.0
      %3535 = vmatprep.subr.mxu0 0.0
      %3536 = vmatpush2.xpose.msra.mxu0 0.0
      %3537 = vmatprep.subr.mxu0 0.0
      %3538 = vmatpush2.xpose.msra.mxu0 0.0
      %3539 = vmatprep.subr.mxu0 0.0
      %3540 = vmatpush2.xpose.msra.mxu0 0.0
      %3541 = vmatprep.subr.mxu0 0.0
      %3542 = vmatpush2.xpose.msra.mxu0 0.0
      %3543 = vmatprep.subr.mxu0 0.0
      %3544 = vmatpush2.xpose.msra.mxu0 0.0
      %3545 = vmatprep.subr.mxu0 0.0
      %3546 = vmatpush2.xpose.msra.mxu0 0.0
      %3547 = vmatprep.subr.mxu0 0.0
      %3548 = vmatpush2.xpose.msra.mxu0 0.0
      %3549 = vmatprep.subr.mxu0 0.0
      %3550 = vmatpush2.xpose.msra.mxu0 0.0
      %3551 = vmatprep.subr.mxu0 0.0
      %3552 = vmatpush2.xpose.msra.mxu0 0.0
      %3553 = vmatprep.mubr.f32.mxu0 0.0
      %3554 = vmatmul.mubr.f32.gmra.mxu0 %v3487
      %v3555 = vpop.f32.mrf.mxu0
      %v3556 = vadd.f32 %v3483, %v3555
      %v3557 = vpop.f32.mrf.mxu0
      %3558 = vdwg.mxu0
      %v3559 = vsel %vm1597, -100.0, %v3556
      %v3560 = vsel %vm1367, %v3559, -inf
      %3561 = vmax.xlane.f32.xlu0 %v3560
      %v3562 = vpop.xlane.xlu0 %3561
      %v3563 = vsub.f32 %v3559, %v3562
      %v3564 = vmul.f32 %v3563, 1.442695
      %v3565 = vpow.pop %v3564
      %v3566 = vsel %vm1367, %v3565, 0.0
      %3567 = vadd.xlane.f32.xlu0 %v3566
      %v3568 = vpop.xlane.xlu0 %3567
      %v3569 = vrcp.pop %v3568
      %v3570 = vmul.f32 %v3565, %v3569
      %v3572 = vsel %vm1367, %v3570, 0
      %3574 = vmatprep.subr.mxu0 0.0
      %3575 = vmatpush1.msra.mxu0 0.0
      %3576 = vmatprep.subr.mxu0 0.0
      %3577 = vmatpush1.msra.mxu0 0.0
      %3578 = vmatprep.subr.mxu0 0.0
      %3579 = vmatpush1.msra.mxu0 0.0
      %3580 = vmatprep.subr.mxu0 0.0
      %3581 = vmatpush1.msra.mxu0 0.0
      %3582 = vmatprep.subr.mxu0 0.0
      %3583 = vmatpush1.msra.mxu0 0.0
      %3584 = vmatprep.subr.mxu0 0.0
      %3585 = vmatpush1.msra.mxu0 0.0
      %3586 = vmatprep.subr.mxu0 0.0
      %3587 = vmatpush1.msra.mxu0 0.0
      %3588 = vmatprep.subr.mxu0 0.0
      %3589 = vmatpush1.msra.mxu0 0.0
      %3590 = vmatprep.subr.mxu0 0.0
      %3591 = vmatpush1.msra.mxu0 0.0
      %3592 = vmatprep.subr.mxu0 0.0
      %3593 = vmatpush1.msra.mxu0 0.0
      %3594 = vmatprep.subr.mxu0 0.0
      %3595 = vmatpush1.msra.mxu0 0.0
      %3596 = vmatprep.subr.mxu0 0.0
      %3597 = vmatpush1.msra.mxu0 0.0
      %3598 = vmatprep.subr.mxu0 0.0
      %3599 = vmatpush1.msra.mxu0 0.0
      %3600 = vmatprep.subr.mxu0 0.0
      %3601 = vmatpush1.msra.mxu0 0.0
      %3602 = vmatprep.subr.mxu0 0.0
      %3603 = vmatpush1.msra.mxu0 0.0
      %3604 = vmatprep.subr.mxu0 0.0
      %3605 = vmatpush1.msra.mxu0 %v582
      %3606 = vmatprep.subr.mxu0 0.0
      %3607 = vmatpush2.msra.mxu0 0.0
      %3608 = vmatprep.subr.mxu0 0.0
      %3609 = vmatpush2.msra.mxu0 0.0
      %3610 = vmatprep.subr.mxu0 0.0
      %3611 = vmatpush2.msra.mxu0 0.0
      %3612 = vmatprep.subr.mxu0 0.0
      %3613 = vmatpush2.msra.mxu0 0.0
      %3614 = vmatprep.subr.mxu0 0.0
      %3615 = vmatpush2.msra.mxu0 0.0
      %3616 = vmatprep.subr.mxu0 0.0
      %3617 = vmatpush2.msra.mxu0 0.0
      %3618 = vmatprep.subr.mxu0 0.0
      %3619 = vmatpush2.msra.mxu0 0.0
      %3620 = vmatprep.subr.mxu0 0.0
      %3621 = vmatpush2.msra.mxu0 0.0
      %3622 = vmatprep.subr.mxu0 0.0
      %3623 = vmatpush2.msra.mxu0 0.0
      %3624 = vmatprep.subr.mxu0 0.0
      %3625 = vmatpush2.msra.mxu0 0.0
      %3626 = vmatprep.subr.mxu0 0.0
      %3627 = vmatpush2.msra.mxu0 0.0
      %3628 = vmatprep.subr.mxu0 0.0
      %3629 = vmatpush2.msra.mxu0 0.0
      %3630 = vmatprep.subr.mxu0 0.0
      %3631 = vmatpush2.msra.mxu0 0.0
      %3632 = vmatprep.subr.mxu0 0.0
      %3633 = vmatpush2.msra.mxu0 0.0
      %3634 = vmatprep.subr.mxu0 0.0
      %3635 = vmatpush2.msra.mxu0 0.0
      %3636 = vmatprep.subr.mxu0 0.0
      %3637 = vmatpush2.msra.mxu0 0.0
      %3638 = vmatprep.mubr.f32.mxu0 0.0
      %3639 = vmatmul.mubr.f32.gmra.mxu0 %v3572
      %v3640 = vpop.f32.mrf.mxu0
      %v3641 = vadd.f32 0.0, %v3640
      %v3642 = vpop.f32.mrf.mxu0
      %3643 = vdwg.mxu0
      %s3644 = scalar_lea.vmem %s10, 192
      %v3645 = vld [vmem:[%s3644] sm:$0xff]
      %v3646 = vld [vmem:[%s3644 + $0x8] sm:$0xff]
      %v3647 = vld [vmem:[%s3644 + $0x10] sm:$0xff]
      %v3648 = vld [vmem:[%s3644 + $0x18] sm:$0xff]
      %3649 = vrot.lane.b32.xlu0 %v1040, 64
      %v3650 = vpop.permute.xlu0 %3649
      %v3653 = vsel %vm598, %v3641, 0
      %3655 = vmatprep.subr.mxu0 0.0
      %3656 = vmatpush1.msra.mxu0 0.0
      %3657 = vmatprep.subr.mxu0 0.0
      %3658 = vmatpush1.msra.mxu0 0.0
      %3659 = vmatprep.subr.mxu0 0.0
      %3660 = vmatpush1.msra.mxu0 0.0
      %3661 = vmatprep.subr.mxu0 0.0
      %3662 = vmatpush1.msra.mxu0 0.0
      %3663 = vmatprep.subr.mxu0 0.0
      %3664 = vmatpush1.msra.mxu0 0.0
      %3665 = vmatprep.subr.mxu0 0.0
      %3666 = vmatpush1.msra.mxu0 0.0
      %3667 = vmatprep.subr.mxu0 0.0
      %3668 = vmatpush1.msra.mxu0 0.0
      %3669 = vmatprep.subr.mxu0 0.0
      %3670 = vmatpush1.msra.mxu0 0.0
      %3671 = vmatprep.subr.mxu0 0.0
      %3672 = vmatpush1.msra.mxu0 0.0
      %3673 = vmatprep.subr.mxu0 0.0
      %3674 = vmatpush1.msra.mxu0 0.0
      %3675 = vmatprep.subr.mxu0 0.0
      %3676 = vmatpush1.msra.mxu0 0.0
      %3677 = vmatprep.subr.mxu0 0.0
      %3678 = vmatpush1.msra.mxu0 0.0
      %3679 = vmatprep.subr.mxu0 0.0
      %3680 = vmatpush1.msra.mxu0 %v3648
      %3681 = vmatprep.subr.mxu0 0.0
      %3682 = vmatpush1.msra.mxu0 %v3647
      %3683 = vmatprep.subr.mxu0 0.0
      %3684 = vmatpush1.msra.mxu0 %v3646
      %3685 = vmatprep.subr.mxu0 0.0
      %3686 = vmatpush1.msra.mxu0 %v3645
      %3687 = vmatprep.subr.mxu0 0.0
      %3688 = vmatpush2.msra.mxu0 0.0
      %3689 = vmatprep.subr.mxu0 0.0
      %3690 = vmatpush2.msra.mxu0 0.0
      %3691 = vmatprep.subr.mxu0 0.0
      %3692 = vmatpush2.msra.mxu0 0.0
      %3693 = vmatprep.subr.mxu0 0.0
      %3694 = vmatpush2.msra.mxu0 0.0
      %3695 = vmatprep.subr.mxu0 0.0
      %3696 = vmatpush2.msra.mxu0 0.0
      %3697 = vmatprep.subr.mxu0 0.0
      %3698 = vmatpush2.msra.mxu0 0.0
      %3699 = vmatprep.subr.mxu0 0.0
      %3700 = vmatpush2.msra.mxu0 0.0
      %3701 = vmatprep.subr.mxu0 0.0
      %3702 = vmatpush2.msra.mxu0 0.0
      %3703 = vmatprep.subr.mxu0 0.0
      %3704 = vmatpush2.msra.mxu0 0.0
      %3705 = vmatprep.subr.mxu0 0.0
      %3706 = vmatpush2.msra.mxu0 0.0
      %3707 = vmatprep.subr.mxu0 0.0
      %3708 = vmatpush2.msra.mxu0 0.0
      %3709 = vmatprep.subr.mxu0 0.0
      %3710 = vmatpush2.msra.mxu0 0.0
      %3711 = vmatprep.subr.mxu0 0.0
      %3712 = vmatpush2.msra.mxu0 0.0
      %3713 = vmatprep.subr.mxu0 0.0
      %3714 = vmatpush2.msra.mxu0 0.0
      %3715 = vmatprep.subr.mxu0 0.0
      %3716 = vmatpush2.msra.mxu0 0.0
      %3717 = vmatprep.subr.mxu0 0.0
      %3718 = vmatpush2.msra.mxu0 0.0
      %3719 = vmatprep.mubr.f32.mxu0 0.0
      %3720 = vmatmul.mubr.f32.gmra.mxu0 %v3653
      %v3721 = vpop.f32.mrf.mxu0
      %v3722 = vadd.f32 %v3650, %v3721
      %v3723 = vpop.f32.mrf.mxu0
      %3724 = vdwg.mxu0
      %s3725 = scalar_lea.vmem %s11, 6
      %v3726 = vld [vmem:[%s3725] sm:$0x1]
      %v3728 = vlaneseq
      %v3729 = vshrl.u32 %v3728, 7
      %v3730 = vsub.s32 0, %v3729
      %v3731 = vrot.slane %v3726, %v3730
      %v3733 = vadd.f32 %v3722, %v3731
      %v3734 = vtanh.pop %v3733
      %s3735 = scalar_lea.vmem %s14, 192
      %v3736 = vld [vmem:[%s3735] sm:$0xff]
      %v3737 = vld [vmem:[%s3735 + $0x8] sm:$0xff]
      %v3738 = vld [vmem:[%s3735 + $0x10] sm:$0xff]
      %v3739 = vld [vmem:[%s3735 + $0x18] sm:$0xff]
      %s3740 = scalar_lea.vmem %s15, 6
      %v3741 = vld [vmem:[%s3740] sm:$0x1]
      %v3743 = vlaneseq
      %v3744 = vshrl.u32 %v3743, 7
      %v3745 = vsub.s32 0, %v3744
      %v3746 = vrot.slane %v3741, %v3745
      %v3749 = vsel %vm598, %v3734, 0
      %3751 = vmatprep.subr.mxu0 0.0
      %3752 = vmatpush1.msra.mxu0 0.0
      %3753 = vmatprep.subr.mxu0 0.0
      %3754 = vmatpush1.msra.mxu0 0.0
      %3755 = vmatprep.subr.mxu0 0.0
      %3756 = vmatpush1.msra.mxu0 0.0
      %3757 = vmatprep.subr.mxu0 0.0
      %3758 = vmatpush1.msra.mxu0 0.0
      %3759 = vmatprep.subr.mxu0 0.0
      %3760 = vmatpush1.msra.mxu0 0.0
      %3761 = vmatprep.subr.mxu0 0.0
      %3762 = vmatpush1.msra.mxu0 0.0
      %3763 = vmatprep.subr.mxu0 0.0
      %3764 = vmatpush1.msra.mxu0 0.0
      %3765 = vmatprep.subr.mxu0 0.0
      %3766 = vmatpush1.msra.mxu0 0.0
      %3767 = vmatprep.subr.mxu0 0.0
      %3768 = vmatpush1.msra.mxu0 0.0
      %3769 = vmatprep.subr.mxu0 0.0
      %3770 = vmatpush1.msra.mxu0 0.0
      %3771 = vmatprep.subr.mxu0 0.0
      %3772 = vmatpush1.msra.mxu0 0.0
      %3773 = vmatprep.subr.mxu0 0.0
      %3774 = vmatpush1.msra.mxu0 0.0
      %3775 = vmatprep.subr.mxu0 0.0
      %3776 = vmatpush1.msra.mxu0 %v3739
      %3777 = vmatprep.subr.mxu0 0.0
      %3778 = vmatpush1.msra.mxu0 %v3738
      %3779 = vmatprep.subr.mxu0 0.0
      %3780 = vmatpush1.msra.mxu0 %v3737
      %3781 = vmatprep.subr.mxu0 0.0
      %3782 = vmatpush1.msra.mxu0 %v3736
      %3783 = vmatprep.subr.mxu0 0.0
      %3784 = vmatpush2.msra.mxu0 0.0
      %3785 = vmatprep.subr.mxu0 0.0
      %3786 = vmatpush2.msra.mxu0 0.0
      %3787 = vmatprep.subr.mxu0 0.0
      %3788 = vmatpush2.msra.mxu0 0.0
      %3789 = vmatprep.subr.mxu0 0.0
      %3790 = vmatpush2.msra.mxu0 0.0
      %3791 = vmatprep.subr.mxu0 0.0
      %3792 = vmatpush2.msra.mxu0 0.0
      %3793 = vmatprep.subr.mxu0 0.0
      %3794 = vmatpush2.msra.mxu0 0.0
      %3795 = vmatprep.subr.mxu0 0.0
      %3796 = vmatpush2.msra.mxu0 0.0
      %3797 = vmatprep.subr.mxu0 0.0
      %3798 = vmatpush2.msra.mxu0 0.0
      %3799 = vmatprep.subr.mxu0 0.0
      %3800 = vmatpush2.msra.mxu0 0.0
      %3801 = vmatprep.subr.mxu0 0.0
      %3802 = vmatpush2.msra.mxu0 0.0
      %3803 = vmatprep.subr.mxu0 0.0
      %3804 = vmatpush2.msra.mxu0 0.0
      %3805 = vmatprep.subr.mxu0 0.0
      %3806 = vmatpush2.msra.mxu0 0.0
      %3807 = vmatprep.subr.mxu0 0.0
      %3808 = vmatpush2.msra.mxu0 0.0
      %3809 = vmatprep.subr.mxu0 0.0
      %3810 = vmatpush2.msra.mxu0 0.0
      %3811 = vmatprep.subr.mxu0 0.0
      %3812 = vmatpush2.msra.mxu0 0.0
      %3813 = vmatprep.subr.mxu0 0.0
      %3814 = vmatpush2.msra.mxu0 0.0
      %3815 = vmatprep.mubr.f32.mxu0 0.0
      %3816 = vmatmul.mubr.f32.gmra.mxu0 %v3749
      %v3817 = vpop.f32.mrf.mxu0
      %v3818 = vadd.f32 %v3746, %v3817
      %v3819 = vpop.f32.mrf.mxu0
      %3820 = vdwg.mxu0
      %3821 = vset.pattern.permute.xlu0 7
      %3822 = vperm.xlu0 %3821, %v887
      %v3823 = vpop.permute.xlu0 %3822
      %3825 = vrot.lane.b32.xlu0 %v671, 32
      %v3826 = vpop.permute.xlu0 %3825
      %v3827 = vsel %vm598, %v3826, 0
      %3829 = vmatprep.subr.mxu0 0.0
      %3830 = vmatpush1.xpose.msra.mxu0 0.0
      %3831 = vmatprep.subr.mxu0 0.0
      %3832 = vmatpush1.xpose.msra.mxu0 0.0
      %3833 = vmatprep.subr.mxu0 0.0
      %3834 = vmatpush1.xpose.msra.mxu0 0.0
      %3835 = vmatprep.subr.mxu0 0.0
      %3836 = vmatpush1.xpose.msra.mxu0 0.0
      %3837 = vmatprep.subr.mxu0 0.0
      %3838 = vmatpush1.xpose.msra.mxu0 0.0
      %3839 = vmatprep.subr.mxu0 0.0
      %3840 = vmatpush1.xpose.msra.mxu0 0.0
      %3841 = vmatprep.subr.mxu0 0.0
      %3842 = vmatpush1.xpose.msra.mxu0 0.0
      %3843 = vmatprep.subr.mxu0 0.0
      %3844 = vmatpush1.xpose.msra.mxu0 0.0
      %3845 = vmatprep.subr.mxu0 0.0
      %3846 = vmatpush1.xpose.msra.mxu0 0.0
      %3847 = vmatprep.subr.mxu0 0.0
      %3848 = vmatpush1.xpose.msra.mxu0 0.0
      %3849 = vmatprep.subr.mxu0 0.0
      %3850 = vmatpush1.xpose.msra.mxu0 0.0
      %3851 = vmatprep.subr.mxu0 0.0
      %3852 = vmatpush1.xpose.msra.mxu0 0.0
      %3853 = vmatprep.subr.mxu0 0.0
      %3854 = vmatpush1.xpose.msra.mxu0 0.0
      %3855 = vmatprep.subr.mxu0 0.0
      %3856 = vmatpush1.xpose.msra.mxu0 0.0
      %3857 = vmatprep.subr.mxu0 0.0
      %3858 = vmatpush1.xpose.msra.mxu0 0.0
      %3859 = vmatprep.subr.mxu0 0.0
      %3860 = vmatpush1.xpose.msra.mxu0 %v1206
      %3861 = vmatprep.subr.mxu0 0.0
      %3862 = vmatpush2.xpose.msra.mxu0 0.0
      %3863 = vmatprep.subr.mxu0 0.0
      %3864 = vmatpush2.xpose.msra.mxu0 0.0
      %3865 = vmatprep.subr.mxu0 0.0
      %3866 = vmatpush2.xpose.msra.mxu0 0.0
      %3867 = vmatprep.subr.mxu0 0.0
      %3868 = vmatpush2.xpose.msra.mxu0 0.0
      %3869 = vmatprep.subr.mxu0 0.0
      %3870 = vmatpush2.xpose.msra.mxu0 0.0
      %3871 = vmatprep.subr.mxu0 0.0
      %3872 = vmatpush2.xpose.msra.mxu0 0.0
      %3873 = vmatprep.subr.mxu0 0.0
      %3874 = vmatpush2.xpose.msra.mxu0 0.0
      %3875 = vmatprep.subr.mxu0 0.0
      %3876 = vmatpush2.xpose.msra.mxu0 0.0
      %3877 = vmatprep.subr.mxu0 0.0
      %3878 = vmatpush2.xpose.msra.mxu0 0.0
      %3879 = vmatprep.subr.mxu0 0.0
      %3880 = vmatpush2.xpose.msra.mxu0 0.0
      %3881 = vmatprep.subr.mxu0 0.0
      %3882 = vmatpush2.xpose.msra.mxu0 0.0
      %3883 = vmatprep.subr.mxu0 0.0
      %3884 = vmatpush2.xpose.msra.mxu0 0.0
      %3885 = vmatprep.subr.mxu0 0.0
      %3886 = vmatpush2.xpose.msra.mxu0 0.0
      %3887 = vmatprep.subr.mxu0 0.0
      %3888 = vmatpush2.xpose.msra.mxu0 0.0
      %3889 = vmatprep.subr.mxu0 0.0
      %3890 = vmatpush2.xpose.msra.mxu0 0.0
      %3891 = vmatprep.subr.mxu0 0.0
      %3892 = vmatpush2.xpose.msra.mxu0 0.0
      %3893 = vmatprep.mubr.f32.mxu0 0.0
      %3894 = vmatmul.mubr.f32.gmra.mxu0 %v3827
      %v3895 = vpop.f32.mrf.mxu0
      %v3896 = vadd.f32 %v3823, %v3895
      %v3897 = vpop.f32.mrf.mxu0
      %3898 = vdwg.mxu0
      %v3899 = vsel %vm1597, -100.0, %v3896
      %v3900 = vsel %vm1367, %v3899, -inf
      %3901 = vmax.xlane.f32.xlu0 %v3900
      %v3902 = vpop.xlane.xlu0 %3901
      %v3903 = vsub.f32 %v3899, %v3902
      %v3904 = vmul.f32 %v3903, 1.442695
      %v3905 = vpow.pop %v3904
      %v3906 = vsel %vm1367, %v3905, 0.0
      %3907 = vadd.xlane.f32.xlu0 %v3906
      %v3908 = vpop.xlane.xlu0 %3907
      %v3909 = vrcp.pop %v3908
      %v3910 = vmul.f32 %v3905, %v3909
      %v3912 = vsel %vm1367, %v3910, 0
      %3914 = vmatprep.subr.mxu0 0.0
      %3915 = vmatpush1.msra.mxu0 0.0
      %3916 = vmatprep.subr.mxu0 0.0
      %3917 = vmatpush1.msra.mxu0 0.0
      %3918 = vmatprep.subr.mxu0 0.0
      %3919 = vmatpush1.msra.mxu0 0.0
      %3920 = vmatprep.subr.mxu0 0.0
      %3921 = vmatpush1.msra.mxu0 0.0
      %3922 = vmatprep.subr.mxu0 0.0
      %3923 = vmatpush1.msra.mxu0 0.0
      %3924 = vmatprep.subr.mxu0 0.0
      %3925 = vmatpush1.msra.mxu0 0.0
      %3926 = vmatprep.subr.mxu0 0.0
      %3927 = vmatpush1.msra.mxu0 0.0
      %3928 = vmatprep.subr.mxu0 0.0
      %3929 = vmatpush1.msra.mxu0 0.0
      %3930 = vmatprep.subr.mxu0 0.0
      %3931 = vmatpush1.msra.mxu0 0.0
      %3932 = vmatprep.subr.mxu0 0.0
      %3933 = vmatpush1.msra.mxu0 0.0
      %3934 = vmatprep.subr.mxu0 0.0
      %3935 = vmatpush1.msra.mxu0 0.0
      %3936 = vmatprep.subr.mxu0 0.0
      %3937 = vmatpush1.msra.mxu0 0.0
      %3938 = vmatprep.subr.mxu0 0.0
      %3939 = vmatpush1.msra.mxu0 0.0
      %3940 = vmatprep.subr.mxu0 0.0
      %3941 = vmatpush1.msra.mxu0 0.0
      %3942 = vmatprep.subr.mxu0 0.0
      %3943 = vmatpush1.msra.mxu0 0.0
      %3944 = vmatprep.subr.mxu0 0.0
      %3945 = vmatpush1.msra.mxu0 %v582
      %3946 = vmatprep.subr.mxu0 0.0
      %3947 = vmatpush2.msra.mxu0 0.0
      %3948 = vmatprep.subr.mxu0 0.0
      %3949 = vmatpush2.msra.mxu0 0.0
      %3950 = vmatprep.subr.mxu0 0.0
      %3951 = vmatpush2.msra.mxu0 0.0
      %3952 = vmatprep.subr.mxu0 0.0
      %3953 = vmatpush2.msra.mxu0 0.0
      %3954 = vmatprep.subr.mxu0 0.0
      %3955 = vmatpush2.msra.mxu0 0.0
      %3956 = vmatprep.subr.mxu0 0.0
      %3957 = vmatpush2.msra.mxu0 0.0
      %3958 = vmatprep.subr.mxu0 0.0
      %3959 = vmatpush2.msra.mxu0 0.0
      %3960 = vmatprep.subr.mxu0 0.0
      %3961 = vmatpush2.msra.mxu0 0.0
      %3962 = vmatprep.subr.mxu0 0.0
      %3963 = vmatpush2.msra.mxu0 0.0
      %3964 = vmatprep.subr.mxu0 0.0
      %3965 = vmatpush2.msra.mxu0 0.0
      %3966 = vmatprep.subr.mxu0 0.0
      %3967 = vmatpush2.msra.mxu0 0.0
      %3968 = vmatprep.subr.mxu0 0.0
      %3969 = vmatpush2.msra.mxu0 0.0
      %3970 = vmatprep.subr.mxu0 0.0
      %3971 = vmatpush2.msra.mxu0 0.0
      %3972 = vmatprep.subr.mxu0 0.0
      %3973 = vmatpush2.msra.mxu0 0.0
      %3974 = vmatprep.subr.mxu0 0.0
      %3975 = vmatpush2.msra.mxu0 0.0
      %3976 = vmatprep.subr.mxu0 0.0
      %3977 = vmatpush2.msra.mxu0 0.0
      %3978 = vmatprep.mubr.f32.mxu0 0.0
      %3979 = vmatmul.mubr.f32.gmra.mxu0 %v3912
      %v3980 = vpop.f32.mrf.mxu0
      %v3981 = vadd.f32 0.0, %v3980
      %v3982 = vpop.f32.mrf.mxu0
      %3983 = vdwg.mxu0
      %s3984 = scalar_lea.vmem %s10, 224
      %v3985 = vld [vmem:[%s3984] sm:$0xff]
      %v3986 = vld [vmem:[%s3984 + $0x8] sm:$0xff]
      %v3987 = vld [vmem:[%s3984 + $0x10] sm:$0xff]
      %v3988 = vld [vmem:[%s3984 + $0x18] sm:$0xff]
      %3989 = vrot.lane.b32.xlu0 %v1040, 32
      %v3990 = vpop.permute.xlu0 %3989
      %v3993 = vsel %vm598, %v3981, 0
      %3995 = vmatprep.subr.mxu0 0.0
      %3996 = vmatpush1.msra.mxu0 0.0
      %3997 = vmatprep.subr.mxu0 0.0
      %3998 = vmatpush1.msra.mxu0 0.0
      %3999 = vmatprep.subr.mxu0 0.0
      %4000 = vmatpush1.msra.mxu0 0.0
      %4001 = vmatprep.subr.mxu0 0.0
      %4002 = vmatpush1.msra.mxu0 0.0
      %4003 = vmatprep.subr.mxu0 0.0
      %4004 = vmatpush1.msra.mxu0 0.0
      %4005 = vmatprep.subr.mxu0 0.0
      %4006 = vmatpush1.msra.mxu0 0.0
      %4007 = vmatprep.subr.mxu0 0.0
      %4008 = vmatpush1.msra.mxu0 0.0
      %4009 = vmatprep.subr.mxu0 0.0
      %4010 = vmatpush1.msra.mxu0 0.0
      %4011 = vmatprep.subr.mxu0 0.0
      %4012 = vmatpush1.msra.mxu0 0.0
      %4013 = vmatprep.subr.mxu0 0.0
      %4014 = vmatpush1.msra.mxu0 0.0
      %4015 = vmatprep.subr.mxu0 0.0
      %4016 = vmatpush1.msra.mxu0 0.0
      %4017 = vmatprep.subr.mxu0 0.0
      %4018 = vmatpush1.msra.mxu0 0.0
      %4019 = vmatprep.subr.mxu0 0.0
      %4020 = vmatpush1.msra.mxu0 %v3988
      %4021 = vmatprep.subr.mxu0 0.0
      %4022 = vmatpush1.msra.mxu0 %v3987
      %4023 = vmatprep.subr.mxu0 0.0
      %4024 = vmatpush1.msra.mxu0 %v3986
      %4025 = vmatprep.subr.mxu0 0.0
      %4026 = vmatpush1.msra.mxu0 %v3985
      %4027 = vmatprep.subr.mxu0 0.0
      %4028 = vmatpush2.msra.mxu0 0.0
      %4029 = vmatprep.subr.mxu0 0.0
      %4030 = vmatpush2.msra.mxu0 0.0
      %4031 = vmatprep.subr.mxu0 0.0
      %4032 = vmatpush2.msra.mxu0 0.0
      %4033 = vmatprep.subr.mxu0 0.0
      %4034 = vmatpush2.msra.mxu0 0.0
      %4035 = vmatprep.subr.mxu0 0.0
      %4036 = vmatpush2.msra.mxu0 0.0
      %4037 = vmatprep.subr.mxu0 0.0
      %4038 = vmatpush2.msra.mxu0 0.0
      %4039 = vmatprep.subr.mxu0 0.0
      %4040 = vmatpush2.msra.mxu0 0.0
      %4041 = vmatprep.subr.mxu0 0.0
      %4042 = vmatpush2.msra.mxu0 0.0
      %4043 = vmatprep.subr.mxu0 0.0
      %4044 = vmatpush2.msra.mxu0 0.0
      %4045 = vmatprep.subr.mxu0 0.0
      %4046 = vmatpush2.msra.mxu0 0.0
      %4047 = vmatprep.subr.mxu0 0.0
      %4048 = vmatpush2.msra.mxu0 0.0
      %4049 = vmatprep.subr.mxu0 0.0
      %4050 = vmatpush2.msra.mxu0 0.0
      %4051 = vmatprep.subr.mxu0 0.0
      %4052 = vmatpush2.msra.mxu0 0.0
      %4053 = vmatprep.subr.mxu0 0.0
      %4054 = vmatpush2.msra.mxu0 0.0
      %4055 = vmatprep.subr.mxu0 0.0
      %4056 = vmatpush2.msra.mxu0 0.0
      %4057 = vmatprep.subr.mxu0 0.0
      %4058 = vmatpush2.msra.mxu0 0.0
      %4059 = vmatprep.mubr.f32.mxu0 0.0
      %4060 = vmatmul.mubr.f32.gmra.mxu0 %v3993
      %v4061 = vpop.f32.mrf.mxu0
      %v4062 = vadd.f32 %v3990, %v4061
      %v4063 = vpop.f32.mrf.mxu0
      %4064 = vdwg.mxu0
      %s4065 = scalar_lea.vmem %s11, 7
      %v4066 = vld [vmem:[%s4065] sm:$0x1]
      %v4068 = vlaneseq
      %v4069 = vshrl.u32 %v4068, 7
      %v4070 = vsub.s32 0, %v4069
      %v4071 = vrot.slane %v4066, %v4070
      %v4073 = vadd.f32 %v4062, %v4071
      %v4074 = vtanh.pop %v4073
      %s4075 = scalar_lea.vmem %s14, 224
      %v4076 = vld [vmem:[%s4075] sm:$0xff]
      %v4077 = vld [vmem:[%s4075 + $0x8] sm:$0xff]
      %v4078 = vld [vmem:[%s4075 + $0x10] sm:$0xff]
      %v4079 = vld [vmem:[%s4075 + $0x18] sm:$0xff]
      %s4080 = scalar_lea.vmem %s15, 7
      %v4081 = vld [vmem:[%s4080] sm:$0x1]
      %v4083 = vlaneseq
      %v4084 = vshrl.u32 %v4083, 7
      %v4085 = vsub.s32 0, %v4084
      %v4086 = vrot.slane %v4081, %v4085
      %v4089 = vsel %vm598, %v4074, 0
      %4091 = vmatprep.subr.mxu0 0.0
      %4092 = vmatpush1.msra.mxu0 0.0
      %4093 = vmatprep.subr.mxu0 0.0
      %4094 = vmatpush1.msra.mxu0 0.0
      %4095 = vmatprep.subr.mxu0 0.0
      %4096 = vmatpush1.msra.mxu0 0.0
      %4097 = vmatprep.subr.mxu0 0.0
      %4098 = vmatpush1.msra.mxu0 0.0
      %4099 = vmatprep.subr.mxu0 0.0
      %4100 = vmatpush1.msra.mxu0 0.0
      %4101 = vmatprep.subr.mxu0 0.0
      %4102 = vmatpush1.msra.mxu0 0.0
      %4103 = vmatprep.subr.mxu0 0.0
      %4104 = vmatpush1.msra.mxu0 0.0
      %4105 = vmatprep.subr.mxu0 0.0
      %4106 = vmatpush1.msra.mxu0 0.0
      %4107 = vmatprep.subr.mxu0 0.0
      %4108 = vmatpush1.msra.mxu0 0.0
      %4109 = vmatprep.subr.mxu0 0.0
      %4110 = vmatpush1.msra.mxu0 0.0
      %4111 = vmatprep.subr.mxu0 0.0
      %4112 = vmatpush1.msra.mxu0 0.0
      %4113 = vmatprep.subr.mxu0 0.0
      %4114 = vmatpush1.msra.mxu0 0.0
      %4115 = vmatprep.subr.mxu0 0.0
      %4116 = vmatpush1.msra.mxu0 %v4079
      %4117 = vmatprep.subr.mxu0 0.0
      %4118 = vmatpush1.msra.mxu0 %v4078
      %4119 = vmatprep.subr.mxu0 0.0
      %4120 = vmatpush1.msra.mxu0 %v4077
      %4121 = vmatprep.subr.mxu0 0.0
      %4122 = vmatpush1.msra.mxu0 %v4076
      %4123 = vmatprep.subr.mxu0 0.0
      %4124 = vmatpush2.msra.mxu0 0.0
      %4125 = vmatprep.subr.mxu0 0.0
      %4126 = vmatpush2.msra.mxu0 0.0
      %4127 = vmatprep.subr.mxu0 0.0
      %4128 = vmatpush2.msra.mxu0 0.0
      %4129 = vmatprep.subr.mxu0 0.0
      %4130 = vmatpush2.msra.mxu0 0.0
      %4131 = vmatprep.subr.mxu0 0.0
      %4132 = vmatpush2.msra.mxu0 0.0
      %4133 = vmatprep.subr.mxu0 0.0
      %4134 = vmatpush2.msra.mxu0 0.0
      %4135 = vmatprep.subr.mxu0 0.0
      %4136 = vmatpush2.msra.mxu0 0.0
      %4137 = vmatprep.subr.mxu0 0.0
      %4138 = vmatpush2.msra.mxu0 0.0
      %4139 = vmatprep.subr.mxu0 0.0
      %4140 = vmatpush2.msra.mxu0 0.0
      %4141 = vmatprep.subr.mxu0 0.0
      %4142 = vmatpush2.msra.mxu0 0.0
      %4143 = vmatprep.subr.mxu0 0.0
      %4144 = vmatpush2.msra.mxu0 0.0
      %4145 = vmatprep.subr.mxu0 0.0
      %4146 = vmatpush2.msra.mxu0 0.0
      %4147 = vmatprep.subr.mxu0 0.0
      %4148 = vmatpush2.msra.mxu0 0.0
      %4149 = vmatprep.subr.mxu0 0.0
      %4150 = vmatpush2.msra.mxu0 0.0
      %4151 = vmatprep.subr.mxu0 0.0
      %4152 = vmatpush2.msra.mxu0 0.0
      %4153 = vmatprep.subr.mxu0 0.0
      %4154 = vmatpush2.msra.mxu0 0.0
      %4155 = vmatprep.mubr.f32.mxu0 0.0
      %4156 = vmatmul.mubr.f32.gmra.mxu0 %v4089
      %v4157 = vpop.f32.mrf.mxu0
      %v4158 = vadd.f32 %v4086, %v4157
      %v4159 = vpop.f32.mrf.mxu0
      %4160 = vdwg.mxu0
      %4162 = vset.pattern.permute.xlu0 8
      %4163 = vperm.xlu0 %4162, %v957
      %v4164 = vpop.permute.xlu0 %4163
      %v4167 = vsel %vm598, %v813, 0
      %4169 = vmatprep.subr.mxu0 0.0
      %4170 = vmatpush1.xpose.msra.mxu0 0.0
      %4171 = vmatprep.subr.mxu0 0.0
      %4172 = vmatpush1.xpose.msra.mxu0 0.0
      %4173 = vmatprep.subr.mxu0 0.0
      %4174 = vmatpush1.xpose.msra.mxu0 0.0
      %4175 = vmatprep.subr.mxu0 0.0
      %4176 = vmatpush1.xpose.msra.mxu0 0.0
      %4177 = vmatprep.subr.mxu0 0.0
      %4178 = vmatpush1.xpose.msra.mxu0 0.0
      %4179 = vmatprep.subr.mxu0 0.0
      %4180 = vmatpush1.xpose.msra.mxu0 0.0
      %4181 = vmatprep.subr.mxu0 0.0
      %4182 = vmatpush1.xpose.msra.mxu0 0.0
      %4183 = vmatprep.subr.mxu0 0.0
      %4184 = vmatpush1.xpose.msra.mxu0 0.0
      %4185 = vmatprep.subr.mxu0 0.0
      %4186 = vmatpush1.xpose.msra.mxu0 0.0
      %4187 = vmatprep.subr.mxu0 0.0
      %4188 = vmatpush1.xpose.msra.mxu0 0.0
      %4189 = vmatprep.subr.mxu0 0.0
      %4190 = vmatpush1.xpose.msra.mxu0 0.0
      %4191 = vmatprep.subr.mxu0 0.0
      %4192 = vmatpush1.xpose.msra.mxu0 0.0
      %4193 = vmatprep.subr.mxu0 0.0
      %4194 = vmatpush1.xpose.msra.mxu0 0.0
      %4195 = vmatprep.subr.mxu0 0.0
      %4196 = vmatpush1.xpose.msra.mxu0 0.0
      %4197 = vmatprep.subr.mxu0 0.0
      %4198 = vmatpush1.xpose.msra.mxu0 0.0
      %4199 = vmatprep.subr.mxu0 0.0
      %4200 = vmatpush1.xpose.msra.mxu0 %v1206
      %4201 = vmatprep.subr.mxu0 0.0
      %4202 = vmatpush2.xpose.msra.mxu0 0.0
      %4203 = vmatprep.subr.mxu0 0.0
      %4204 = vmatpush2.xpose.msra.mxu0 0.0
      %4205 = vmatprep.subr.mxu0 0.0
      %4206 = vmatpush2.xpose.msra.mxu0 0.0
      %4207 = vmatprep.subr.mxu0 0.0
      %4208 = vmatpush2.xpose.msra.mxu0 0.0
      %4209 = vmatprep.subr.mxu0 0.0
      %4210 = vmatpush2.xpose.msra.mxu0 0.0
      %4211 = vmatprep.subr.mxu0 0.0
      %4212 = vmatpush2.xpose.msra.mxu0 0.0
      %4213 = vmatprep.subr.mxu0 0.0
      %4214 = vmatpush2.xpose.msra.mxu0 0.0
      %4215 = vmatprep.subr.mxu0 0.0
      %4216 = vmatpush2.xpose.msra.mxu0 0.0
      %4217 = vmatprep.subr.mxu0 0.0
      %4218 = vmatpush2.xpose.msra.mxu0 0.0
      %4219 = vmatprep.subr.mxu0 0.0
      %4220 = vmatpush2.xpose.msra.mxu0 0.0
      %4221 = vmatprep.subr.mxu0 0.0
      %4222 = vmatpush2.xpose.msra.mxu0 0.0
      %4223 = vmatprep.subr.mxu0 0.0
      %4224 = vmatpush2.xpose.msra.mxu0 0.0
      %4225 = vmatprep.subr.mxu0 0.0
      %4226 = vmatpush2.xpose.msra.mxu0 0.0
      %4227 = vmatprep.subr.mxu0 0.0
      %4228 = vmatpush2.xpose.msra.mxu0 0.0
      %4229 = vmatprep.subr.mxu0 0.0
      %4230 = vmatpush2.xpose.msra.mxu0 0.0
      %4231 = vmatprep.subr.mxu0 0.0
      %4232 = vmatpush2.xpose.msra.mxu0 0.0
      %4233 = vmatprep.mubr.f32.mxu0 0.0
      %4234 = vmatmul.mubr.f32.gmra.mxu0 %v4167
      %v4235 = vpop.f32.mrf.mxu0
      %v4236 = vadd.f32 %v4164, %v4235
      %v4237 = vpop.f32.mrf.mxu0
      %4238 = vdwg.mxu0
      %v4239 = vsel %vm1597, -100.0, %v4236
      %v4240 = vsel %vm1367, %v4239, -inf
      %4241 = vmax.xlane.f32.xlu0 %v4240
      %v4242 = vpop.xlane.xlu0 %4241
      %v4243 = vsub.f32 %v4239, %v4242
      %v4244 = vmul.f32 %v4243, 1.442695
      %v4245 = vpow.pop %v4244
      %v4246 = vsel %vm1367, %v4245, 0.0
      %4247 = vadd.xlane.f32.xlu0 %v4246
      %v4248 = vpop.xlane.xlu0 %4247
      %v4249 = vrcp.pop %v4248
      %v4250 = vmul.f32 %v4245, %v4249
      %v4252 = vsel %vm1367, %v4250, 0
      %4254 = vmatprep.subr.mxu0 0.0
      %4255 = vmatpush1.msra.mxu0 0.0
      %4256 = vmatprep.subr.mxu0 0.0
      %4257 = vmatpush1.msra.mxu0 0.0
      %4258 = vmatprep.subr.mxu0 0.0
      %4259 = vmatpush1.msra.mxu0 0.0
      %4260 = vmatprep.subr.mxu0 0.0
      %4261 = vmatpush1.msra.mxu0 0.0
      %4262 = vmatprep.subr.mxu0 0.0
      %4263 = vmatpush1.msra.mxu0 0.0
      %4264 = vmatprep.subr.mxu0 0.0
      %4265 = vmatpush1.msra.mxu0 0.0
      %4266 = vmatprep.subr.mxu0 0.0
      %4267 = vmatpush1.msra.mxu0 0.0
      %4268 = vmatprep.subr.mxu0 0.0
      %4269 = vmatpush1.msra.mxu0 0.0
      %4270 = vmatprep.subr.mxu0 0.0
      %4271 = vmatpush1.msra.mxu0 0.0
      %4272 = vmatprep.subr.mxu0 0.0
      %4273 = vmatpush1.msra.mxu0 0.0
      %4274 = vmatprep.subr.mxu0 0.0
      %4275 = vmatpush1.msra.mxu0 0.0
      %4276 = vmatprep.subr.mxu0 0.0
      %4277 = vmatpush1.msra.mxu0 0.0
      %4278 = vmatprep.subr.mxu0 0.0
      %4279 = vmatpush1.msra.mxu0 0.0
      %4280 = vmatprep.subr.mxu0 0.0
      %4281 = vmatpush1.msra.mxu0 0.0
      %4282 = vmatprep.subr.mxu0 0.0
      %4283 = vmatpush1.msra.mxu0 0.0
      %4284 = vmatprep.subr.mxu0 0.0
      %4285 = vmatpush1.msra.mxu0 %v582
      %4286 = vmatprep.subr.mxu0 0.0
      %4287 = vmatpush2.msra.mxu0 0.0
      %4288 = vmatprep.subr.mxu0 0.0
      %4289 = vmatpush2.msra.mxu0 0.0
      %4290 = vmatprep.subr.mxu0 0.0
      %4291 = vmatpush2.msra.mxu0 0.0
      %4292 = vmatprep.subr.mxu0 0.0
      %4293 = vmatpush2.msra.mxu0 0.0
      %4294 = vmatprep.subr.mxu0 0.0
      %4295 = vmatpush2.msra.mxu0 0.0
      %4296 = vmatprep.subr.mxu0 0.0
      %4297 = vmatpush2.msra.mxu0 0.0
      %4298 = vmatprep.subr.mxu0 0.0
      %4299 = vmatpush2.msra.mxu0 0.0
      %4300 = vmatprep.subr.mxu0 0.0
      %4301 = vmatpush2.msra.mxu0 0.0
      %4302 = vmatprep.subr.mxu0 0.0
      %4303 = vmatpush2.msra.mxu0 0.0
      %4304 = vmatprep.subr.mxu0 0.0
      %4305 = vmatpush2.msra.mxu0 0.0
      %4306 = vmatprep.subr.mxu0 0.0
      %4307 = vmatpush2.msra.mxu0 0.0
      %4308 = vmatprep.subr.mxu0 0.0
      %4309 = vmatpush2.msra.mxu0 0.0
      %4310 = vmatprep.subr.mxu0 0.0
      %4311 = vmatpush2.msra.mxu0 0.0
      %4312 = vmatprep.subr.mxu0 0.0
      %4313 = vmatpush2.msra.mxu0 0.0
      %4314 = vmatprep.subr.mxu0 0.0
      %4315 = vmatpush2.msra.mxu0 0.0
      %4316 = vmatprep.subr.mxu0 0.0
      %4317 = vmatpush2.msra.mxu0 0.0
      %4318 = vmatprep.mubr.f32.mxu0 0.0
      %4319 = vmatmul.mubr.f32.gmra.mxu0 %v4252
      %v4320 = vpop.f32.mrf.mxu0
      %v4321 = vadd.f32 0.0, %v4320
      %v4322 = vpop.f32.mrf.mxu0
      %4323 = vdwg.mxu0
      %s4324 = scalar_lea.vmem %s10, 256
      %v4325 = vld [vmem:[%s4324] sm:$0xff]
      %v4326 = vld [vmem:[%s4324 + $0x8] sm:$0xff]
      %v4327 = vld [vmem:[%s4324 + $0x10] sm:$0xff]
      %v4328 = vld [vmem:[%s4324 + $0x18] sm:$0xff]
      %v4330 = vsel %vm598, %v4321, 0
      %4332 = vmatprep.subr.mxu0 0.0
      %4333 = vmatpush1.msra.mxu0 0.0
      %4334 = vmatprep.subr.mxu0 0.0
      %4335 = vmatpush1.msra.mxu0 0.0
      %4336 = vmatprep.subr.mxu0 0.0
      %4337 = vmatpush1.msra.mxu0 0.0
      %4338 = vmatprep.subr.mxu0 0.0
      %4339 = vmatpush1.msra.mxu0 0.0
      %4340 = vmatprep.subr.mxu0 0.0
      %4341 = vmatpush1.msra.mxu0 0.0
      %4342 = vmatprep.subr.mxu0 0.0
      %4343 = vmatpush1.msra.mxu0 0.0
      %4344 = vmatprep.subr.mxu0 0.0
      %4345 = vmatpush1.msra.mxu0 0.0
      %4346 = vmatprep.subr.mxu0 0.0
      %4347 = vmatpush1.msra.mxu0 0.0
      %4348 = vmatprep.subr.mxu0 0.0
      %4349 = vmatpush1.msra.mxu0 0.0
      %4350 = vmatprep.subr.mxu0 0.0
      %4351 = vmatpush1.msra.mxu0 0.0
      %4352 = vmatprep.subr.mxu0 0.0
      %4353 = vmatpush1.msra.mxu0 0.0
      %4354 = vmatprep.subr.mxu0 0.0
      %4355 = vmatpush1.msra.mxu0 0.0
      %4356 = vmatprep.subr.mxu0 0.0
      %4357 = vmatpush1.msra.mxu0 %v4328
      %4358 = vmatprep.subr.mxu0 0.0
      %4359 = vmatpush1.msra.mxu0 %v4327
      %4360 = vmatprep.subr.mxu0 0.0
      %4361 = vmatpush1.msra.mxu0 %v4326
      %4362 = vmatprep.subr.mxu0 0.0
      %4363 = vmatpush1.msra.mxu0 %v4325
      %4364 = vmatprep.subr.mxu0 0.0
      %4365 = vmatpush2.msra.mxu0 0.0
      %4366 = vmatprep.subr.mxu0 0.0
      %4367 = vmatpush2.msra.mxu0 0.0
      %4368 = vmatprep.subr.mxu0 0.0
      %4369 = vmatpush2.msra.mxu0 0.0
      %4370 = vmatprep.subr.mxu0 0.0
      %4371 = vmatpush2.msra.mxu0 0.0
      %4372 = vmatprep.subr.mxu0 0.0
      %4373 = vmatpush2.msra.mxu0 0.0
      %4374 = vmatprep.subr.mxu0 0.0
      %4375 = vmatpush2.msra.mxu0 0.0
      %4376 = vmatprep.subr.mxu0 0.0
      %4377 = vmatpush2.msra.mxu0 0.0
      %4378 = vmatprep.subr.mxu0 0.0
      %4379 = vmatpush2.msra.mxu0 0.0
      %4380 = vmatprep.subr.mxu0 0.0
      %4381 = vmatpush2.msra.mxu0 0.0
      %4382 = vmatprep.subr.mxu0 0.0
      %4383 = vmatpush2.msra.mxu0 0.0
      %4384 = vmatprep.subr.mxu0 0.0
      %4385 = vmatpush2.msra.mxu0 0.0
      %4386 = vmatprep.subr.mxu0 0.0
      %4387 = vmatpush2.msra.mxu0 0.0
      %4388 = vmatprep.subr.mxu0 0.0
      %4389 = vmatpush2.msra.mxu0 0.0
      %4390 = vmatprep.subr.mxu0 0.0
      %4391 = vmatpush2.msra.mxu0 0.0
      %4392 = vmatprep.subr.mxu0 0.0
      %4393 = vmatpush2.msra.mxu0 0.0
      %4394 = vmatprep.subr.mxu0 0.0
      %4395 = vmatpush2.msra.mxu0 0.0
      %4396 = vmatprep.mubr.f32.mxu0 0.0
      %4397 = vmatmul.mubr.f32.gmra.mxu0 %v4330
      %v4398 = vpop.f32.mrf.mxu0
      %v4399 = vadd.f32 %v1179, %v4398
      %v4400 = vpop.f32.mrf.mxu0
      %4401 = vdwg.mxu0
      %s4402 = scalar_lea.vmem %s11, 8
      %v4403 = vld [vmem:[%s4402] sm:$0x1]
      %v4405 = vlaneseq
      %v4406 = vshrl.u32 %v4405, 7
      %v4407 = vsub.s32 0, %v4406
      %v4408 = vrot.slane %v4403, %v4407
      %v4410 = vadd.f32 %v4399, %v4408
      %s4411 = scalar_lea.vmem %s12, 256
      %v4412 = vld [vmem:[%s4411] sm:$0xff]
      %v4413 = vld [vmem:[%s4411 + $0x8] sm:$0xff]
      %v4414 = vld [vmem:[%s4411 + $0x10] sm:$0xff]
      %v4415 = vld [vmem:[%s4411 + $0x18] sm:$0xff]
      %s4416 = scalar_lea.vmem %s13, 8
      %v4417 = vld [vmem:[%s4416] sm:$0x1]
      %v4419 = vlaneseq
      %v4420 = vshrl.u32 %v4419, 7
      %v4421 = vsub.s32 0, %v4420
      %v4422 = vrot.slane %v4417, %v4421
      %v4425 = vsel %vm598, %v4410, 0
      %4427 = vmatprep.subr.mxu0 0.0
      %4428 = vmatpush1.msra.mxu0 0.0
      %4429 = vmatprep.subr.mxu0 0.0
      %4430 = vmatpush1.msra.mxu0 0.0
      %4431 = vmatprep.subr.mxu0 0.0
      %4432 = vmatpush1.msra.mxu0 0.0
      %4433 = vmatprep.subr.mxu0 0.0
      %4434 = vmatpush1.msra.mxu0 0.0
      %4435 = vmatprep.subr.mxu0 0.0
      %4436 = vmatpush1.msra.mxu0 0.0
      %4437 = vmatprep.subr.mxu0 0.0
      %4438 = vmatpush1.msra.mxu0 0.0
      %4439 = vmatprep.subr.mxu0 0.0
      %4440 = vmatpush1.msra.mxu0 0.0
      %4441 = vmatprep.subr.mxu0 0.0
      %4442 = vmatpush1.msra.mxu0 0.0
      %4443 = vmatprep.subr.mxu0 0.0
      %4444 = vmatpush1.msra.mxu0 0.0
      %4445 = vmatprep.subr.mxu0 0.0
      %4446 = vmatpush1.msra.mxu0 0.0
      %4447 = vmatprep.subr.mxu0 0.0
      %4448 = vmatpush1.msra.mxu0 0.0
      %4449 = vmatprep.subr.mxu0 0.0
      %4450 = vmatpush1.msra.mxu0 0.0
      %4451 = vmatprep.subr.mxu0 0.0
      %4452 = vmatpush1.msra.mxu0 %v4415
      %4453 = vmatprep.subr.mxu0 0.0
      %4454 = vmatpush1.msra.mxu0 %v4414
      %4455 = vmatprep.subr.mxu0 0.0
      %4456 = vmatpush1.msra.mxu0 %v4413
      %4457 = vmatprep.subr.mxu0 0.0
      %4458 = vmatpush1.msra.mxu0 %v4412
      %4459 = vmatprep.subr.mxu0 0.0
      %4460 = vmatpush2.msra.mxu0 0.0
      %4461 = vmatprep.subr.mxu0 0.0
      %4462 = vmatpush2.msra.mxu0 0.0
      %4463 = vmatprep.subr.mxu0 0.0
      %4464 = vmatpush2.msra.mxu0 0.0
      %4465 = vmatprep.subr.mxu0 0.0
      %4466 = vmatpush2.msra.mxu0 0.0
      %4467 = vmatprep.subr.mxu0 0.0
      %4468 = vmatpush2.msra.mxu0 0.0
      %4469 = vmatprep.subr.mxu0 0.0
      %4470 = vmatpush2.msra.mxu0 0.0
      %4471 = vmatprep.subr.mxu0 0.0
      %4472 = vmatpush2.msra.mxu0 0.0
      %4473 = vmatprep.subr.mxu0 0.0
      %4474 = vmatpush2.msra.mxu0 0.0
      %4475 = vmatprep.subr.mxu0 0.0
      %4476 = vmatpush2.msra.mxu0 0.0
      %4477 = vmatprep.subr.mxu0 0.0
      %4478 = vmatpush2.msra.mxu0 0.0
      %4479 = vmatprep.subr.mxu0 0.0
      %4480 = vmatpush2.msra.mxu0 0.0
      %4481 = vmatprep.subr.mxu0 0.0
      %4482 = vmatpush2.msra.mxu0 0.0
      %4483 = vmatprep.subr.mxu0 0.0
      %4484 = vmatpush2.msra.mxu0 0.0
      %4485 = vmatprep.subr.mxu0 0.0
      %4486 = vmatpush2.msra.mxu0 0.0
      %4487 = vmatprep.subr.mxu0 0.0
      %4488 = vmatpush2.msra.mxu0 0.0
      %4489 = vmatprep.subr.mxu0 0.0
      %4490 = vmatpush2.msra.mxu0 0.0
      %4491 = vmatprep.mubr.f32.mxu0 0.0
      %4492 = vmatmul.mubr.f32.gmra.mxu0 %v4425
      %v4493 = vpop.f32.mrf.mxu0
      %v4494 = vadd.f32 %v4422, %v4493
      %v4495 = vpop.f32.mrf.mxu0
      %4496 = vdwg.mxu0
      %v4497 = vtanh.pop %v4494
      %s4498 = scalar_lea.vmem %s14, 256
      %v4499 = vld [vmem:[%s4498] sm:$0xff]
      %v4500 = vld [vmem:[%s4498 + $0x8] sm:$0xff]
      %v4501 = vld [vmem:[%s4498 + $0x10] sm:$0xff]
      %v4502 = vld [vmem:[%s4498 + $0x18] sm:$0xff]
      %s4503 = scalar_lea.vmem %s15, 8
      %v4504 = vld [vmem:[%s4503] sm:$0x1]
      %v4506 = vlaneseq
      %v4507 = vshrl.u32 %v4506, 7
      %v4508 = vsub.s32 0, %v4507
      %v4509 = vrot.slane %v4504, %v4508
      %v4512 = vsel %vm598, %v4497, 0
      %4514 = vmatprep.subr.mxu0 0.0
      %4515 = vmatpush1.msra.mxu0 0.0
      %4516 = vmatprep.subr.mxu0 0.0
      %4517 = vmatpush1.msra.mxu0 0.0
      %4518 = vmatprep.subr.mxu0 0.0
      %4519 = vmatpush1.msra.mxu0 0.0
      %4520 = vmatprep.subr.mxu0 0.0
      %4521 = vmatpush1.msra.mxu0 0.0
      %4522 = vmatprep.subr.mxu0 0.0
      %4523 = vmatpush1.msra.mxu0 0.0
      %4524 = vmatprep.subr.mxu0 0.0
      %4525 = vmatpush1.msra.mxu0 0.0
      %4526 = vmatprep.subr.mxu0 0.0
      %4527 = vmatpush1.msra.mxu0 0.0
      %4528 = vmatprep.subr.mxu0 0.0
      %4529 = vmatpush1.msra.mxu0 0.0
      %4530 = vmatprep.subr.mxu0 0.0
      %4531 = vmatpush1.msra.mxu0 0.0
      %4532 = vmatprep.subr.mxu0 0.0
      %4533 = vmatpush1.msra.mxu0 0.0
      %4534 = vmatprep.subr.mxu0 0.0
      %4535 = vmatpush1.msra.mxu0 0.0
      %4536 = vmatprep.subr.mxu0 0.0
      %4537 = vmatpush1.msra.mxu0 0.0
      %4538 = vmatprep.subr.mxu0 0.0
      %4539 = vmatpush1.msra.mxu0 %v4502
      %4540 = vmatprep.subr.mxu0 0.0
      %4541 = vmatpush1.msra.mxu0 %v4501
      %4542 = vmatprep.subr.mxu0 0.0
      %4543 = vmatpush1.msra.mxu0 %v4500
      %4544 = vmatprep.subr.mxu0 0.0
      %4545 = vmatpush1.msra.mxu0 %v4499
      %4546 = vmatprep.subr.mxu0 0.0
      %4547 = vmatpush2.msra.mxu0 0.0
      %4548 = vmatprep.subr.mxu0 0.0
      %4549 = vmatpush2.msra.mxu0 0.0
      %4550 = vmatprep.subr.mxu0 0.0
      %4551 = vmatpush2.msra.mxu0 0.0
      %4552 = vmatprep.subr.mxu0 0.0
      %4553 = vmatpush2.msra.mxu0 0.0
      %4554 = vmatprep.subr.mxu0 0.0
      %4555 = vmatpush2.msra.mxu0 0.0
      %4556 = vmatprep.subr.mxu0 0.0
      %4557 = vmatpush2.msra.mxu0 0.0
      %4558 = vmatprep.subr.mxu0 0.0
      %4559 = vmatpush2.msra.mxu0 0.0
      %4560 = vmatprep.subr.mxu0 0.0
      %4561 = vmatpush2.msra.mxu0 0.0
      %4562 = vmatprep.subr.mxu0 0.0
      %4563 = vmatpush2.msra.mxu0 0.0
      %4564 = vmatprep.subr.mxu0 0.0
      %4565 = vmatpush2.msra.mxu0 0.0
      %4566 = vmatprep.subr.mxu0 0.0
      %4567 = vmatpush2.msra.mxu0 0.0
      %4568 = vmatprep.subr.mxu0 0.0
      %4569 = vmatpush2.msra.mxu0 0.0
      %4570 = vmatprep.subr.mxu0 0.0
      %4571 = vmatpush2.msra.mxu0 0.0
      %4572 = vmatprep.subr.mxu0 0.0
      %4573 = vmatpush2.msra.mxu0 0.0
      %4574 = vmatprep.subr.mxu0 0.0
      %4575 = vmatpush2.msra.mxu0 0.0
      %4576 = vmatprep.subr.mxu0 0.0
      %4577 = vmatpush2.msra.mxu0 0.0
      %4578 = vmatprep.mubr.f32.mxu0 0.0
      %4579 = vmatmul.mubr.f32.gmra.mxu0 %v4512
      %v4580 = vpop.f32.mrf.mxu0
      %v4581 = vadd.f32 %v4509, %v4580
      %v4582 = vpop.f32.mrf.mxu0
      %4583 = vdwg.mxu0
      %4584 = vset.pattern.permute.xlu0 9
      %4585 = vperm.xlu0 %4584, %v957
      %v4586 = vpop.permute.xlu0 %4585
      %4588 = vrot.lane.b32.xlu0 %v813, 96
      %v4589 = vpop.permute.xlu0 %4588
      %v4590 = vsel %vm598, %v4589, 0
      %4592 = vmatprep.subr.mxu0 0.0
      %4593 = vmatpush1.xpose.msra.mxu0 0.0
      %4594 = vmatprep.subr.mxu0 0.0
      %4595 = vmatpush1.xpose.msra.mxu0 0.0
      %4596 = vmatprep.subr.mxu0 0.0
      %4597 = vmatpush1.xpose.msra.mxu0 0.0
      %4598 = vmatprep.subr.mxu0 0.0
      %4599 = vmatpush1.xpose.msra.mxu0 0.0
      %4600 = vmatprep.subr.mxu0 0.0
      %4601 = vmatpush1.xpose.msra.mxu0 0.0
      %4602 = vmatprep.subr.mxu0 0.0
      %4603 = vmatpush1.xpose.msra.mxu0 0.0
      %4604 = vmatprep.subr.mxu0 0.0
      %4605 = vmatpush1.xpose.msra.mxu0 0.0
      %4606 = vmatprep.subr.mxu0 0.0
      %4607 = vmatpush1.xpose.msra.mxu0 0.0
      %4608 = vmatprep.subr.mxu0 0.0
      %4609 = vmatpush1.xpose.msra.mxu0 0.0
      %4610 = vmatprep.subr.mxu0 0.0
      %4611 = vmatpush1.xpose.msra.mxu0 0.0
      %4612 = vmatprep.subr.mxu0 0.0
      %4613 = vmatpush1.xpose.msra.mxu0 0.0
      %4614 = vmatprep.subr.mxu0 0.0
      %4615 = vmatpush1.xpose.msra.mxu0 0.0
      %4616 = vmatprep.subr.mxu0 0.0
      %4617 = vmatpush1.xpose.msra.mxu0 0.0
      %4618 = vmatprep.subr.mxu0 0.0
      %4619 = vmatpush1.xpose.msra.mxu0 0.0
      %4620 = vmatprep.subr.mxu0 0.0
      %4621 = vmatpush1.xpose.msra.mxu0 0.0
      %4622 = vmatprep.subr.mxu0 0.0
      %4623 = vmatpush1.xpose.msra.mxu0 %v1206
      %4624 = vmatprep.subr.mxu0 0.0
      %4625 = vmatpush2.xpose.msra.mxu0 0.0
      %4626 = vmatprep.subr.mxu0 0.0
      %4627 = vmatpush2.xpose.msra.mxu0 0.0
      %4628 = vmatprep.subr.mxu0 0.0
      %4629 = vmatpush2.xpose.msra.mxu0 0.0
      %4630 = vmatprep.subr.mxu0 0.0
      %4631 = vmatpush2.xpose.msra.mxu0 0.0
      %4632 = vmatprep.subr.mxu0 0.0
      %4633 = vmatpush2.xpose.msra.mxu0 0.0
      %4634 = vmatprep.subr.mxu0 0.0
      %4635 = vmatpush2.xpose.msra.mxu0 0.0
      %4636 = vmatprep.subr.mxu0 0.0
      %4637 = vmatpush2.xpose.msra.mxu0 0.0
      %4638 = vmatprep.subr.mxu0 0.0
      %4639 = vmatpush2.xpose.msra.mxu0 0.0
      %4640 = vmatprep.subr.mxu0 0.0
      %4641 = vmatpush2.xpose.msra.mxu0 0.0
      %4642 = vmatprep.subr.mxu0 0.0
      %4643 = vmatpush2.xpose.msra.mxu0 0.0
      %4644 = vmatprep.subr.mxu0 0.0
      %4645 = vmatpush2.xpose.msra.mxu0 0.0
      %4646 = vmatprep.subr.mxu0 0.0
      %4647 = vmatpush2.xpose.msra.mxu0 0.0
      %4648 = vmatprep.subr.mxu0 0.0
      %4649 = vmatpush2.xpose.msra.mxu0 0.0
      %4650 = vmatprep.subr.mxu0 0.0
      %4651 = vmatpush2.xpose.msra.mxu0 0.0
      %4652 = vmatprep.subr.mxu0 0.0
      %4653 = vmatpush2.xpose.msra.mxu0 0.0
      %4654 = vmatprep.subr.mxu0 0.0
      %4655 = vmatpush2.xpose.msra.mxu0 0.0
      %4656 = vmatprep.mubr.f32.mxu0 0.0
      %4657 = vmatmul.mubr.f32.gmra.mxu0 %v4590
      %v4658 = vpop.f32.mrf.mxu0
      %v4659 = vadd.f32 %v4586, %v4658
      %v4660 = vpop.f32.mrf.mxu0
      %4661 = vdwg.mxu0
      %v4662 = vsel %vm1597, -100.0, %v4659
      %v4663 = vsel %vm1367, %v4662, -inf
      %4664 = vmax.xlane.f32.xlu0 %v4663
      %v4665 = vpop.xlane.xlu0 %4664
      %v4666 = vsub.f32 %v4662, %v4665
      %v4667 = vmul.f32 %v4666, 1.442695
      %v4668 = vpow.pop %v4667
      %v4669 = vsel %vm1367, %v4668, 0.0
      %4670 = vadd.xlane.f32.xlu0 %v4669
      %v4671 = vpop.xlane.xlu0 %4670
      %v4672 = vrcp.pop %v4671
      %v4673 = vmul.f32 %v4668, %v4672
      %v4675 = vsel %vm1367, %v4673, 0
      %4677 = vmatprep.subr.mxu0 0.0
      %4678 = vmatpush1.msra.mxu0 0.0
      %4679 = vmatprep.subr.mxu0 0.0
      %4680 = vmatpush1.msra.mxu0 0.0
      %4681 = vmatprep.subr.mxu0 0.0
      %4682 = vmatpush1.msra.mxu0 0.0
      %4683 = vmatprep.subr.mxu0 0.0
      %4684 = vmatpush1.msra.mxu0 0.0
      %4685 = vmatprep.subr.mxu0 0.0
      %4686 = vmatpush1.msra.mxu0 0.0
      %4687 = vmatprep.subr.mxu0 0.0
      %4688 = vmatpush1.msra.mxu0 0.0
      %4689 = vmatprep.subr.mxu0 0.0
      %4690 = vmatpush1.msra.mxu0 0.0
      %4691 = vmatprep.subr.mxu0 0.0
      %4692 = vmatpush1.msra.mxu0 0.0
      %4693 = vmatprep.subr.mxu0 0.0
      %4694 = vmatpush1.msra.mxu0 0.0
      %4695 = vmatprep.subr.mxu0 0.0
      %4696 = vmatpush1.msra.mxu0 0.0
      %4697 = vmatprep.subr.mxu0 0.0
      %4698 = vmatpush1.msra.mxu0 0.0
      %4699 = vmatprep.subr.mxu0 0.0
      %4700 = vmatpush1.msra.mxu0 0.0
      %4701 = vmatprep.subr.mxu0 0.0
      %4702 = vmatpush1.msra.mxu0 0.0
      %4703 = vmatprep.subr.mxu0 0.0
      %4704 = vmatpush1.msra.mxu0 0.0
      %4705 = vmatprep.subr.mxu0 0.0
      %4706 = vmatpush1.msra.mxu0 0.0
      %4707 = vmatprep.subr.mxu0 0.0
      %4708 = vmatpush1.msra.mxu0 %v582
      %4709 = vmatprep.subr.mxu0 0.0
      %4710 = vmatpush2.msra.mxu0 0.0
      %4711 = vmatprep.subr.mxu0 0.0
      %4712 = vmatpush2.msra.mxu0 0.0
      %4713 = vmatprep.subr.mxu0 0.0
      %4714 = vmatpush2.msra.mxu0 0.0
      %4715 = vmatprep.subr.mxu0 0.0
      %4716 = vmatpush2.msra.mxu0 0.0
      %4717 = vmatprep.subr.mxu0 0.0
      %4718 = vmatpush2.msra.mxu0 0.0
      %4719 = vmatprep.subr.mxu0 0.0
      %4720 = vmatpush2.msra.mxu0 0.0
      %4721 = vmatprep.subr.mxu0 0.0
      %4722 = vmatpush2.msra.mxu0 0.0
      %4723 = vmatprep.subr.mxu0 0.0
      %4724 = vmatpush2.msra.mxu0 0.0
      %4725 = vmatprep.subr.mxu0 0.0
      %4726 = vmatpush2.msra.mxu0 0.0
      %4727 = vmatprep.subr.mxu0 0.0
      %4728 = vmatpush2.msra.mxu0 0.0
      %4729 = vmatprep.subr.mxu0 0.0
      %4730 = vmatpush2.msra.mxu0 0.0
      %4731 = vmatprep.subr.mxu0 0.0
      %4732 = vmatpush2.msra.mxu0 0.0
      %4733 = vmatprep.subr.mxu0 0.0
      %4734 = vmatpush2.msra.mxu0 0.0
      %4735 = vmatprep.subr.mxu0 0.0
      %4736 = vmatpush2.msra.mxu0 0.0
      %4737 = vmatprep.subr.mxu0 0.0
      %4738 = vmatpush2.msra.mxu0 0.0
      %4739 = vmatprep.subr.mxu0 0.0
      %4740 = vmatpush2.msra.mxu0 0.0
      %4741 = vmatprep.mubr.f32.mxu0 0.0
      %4742 = vmatmul.mubr.f32.gmra.mxu0 %v4675
      %v4743 = vpop.f32.mrf.mxu0
      %v4744 = vadd.f32 0.0, %v4743
      %v4745 = vpop.f32.mrf.mxu0
      %4746 = vdwg.mxu0
      %s4747 = scalar_lea.vmem %s10, 288
      %v4748 = vld [vmem:[%s4747] sm:$0xff]
      %v4749 = vld [vmem:[%s4747 + $0x8] sm:$0xff]
      %v4750 = vld [vmem:[%s4747 + $0x10] sm:$0xff]
      %v4751 = vld [vmem:[%s4747 + $0x18] sm:$0xff]
      %4753 = vrot.lane.b32.xlu0 %v1179, 96
      %v4754 = vpop.permute.xlu0 %4753
      %v4757 = vsel %vm598, %v4744, 0
      %4759 = vmatprep.subr.mxu0 0.0
      %4760 = vmatpush1.msra.mxu0 0.0
      %4761 = vmatprep.subr.mxu0 0.0
      %4762 = vmatpush1.msra.mxu0 0.0
      %4763 = vmatprep.subr.mxu0 0.0
      %4764 = vmatpush1.msra.mxu0 0.0
      %4765 = vmatprep.subr.mxu0 0.0
      %4766 = vmatpush1.msra.mxu0 0.0
      %4767 = vmatprep.subr.mxu0 0.0
      %4768 = vmatpush1.msra.mxu0 0.0
      %4769 = vmatprep.subr.mxu0 0.0
      %4770 = vmatpush1.msra.mxu0 0.0
      %4771 = vmatprep.subr.mxu0 0.0
      %4772 = vmatpush1.msra.mxu0 0.0
      %4773 = vmatprep.subr.mxu0 0.0
      %4774 = vmatpush1.msra.mxu0 0.0
      %4775 = vmatprep.subr.mxu0 0.0
      %4776 = vmatpush1.msra.mxu0 0.0
      %4777 = vmatprep.subr.mxu0 0.0
      %4778 = vmatpush1.msra.mxu0 0.0
      %4779 = vmatprep.subr.mxu0 0.0
      %4780 = vmatpush1.msra.mxu0 0.0
      %4781 = vmatprep.subr.mxu0 0.0
      %4782 = vmatpush1.msra.mxu0 0.0
      %4783 = vmatprep.subr.mxu0 0.0
      %4784 = vmatpush1.msra.mxu0 %v4751
      %4785 = vmatprep.subr.mxu0 0.0
      %4786 = vmatpush1.msra.mxu0 %v4750
      %4787 = vmatprep.subr.mxu0 0.0
      %4788 = vmatpush1.msra.mxu0 %v4749
      %4789 = vmatprep.subr.mxu0 0.0
      %4790 = vmatpush1.msra.mxu0 %v4748
      %4791 = vmatprep.subr.mxu0 0.0
      %4792 = vmatpush2.msra.mxu0 0.0
      %4793 = vmatprep.subr.mxu0 0.0
      %4794 = vmatpush2.msra.mxu0 0.0
      %4795 = vmatprep.subr.mxu0 0.0
      %4796 = vmatpush2.msra.mxu0 0.0
      %4797 = vmatprep.subr.mxu0 0.0
      %4798 = vmatpush2.msra.mxu0 0.0
      %4799 = vmatprep.subr.mxu0 0.0
      %4800 = vmatpush2.msra.mxu0 0.0
      %4801 = vmatprep.subr.mxu0 0.0
      %4802 = vmatpush2.msra.mxu0 0.0
      %4803 = vmatprep.subr.mxu0 0.0
      %4804 = vmatpush2.msra.mxu0 0.0
      %4805 = vmatprep.subr.mxu0 0.0
      %4806 = vmatpush2.msra.mxu0 0.0
      %4807 = vmatprep.subr.mxu0 0.0
      %4808 = vmatpush2.msra.mxu0 0.0
      %4809 = vmatprep.subr.mxu0 0.0
      %4810 = vmatpush2.msra.mxu0 0.0
      %4811 = vmatprep.subr.mxu0 0.0
      %4812 = vmatpush2.msra.mxu0 0.0
      %4813 = vmatprep.subr.mxu0 0.0
      %4814 = vmatpush2.msra.mxu0 0.0
      %4815 = vmatprep.subr.mxu0 0.0
      %4816 = vmatpush2.msra.mxu0 0.0
      %4817 = vmatprep.subr.mxu0 0.0
      %4818 = vmatpush2.msra.mxu0 0.0
      %4819 = vmatprep.subr.mxu0 0.0
      %4820 = vmatpush2.msra.mxu0 0.0
      %4821 = vmatprep.subr.mxu0 0.0
      %4822 = vmatpush2.msra.mxu0 0.0
      %4823 = vmatprep.mubr.f32.mxu0 0.0
      %4824 = vmatmul.mubr.f32.gmra.mxu0 %v4757
      %v4825 = vpop.f32.mrf.mxu0
      %v4826 = vadd.f32 %v4754, %v4825
      %v4827 = vpop.f32.mrf.mxu0
      %4828 = vdwg.mxu0
      %s4829 = scalar_lea.vmem %s11, 9
      %v4830 = vld [vmem:[%s4829] sm:$0x1]
      %v4832 = vlaneseq
      %v4833 = vshrl.u32 %v4832, 7
      %v4834 = vsub.s32 0, %v4833
      %v4835 = vrot.slane %v4830, %v4834
      %v4837 = vadd.f32 %v4826, %v4835
      %s4838 = scalar_lea.vmem %s12, 288
      %v4839 = vld [vmem:[%s4838] sm:$0xff]
      %v4840 = vld [vmem:[%s4838 + $0x8] sm:$0xff]
      %v4841 = vld [vmem:[%s4838 + $0x10] sm:$0xff]
      %v4842 = vld [vmem:[%s4838 + $0x18] sm:$0xff]
      %s4843 = scalar_lea.vmem %s13, 9
      %v4844 = vld [vmem:[%s4843] sm:$0x1]
      %v4846 = vlaneseq
      %v4847 = vshrl.u32 %v4846, 7
      %v4848 = vsub.s32 0, %v4847
      %v4849 = vrot.slane %v4844, %v4848
      %v4852 = vsel %vm598, %v4837, 0
      %4854 = vmatprep.subr.mxu0 0.0
      %4855 = vmatpush1.msra.mxu0 0.0
      %4856 = vmatprep.subr.mxu0 0.0
      %4857 = vmatpush1.msra.mxu0 0.0
      %4858 = vmatprep.subr.mxu0 0.0
      %4859 = vmatpush1.msra.mxu0 0.0
      %4860 = vmatprep.subr.mxu0 0.0
      %4861 = vmatpush1.msra.mxu0 0.0
      %4862 = vmatprep.subr.mxu0 0.0
      %4863 = vmatpush1.msra.mxu0 0.0
      %4864 = vmatprep.subr.mxu0 0.0
      %4865 = vmatpush1.msra.mxu0 0.0
      %4866 = vmatprep.subr.mxu0 0.0
      %4867 = vmatpush1.msra.mxu0 0.0
      %4868 = vmatprep.subr.mxu0 0.0
      %4869 = vmatpush1.msra.mxu0 0.0
      %4870 = vmatprep.subr.mxu0 0.0
      %4871 = vmatpush1.msra.mxu0 0.0
      %4872 = vmatprep.subr.mxu0 0.0
      %4873 = vmatpush1.msra.mxu0 0.0
      %4874 = vmatprep.subr.mxu0 0.0
      %4875 = vmatpush1.msra.mxu0 0.0
      %4876 = vmatprep.subr.mxu0 0.0
      %4877 = vmatpush1.msra.mxu0 0.0
      %4878 = vmatprep.subr.mxu0 0.0
      %4879 = vmatpush1.msra.mxu0 %v4842
      %4880 = vmatprep.subr.mxu0 0.0
      %4881 = vmatpush1.msra.mxu0 %v4841
      %4882 = vmatprep.subr.mxu0 0.0
      %4883 = vmatpush1.msra.mxu0 %v4840
      %4884 = vmatprep.subr.mxu0 0.0
      %4885 = vmatpush1.msra.mxu0 %v4839
      %4886 = vmatprep.subr.mxu0 0.0
      %4887 = vmatpush2.msra.mxu0 0.0
      %4888 = vmatprep.subr.mxu0 0.0
      %4889 = vmatpush2.msra.mxu0 0.0
      %4890 = vmatprep.subr.mxu0 0.0
      %4891 = vmatpush2.msra.mxu0 0.0
      %4892 = vmatprep.subr.mxu0 0.0
      %4893 = vmatpush2.msra.mxu0 0.0
      %4894 = vmatprep.subr.mxu0 0.0
      %4895 = vmatpush2.msra.mxu0 0.0
      %4896 = vmatprep.subr.mxu0 0.0
      %4897 = vmatpush2.msra.mxu0 0.0
      %4898 = vmatprep.subr.mxu0 0.0
      %4899 = vmatpush2.msra.mxu0 0.0
      %4900 = vmatprep.subr.mxu0 0.0
      %4901 = vmatpush2.msra.mxu0 0.0
      %4902 = vmatprep.subr.mxu0 0.0
      %4903 = vmatpush2.msra.mxu0 0.0
      %4904 = vmatprep.subr.mxu0 0.0
      %4905 = vmatpush2.msra.mxu0 0.0
      %4906 = vmatprep.subr.mxu0 0.0
      %4907 = vmatpush2.msra.mxu0 0.0
      %4908 = vmatprep.subr.mxu0 0.0
      %4909 = vmatpush2.msra.mxu0 0.0
      %4910 = vmatprep.subr.mxu0 0.0
      %4911 = vmatpush2.msra.mxu0 0.0
      %4912 = vmatprep.subr.mxu0 0.0
      %4913 = vmatpush2.msra.mxu0 0.0
      %4914 = vmatprep.subr.mxu0 0.0
      %4915 = vmatpush2.msra.mxu0 0.0
      %4916 = vmatprep.subr.mxu0 0.0
      %4917 = vmatpush2.msra.mxu0 0.0
      %4918 = vmatprep.mubr.f32.mxu0 0.0
      %4919 = vmatmul.mubr.f32.gmra.mxu0 %v4852
      %v4920 = vpop.f32.mrf.mxu0
      %v4921 = vadd.f32 %v4849, %v4920
      %v4922 = vpop.f32.mrf.mxu0
      %4923 = vdwg.mxu0
      %v4924 = vtanh.pop %v4921
      %s4925 = scalar_lea.vmem %s14, 288
      %v4926 = vld [vmem:[%s4925] sm:$0xff]
      %v4927 = vld [vmem:[%s4925 + $0x8] sm:$0xff]
      %v4928 = vld [vmem:[%s4925 + $0x10] sm:$0xff]
      %v4929 = vld [vmem:[%s4925 + $0x18] sm:$0xff]
      %s4930 = scalar_lea.vmem %s15, 9
      %v4931 = vld [vmem:[%s4930] sm:$0x1]
      %v4933 = vlaneseq
      %v4934 = vshrl.u32 %v4933, 7
      %v4935 = vsub.s32 0, %v4934
      %v4936 = vrot.slane %v4931, %v4935
      %v4939 = vsel %vm598, %v4924, 0
      %4941 = vmatprep.subr.mxu0 0.0
      %4942 = vmatpush1.msra.mxu0 0.0
      %4943 = vmatprep.subr.mxu0 0.0
      %4944 = vmatpush1.msra.mxu0 0.0
      %4945 = vmatprep.subr.mxu0 0.0
      %4946 = vmatpush1.msra.mxu0 0.0
      %4947 = vmatprep.subr.mxu0 0.0
      %4948 = vmatpush1.msra.mxu0 0.0
      %4949 = vmatprep.subr.mxu0 0.0
      %4950 = vmatpush1.msra.mxu0 0.0
      %4951 = vmatprep.subr.mxu0 0.0
      %4952 = vmatpush1.msra.mxu0 0.0
      %4953 = vmatprep.subr.mxu0 0.0
      %4954 = vmatpush1.msra.mxu0 0.0
      %4955 = vmatprep.subr.mxu0 0.0
      %4956 = vmatpush1.msra.mxu0 0.0
      %4957 = vmatprep.subr.mxu0 0.0
      %4958 = vmatpush1.msra.mxu0 0.0
      %4959 = vmatprep.subr.mxu0 0.0
      %4960 = vmatpush1.msra.mxu0 0.0
      %4961 = vmatprep.subr.mxu0 0.0
      %4962 = vmatpush1.msra.mxu0 0.0
      %4963 = vmatprep.subr.mxu0 0.0
      %4964 = vmatpush1.msra.mxu0 0.0
      %4965 = vmatprep.subr.mxu0 0.0
      %4966 = vmatpush1.msra.mxu0 %v4929
      %4967 = vmatprep.subr.mxu0 0.0
      %4968 = vmatpush1.msra.mxu0 %v4928
      %4969 = vmatprep.subr.mxu0 0.0
      %4970 = vmatpush1.msra.mxu0 %v4927
      %4971 = vmatprep.subr.mxu0 0.0
      %4972 = vmatpush1.msra.mxu0 %v4926
      %4973 = vmatprep.subr.mxu0 0.0
      %4974 = vmatpush2.msra.mxu0 0.0
      %4975 = vmatprep.subr.mxu0 0.0
      %4976 = vmatpush2.msra.mxu0 0.0
      %4977 = vmatprep.subr.mxu0 0.0
      %4978 = vmatpush2.msra.mxu0 0.0
      %4979 = vmatprep.subr.mxu0 0.0
      %4980 = vmatpush2.msra.mxu0 0.0
      %4981 = vmatprep.subr.mxu0 0.0
      %4982 = vmatpush2.msra.mxu0 0.0
      %4983 = vmatprep.subr.mxu0 0.0
      %4984 = vmatpush2.msra.mxu0 0.0
      %4985 = vmatprep.subr.mxu0 0.0
      %4986 = vmatpush2.msra.mxu0 0.0
      %4987 = vmatprep.subr.mxu0 0.0
      %4988 = vmatpush2.msra.mxu0 0.0
      %4989 = vmatprep.subr.mxu0 0.0
      %4990 = vmatpush2.msra.mxu0 0.0
      %4991 = vmatprep.subr.mxu0 0.0
      %4992 = vmatpush2.msra.mxu0 0.0
      %4993 = vmatprep.subr.mxu0 0.0
      %4994 = vmatpush2.msra.mxu0 0.0
      %4995 = vmatprep.subr.mxu0 0.0
      %4996 = vmatpush2.msra.mxu0 0.0
      %4997 = vmatprep.subr.mxu0 0.0
      %4998 = vmatpush2.msra.mxu0 0.0
      %4999 = vmatprep.subr.mxu0 0.0
      %5000 = vmatpush2.msra.mxu0 0.0
      %5001 = vmatprep.subr.mxu0 0.0
      %5002 = vmatpush2.msra.mxu0 0.0
      %5003 = vmatprep.subr.mxu0 0.0
      %5004 = vmatpush2.msra.mxu0 0.0
      %5005 = vmatprep.mubr.f32.mxu0 0.0
      %5006 = vmatmul.mubr.f32.gmra.mxu0 %v4939
      %v5007 = vpop.f32.mrf.mxu0
      %v5008 = vadd.f32 %v4936, %v5007
      %v5009 = vpop.f32.mrf.mxu0
      %5010 = vdwg.mxu0
      %5011 = vset.pattern.permute.xlu0 10
      %5012 = vperm.xlu0 %5011, %v957
      %v5013 = vpop.permute.xlu0 %5012
      %5015 = vrot.lane.b32.xlu0 %v813, 64
      %v5016 = vpop.permute.xlu0 %5015
      %v5017 = vsel %vm598, %v5016, 0
      %5019 = vmatprep.subr.mxu0 0.0
      %5020 = vmatpush1.xpose.msra.mxu0 0.0
      %5021 = vmatprep.subr.mxu0 0.0
      %5022 = vmatpush1.xpose.msra.mxu0 0.0
      %5023 = vmatprep.subr.mxu0 0.0
      %5024 = vmatpush1.xpose.msra.mxu0 0.0
      %5025 = vmatprep.subr.mxu0 0.0
      %5026 = vmatpush1.xpose.msra.mxu0 0.0
      %5027 = vmatprep.subr.mxu0 0.0
      %5028 = vmatpush1.xpose.msra.mxu0 0.0
      %5029 = vmatprep.subr.mxu0 0.0
      %5030 = vmatpush1.xpose.msra.mxu0 0.0
      %5031 = vmatprep.subr.mxu0 0.0
      %5032 = vmatpush1.xpose.msra.mxu0 0.0
      %5033 = vmatprep.subr.mxu0 0.0
      %5034 = vmatpush1.xpose.msra.mxu0 0.0
      %5035 = vmatprep.subr.mxu0 0.0
      %5036 = vmatpush1.xpose.msra.mxu0 0.0
      %5037 = vmatprep.subr.mxu0 0.0
      %5038 = vmatpush1.xpose.msra.mxu0 0.0
      %5039 = vmatprep.subr.mxu0 0.0
      %5040 = vmatpush1.xpose.msra.mxu0 0.0
      %5041 = vmatprep.subr.mxu0 0.0
      %5042 = vmatpush1.xpose.msra.mxu0 0.0
      %5043 = vmatprep.subr.mxu0 0.0
      %5044 = vmatpush1.xpose.msra.mxu0 0.0
      %5045 = vmatprep.subr.mxu0 0.0
      %5046 = vmatpush1.xpose.msra.mxu0 0.0
      %5047 = vmatprep.subr.mxu0 0.0
      %5048 = vmatpush1.xpose.msra.mxu0 0.0
      %5049 = vmatprep.subr.mxu0 0.0
      %5050 = vmatpush1.xpose.msra.mxu0 %v1206
      %5051 = vmatprep.subr.mxu0 0.0
      %5052 = vmatpush2.xpose.msra.mxu0 0.0
      %5053 = vmatprep.subr.mxu0 0.0
      %5054 = vmatpush2.xpose.msra.mxu0 0.0
      %5055 = vmatprep.subr.mxu0 0.0
      %5056 = vmatpush2.xpose.msra.mxu0 0.0
      %5057 = vmatprep.subr.mxu0 0.0
      %5058 = vmatpush2.xpose.msra.mxu0 0.0
      %5059 = vmatprep.subr.mxu0 0.0
      %5060 = vmatpush2.xpose.msra.mxu0 0.0
      %5061 = vmatprep.subr.mxu0 0.0
      %5062 = vmatpush2.xpose.msra.mxu0 0.0
      %5063 = vmatprep.subr.mxu0 0.0
      %5064 = vmatpush2.xpose.msra.mxu0 0.0
      %5065 = vmatprep.subr.mxu0 0.0
      %5066 = vmatpush2.xpose.msra.mxu0 0.0
      %5067 = vmatprep.subr.mxu0 0.0
      %5068 = vmatpush2.xpose.msra.mxu0 0.0
      %5069 = vmatprep.subr.mxu0 0.0
      %5070 = vmatpush2.xpose.msra.mxu0 0.0
      %5071 = vmatprep.subr.mxu0 0.0
      %5072 = vmatpush2.xpose.msra.mxu0 0.0
      %5073 = vmatprep.subr.mxu0 0.0
      %5074 = vmatpush2.xpose.msra.mxu0 0.0
      %5075 = vmatprep.subr.mxu0 0.0
      %5076 = vmatpush2.xpose.msra.mxu0 0.0
      %5077 = vmatprep.subr.mxu0 0.0
      %5078 = vmatpush2.xpose.msra.mxu0 0.0
      %5079 = vmatprep.subr.mxu0 0.0
      %5080 = vmatpush2.xpose.msra.mxu0 0.0
      %5081 = vmatprep.subr.mxu0 0.0
      %5082 = vmatpush2.xpose.msra.mxu0 0.0
      %5083 = vmatprep.mubr.f32.mxu0 0.0
      %5084 = vmatmul.mubr.f32.gmra.mxu0 %v5017
      %v5085 = vpop.f32.mrf.mxu0
      %v5086 = vadd.f32 %v5013, %v5085
      %v5087 = vpop.f32.mrf.mxu0
      %5088 = vdwg.mxu0
      %v5089 = vsel %vm1597, -100.0, %v5086
      %v5090 = vsel %vm1367, %v5089, -inf
      %5091 = vmax.xlane.f32.xlu0 %v5090
      %v5092 = vpop.xlane.xlu0 %5091
      %v5093 = vsub.f32 %v5089, %v5092
      %v5094 = vmul.f32 %v5093, 1.442695
      %v5095 = vpow.pop %v5094
      %v5096 = vsel %vm1367, %v5095, 0.0
      %5097 = vadd.xlane.f32.xlu0 %v5096
      %v5098 = vpop.xlane.xlu0 %5097
      %v5099 = vrcp.pop %v5098
      %v5100 = vmul.f32 %v5095, %v5099
      %v5102 = vsel %vm1367, %v5100, 0
      %5104 = vmatprep.subr.mxu0 0.0
      %5105 = vmatpush1.msra.mxu0 0.0
      %5106 = vmatprep.subr.mxu0 0.0
      %5107 = vmatpush1.msra.mxu0 0.0
      %5108 = vmatprep.subr.mxu0 0.0
      %5109 = vmatpush1.msra.mxu0 0.0
      %5110 = vmatprep.subr.mxu0 0.0
      %5111 = vmatpush1.msra.mxu0 0.0
      %5112 = vmatprep.subr.mxu0 0.0
      %5113 = vmatpush1.msra.mxu0 0.0
      %5114 = vmatprep.subr.mxu0 0.0
      %5115 = vmatpush1.msra.mxu0 0.0
      %5116 = vmatprep.subr.mxu0 0.0
      %5117 = vmatpush1.msra.mxu0 0.0
      %5118 = vmatprep.subr.mxu0 0.0
      %5119 = vmatpush1.msra.mxu0 0.0
      %5120 = vmatprep.subr.mxu0 0.0
      %5121 = vmatpush1.msra.mxu0 0.0
      %5122 = vmatprep.subr.mxu0 0.0
      %5123 = vmatpush1.msra.mxu0 0.0
      %5124 = vmatprep.subr.mxu0 0.0
      %5125 = vmatpush1.msra.mxu0 0.0
      %5126 = vmatprep.subr.mxu0 0.0
      %5127 = vmatpush1.msra.mxu0 0.0
      %5128 = vmatprep.subr.mxu0 0.0
      %5129 = vmatpush1.msra.mxu0 0.0
      %5130 = vmatprep.subr.mxu0 0.0
      %5131 = vmatpush1.msra.mxu0 0.0
      %5132 = vmatprep.subr.mxu0 0.0
      %5133 = vmatpush1.msra.mxu0 0.0
      %5134 = vmatprep.subr.mxu0 0.0
      %5135 = vmatpush1.msra.mxu0 %v582
      %5136 = vmatprep.subr.mxu0 0.0
      %5137 = vmatpush2.msra.mxu0 0.0
      %5138 = vmatprep.subr.mxu0 0.0
      %5139 = vmatpush2.msra.mxu0 0.0
      %5140 = vmatprep.subr.mxu0 0.0
      %5141 = vmatpush2.msra.mxu0 0.0
      %5142 = vmatprep.subr.mxu0 0.0
      %5143 = vmatpush2.msra.mxu0 0.0
      %5144 = vmatprep.subr.mxu0 0.0
      %5145 = vmatpush2.msra.mxu0 0.0
      %5146 = vmatprep.subr.mxu0 0.0
      %5147 = vmatpush2.msra.mxu0 0.0
      %5148 = vmatprep.subr.mxu0 0.0
      %5149 = vmatpush2.msra.mxu0 0.0
      %5150 = vmatprep.subr.mxu0 0.0
      %5151 = vmatpush2.msra.mxu0 0.0
      %5152 = vmatprep.subr.mxu0 0.0
      %5153 = vmatpush2.msra.mxu0 0.0
      %5154 = vmatprep.subr.mxu0 0.0
      %5155 = vmatpush2.msra.mxu0 0.0
      %5156 = vmatprep.subr.mxu0 0.0
      %5157 = vmatpush2.msra.mxu0 0.0
      %5158 = vmatprep.subr.mxu0 0.0
      %5159 = vmatpush2.msra.mxu0 0.0
      %5160 = vmatprep.subr.mxu0 0.0
      %5161 = vmatpush2.msra.mxu0 0.0
      %5162 = vmatprep.subr.mxu0 0.0
      %5163 = vmatpush2.msra.mxu0 0.0
      %5164 = vmatprep.subr.mxu0 0.0
      %5165 = vmatpush2.msra.mxu0 0.0
      %5166 = vmatprep.subr.mxu0 0.0
      %5167 = vmatpush2.msra.mxu0 0.0
      %5168 = vmatprep.mubr.f32.mxu0 0.0
      %5169 = vmatmul.mubr.f32.gmra.mxu0 %v5102
      %v5170 = vpop.f32.mrf.mxu0
      %v5171 = vadd.f32 0.0, %v5170
      %v5172 = vpop.f32.mrf.mxu0
      %5173 = vdwg.mxu0
      %s5174 = scalar_lea.vmem %s10, 320
      %v5175 = vld [vmem:[%s5174] sm:$0xff]
      %v5176 = vld [vmem:[%s5174 + $0x8] sm:$0xff]
      %v5177 = vld [vmem:[%s5174 + $0x10] sm:$0xff]
      %v5178 = vld [vmem:[%s5174 + $0x18] sm:$0xff]
      %5179 = vrot.lane.b32.xlu0 %v1179, 64
      %v5180 = vpop.permute.xlu0 %5179
      %v5183 = vsel %vm598, %v5171, 0
      %5185 = vmatprep.subr.mxu0 0.0
      %5186 = vmatpush1.msra.mxu0 0.0
      %5187 = vmatprep.subr.mxu0 0.0
      %5188 = vmatpush1.msra.mxu0 0.0
      %5189 = vmatprep.subr.mxu0 0.0
      %5190 = vmatpush1.msra.mxu0 0.0
      %5191 = vmatprep.subr.mxu0 0.0
      %5192 = vmatpush1.msra.mxu0 0.0
      %5193 = vmatprep.subr.mxu0 0.0
      %5194 = vmatpush1.msra.mxu0 0.0
      %5195 = vmatprep.subr.mxu0 0.0
      %5196 = vmatpush1.msra.mxu0 0.0
      %5197 = vmatprep.subr.mxu0 0.0
      %5198 = vmatpush1.msra.mxu0 0.0
      %5199 = vmatprep.subr.mxu0 0.0
      %5200 = vmatpush1.msra.mxu0 0.0
      %5201 = vmatprep.subr.mxu0 0.0
      %5202 = vmatpush1.msra.mxu0 0.0
      %5203 = vmatprep.subr.mxu0 0.0
      %5204 = vmatpush1.msra.mxu0 0.0
      %5205 = vmatprep.subr.mxu0 0.0
      %5206 = vmatpush1.msra.mxu0 0.0
      %5207 = vmatprep.subr.mxu0 0.0
      %5208 = vmatpush1.msra.mxu0 0.0
      %5209 = vmatprep.subr.mxu0 0.0
      %5210 = vmatpush1.msra.mxu0 %v5178
      %5211 = vmatprep.subr.mxu0 0.0
      %5212 = vmatpush1.msra.mxu0 %v5177
      %5213 = vmatprep.subr.mxu0 0.0
      %5214 = vmatpush1.msra.mxu0 %v5176
      %5215 = vmatprep.subr.mxu0 0.0
      %5216 = vmatpush1.msra.mxu0 %v5175
      %5217 = vmatprep.subr.mxu0 0.0
      %5218 = vmatpush2.msra.mxu0 0.0
      %5219 = vmatprep.subr.mxu0 0.0
      %5220 = vmatpush2.msra.mxu0 0.0
      %5221 = vmatprep.subr.mxu0 0.0
      %5222 = vmatpush2.msra.mxu0 0.0
      %5223 = vmatprep.subr.mxu0 0.0
      %5224 = vmatpush2.msra.mxu0 0.0
      %5225 = vmatprep.subr.mxu0 0.0
      %5226 = vmatpush2.msra.mxu0 0.0
      %5227 = vmatprep.subr.mxu0 0.0
      %5228 = vmatpush2.msra.mxu0 0.0
      %5229 = vmatprep.subr.mxu0 0.0
      %5230 = vmatpush2.msra.mxu0 0.0
      %5231 = vmatprep.subr.mxu0 0.0
      %5232 = vmatpush2.msra.mxu0 0.0
      %5233 = vmatprep.subr.mxu0 0.0
      %5234 = vmatpush2.msra.mxu0 0.0
      %5235 = vmatprep.subr.mxu0 0.0
      %5236 = vmatpush2.msra.mxu0 0.0
      %5237 = vmatprep.subr.mxu0 0.0
      %5238 = vmatpush2.msra.mxu0 0.0
      %5239 = vmatprep.subr.mxu0 0.0
      %5240 = vmatpush2.msra.mxu0 0.0
      %5241 = vmatprep.subr.mxu0 0.0
      %5242 = vmatpush2.msra.mxu0 0.0
      %5243 = vmatprep.subr.mxu0 0.0
      %5244 = vmatpush2.msra.mxu0 0.0
      %5245 = vmatprep.subr.mxu0 0.0
      %5246 = vmatpush2.msra.mxu0 0.0
      %5247 = vmatprep.subr.mxu0 0.0
      %5248 = vmatpush2.msra.mxu0 0.0
      %5249 = vmatprep.mubr.f32.mxu0 0.0
      %5250 = vmatmul.mubr.f32.gmra.mxu0 %v5183
      %v5251 = vpop.f32.mrf.mxu0
      %v5252 = vadd.f32 %v5180, %v5251
      %v5253 = vpop.f32.mrf.mxu0
      %5254 = vdwg.mxu0
      %s5255 = scalar_lea.vmem %s11, 10
      %v5256 = vld [vmem:[%s5255] sm:$0x1]
      %v5258 = vlaneseq
      %v5259 = vshrl.u32 %v5258, 7
      %v5260 = vsub.s32 0, %v5259
      %v5261 = vrot.slane %v5256, %v5260
      %v5263 = vadd.f32 %v5252, %v5261
      %s5264 = scalar_lea.vmem %s12, 320
      %v5265 = vld [vmem:[%s5264] sm:$0xff]
      %v5266 = vld [vmem:[%s5264 + $0x8] sm:$0xff]
      %v5267 = vld [vmem:[%s5264 + $0x10] sm:$0xff]
      %v5268 = vld [vmem:[%s5264 + $0x18] sm:$0xff]
      %s5269 = scalar_lea.vmem %s13, 10
      %v5270 = vld [vmem:[%s5269] sm:$0x1]
      %v5272 = vlaneseq
      %v5273 = vshrl.u32 %v5272, 7
      %v5274 = vsub.s32 0, %v5273
      %v5275 = vrot.slane %v5270, %v5274
      %v5278 = vsel %vm598, %v5263, 0
      %5280 = vmatprep.subr.mxu0 0.0
      %5281 = vmatpush1.msra.mxu0 0.0
      %5282 = vmatprep.subr.mxu0 0.0
      %5283 = vmatpush1.msra.mxu0 0.0
      %5284 = vmatprep.subr.mxu0 0.0
      %5285 = vmatpush1.msra.mxu0 0.0
      %5286 = vmatprep.subr.mxu0 0.0
      %5287 = vmatpush1.msra.mxu0 0.0
      %5288 = vmatprep.subr.mxu0 0.0
      %5289 = vmatpush1.msra.mxu0 0.0
      %5290 = vmatprep.subr.mxu0 0.0
      %5291 = vmatpush1.msra.mxu0 0.0
      %5292 = vmatprep.subr.mxu0 0.0
      %5293 = vmatpush1.msra.mxu0 0.0
      %5294 = vmatprep.subr.mxu0 0.0
      %5295 = vmatpush1.msra.mxu0 0.0
      %5296 = vmatprep.subr.mxu0 0.0
      %5297 = vmatpush1.msra.mxu0 0.0
      %5298 = vmatprep.subr.mxu0 0.0
      %5299 = vmatpush1.msra.mxu0 0.0
      %5300 = vmatprep.subr.mxu0 0.0
      %5301 = vmatpush1.msra.mxu0 0.0
      %5302 = vmatprep.subr.mxu0 0.0
      %5303 = vmatpush1.msra.mxu0 0.0
      %5304 = vmatprep.subr.mxu0 0.0
      %5305 = vmatpush1.msra.mxu0 %v5268
      %5306 = vmatprep.subr.mxu0 0.0
      %5307 = vmatpush1.msra.mxu0 %v5267
      %5308 = vmatprep.subr.mxu0 0.0
      %5309 = vmatpush1.msra.mxu0 %v5266
      %5310 = vmatprep.subr.mxu0 0.0
      %5311 = vmatpush1.msra.mxu0 %v5265
      %5312 = vmatprep.subr.mxu0 0.0
      %5313 = vmatpush2.msra.mxu0 0.0
      %5314 = vmatprep.subr.mxu0 0.0
      %5315 = vmatpush2.msra.mxu0 0.0
      %5316 = vmatprep.subr.mxu0 0.0
      %5317 = vmatpush2.msra.mxu0 0.0
      %5318 = vmatprep.subr.mxu0 0.0
      %5319 = vmatpush2.msra.mxu0 0.0
      %5320 = vmatprep.subr.mxu0 0.0
      %5321 = vmatpush2.msra.mxu0 0.0
      %5322 = vmatprep.subr.mxu0 0.0
      %5323 = vmatpush2.msra.mxu0 0.0
      %5324 = vmatprep.subr.mxu0 0.0
      %5325 = vmatpush2.msra.mxu0 0.0
      %5326 = vmatprep.subr.mxu0 0.0
      %5327 = vmatpush2.msra.mxu0 0.0
      %5328 = vmatprep.subr.mxu0 0.0
      %5329 = vmatpush2.msra.mxu0 0.0
      %5330 = vmatprep.subr.mxu0 0.0
      %5331 = vmatpush2.msra.mxu0 0.0
      %5332 = vmatprep.subr.mxu0 0.0
      %5333 = vmatpush2.msra.mxu0 0.0
      %5334 = vmatprep.subr.mxu0 0.0
      %5335 = vmatpush2.msra.mxu0 0.0
      %5336 = vmatprep.subr.mxu0 0.0
      %5337 = vmatpush2.msra.mxu0 0.0
      %5338 = vmatprep.subr.mxu0 0.0
      %5339 = vmatpush2.msra.mxu0 0.0
      %5340 = vmatprep.subr.mxu0 0.0
      %5341 = vmatpush2.msra.mxu0 0.0
      %5342 = vmatprep.subr.mxu0 0.0
      %5343 = vmatpush2.msra.mxu0 0.0
      %5344 = vmatprep.mubr.f32.mxu0 0.0
      %5345 = vmatmul.mubr.f32.gmra.mxu0 %v5278
      %v5346 = vpop.f32.mrf.mxu0
      %v5347 = vadd.f32 %v5275, %v5346
      %v5348 = vpop.f32.mrf.mxu0
      %5349 = vdwg.mxu0
      %v5350 = vtanh.pop %v5347
      %s5351 = scalar_lea.vmem %s14, 320
      %v5352 = vld [vmem:[%s5351] sm:$0xff]
      %v5353 = vld [vmem:[%s5351 + $0x8] sm:$0xff]
      %v5354 = vld [vmem:[%s5351 + $0x10] sm:$0xff]
      %v5355 = vld [vmem:[%s5351 + $0x18] sm:$0xff]
      %s5356 = scalar_lea.vmem %s15, 10
      %v5357 = vld [vmem:[%s5356] sm:$0x1]
      %v5359 = vlaneseq
      %v5360 = vshrl.u32 %v5359, 7
      %v5361 = vsub.s32 0, %v5360
      %v5362 = vrot.slane %v5357, %v5361
      %v5365 = vsel %vm598, %v5350, 0
      %5367 = vmatprep.subr.mxu0 0.0
      %5368 = vmatpush1.msra.mxu0 0.0
      %5369 = vmatprep.subr.mxu0 0.0
      %5370 = vmatpush1.msra.mxu0 0.0
      %5371 = vmatprep.subr.mxu0 0.0
      %5372 = vmatpush1.msra.mxu0 0.0
      %5373 = vmatprep.subr.mxu0 0.0
      %5374 = vmatpush1.msra.mxu0 0.0
      %5375 = vmatprep.subr.mxu0 0.0
      %5376 = vmatpush1.msra.mxu0 0.0
      %5377 = vmatprep.subr.mxu0 0.0
      %5378 = vmatpush1.msra.mxu0 0.0
      %5379 = vmatprep.subr.mxu0 0.0
      %5380 = vmatpush1.msra.mxu0 0.0
      %5381 = vmatprep.subr.mxu0 0.0
      %5382 = vmatpush1.msra.mxu0 0.0
      %5383 = vmatprep.subr.mxu0 0.0
      %5384 = vmatpush1.msra.mxu0 0.0
      %5385 = vmatprep.subr.mxu0 0.0
      %5386 = vmatpush1.msra.mxu0 0.0
      %5387 = vmatprep.subr.mxu0 0.0
      %5388 = vmatpush1.msra.mxu0 0.0
      %5389 = vmatprep.subr.mxu0 0.0
      %5390 = vmatpush1.msra.mxu0 0.0
      %5391 = vmatprep.subr.mxu0 0.0
      %5392 = vmatpush1.msra.mxu0 %v5355
      %5393 = vmatprep.subr.mxu0 0.0
      %5394 = vmatpush1.msra.mxu0 %v5354
      %5395 = vmatprep.subr.mxu0 0.0
      %5396 = vmatpush1.msra.mxu0 %v5353
      %5397 = vmatprep.subr.mxu0 0.0
      %5398 = vmatpush1.msra.mxu0 %v5352
      %5399 = vmatprep.subr.mxu0 0.0
      %5400 = vmatpush2.msra.mxu0 0.0
      %5401 = vmatprep.subr.mxu0 0.0
      %5402 = vmatpush2.msra.mxu0 0.0
      %5403 = vmatprep.subr.mxu0 0.0
      %5404 = vmatpush2.msra.mxu0 0.0
      %5405 = vmatprep.subr.mxu0 0.0
      %5406 = vmatpush2.msra.mxu0 0.0
      %5407 = vmatprep.subr.mxu0 0.0
      %5408 = vmatpush2.msra.mxu0 0.0
      %5409 = vmatprep.subr.mxu0 0.0
      %5410 = vmatpush2.msra.mxu0 0.0
      %5411 = vmatprep.subr.mxu0 0.0
      %5412 = vmatpush2.msra.mxu0 0.0
      %5413 = vmatprep.subr.mxu0 0.0
      %5414 = vmatpush2.msra.mxu0 0.0
      %5415 = vmatprep.subr.mxu0 0.0
      %5416 = vmatpush2.msra.mxu0 0.0
      %5417 = vmatprep.subr.mxu0 0.0
      %5418 = vmatpush2.msra.mxu0 0.0
      %5419 = vmatprep.subr.mxu0 0.0
      %5420 = vmatpush2.msra.mxu0 0.0
      %5421 = vmatprep.subr.mxu0 0.0
      %5422 = vmatpush2.msra.mxu0 0.0
      %5423 = vmatprep.subr.mxu0 0.0
      %5424 = vmatpush2.msra.mxu0 0.0
      %5425 = vmatprep.subr.mxu0 0.0
      %5426 = vmatpush2.msra.mxu0 0.0
      %5427 = vmatprep.subr.mxu0 0.0
      %5428 = vmatpush2.msra.mxu0 0.0
      %5429 = vmatprep.subr.mxu0 0.0
      %5430 = vmatpush2.msra.mxu0 0.0
      %5431 = vmatprep.mubr.f32.mxu0 0.0
      %5432 = vmatmul.mubr.f32.gmra.mxu0 %v5365
      %v5433 = vpop.f32.mrf.mxu0
      %v5434 = vadd.f32 %v5362, %v5433
      %v5435 = vpop.f32.mrf.mxu0
      %5436 = vdwg.mxu0
      %5437 = vset.pattern.permute.xlu0 11
      %5438 = vperm.xlu0 %5437, %v887
      %v5439 = vpop.permute.xlu0 %5438
      %5442 = vrot.lane.b32.xlu0 %v740, 32
      %v5443 = vpop.permute.xlu0 %5442
      %v5444 = vsel %vm598, %v5443, 0
      %5446 = vmatprep.subr.mxu0 0.0
      %5447 = vmatpush1.xpose.msra.mxu0 0.0
      %5448 = vmatprep.subr.mxu0 0.0
      %5449 = vmatpush1.xpose.msra.mxu0 0.0
      %5450 = vmatprep.subr.mxu0 0.0
      %5451 = vmatpush1.xpose.msra.mxu0 0.0
      %5452 = vmatprep.subr.mxu0 0.0
      %5453 = vmatpush1.xpose.msra.mxu0 0.0
      %5454 = vmatprep.subr.mxu0 0.0
      %5455 = vmatpush1.xpose.msra.mxu0 0.0
      %5456 = vmatprep.subr.mxu0 0.0
      %5457 = vmatpush1.xpose.msra.mxu0 0.0
      %5458 = vmatprep.subr.mxu0 0.0
      %5459 = vmatpush1.xpose.msra.mxu0 0.0
      %5460 = vmatprep.subr.mxu0 0.0
      %5461 = vmatpush1.xpose.msra.mxu0 0.0
      %5462 = vmatprep.subr.mxu0 0.0
      %5463 = vmatpush1.xpose.msra.mxu0 0.0
      %5464 = vmatprep.subr.mxu0 0.0
      %5465 = vmatpush1.xpose.msra.mxu0 0.0
      %5466 = vmatprep.subr.mxu0 0.0
      %5467 = vmatpush1.xpose.msra.mxu0 0.0
      %5468 = vmatprep.subr.mxu0 0.0
      %5469 = vmatpush1.xpose.msra.mxu0 0.0
      %5470 = vmatprep.subr.mxu0 0.0
      %5471 = vmatpush1.xpose.msra.mxu0 0.0
      %5472 = vmatprep.subr.mxu0 0.0
      %5473 = vmatpush1.xpose.msra.mxu0 0.0
      %5474 = vmatprep.subr.mxu0 0.0
      %5475 = vmatpush1.xpose.msra.mxu0 0.0
      %5476 = vmatprep.subr.mxu0 0.0
      %5477 = vmatpush1.xpose.msra.mxu0 %v1206
      %5478 = vmatprep.subr.mxu0 0.0
      %5479 = vmatpush2.xpose.msra.mxu0 0.0
      %5480 = vmatprep.subr.mxu0 0.0
      %5481 = vmatpush2.xpose.msra.mxu0 0.0
      %5482 = vmatprep.subr.mxu0 0.0
      %5483 = vmatpush2.xpose.msra.mxu0 0.0
      %5484 = vmatprep.subr.mxu0 0.0
      %5485 = vmatpush2.xpose.msra.mxu0 0.0
      %5486 = vmatprep.subr.mxu0 0.0
      %5487 = vmatpush2.xpose.msra.mxu0 0.0
      %5488 = vmatprep.subr.mxu0 0.0
      %5489 = vmatpush2.xpose.msra.mxu0 0.0
      %5490 = vmatprep.subr.mxu0 0.0
      %5491 = vmatpush2.xpose.msra.mxu0 0.0
      %5492 = vmatprep.subr.mxu0 0.0
      %5493 = vmatpush2.xpose.msra.mxu0 0.0
      %5494 = vmatprep.subr.mxu0 0.0
      %5495 = vmatpush2.xpose.msra.mxu0 0.0
      %5496 = vmatprep.subr.mxu0 0.0
      %5497 = vmatpush2.xpose.msra.mxu0 0.0
      %5498 = vmatprep.subr.mxu0 0.0
      %5499 = vmatpush2.xpose.msra.mxu0 0.0
      %5500 = vmatprep.subr.mxu0 0.0
      %5501 = vmatpush2.xpose.msra.mxu0 0.0
      %5502 = vmatprep.subr.mxu0 0.0
      %5503 = vmatpush2.xpose.msra.mxu0 0.0
      %5504 = vmatprep.subr.mxu0 0.0
      %5505 = vmatpush2.xpose.msra.mxu0 0.0
      %5506 = vmatprep.subr.mxu0 0.0
      %5507 = vmatpush2.xpose.msra.mxu0 0.0
      %5508 = vmatprep.subr.mxu0 0.0
      %5509 = vmatpush2.xpose.msra.mxu0 0.0
      %5510 = vmatprep.mubr.f32.mxu0 0.0
      %5511 = vmatmul.mubr.f32.gmra.mxu0 %v5444
      %v5512 = vpop.f32.mrf.mxu0
      %v5513 = vadd.f32 %v5439, %v5512
      %v5514 = vpop.f32.mrf.mxu0
      %5515 = vdwg.mxu0
      %v5516 = vsel %vm1597, -100.0, %v5513
      %v5517 = vsel %vm1367, %v5516, -inf
      %5518 = vmax.xlane.f32.xlu0 %v5517
      %v5519 = vpop.xlane.xlu0 %5518
      %v5520 = vsub.f32 %v5516, %v5519
      %v5521 = vmul.f32 %v5520, 1.442695
      %v5522 = vpow.pop %v5521
      %v5523 = vsel %vm1367, %v5522, 0.0
      %5524 = vadd.xlane.f32.xlu0 %v5523
      %v5525 = vpop.xlane.xlu0 %5524
      %v5526 = vrcp.pop %v5525
      %v5527 = vmul.f32 %v5522, %v5526
      %v5529 = vsel %vm1367, %v5527, 0
      %5531 = vmatprep.subr.mxu0 0.0
      %5532 = vmatpush1.msra.mxu0 0.0
      %5533 = vmatprep.subr.mxu0 0.0
      %5534 = vmatpush1.msra.mxu0 0.0
      %5535 = vmatprep.subr.mxu0 0.0
      %5536 = vmatpush1.msra.mxu0 0.0
      %5537 = vmatprep.subr.mxu0 0.0
      %5538 = vmatpush1.msra.mxu0 0.0
      %5539 = vmatprep.subr.mxu0 0.0
      %5540 = vmatpush1.msra.mxu0 0.0
      %5541 = vmatprep.subr.mxu0 0.0
      %5542 = vmatpush1.msra.mxu0 0.0
      %5543 = vmatprep.subr.mxu0 0.0
      %5544 = vmatpush1.msra.mxu0 0.0
      %5545 = vmatprep.subr.mxu0 0.0
      %5546 = vmatpush1.msra.mxu0 0.0
      %5547 = vmatprep.subr.mxu0 0.0
      %5548 = vmatpush1.msra.mxu0 0.0
      %5549 = vmatprep.subr.mxu0 0.0
      %5550 = vmatpush1.msra.mxu0 0.0
      %5551 = vmatprep.subr.mxu0 0.0
      %5552 = vmatpush1.msra.mxu0 0.0
      %5553 = vmatprep.subr.mxu0 0.0
      %5554 = vmatpush1.msra.mxu0 0.0
      %5555 = vmatprep.subr.mxu0 0.0
      %5556 = vmatpush1.msra.mxu0 0.0
      %5557 = vmatprep.subr.mxu0 0.0
      %5558 = vmatpush1.msra.mxu0 0.0
      %5559 = vmatprep.subr.mxu0 0.0
      %5560 = vmatpush1.msra.mxu0 0.0
      %5561 = vmatprep.subr.mxu0 0.0
      %5562 = vmatpush1.msra.mxu0 %v582
      %5563 = vmatprep.subr.mxu0 0.0
      %5564 = vmatpush2.msra.mxu0 0.0
      %5565 = vmatprep.subr.mxu0 0.0
      %5566 = vmatpush2.msra.mxu0 0.0
      %5567 = vmatprep.subr.mxu0 0.0
      %5568 = vmatpush2.msra.mxu0 0.0
      %5569 = vmatprep.subr.mxu0 0.0
      %5570 = vmatpush2.msra.mxu0 0.0
      %5571 = vmatprep.subr.mxu0 0.0
      %5572 = vmatpush2.msra.mxu0 0.0
      %5573 = vmatprep.subr.mxu0 0.0
      %5574 = vmatpush2.msra.mxu0 0.0
      %5575 = vmatprep.subr.mxu0 0.0
      %5576 = vmatpush2.msra.mxu0 0.0
      %5577 = vmatprep.subr.mxu0 0.0
      %5578 = vmatpush2.msra.mxu0 0.0
      %5579 = vmatprep.subr.mxu0 0.0
      %5580 = vmatpush2.msra.mxu0 0.0
      %5581 = vmatprep.subr.mxu0 0.0
      %5582 = vmatpush2.msra.mxu0 0.0
      %5583 = vmatprep.subr.mxu0 0.0
      %5584 = vmatpush2.msra.mxu0 0.0
      %5585 = vmatprep.subr.mxu0 0.0
      %5586 = vmatpush2.msra.mxu0 0.0
      %5587 = vmatprep.subr.mxu0 0.0
      %5588 = vmatpush2.msra.mxu0 0.0
      %5589 = vmatprep.subr.mxu0 0.0
      %5590 = vmatpush2.msra.mxu0 0.0
      %5591 = vmatprep.subr.mxu0 0.0
      %5592 = vmatpush2.msra.mxu0 0.0
      %5593 = vmatprep.subr.mxu0 0.0
      %5594 = vmatpush2.msra.mxu0 0.0
      %5595 = vmatprep.mubr.f32.mxu0 0.0
      %5596 = vmatmul.mubr.f32.gmra.mxu0 %v5529
      %v5597 = vpop.f32.mrf.mxu0
      %v5598 = vadd.f32 0.0, %v5597
      %v5599 = vpop.f32.mrf.mxu0
      %5600 = vdwg.mxu0
      %s5601 = scalar_lea.vmem %s10, 352
      %v5602 = vld [vmem:[%s5601] sm:$0xff]
      %v5603 = vld [vmem:[%s5601 + $0x8] sm:$0xff]
      %v5604 = vld [vmem:[%s5601 + $0x10] sm:$0xff]
      %v5605 = vld [vmem:[%s5601 + $0x18] sm:$0xff]
      %5607 = vrot.lane.b32.xlu0 %v1109, 32
      %v5608 = vpop.permute.xlu0 %5607
      %v5611 = vsel %vm598, %v5598, 0
      %5613 = vmatprep.subr.mxu0 0.0
      %5614 = vmatpush1.msra.mxu0 0.0
      %5615 = vmatprep.subr.mxu0 0.0
      %5616 = vmatpush1.msra.mxu0 0.0
      %5617 = vmatprep.subr.mxu0 0.0
      %5618 = vmatpush1.msra.mxu0 0.0
      %5619 = vmatprep.subr.mxu0 0.0
      %5620 = vmatpush1.msra.mxu0 0.0
      %5621 = vmatprep.subr.mxu0 0.0
      %5622 = vmatpush1.msra.mxu0 0.0
      %5623 = vmatprep.subr.mxu0 0.0
      %5624 = vmatpush1.msra.mxu0 0.0
      %5625 = vmatprep.subr.mxu0 0.0
      %5626 = vmatpush1.msra.mxu0 0.0
      %5627 = vmatprep.subr.mxu0 0.0
      %5628 = vmatpush1.msra.mxu0 0.0
      %5629 = vmatprep.subr.mxu0 0.0
      %5630 = vmatpush1.msra.mxu0 0.0
      %5631 = vmatprep.subr.mxu0 0.0
      %5632 = vmatpush1.msra.mxu0 0.0
      %5633 = vmatprep.subr.mxu0 0.0
      %5634 = vmatpush1.msra.mxu0 0.0
      %5635 = vmatprep.subr.mxu0 0.0
      %5636 = vmatpush1.msra.mxu0 0.0
      %5637 = vmatprep.subr.mxu0 0.0
      %5638 = vmatpush1.msra.mxu0 %v5605
      %5639 = vmatprep.subr.mxu0 0.0
      %5640 = vmatpush1.msra.mxu0 %v5604
      %5641 = vmatprep.subr.mxu0 0.0
      %5642 = vmatpush1.msra.mxu0 %v5603
      %5643 = vmatprep.subr.mxu0 0.0
      %5644 = vmatpush1.msra.mxu0 %v5602
      %5645 = vmatprep.subr.mxu0 0.0
      %5646 = vmatpush2.msra.mxu0 0.0
      %5647 = vmatprep.subr.mxu0 0.0
      %5648 = vmatpush2.msra.mxu0 0.0
      %5649 = vmatprep.subr.mxu0 0.0
      %5650 = vmatpush2.msra.mxu0 0.0
      %5651 = vmatprep.subr.mxu0 0.0
      %5652 = vmatpush2.msra.mxu0 0.0
      %5653 = vmatprep.subr.mxu0 0.0
      %5654 = vmatpush2.msra.mxu0 0.0
      %5655 = vmatprep.subr.mxu0 0.0
      %5656 = vmatpush2.msra.mxu0 0.0
      %5657 = vmatprep.subr.mxu0 0.0
      %5658 = vmatpush2.msra.mxu0 0.0
      %5659 = vmatprep.subr.mxu0 0.0
      %5660 = vmatpush2.msra.mxu0 0.0
      %5661 = vmatprep.subr.mxu0 0.0
      %5662 = vmatpush2.msra.mxu0 0.0
      %5663 = vmatprep.subr.mxu0 0.0
      %5664 = vmatpush2.msra.mxu0 0.0
      %5665 = vmatprep.subr.mxu0 0.0
      %5666 = vmatpush2.msra.mxu0 0.0
      %5667 = vmatprep.subr.mxu0 0.0
      %5668 = vmatpush2.msra.mxu0 0.0
      %5669 = vmatprep.subr.mxu0 0.0
      %5670 = vmatpush2.msra.mxu0 0.0
      %5671 = vmatprep.subr.mxu0 0.0
      %5672 = vmatpush2.msra.mxu0 0.0
      %5673 = vmatprep.subr.mxu0 0.0
      %5674 = vmatpush2.msra.mxu0 0.0
      %5675 = vmatprep.subr.mxu0 0.0
      %5676 = vmatpush2.msra.mxu0 0.0
      %5677 = vmatprep.mubr.f32.mxu0 0.0
      %5678 = vmatmul.mubr.f32.gmra.mxu0 %v5611
      %v5679 = vpop.f32.mrf.mxu0
      %v5680 = vadd.f32 %v5608, %v5679
      %v5681 = vpop.f32.mrf.mxu0
      %5682 = vdwg.mxu0
      %s5683 = scalar_lea.vmem %s11, 11
      %v5684 = vld [vmem:[%s5683] sm:$0x1]
      %v5686 = vlaneseq
      %v5687 = vshrl.u32 %v5686, 7
      %v5688 = vsub.s32 0, %v5687
      %v5689 = vrot.slane %v5684, %v5688
      %v5691 = vadd.f32 %v5680, %v5689
      %v5692 = vlaneseq
      %v5693 = vshrl.u32 %v5692, 7
      %v5694 = vsub.s32 0, %v5693
      %v5695 = vrot.slane %v1515, %v5694
      %v5696 = vadd.f32 %v5691, %v5695
      %v5697 = vmax.f32 %v5696, 0.0
      %s5698 = scalar_lea.vmem %s14, 352
      %v5699 = vld [vmem:[%s5698] sm:$0xff]
      %v5700 = vld [vmem:[%s5698 + $0x8] sm:$0xff]
      %v5701 = vld [vmem:[%s5698 + $0x10] sm:$0xff]
      %v5702 = vld [vmem:[%s5698 + $0x18] sm:$0xff]
      %s5703 = scalar_lea.vmem %s15, 11
      %v5704 = vld [vmem:[%s5703] sm:$0x1]
      %v5706 = vlaneseq
      %v5707 = vshrl.u32 %v5706, 7
      %v5708 = vsub.s32 0, %v5707
      %v5709 = vrot.slane %v5704, %v5708
      %v5712 = vsel %vm598, %v5697, 0
      %5714 = vmatprep.subr.mxu0 0.0
      %5715 = vmatpush1.msra.mxu0 0.0
      %5716 = vmatprep.subr.mxu0 0.0
      %5717 = vmatpush1.msra.mxu0 0.0
      %5718 = vmatprep.subr.mxu0 0.0
      %5719 = vmatpush1.msra.mxu0 0.0
      %5720 = vmatprep.subr.mxu0 0.0
      %5721 = vmatpush1.msra.mxu0 0.0
      %5722 = vmatprep.subr.mxu0 0.0
      %5723 = vmatpush1.msra.mxu0 0.0
      %5724 = vmatprep.subr.mxu0 0.0
      %5725 = vmatpush1.msra.mxu0 0.0
      %5726 = vmatprep.subr.mxu0 0.0
      %5727 = vmatpush1.msra.mxu0 0.0
      %5728 = vmatprep.subr.mxu0 0.0
      %5729 = vmatpush1.msra.mxu0 0.0
      %5730 = vmatprep.subr.mxu0 0.0
      %5731 = vmatpush1.msra.mxu0 0.0
      %5732 = vmatprep.subr.mxu0 0.0
      %5733 = vmatpush1.msra.mxu0 0.0
      %5734 = vmatprep.subr.mxu0 0.0
      %5735 = vmatpush1.msra.mxu0 0.0
      %5736 = vmatprep.subr.mxu0 0.0
      %5737 = vmatpush1.msra.mxu0 0.0
      %5738 = vmatprep.subr.mxu0 0.0
      %5739 = vmatpush1.msra.mxu0 %v5702
      %5740 = vmatprep.subr.mxu0 0.0
      %5741 = vmatpush1.msra.mxu0 %v5701
      %5742 = vmatprep.subr.mxu0 0.0
      %5743 = vmatpush1.msra.mxu0 %v5700
      %5744 = vmatprep.subr.mxu0 0.0
      %5745 = vmatpush1.msra.mxu0 %v5699
      %5746 = vmatprep.subr.mxu0 0.0
      %5747 = vmatpush2.msra.mxu0 0.0
      %5748 = vmatprep.subr.mxu0 0.0
      %5749 = vmatpush2.msra.mxu0 0.0
      %5750 = vmatprep.subr.mxu0 0.0
      %5751 = vmatpush2.msra.mxu0 0.0
      %5752 = vmatprep.subr.mxu0 0.0
      %5753 = vmatpush2.msra.mxu0 0.0
      %5754 = vmatprep.subr.mxu0 0.0
      %5755 = vmatpush2.msra.mxu0 0.0
      %5756 = vmatprep.subr.mxu0 0.0
      %5757 = vmatpush2.msra.mxu0 0.0
      %5758 = vmatprep.subr.mxu0 0.0
      %5759 = vmatpush2.msra.mxu0 0.0
      %5760 = vmatprep.subr.mxu0 0.0
      %5761 = vmatpush2.msra.mxu0 0.0
      %5762 = vmatprep.subr.mxu0 0.0
      %5763 = vmatpush2.msra.mxu0 0.0
      %5764 = vmatprep.subr.mxu0 0.0
      %5765 = vmatpush2.msra.mxu0 0.0
      %5766 = vmatprep.subr.mxu0 0.0
      %5767 = vmatpush2.msra.mxu0 0.0
      %5768 = vmatprep.subr.mxu0 0.0
      %5769 = vmatpush2.msra.mxu0 0.0
      %5770 = vmatprep.subr.mxu0 0.0
      %5771 = vmatpush2.msra.mxu0 0.0
      %5772 = vmatprep.subr.mxu0 0.0
      %5773 = vmatpush2.msra.mxu0 0.0
      %5774 = vmatprep.subr.mxu0 0.0
      %5775 = vmatpush2.msra.mxu0 0.0
      %5776 = vmatprep.subr.mxu0 0.0
      %5777 = vmatpush2.msra.mxu0 0.0
      %5778 = vmatprep.mubr.f32.mxu0 0.0
      %5779 = vmatmul.mubr.f32.gmra.mxu0 %v5712
      %v5780 = vpop.f32.mrf.mxu0
      %v5781 = vadd.f32 %v5709, %v5780
      %v5782 = vpop.f32.mrf.mxu0
      %5783 = vdwg.mxu0
      %5785 = vrot.lane.b32.xlu0 %v2163, 8
      %v5786 = vpop.permute.xlu0 %5785
      %5789 = vrot.lane.b32.xlu0 %v2485, 16
      %v5790 = vpop.permute.xlu0 %5789
      %5793 = vrot.lane.b32.xlu0 %v2807, 24
      %v5794 = vpop.permute.xlu0 %5793
      %5797 = vrot.lane.b32.xlu0 %v3139, 32
      %v5798 = vpop.permute.xlu0 %5797
      %5801 = vrot.lane.b32.xlu0 %v3478, 40
      %v5802 = vpop.permute.xlu0 %5801
      %5805 = vrot.lane.b32.xlu0 %v3818, 48
      %v5806 = vpop.permute.xlu0 %5805
      %5809 = vrot.lane.b32.xlu0 %v4158, 56
      %v5810 = vpop.permute.xlu0 %5809
      %5813 = vrot.lane.b32.xlu0 %v4581, 64
      %v5814 = vpop.permute.xlu0 %5813
      %5817 = vrot.lane.b32.xlu0 %v5008, 72
      %v5818 = vpop.permute.xlu0 %5817
      %5821 = vrot.lane.b32.xlu0 %v5434, 80
      %v5822 = vpop.permute.xlu0 %5821
      %5825 = vrot.lane.b32.xlu0 %v5781, 88
      %v5826 = vpop.permute.xlu0 %5825
      %v5828 = vsel %vm1367, %v1841, %v5786
      %vm5829 = vcmask 130048
      %v5830 = vsel %vm5829, %v5828, %v5790
      %vm5831 = vcmask 195584
      %v5832 = vsel %vm5831, %v5830, %v5794
      %v5833 = vsel %vm598, %v5832, %v5798
      %vm5834 = vcmask 326656
      %v5835 = vsel %vm5834, %v5833, %v5802
      %vm5836 = vcmask 392192
      %v5837 = vsel %vm5836, %v5835, %v5806
      %vm5838 = vcmask 457728
      %v5839 = vsel %vm5838, %v5837, %v5810
      %vm5840 = vcmask 523264
      %v5841 = vsel %vm5840, %v5839, %v5814
      %vm5842 = vcmask 588800
      %v5843 = vsel %vm5842, %v5841, %v5818
      %vm5844 = vcmask 654336
      %v5845 = vsel %vm5844, %v5843, %v5822
      %vm5846 = vcmask 719872
      %v5847 = vsel %vm5846, %v5845, %v5826
      %vm5848 = vcmask 785408
      %v5849 = vsel %vm5848, %v5847, 0.0
      %5850 = vst [vmem:[%s578] sm:$0xff] %v5849
      %p5851 = scmp.lt.s32.totalorder %s41, 1
      %s5852 = scalar_select %p5851, %s41, 1
      %s5853 = smul.addr %s5852, 8
      %s5854 = scalar_lea.vmem %s19, %s5853
      // Predicated region
      $region85: #{forward.9} parent=83 // pred_check
        %p5855 = pneg %p415
      $region86: #{forward.9} parent=83 // pred_check_branch
        %5857 = sbr.rel (%p5855) target = $region88
      $region87: #{forward.9} parent=83 // pred_region
        _
      $region88: #{forward.9} parent=83 // pred_fallthru
        _
    $region84: #{forward.9} parent=5 // pred_fallthru
      _
    %p5858 = scmp.le.s32.totalorder 2, %s36
    // Predicated region
    $region89: #{forward.9} parent=5 // pred_check
      %p5859 = pneg %p5858
    $region90: #{forward.9} parent=5 // pred_check_branch
      %5861 = sbr.rel (%p5859) target = $region92
    $region91: #{forward.9} parent=5 // pred_region
      %s5862 = ssub.s32 %s36, 2
      // Predicated region
      $region93: #{forward.9} parent=91 // pred_check
        %p5863 = pneg %p421
      $region94: #{forward.9} parent=91 // pred_check_branch
        %5865 = sbr.rel (%p5863) target = $region96
      $region95: #{forward.9} parent=91 // pred_region
        %p5866 = scmp.lt.s32.totalorder %s42, 1
        %s5867 = scalar_select %p5866, %s42, 1
        %s5868 = smul.addr %s5867, 8
        %s5869 = scalar_lea.vmem %s19, %s5868
      $region96: #{forward.9} parent=91 // pred_fallthru
        _
    $region92: #{forward.9} parent=5 // pred_fallthru
      _
  $region6: #{forward.9} parent=0 // loop_footer
    %s40 = sadd.s32 1, %s36
  $region7: #{forward.9} parent=0 // loop_footer_branch
    %35 = sbr.rel target = $region3
  $region8: #{forward.9} parent=0 // loop_exit
    _

</llo_original>
